<compile_context>
chip_gen: v7x
topology: tpu7x:2x2x1
jax: 0.10.0
libtpu: 0.0.40
codegen_flags: <defaults>
</compile_context>

<pallas_src>
import functools

import numpy as np
import jax
import jax.numpy as jnp
from jax import lax
from jax.experimental import pallas as pl
from jax.experimental.pallas import tpu as pltpu


BT = 16                     # samples per grid step (batch tile)


# ----------------------------------------------------------------------------
# The single fused kernel
# ----------------------------------------------------------------------------
def _fused_kernel(x_ref, w1_ref, w2_ref, w3_ref, f1_ref, f2_ref, f3_ref,
                  sh1_ref, sh2_ref, sh3_ref, o_ref,
                  s1e, s1o, s2, s3, *, bt):
    """Whole-network forward for one batch tile of `bt` samples.

    x_ref : (bt, 8, 9, 180) bf16   -- [b, h%8, h//8, w*3+c], H padded to 72
    w1_ref: (8, 180, 112)  bf16    -- conv1 structured weights (BN scale folded)
    w2_ref: (4, 112,  96)  bf16    -- conv2
    w3_ref: (2,  96, 160)  bf16    -- conv3
    f1_ref: (5, 160, 512)  bf16    -- fc1, decomposed over the 5 feature rows
    f2_ref: (512, 512)     bf16    -- fc2
    f3_ref: (1, 512)       f32     -- fc3 (applied as VPU mul + lane reduce)
    sh*   : (1, N)         f32     -- folded conv-bias + BN shift per lane
    o_ref : (bt, 1)        f32
    s1e/s1o: (bt, 16, 112) bf16    -- conv1 even / odd output rows (+ zero pad)
    s2    : (bt, 16,  96)  bf16    -- conv2 output rows (+ zero pad)
    s3    : (bt,  8, 160)  bf16    -- conv3 output rows
    """
    f32, bf16 = jnp.float32, jnp.bfloat16

    def leaky(y):
        return jnp.where(y >= 0.0, y, 0.2 * y)

    # ---------------- conv1: 3->8, k=8, s=4  (out rows 0..15, valid 0..13) ----
    # even output row p1=2t reads input row 8t + i ; odd p1=2t+1 reads 8t + 4 + i
    acc_e = jnp.zeros((bt * 8, 112), f32)
    acc_o = jnp.zeros((bt * 8, 112), f32)
    for i in range(8):
        w_i = w1_ref[i]                                        # (180, 112)
        ue, uo = i, 4 + i
        lhs_e = x_ref[:, ue % 8, ue // 8:ue // 8 + 8, :].reshape(bt * 8, 180)
        lhs_o = x_ref[:, uo % 8, uo // 8:uo // 8 + 8, :].reshape(bt * 8, 180)
        acc_e = acc_e + jnp.dot(lhs_e, w_i, preferred_element_type=f32)
        acc_o = acc_o + jnp.dot(lhs_o, w_i, preferred_element_type=f32)
    h1e = leaky(acc_e + sh1_ref[...]).astype(bf16)
    h1o = leaky(acc_o + sh1_ref[...]).astype(bf16)
    z112 = jnp.zeros((bt, 8, 112), bf16)
    s1e[:, 0:8, :] = h1e.reshape(bt, 8, 112)
    s1e[:, 8:16, :] = z112
    s1o[:, 0:8, :] = h1o.reshape(bt, 8, 112)
    s1o[:, 8:16, :] = z112

    # ---------------- conv2: 8->16, k=4, s=2  (out rows 0..7, valid 0..5) -----
    # input row 2*p2 + i2  ->  parity buffer (i2 % 2) at position p2 + i2//2
    acc2 = jnp.zeros((bt * 8, 96), f32)
    for i2 in range(4):
        src = s1e if (i2 % 2) == 0 else s1o
        off = i2 // 2
        lhs = src[:, off:off + 8, :].reshape(bt * 8, 112)
        acc2 = acc2 + jnp.dot(lhs, w2_ref[i2], preferred_element_type=f32)
    h2 = leaky(acc2 + sh2_ref[...]).astype(bf16)
    s2[:, 0:8, :] = h2.reshape(bt, 8, 96)
    s2[:, 8:16, :] = jnp.zeros((bt, 8, 96), bf16)

    # ---------------- conv3: 16->32, k=2, s=1 (out rows 0..7, valid 0..4) -----
    acc3 = jnp.zeros((bt * 8, 160), f32)
    for i3 in range(2):
        lhs = s2[:, i3:i3 + 8, :].reshape(bt * 8, 96)
        acc3 = acc3 + jnp.dot(lhs, w3_ref[i3], preferred_element_type=f32)
    h3 = leaky(acc3 + sh3_ref[...]).astype(bf16)
    s3[...] = h3.reshape(bt, 8, 160)

    # ---------------- FC chain (Dropout is eval-mode identity) ----------------
    # fc1 consumes the 5 valid conv3 rows one at a time (no rows->lanes relayout)
    accf = jnp.zeros((bt, 512), f32)
    for h in range(5):
        accf = accf + jnp.dot(s3[:, h, :], f1_ref[h], preferred_element_type=f32)
    z1 = jnp.maximum(accf, 0.0).astype(bf16)
    z2 = jnp.maximum(jnp.dot(z1, f2_ref[...], preferred_element_type=f32), 0.0)
    # fc3: 512 -> 1 as a VPU multiply + lane reduction (no 1-lane matmul)
    o_ref[...] = jnp.sum(z2 * f3_ref[...], axis=1, keepdims=True).astype(o_ref.dtype)


# ----------------------------------------------------------------------------
# Forward pass: one pallas_call for the whole network
# ----------------------------------------------------------------------------
def angle_predictor_forward(pp, x_nchw):
    B = x_nchw.shape[0]
    Bp = ((B + BT - 1) // BT) * BT

    # Input prep: pure data movement on the raw input only (no inter-layer glue).
    x = x_nchw.astype(jnp.bfloat16)
    x = jnp.transpose(x, (0, 2, 3, 1))                       # NCHW -> NHWC
    x = jnp.pad(x, ((0, Bp - B), (0, 12), (0, 0), (0, 0)))   # batch -> Bp, H 60 -> 72
    x = x.reshape(Bp, 72, 180)                               # lanes = w*3 + c
    x = x.reshape(Bp, 9, 8, 180).transpose(0, 2, 1, 3)       # (b, h%8, h//8, lanes)

    flops_per_sample = 2 * (14 * 14 * 192 * 8 + 6 * 6 * 128 * 16 + 5 * 5 * 64 * 32
                            + 800 * 512 + 512 * 512 + 512)
    cost = pl.CostEstimate(
        flops=Bp * flops_per_sample,
        bytes_accessed=Bp * (72 * 180 * 2 + 4) + 2_200_000,
        transcendentals=0)

    out = pl.pallas_call(
        functools.partial(_fused_kernel, bt=BT),
        out_shape=jax.ShapeDtypeStruct((Bp, 1), jnp.float32),
        grid=(Bp // BT,),
        in_specs=[
            pl.BlockSpec((BT, 8, 9, 180), lambda g: (g, 0, 0, 0)),
            pl.BlockSpec((8, 180, 112), lambda g: (0, 0, 0)),
            pl.BlockSpec((4, 112, 96), lambda g: (0, 0, 0)),
            pl.BlockSpec((2, 96, 160), lambda g: (0, 0, 0)),
            pl.BlockSpec((5, 160, 512), lambda g: (0, 0, 0)),
            pl.BlockSpec((512, 512), lambda g: (0, 0)),
            pl.BlockSpec((1, 512), lambda g: (0, 0)),
            pl.BlockSpec((1, 112), lambda g: (0, 0)),
            pl.BlockSpec((1, 96), lambda g: (0, 0)),
            pl.BlockSpec((1, 160), lambda g: (0, 0)),
        ],
        out_specs=pl.BlockSpec((BT, 1), lambda g: (g, 0)),
        scratch_shapes=[
            pltpu.VMEM((BT, 16, 112), jnp.bfloat16),
            pltpu.VMEM((BT, 16, 112), jnp.bfloat16),
            pltpu.VMEM((BT, 16, 96), jnp.bfloat16),
            pltpu.VMEM((BT, 8, 160), jnp.bfloat16),
        ],
        compiler_params=pltpu.CompilerParams(
            dimension_semantics=("parallel",),
            vmem_limit_bytes=32 * 1024 * 1024),
        cost_estimate=cost,
    )(x, pp["w1"], pp["w2"], pp["w3"], pp["fc1"], pp["fc2"], pp["fc3"],
      pp["sh1"], pp["sh2"], pp["sh3"])
    return out[:B]


# ----------------------------------------------------------------------------
# Parameter construction (deterministic, synthetic, PyTorch layouts)
# ----------------------------------------------------------------------------
def init_params(key):
    ks = jax.random.split(key, 12)

    def conv(k, o, c, kk):
        kw_, kb_ = jax.random.split(k)
        fan_in = c * kk * kk
        w = jax.random.normal(kw_, (o, c, kk, kk), jnp.float32) / jnp.sqrt(fan_in)
        b = 0.05 * jax.random.normal(kb_, (o,), jnp.float32)
        return w, b

    def bn(k, c):
        k1, k2, k3, k4 = jax.random.split(k, 4)
        gamma = 1.0 + 0.1 * jax.random.normal(k1, (c,), jnp.float32)
        beta = 0.1 * jax.random.normal(k2, (c,), jnp.float32)
        mean = 0.1 * jax.random.normal(k3, (c,), jnp.float32)
        var = 1.0 + 0.1 * jnp.abs(jax.random.normal(k4, (c,), jnp.float32))
        return gamma, beta, mean, var

    def linear(k, o, i):
        return jax.random.normal(k, (o, i), jnp.float32) / jnp.sqrt(i)

    return {
        "conv1": conv(ks[0], 8, 3, 8),   "bn1": bn(ks[1], 8),
        "conv2": conv(ks[2], 16, 8, 4),  "bn2": bn(ks[3], 16),
        "conv3": conv(ks[4], 32, 16, 2), "bn3": bn(ks[5], 32),
        "fc1": linear(ks[6], 512, 800),
        "fc2": linear(ks[7], 512, 512),
        "fc3": linear(ks[8], 1, 512),
    }


def prep_params(params):
    """One-time weight prep (host side):
       - fold eval-mode BatchNorm: scale into the conv weights, shift kept per lane
       - build structured conv weights  (kh, in_w*C_in, out_w*C_out)
       - fold the PyTorch NCHW flatten order into fc1, decomposed over the 5 rows
       - cast all MXU operands to bf16."""
    def np32(a):
        return np.asarray(a, np.float32)

    def fold_bn(conv_b, bn, eps=1e-5):
        gamma, beta, mean, var = (np32(t) for t in bn)
        scale = gamma / np.sqrt(var + eps)
        shift = scale * (np32(conv_b) - mean) + beta
        return scale, shift

    def structured(w, scale, in_w, out_w, stride):
        O, C, KH, KW = w.shape
        ws = w * scale[:, None, None, None]
        m = np.zeros((KH, in_w * C, out_w * O), np.float32)
        for i in range(KH):
            for j in range(KW):
                for q in range(out_w):
                    win = stride * q + j
                    m[i, win * C:(win + 1) * C, q * O:(q + 1) * O] = ws[:, :, i, j].T
        return m

    pp = {}
    convs = [("conv1", "bn1", 60, 14, 4),
             ("conv2", "bn2", 14, 6, 2),
             ("conv3", "bn3", 6, 5, 1)]
    for idx, (cname, bname, in_w, out_w, stride) in enumerate(convs, 1):
        w, b = params[cname]
        scale, shift = fold_bn(b, params[bname])
        pp[f"w{idx}"] = jnp.asarray(structured(np32(w), scale, in_w, out_w, stride),
                                    jnp.bfloat16)
        pp[f"sh{idx}"] = jnp.asarray(np.tile(shift, out_w)[None, :], jnp.float32)

    # fc1 torch layout (512, 800) with input index c*25 + h*5 + w (NCHW flatten).
    # Re-lay it out as (h, w*32 + c, n) so it consumes the kernel's per-row
    # (lane = w*32 + c) conv3 output directly.
    fc1 = np32(params["fc1"]).reshape(512, 32, 5, 5)          # [n, c, h, w]
    fc1 = np.transpose(fc1, (2, 3, 1, 0)).reshape(5, 160, 512)
    pp["fc1"] = jnp.asarray(fc1, jnp.bfloat16)
    pp["fc2"] = jnp.asarray(np32(params["fc2"]).T, jnp.bfloat16)
    pp["fc3"] = jnp.asarray(np32(params["fc3"]), jnp.float32)  # (1, 512), VPU path
    return pp


# ----------------------------------------------------------------------------
# Pure-JAX f32 reference (mirrors the PyTorch module in eval mode)
# ----------------------------------------------------------------------------
def reference_forward(params, x_nchw):
    hp = lax.Precision.HIGHEST

    def conv_bn_lrelu(x, w, b, bn, stride):
        gamma, beta, mean, var = bn
        y = lax.conv_general_dilated(
            x, w, (stride, stride), "VALID",
            dimension_numbers=("NCHW", "OIHW", "NCHW"), precision=hp)
        y = y + b[None, :, None, None]
        y = (y - mean[None, :, None, None]) / jnp.sqrt(var[None, :, None, None] + 1e-5)
        y = gamma[None, :, None, None] * y + beta[None, :, None, None]
        return jnp.where(y >= 0.0, y, 0.2 * y)

    x = x_nchw.astype(jnp.float32)
    x = conv_bn_lrelu(x, *params["conv1"], params["bn1"], 4)
    x = conv_bn_lrelu(x, *params["conv2"], params["bn2"], 2)
    x = conv_bn_lrelu(x, *params["conv3"], params["bn3"], 1)
    x = x.reshape(x.shape[0], -1)                       # PyTorch flatten(start_dim=1)
    x = jnp.maximum(jnp.dot(x, params["fc1"].T, precision=hp), 0.0)
    x = jnp.maximum(jnp.dot(x, params["fc2"].T, precision=hp), 0.0)
    return jnp.dot(x, params["fc3"].T, precision=hp)


if __name__ == "__main__":
    key = jax.random.PRNGKey(0)
    pkey, xkey = jax.random.split(key)
    params = init_params(pkey)
    prepped = prep_params(params)

    # Input size implied by Linear(800, ...): (B, 3, 60, 60)
    x = jax.random.normal(xkey, (2, 3, 60, 60), jnp.float32)

    fwd = jax.jit(angle_predictor_forward)
    out = jax.block_until_ready(fwd(prepped, x))
    assert out.shape == (2, 1), out.shape
    assert bool(jnp.all(jnp.isfinite(out)))

    # Validate the bf16-MXU Pallas path against the f32 reference.
    ref = jax.jit(reference_forward)(params, x)
    err = float(jnp.max(jnp.abs(out - ref)))
    tol = 0.08 + 0.05 * float(jnp.max(jnp.abs(ref)))
    assert err <= tol, f"mismatch vs f32 reference: err={err}, tol={tol}"

    print("KERNEL_OK")
</pallas_src>

<mosaic_0001>
module attributes {stable_mosaic.version = 11 : i64} {
  func.func @_fused_kernel(%arg0: i32, %arg1: memref<16x8x9x180xbf16, #tpu.memory_space<vmem>>, %arg2: memref<8x180x112xbf16, #tpu.memory_space<vmem>>, %arg3: memref<4x112x96xbf16, #tpu.memory_space<vmem>>, %arg4: memref<2x96x160xbf16, #tpu.memory_space<vmem>>, %arg5: memref<5x160x512xbf16, #tpu.memory_space<vmem>>, %arg6: memref<512x512xbf16, #tpu.memory_space<vmem>>, %arg7: memref<1x512xf32, #tpu.memory_space<vmem>>, %arg8: memref<1x112xf32, #tpu.memory_space<vmem>>, %arg9: memref<1x96xf32, #tpu.memory_space<vmem>>, %arg10: memref<1x160xf32, #tpu.memory_space<vmem>>, %arg11: memref<16x1xf32, #tpu.memory_space<vmem>>, %arg12: memref<16x16x112xbf16, #tpu.memory_space<vmem>>, %arg13: memref<16x16x112xbf16, #tpu.memory_space<vmem>>, %arg14: memref<16x16x96xbf16, #tpu.memory_space<vmem>>, %arg15: memref<16x8x160xbf16, #tpu.memory_space<vmem>>) attributes {dimension_semantics = [#tpu.dimension_semantics<parallel>], iteration_bounds = array<i64: 1>, scalar_prefetch = 0 : i64, scratch_operands = 4 : i64, tpu.core_type = #tpu.core_type<tc>, window_params = [{transform_indices = @transform_0, window_bounds = array<i64: 16, 8, 9, 180>}, {pipeline_mode = #tpu.pipeline_mode<synchronous>, transform_indices = @transform_1, window_bounds = array<i64: 8, 180, 112>}, {pipeline_mode = #tpu.pipeline_mode<synchronous>, transform_indices = @transform_2, window_bounds = array<i64: 4, 112, 96>}, {pipeline_mode = #tpu.pipeline_mode<synchronous>, transform_indices = @transform_3, window_bounds = array<i64: 2, 96, 160>}, {pipeline_mode = #tpu.pipeline_mode<synchronous>, transform_indices = @transform_4, window_bounds = array<i64: 5, 160, 512>}, {pipeline_mode = #tpu.pipeline_mode<synchronous>, transform_indices = @transform_5, window_bounds = array<i64: 512, 512>}, {pipeline_mode = #tpu.pipeline_mode<synchronous>, transform_indices = @transform_6, window_bounds = array<i64: 1, 512>}, {pipeline_mode = #tpu.pipeline_mode<synchronous>, transform_indices = @transform_7, window_bounds = array<i64: 1, 112>}, {pipeline_mode = #tpu.pipeline_mode<synchronous>, transform_indices = @transform_8, window_bounds = array<i64: 1, 96>}, {pipeline_mode = #tpu.pipeline_mode<synchronous>, transform_indices = @transform_9, window_bounds = array<i64: 1, 160>}, {transform_indices = @transform_10, window_bounds = array<i64: 16, 1>}]} {
    %cst = arith.constant 0.000000e+00 : f32
    %0 = vector.broadcast %cst : f32 to vector<128x112xf32>
    %cst_0 = arith.constant 0.000000e+00 : f32
    %1 = vector.broadcast %cst_0 : f32 to vector<128x112xf32>
    %c0 = arith.constant 0 : index
    %c0_1 = arith.constant 0 : index
    %c0_2 = arith.constant 0 : index
    %2 = vector.load %arg2[%c0, %c0_1, %c0_2] : memref<8x180x112xbf16, #tpu.memory_space<vmem>>, vector<1x180x112xbf16>
    %3 = vector.shape_cast %2 : vector<1x180x112xbf16> to vector<180x112xbf16>
    %c0_3 = arith.constant 0 : index
    %c0_4 = arith.constant 0 : index
    %c0_5 = arith.constant 0 : index
    %c0_6 = arith.constant 0 : index
    %4 = vector.load %arg1[%c0_3, %c0_4, %c0_5, %c0_6] : memref<16x8x9x180xbf16, #tpu.memory_space<vmem>>, vector<16x1x8x180xbf16>
    %5 = vector.shape_cast %4 : vector<16x1x8x180xbf16> to vector<16x8x180xbf16>
    %6 = vector.shape_cast %5 : vector<16x8x180xbf16> to vector<128x180xbf16>
    %c0_7 = arith.constant 0 : index
    %c4 = arith.constant 4 : index
    %c0_8 = arith.constant 0 : index
    %c0_9 = arith.constant 0 : index
    %7 = vector.load %arg1[%c0_7, %c4, %c0_8, %c0_9] : memref<16x8x9x180xbf16, #tpu.memory_space<vmem>>, vector<16x1x8x180xbf16>
    %8 = vector.shape_cast %7 : vector<16x1x8x180xbf16> to vector<16x8x180xbf16>
    %9 = vector.shape_cast %8 : vector<16x8x180xbf16> to vector<128x180xbf16>
    %cst_10 = arith.constant dense<0.000000e+00> : vector<128x112xf32>
    %10 = tpu.matmul %6, %3, %cst_10 {dimension_numbers = #tpu.dot_dimension_numbers<[1], [0], [0], [1], [0, 0, 1, 1], [], []>} : vector<128x180xbf16>, vector<180x112xbf16>, vector<128x112xf32> -> vector<128x112xf32>
    %11 = arith.addf %0, %10 : vector<128x112xf32>
    %cst_11 = arith.constant dense<0.000000e+00> : vector<128x112xf32>
    %12 = tpu.matmul %9, %3, %cst_11 {dimension_numbers = #tpu.dot_dimension_numbers<[1], [0], [0], [1], [0, 0, 1, 1], [], []>} : vector<128x180xbf16>, vector<180x112xbf16>, vector<128x112xf32> -> vector<128x112xf32>
    %13 = arith.addf %1, %12 : vector<128x112xf32>
    %c1 = arith.constant 1 : index
    %c0_12 = arith.constant 0 : index
    %c0_13 = arith.constant 0 : index
    %14 = vector.load %arg2[%c1, %c0_12, %c0_13] : memref<8x180x112xbf16, #tpu.memory_space<vmem>>, vector<1x180x112xbf16>
    %15 = vector.shape_cast %14 : vector<1x180x112xbf16> to vector<180x112xbf16>
    %c0_14 = arith.constant 0 : index
    %c1_15 = arith.constant 1 : index
    %c0_16 = arith.constant 0 : index
    %c0_17 = arith.constant 0 : index
    %16 = vector.load %arg1[%c0_14, %c1_15, %c0_16, %c0_17] : memref<16x8x9x180xbf16, #tpu.memory_space<vmem>>, vector<16x1x8x180xbf16>
    %17 = vector.shape_cast %16 : vector<16x1x8x180xbf16> to vector<16x8x180xbf16>
    %18 = vector.shape_cast %17 : vector<16x8x180xbf16> to vector<128x180xbf16>
    %c0_18 = arith.constant 0 : index
    %c5 = arith.constant 5 : index
    %c0_19 = arith.constant 0 : index
    %c0_20 = arith.constant 0 : index
    %19 = vector.load %arg1[%c0_18, %c5, %c0_19, %c0_20] : memref<16x8x9x180xbf16, #tpu.memory_space<vmem>>, vector<16x1x8x180xbf16>
    %20 = vector.shape_cast %19 : vector<16x1x8x180xbf16> to vector<16x8x180xbf16>
    %21 = vector.shape_cast %20 : vector<16x8x180xbf16> to vector<128x180xbf16>
    %cst_21 = arith.constant dense<0.000000e+00> : vector<128x112xf32>
    %22 = tpu.matmul %18, %15, %cst_21 {dimension_numbers = #tpu.dot_dimension_numbers<[1], [0], [0], [1], [0, 0, 1, 1], [], []>} : vector<128x180xbf16>, vector<180x112xbf16>, vector<128x112xf32> -> vector<128x112xf32>
    %23 = arith.addf %11, %22 : vector<128x112xf32>
    %cst_22 = arith.constant dense<0.000000e+00> : vector<128x112xf32>
    %24 = tpu.matmul %21, %15, %cst_22 {dimension_numbers = #tpu.dot_dimension_numbers<[1], [0], [0], [1], [0, 0, 1, 1], [], []>} : vector<128x180xbf16>, vector<180x112xbf16>, vector<128x112xf32> -> vector<128x112xf32>
    %25 = arith.addf %13, %24 : vector<128x112xf32>
    %c2 = arith.constant 2 : index
    %c0_23 = arith.constant 0 : index
    %c0_24 = arith.constant 0 : index
    %26 = vector.load %arg2[%c2, %c0_23, %c0_24] : memref<8x180x112xbf16, #tpu.memory_space<vmem>>, vector<1x180x112xbf16>
    %27 = vector.shape_cast %26 : vector<1x180x112xbf16> to vector<180x112xbf16>
    %c0_25 = arith.constant 0 : index
    %c2_26 = arith.constant 2 : index
    %c0_27 = arith.constant 0 : index
    %c0_28 = arith.constant 0 : index
    %28 = vector.load %arg1[%c0_25, %c2_26, %c0_27, %c0_28] : memref<16x8x9x180xbf16, #tpu.memory_space<vmem>>, vector<16x1x8x180xbf16>
    %29 = vector.shape_cast %28 : vector<16x1x8x180xbf16> to vector<16x8x180xbf16>
    %30 = vector.shape_cast %29 : vector<16x8x180xbf16> to vector<128x180xbf16>
    %c0_29 = arith.constant 0 : index
    %c6 = arith.constant 6 : index
    %c0_30 = arith.constant 0 : index
    %c0_31 = arith.constant 0 : index
    %31 = vector.load %arg1[%c0_29, %c6, %c0_30, %c0_31] : memref<16x8x9x180xbf16, #tpu.memory_space<vmem>>, vector<16x1x8x180xbf16>
    %32 = vector.shape_cast %31 : vector<16x1x8x180xbf16> to vector<16x8x180xbf16>
    %33 = vector.shape_cast %32 : vector<16x8x180xbf16> to vector<128x180xbf16>
    %cst_32 = arith.constant dense<0.000000e+00> : vector<128x112xf32>
    %34 = tpu.matmul %30, %27, %cst_32 {dimension_numbers = #tpu.dot_dimension_numbers<[1], [0], [0], [1], [0, 0, 1, 1], [], []>} : vector<128x180xbf16>, vector<180x112xbf16>, vector<128x112xf32> -> vector<128x112xf32>
    %35 = arith.addf %23, %34 : vector<128x112xf32>
    %cst_33 = arith.constant dense<0.000000e+00> : vector<128x112xf32>
    %36 = tpu.matmul %33, %27, %cst_33 {dimension_numbers = #tpu.dot_dimension_numbers<[1], [0], [0], [1], [0, 0, 1, 1], [], []>} : vector<128x180xbf16>, vector<180x112xbf16>, vector<128x112xf32> -> vector<128x112xf32>
    %37 = arith.addf %25, %36 : vector<128x112xf32>
    %c3 = arith.constant 3 : index
    %c0_34 = arith.constant 0 : index
    %c0_35 = arith.constant 0 : index
    %38 = vector.load %arg2[%c3, %c0_34, %c0_35] : memref<8x180x112xbf16, #tpu.memory_space<vmem>>, vector<1x180x112xbf16>
    %39 = vector.shape_cast %38 : vector<1x180x112xbf16> to vector<180x112xbf16>
    %c0_36 = arith.constant 0 : index
    %c3_37 = arith.constant 3 : index
    %c0_38 = arith.constant 0 : index
    %c0_39 = arith.constant 0 : index
    %40 = vector.load %arg1[%c0_36, %c3_37, %c0_38, %c0_39] : memref<16x8x9x180xbf16, #tpu.memory_space<vmem>>, vector<16x1x8x180xbf16>
    %41 = vector.shape_cast %40 : vector<16x1x8x180xbf16> to vector<16x8x180xbf16>
    %42 = vector.shape_cast %41 : vector<16x8x180xbf16> to vector<128x180xbf16>
    %c0_40 = arith.constant 0 : index
    %c7 = arith.constant 7 : index
    %c0_41 = arith.constant 0 : index
    %c0_42 = arith.constant 0 : index
    %43 = vector.load %arg1[%c0_40, %c7, %c0_41, %c0_42] : memref<16x8x9x180xbf16, #tpu.memory_space<vmem>>, vector<16x1x8x180xbf16>
    %44 = vector.shape_cast %43 : vector<16x1x8x180xbf16> to vector<16x8x180xbf16>
    %45 = vector.shape_cast %44 : vector<16x8x180xbf16> to vector<128x180xbf16>
    %cst_43 = arith.constant dense<0.000000e+00> : vector<128x112xf32>
    %46 = tpu.matmul %42, %39, %cst_43 {dimension_numbers = #tpu.dot_dimension_numbers<[1], [0], [0], [1], [0, 0, 1, 1], [], []>} : vector<128x180xbf16>, vector<180x112xbf16>, vector<128x112xf32> -> vector<128x112xf32>
    %47 = arith.addf %35, %46 : vector<128x112xf32>
    %cst_44 = arith.constant dense<0.000000e+00> : vector<128x112xf32>
    %48 = tpu.matmul %45, %39, %cst_44 {dimension_numbers = #tpu.dot_dimension_numbers<[1], [0], [0], [1], [0, 0, 1, 1], [], []>} : vector<128x180xbf16>, vector<180x112xbf16>, vector<128x112xf32> -> vector<128x112xf32>
    %49 = arith.addf %37, %48 : vector<128x112xf32>
    %c4_45 = arith.constant 4 : index
    %c0_46 = arith.constant 0 : index
    %c0_47 = arith.constant 0 : index
    %50 = vector.load %arg2[%c4_45, %c0_46, %c0_47] : memref<8x180x112xbf16, #tpu.memory_space<vmem>>, vector<1x180x112xbf16>
    %51 = vector.shape_cast %50 : vector<1x180x112xbf16> to vector<180x112xbf16>
    %c0_48 = arith.constant 0 : index
    %c4_49 = arith.constant 4 : index
    %c0_50 = arith.constant 0 : index
    %c0_51 = arith.constant 0 : index
    %52 = vector.load %arg1[%c0_48, %c4_49, %c0_50, %c0_51] : memref<16x8x9x180xbf16, #tpu.memory_space<vmem>>, vector<16x1x8x180xbf16>
    %53 = vector.shape_cast %52 : vector<16x1x8x180xbf16> to vector<16x8x180xbf16>
    %54 = vector.shape_cast %53 : vector<16x8x180xbf16> to vector<128x180xbf16>
    %c0_52 = arith.constant 0 : index
    %c0_53 = arith.constant 0 : index
    %c1_54 = arith.constant 1 : index
    %c0_55 = arith.constant 0 : index
    %55 = vector.load %arg1[%c0_52, %c0_53, %c1_54, %c0_55] : memref<16x8x9x180xbf16, #tpu.memory_space<vmem>>, vector<16x1x8x180xbf16>
    %56 = vector.shape_cast %55 : vector<16x1x8x180xbf16> to vector<16x8x180xbf16>
    %57 = vector.shape_cast %56 : vector<16x8x180xbf16> to vector<128x180xbf16>
    %cst_56 = arith.constant dense<0.000000e+00> : vector<128x112xf32>
    %58 = tpu.matmul %54, %51, %cst_56 {dimension_numbers = #tpu.dot_dimension_numbers<[1], [0], [0], [1], [0, 0, 1, 1], [], []>} : vector<128x180xbf16>, vector<180x112xbf16>, vector<128x112xf32> -> vector<128x112xf32>
    %59 = arith.addf %47, %58 : vector<128x112xf32>
    %cst_57 = arith.constant dense<0.000000e+00> : vector<128x112xf32>
    %60 = tpu.matmul %57, %51, %cst_57 {dimension_numbers = #tpu.dot_dimension_numbers<[1], [0], [0], [1], [0, 0, 1, 1], [], []>} : vector<128x180xbf16>, vector<180x112xbf16>, vector<128x112xf32> -> vector<128x112xf32>
    %61 = arith.addf %49, %60 : vector<128x112xf32>
    %c5_58 = arith.constant 5 : index
    %c0_59 = arith.constant 0 : index
    %c0_60 = arith.constant 0 : index
    %62 = vector.load %arg2[%c5_58, %c0_59, %c0_60] : memref<8x180x112xbf16, #tpu.memory_space<vmem>>, vector<1x180x112xbf16>
    %63 = vector.shape_cast %62 : vector<1x180x112xbf16> to vector<180x112xbf16>
    %c0_61 = arith.constant 0 : index
    %c5_62 = arith.constant 5 : index
    %c0_63 = arith.constant 0 : index
    %c0_64 = arith.constant 0 : index
    %64 = vector.load %arg1[%c0_61, %c5_62, %c0_63, %c0_64] : memref<16x8x9x180xbf16, #tpu.memory_space<vmem>>, vector<16x1x8x180xbf16>
    %65 = vector.shape_cast %64 : vector<16x1x8x180xbf16> to vector<16x8x180xbf16>
    %66 = vector.shape_cast %65 : vector<16x8x180xbf16> to vector<128x180xbf16>
    %c0_65 = arith.constant 0 : index
    %c1_66 = arith.constant 1 : index
    %c1_67 = arith.constant 1 : index
    %c0_68 = arith.constant 0 : index
    %67 = vector.load %arg1[%c0_65, %c1_66, %c1_67, %c0_68] : memref<16x8x9x180xbf16, #tpu.memory_space<vmem>>, vector<16x1x8x180xbf16>
    %68 = vector.shape_cast %67 : vector<16x1x8x180xbf16> to vector<16x8x180xbf16>
    %69 = vector.shape_cast %68 : vector<16x8x180xbf16> to vector<128x180xbf16>
    %cst_69 = arith.constant dense<0.000000e+00> : vector<128x112xf32>
    %70 = tpu.matmul %66, %63, %cst_69 {dimension_numbers = #tpu.dot_dimension_numbers<[1], [0], [0], [1], [0, 0, 1, 1], [], []>} : vector<128x180xbf16>, vector<180x112xbf16>, vector<128x112xf32> -> vector<128x112xf32>
    %71 = arith.addf %59, %70 : vector<128x112xf32>
    %cst_70 = arith.constant dense<0.000000e+00> : vector<128x112xf32>
    %72 = tpu.matmul %69, %63, %cst_70 {dimension_numbers = #tpu.dot_dimension_numbers<[1], [0], [0], [1], [0, 0, 1, 1], [], []>} : vector<128x180xbf16>, vector<180x112xbf16>, vector<128x112xf32> -> vector<128x112xf32>
    %73 = arith.addf %61, %72 : vector<128x112xf32>
    %c6_71 = arith.constant 6 : index
    %c0_72 = arith.constant 0 : index
    %c0_73 = arith.constant 0 : index
    %74 = vector.load %arg2[%c6_71, %c0_72, %c0_73] : memref<8x180x112xbf16, #tpu.memory_space<vmem>>, vector<1x180x112xbf16>
    %75 = vector.shape_cast %74 : vector<1x180x112xbf16> to vector<180x112xbf16>
    %c0_74 = arith.constant 0 : index
    %c6_75 = arith.constant 6 : index
    %c0_76 = arith.constant 0 : index
    %c0_77 = arith.constant 0 : index
    %76 = vector.load %arg1[%c0_74, %c6_75, %c0_76, %c0_77] : memref<16x8x9x180xbf16, #tpu.memory_space<vmem>>, vector<16x1x8x180xbf16>
    %77 = vector.shape_cast %76 : vector<16x1x8x180xbf16> to vector<16x8x180xbf16>
    %78 = vector.shape_cast %77 : vector<16x8x180xbf16> to vector<128x180xbf16>
    %c0_78 = arith.constant 0 : index
    %c2_79 = arith.constant 2 : index
    %c1_80 = arith.constant 1 : index
    %c0_81 = arith.constant 0 : index
    %79 = vector.load %arg1[%c0_78, %c2_79, %c1_80, %c0_81] : memref<16x8x9x180xbf16, #tpu.memory_space<vmem>>, vector<16x1x8x180xbf16>
    %80 = vector.shape_cast %79 : vector<16x1x8x180xbf16> to vector<16x8x180xbf16>
    %81 = vector.shape_cast %80 : vector<16x8x180xbf16> to vector<128x180xbf16>
    %cst_82 = arith.constant dense<0.000000e+00> : vector<128x112xf32>
    %82 = tpu.matmul %78, %75, %cst_82 {dimension_numbers = #tpu.dot_dimension_numbers<[1], [0], [0], [1], [0, 0, 1, 1], [], []>} : vector<128x180xbf16>, vector<180x112xbf16>, vector<128x112xf32> -> vector<128x112xf32>
    %83 = arith.addf %71, %82 : vector<128x112xf32>
    %cst_83 = arith.constant dense<0.000000e+00> : vector<128x112xf32>
    %84 = tpu.matmul %81, %75, %cst_83 {dimension_numbers = #tpu.dot_dimension_numbers<[1], [0], [0], [1], [0, 0, 1, 1], [], []>} : vector<128x180xbf16>, vector<180x112xbf16>, vector<128x112xf32> -> vector<128x112xf32>
    %85 = arith.addf %73, %84 : vector<128x112xf32>
    %c7_84 = arith.constant 7 : index
    %c0_85 = arith.constant 0 : index
    %c0_86 = arith.constant 0 : index
    %86 = vector.load %arg2[%c7_84, %c0_85, %c0_86] : memref<8x180x112xbf16, #tpu.memory_space<vmem>>, vector<1x180x112xbf16>
    %87 = vector.shape_cast %86 : vector<1x180x112xbf16> to vector<180x112xbf16>
    %c0_87 = arith.constant 0 : index
    %c7_88 = arith.constant 7 : index
    %c0_89 = arith.constant 0 : index
    %c0_90 = arith.constant 0 : index
    %88 = vector.load %arg1[%c0_87, %c7_88, %c0_89, %c0_90] : memref<16x8x9x180xbf16, #tpu.memory_space<vmem>>, vector<16x1x8x180xbf16>
    %89 = vector.shape_cast %88 : vector<16x1x8x180xbf16> to vector<16x8x180xbf16>
    %90 = vector.shape_cast %89 : vector<16x8x180xbf16> to vector<128x180xbf16>
    %c0_91 = arith.constant 0 : index
    %c3_92 = arith.constant 3 : index
    %c1_93 = arith.constant 1 : index
    %c0_94 = arith.constant 0 : index
    %91 = vector.load %arg1[%c0_91, %c3_92, %c1_93, %c0_94] : memref<16x8x9x180xbf16, #tpu.memory_space<vmem>>, vector<16x1x8x180xbf16>
    %92 = vector.shape_cast %91 : vector<16x1x8x180xbf16> to vector<16x8x180xbf16>
    %93 = vector.shape_cast %92 : vector<16x8x180xbf16> to vector<128x180xbf16>
    %cst_95 = arith.constant dense<0.000000e+00> : vector<128x112xf32>
    %94 = tpu.matmul %90, %87, %cst_95 {dimension_numbers = #tpu.dot_dimension_numbers<[1], [0], [0], [1], [0, 0, 1, 1], [], []>} : vector<128x180xbf16>, vector<180x112xbf16>, vector<128x112xf32> -> vector<128x112xf32>
    %95 = arith.addf %83, %94 : vector<128x112xf32>
    %cst_96 = arith.constant dense<0.000000e+00> : vector<128x112xf32>
    %96 = tpu.matmul %93, %87, %cst_96 {dimension_numbers = #tpu.dot_dimension_numbers<[1], [0], [0], [1], [0, 0, 1, 1], [], []>} : vector<128x180xbf16>, vector<180x112xbf16>, vector<128x112xf32> -> vector<128x112xf32>
    %97 = arith.addf %85, %96 : vector<128x112xf32>
    %c0_97 = arith.constant 0 : index
    %c0_98 = arith.constant 0 : index
    %98 = vector.load %arg8[%c0_97, %c0_98] : memref<1x112xf32, #tpu.memory_space<vmem>>, vector<1x112xf32>
    %99 = vector.broadcast %98 : vector<1x112xf32> to vector<128x112xf32>
    %100 = arith.addf %95, %99 : vector<128x112xf32>
    %cst_99 = arith.constant 0.000000e+00 : f32
    %101 = vector.broadcast %cst_99 : f32 to vector<128x112xf32>
    %102 = arith.cmpf oge, %100, %101 : vector<128x112xf32>
    %cst_100 = arith.constant 2.000000e-01 : f32
    %103 = vector.broadcast %cst_100 : f32 to vector<128x112xf32>
    %104 = arith.mulf %103, %100 : vector<128x112xf32>
    %105 = arith.select %102, %100, %104 : vector<128x112xi1>, vector<128x112xf32>
    %106 = arith.truncf %105 : vector<128x112xf32> to vector<128x112xbf16>
    %c0_101 = arith.constant 0 : index
    %c0_102 = arith.constant 0 : index
    %107 = vector.load %arg8[%c0_101, %c0_102] : memref<1x112xf32, #tpu.memory_space<vmem>>, vector<1x112xf32>
    %108 = vector.broadcast %107 : vector<1x112xf32> to vector<128x112xf32>
    %109 = arith.addf %97, %108 : vector<128x112xf32>
    %cst_103 = arith.constant 0.000000e+00 : f32
    %110 = vector.broadcast %cst_103 : f32 to vector<128x112xf32>
    %111 = arith.cmpf oge, %109, %110 : vector<128x112xf32>
    %cst_104 = arith.constant 2.000000e-01 : f32
    %112 = vector.broadcast %cst_104 : f32 to vector<128x112xf32>
    %113 = arith.mulf %112, %109 : vector<128x112xf32>
    %114 = arith.select %111, %109, %113 : vector<128x112xi1>, vector<128x112xf32>
    %115 = arith.truncf %114 : vector<128x112xf32> to vector<128x112xbf16>
    %cst_105 = arith.constant 0.000000e+00 : bf16
    %116 = vector.broadcast %cst_105 : bf16 to vector<16x8x112xbf16>
    %117 = vector.shape_cast %106 : vector<128x112xbf16> to vector<16x8x112xbf16>
    %c0_106 = arith.constant 0 : index
    %c0_107 = arith.constant 0 : index
    %c0_108 = arith.constant 0 : index
    %118 = vector.load %arg12[%c0_106, %c0_107, %c0_108] : memref<16x16x112xbf16, #tpu.memory_space<vmem>>, vector<16x8x112xbf16>
    tpu.vector_store %arg12[%c0_106, %c0_107, %c0_108], %117 {strides = array<i32>} : memref<16x16x112xbf16, #tpu.memory_space<vmem>>, vector<16x8x112xbf16>,
    %c0_109 = arith.constant 0 : index
    %c8 = arith.constant 8 : index
    %c0_110 = arith.constant 0 : index
    %119 = vector.load %arg12[%c0_109, %c8, %c0_110] : memref<16x16x112xbf16, #tpu.memory_space<vmem>>, vector<16x8x112xbf16>
    tpu.vector_store %arg12[%c0_109, %c8, %c0_110], %116 {strides = array<i32>} : memref<16x16x112xbf16, #tpu.memory_space<vmem>>, vector<16x8x112xbf16>,
    %120 = vector.shape_cast %115 : vector<128x112xbf16> to vector<16x8x112xbf16>
    %c0_111 = arith.constant 0 : index
    %c0_112 = arith.constant 0 : index
    %c0_113 = arith.constant 0 : index
    %121 = vector.load %arg13[%c0_111, %c0_112, %c0_113] : memref<16x16x112xbf16, #tpu.memory_space<vmem>>, vector<16x8x112xbf16>
    tpu.vector_store %arg13[%c0_111, %c0_112, %c0_113], %120 {strides = array<i32>} : memref<16x16x112xbf16, #tpu.memory_space<vmem>>, vector<16x8x112xbf16>,
    %c0_114 = arith.constant 0 : index
    %c8_115 = arith.constant 8 : index
    %c0_116 = arith.constant 0 : index
    %122 = vector.load %arg13[%c0_114, %c8_115, %c0_116] : memref<16x16x112xbf16, #tpu.memory_space<vmem>>, vector<16x8x112xbf16>
    tpu.vector_store %arg13[%c0_114, %c8_115, %c0_116], %116 {strides = array<i32>} : memref<16x16x112xbf16, #tpu.memory_space<vmem>>, vector<16x8x112xbf16>,
    %cst_117 = arith.constant 0.000000e+00 : f32
    %123 = vector.broadcast %cst_117 : f32 to vector<128x96xf32>
    %c0_118 = arith.constant 0 : index
    %c0_119 = arith.constant 0 : index
    %c0_120 = arith.constant 0 : index
    %124 = vector.load %arg12[%c0_118, %c0_119, %c0_120] : memref<16x16x112xbf16, #tpu.memory_space<vmem>>, vector<16x8x112xbf16>
    %125 = vector.shape_cast %124 : vector<16x8x112xbf16> to vector<128x112xbf16>
    %c0_121 = arith.constant 0 : index
    %c0_122 = arith.constant 0 : index
    %c0_123 = arith.constant 0 : index
    %126 = vector.load %arg3[%c0_121, %c0_122, %c0_123] : memref<4x112x96xbf16, #tpu.memory_space<vmem>>, vector<1x112x96xbf16>
    %127 = vector.shape_cast %126 : vector<1x112x96xbf16> to vector<112x96xbf16>
    %cst_124 = arith.constant dense<0.000000e+00> : vector<128x96xf32>
    %128 = tpu.matmul %125, %127, %cst_124 {dimension_numbers = #tpu.dot_dimension_numbers<[1], [0], [0], [1], [0, 0, 1, 1], [], []>} : vector<128x112xbf16>, vector<112x96xbf16>, vector<128x96xf32> -> vector<128x96xf32>
    %129 = arith.addf %123, %128 : vector<128x96xf32>
    %c0_125 = arith.constant 0 : index
    %c0_126 = arith.constant 0 : index
    %c0_127 = arith.constant 0 : index
    %130 = vector.load %arg13[%c0_125, %c0_126, %c0_127] : memref<16x16x112xbf16, #tpu.memory_space<vmem>>, vector<16x8x112xbf16>
    %131 = vector.shape_cast %130 : vector<16x8x112xbf16> to vector<128x112xbf16>
    %c1_128 = arith.constant 1 : index
    %c0_129 = arith.constant 0 : index
    %c0_130 = arith.constant 0 : index
    %132 = vector.load %arg3[%c1_128, %c0_129, %c0_130] : memref<4x112x96xbf16, #tpu.memory_space<vmem>>, vector<1x112x96xbf16>
    %133 = vector.shape_cast %132 : vector<1x112x96xbf16> to vector<112x96xbf16>
    %cst_131 = arith.constant dense<0.000000e+00> : vector<128x96xf32>
    %134 = tpu.matmul %131, %133, %cst_131 {dimension_numbers = #tpu.dot_dimension_numbers<[1], [0], [0], [1], [0, 0, 1, 1], [], []>} : vector<128x112xbf16>, vector<112x96xbf16>, vector<128x96xf32> -> vector<128x96xf32>
    %135 = arith.addf %129, %134 : vector<128x96xf32>
    %c0_132 = arith.constant 0 : index
    %c1_133 = arith.constant 1 : index
    %c0_134 = arith.constant 0 : index
    %136 = vector.load %arg12[%c0_132, %c1_133, %c0_134] : memref<16x16x112xbf16, #tpu.memory_space<vmem>>, vector<16x8x112xbf16>
    %137 = vector.shape_cast %136 : vector<16x8x112xbf16> to vector<128x112xbf16>
    %c2_135 = arith.constant 2 : index
    %c0_136 = arith.constant 0 : index
    %c0_137 = arith.constant 0 : index
    %138 = vector.load %arg3[%c2_135, %c0_136, %c0_137] : memref<4x112x96xbf16, #tpu.memory_space<vmem>>, vector<1x112x96xbf16>
    %139 = vector.shape_cast %138 : vector<1x112x96xbf16> to vector<112x96xbf16>
    %cst_138 = arith.constant dense<0.000000e+00> : vector<128x96xf32>
    %140 = tpu.matmul %137, %139, %cst_138 {dimension_numbers = #tpu.dot_dimension_numbers<[1], [0], [0], [1], [0, 0, 1, 1], [], []>} : vector<128x112xbf16>, vector<112x96xbf16>, vector<128x96xf32> -> vector<128x96xf32>
    %141 = arith.addf %135, %140 : vector<128x96xf32>
    %c0_139 = arith.constant 0 : index
    %c1_140 = arith.constant 1 : index
    %c0_141 = arith.constant 0 : index
    %142 = vector.load %arg13[%c0_139, %c1_140, %c0_141] : memref<16x16x112xbf16, #tpu.memory_space<vmem>>, vector<16x8x112xbf16>
    %143 = vector.shape_cast %142 : vector<16x8x112xbf16> to vector<128x112xbf16>
    %c3_142 = arith.constant 3 : index
    %c0_143 = arith.constant 0 : index
    %c0_144 = arith.constant 0 : index
    %144 = vector.load %arg3[%c3_142, %c0_143, %c0_144] : memref<4x112x96xbf16, #tpu.memory_space<vmem>>, vector<1x112x96xbf16>
    %145 = vector.shape_cast %144 : vector<1x112x96xbf16> to vector<112x96xbf16>
    %cst_145 = arith.constant dense<0.000000e+00> : vector<128x96xf32>
    %146 = tpu.matmul %143, %145, %cst_145 {dimension_numbers = #tpu.dot_dimension_numbers<[1], [0], [0], [1], [0, 0, 1, 1], [], []>} : vector<128x112xbf16>, vector<112x96xbf16>, vector<128x96xf32> -> vector<128x96xf32>
    %147 = arith.addf %141, %146 : vector<128x96xf32>
    %c0_146 = arith.constant 0 : index
    %c0_147 = arith.constant 0 : index
    %148 = vector.load %arg9[%c0_146, %c0_147] : memref<1x96xf32, #tpu.memory_space<vmem>>, vector<1x96xf32>
    %149 = vector.broadcast %148 : vector<1x96xf32> to vector<128x96xf32>
    %150 = arith.addf %147, %149 : vector<128x96xf32>
    %cst_148 = arith.constant 0.000000e+00 : f32
    %151 = vector.broadcast %cst_148 : f32 to vector<128x96xf32>
    %152 = arith.cmpf oge, %150, %151 : vector<128x96xf32>
    %cst_149 = arith.constant 2.000000e-01 : f32
    %153 = vector.broadcast %cst_149 : f32 to vector<128x96xf32>
    %154 = arith.mulf %153, %150 : vector<128x96xf32>
    %155 = arith.select %152, %150, %154 : vector<128x96xi1>, vector<128x96xf32>
    %156 = arith.truncf %155 : vector<128x96xf32> to vector<128x96xbf16>
    %157 = vector.shape_cast %156 : vector<128x96xbf16> to vector<16x8x96xbf16>
    %c0_150 = arith.constant 0 : index
    %c0_151 = arith.constant 0 : index
    %c0_152 = arith.constant 0 : index
    %158 = vector.load %arg14[%c0_150, %c0_151, %c0_152] : memref<16x16x96xbf16, #tpu.memory_space<vmem>>, vector<16x8x96xbf16>
    tpu.vector_store %arg14[%c0_150, %c0_151, %c0_152], %157 {strides = array<i32>} : memref<16x16x96xbf16, #tpu.memory_space<vmem>>, vector<16x8x96xbf16>,
    %cst_153 = arith.constant 0.000000e+00 : bf16
    %159 = vector.broadcast %cst_153 : bf16 to vector<16x8x96xbf16>
    %c0_154 = arith.constant 0 : index
    %c8_155 = arith.constant 8 : index
    %c0_156 = arith.constant 0 : index
    %160 = vector.load %arg14[%c0_154, %c8_155, %c0_156] : memref<16x16x96xbf16, #tpu.memory_space<vmem>>, vector<16x8x96xbf16>
    tpu.vector_store %arg14[%c0_154, %c8_155, %c0_156], %159 {strides = array<i32>} : memref<16x16x96xbf16, #tpu.memory_space<vmem>>, vector<16x8x96xbf16>,
    %cst_157 = arith.constant 0.000000e+00 : f32
    %161 = vector.broadcast %cst_157 : f32 to vector<128x160xf32>
    %c0_158 = arith.constant 0 : index
    %c0_159 = arith.constant 0 : index
    %c0_160 = arith.constant 0 : index
    %162 = vector.load %arg14[%c0_158, %c0_159, %c0_160] : memref<16x16x96xbf16, #tpu.memory_space<vmem>>, vector<16x8x96xbf16>
    %163 = vector.shape_cast %162 : vector<16x8x96xbf16> to vector<128x96xbf16>
    %c0_161 = arith.constant 0 : index
    %c0_162 = arith.constant 0 : index
    %c0_163 = arith.constant 0 : index
    %164 = vector.load %arg4[%c0_161, %c0_162, %c0_163] : memref<2x96x160xbf16, #tpu.memory_space<vmem>>, vector<1x96x160xbf16>
    %165 = vector.shape_cast %164 : vector<1x96x160xbf16> to vector<96x160xbf16>
    %cst_164 = arith.constant dense<0.000000e+00> : vector<128x160xf32>
    %166 = tpu.matmul %163, %165, %cst_164 {dimension_numbers = #tpu.dot_dimension_numbers<[1], [0], [0], [1], [0, 0, 1, 1], [], []>} : vector<128x96xbf16>, vector<96x160xbf16>, vector<128x160xf32> -> vector<128x160xf32>
    %167 = arith.addf %161, %166 : vector<128x160xf32>
    %c0_165 = arith.constant 0 : index
    %c1_166 = arith.constant 1 : index
    %c0_167 = arith.constant 0 : index
    %168 = vector.load %arg14[%c0_165, %c1_166, %c0_167] : memref<16x16x96xbf16, #tpu.memory_space<vmem>>, vector<16x8x96xbf16>
    %169 = vector.shape_cast %168 : vector<16x8x96xbf16> to vector<128x96xbf16>
    %c1_168 = arith.constant 1 : index
    %c0_169 = arith.constant 0 : index
    %c0_170 = arith.constant 0 : index
    %170 = vector.load %arg4[%c1_168, %c0_169, %c0_170] : memref<2x96x160xbf16, #tpu.memory_space<vmem>>, vector<1x96x160xbf16>
    %171 = vector.shape_cast %170 : vector<1x96x160xbf16> to vector<96x160xbf16>
    %cst_171 = arith.constant dense<0.000000e+00> : vector<128x160xf32>
    %172 = tpu.matmul %169, %171, %cst_171 {dimension_numbers = #tpu.dot_dimension_numbers<[1], [0], [0], [1], [0, 0, 1, 1], [], []>} : vector<128x96xbf16>, vector<96x160xbf16>, vector<128x160xf32> -> vector<128x160xf32>
    %173 = arith.addf %167, %172 : vector<128x160xf32>
    %c0_172 = arith.constant 0 : index
    %c0_173 = arith.constant 0 : index
    %174 = vector.load %arg10[%c0_172, %c0_173] : memref<1x160xf32, #tpu.memory_space<vmem>>, vector<1x160xf32>
    %175 = vector.broadcast %174 : vector<1x160xf32> to vector<128x160xf32>
    %176 = arith.addf %173, %175 : vector<128x160xf32>
    %cst_174 = arith.constant 0.000000e+00 : f32
    %177 = vector.broadcast %cst_174 : f32 to vector<128x160xf32>
    %178 = arith.cmpf oge, %176, %177 : vector<128x160xf32>
    %cst_175 = arith.constant 2.000000e-01 : f32
    %179 = vector.broadcast %cst_175 : f32 to vector<128x160xf32>
    %180 = arith.mulf %179, %176 : vector<128x160xf32>
    %181 = arith.select %178, %176, %180 : vector<128x160xi1>, vector<128x160xf32>
    %182 = arith.truncf %181 : vector<128x160xf32> to vector<128x160xbf16>
    %183 = vector.shape_cast %182 : vector<128x160xbf16> to vector<16x8x160xbf16>
    %c0_176 = arith.constant 0 : index
    %c0_177 = arith.constant 0 : index
    %c0_178 = arith.constant 0 : index
    %184 = vector.load %arg15[%c0_176, %c0_177, %c0_178] : memref<16x8x160xbf16, #tpu.memory_space<vmem>>, vector<16x8x160xbf16>
    tpu.vector_store %arg15[%c0_176, %c0_177, %c0_178], %183 {strides = array<i32>} : memref<16x8x160xbf16, #tpu.memory_space<vmem>>, vector<16x8x160xbf16>,
    %cst_179 = arith.constant 0.000000e+00 : f32
    %185 = vector.broadcast %cst_179 : f32 to vector<16x512xf32>
    %c0_180 = arith.constant 0 : index
    %c0_181 = arith.constant 0 : index
    %c0_182 = arith.constant 0 : index
    %186 = vector.load %arg15[%c0_180, %c0_181, %c0_182] : memref<16x8x160xbf16, #tpu.memory_space<vmem>>, vector<16x1x160xbf16>
    %187 = vector.shape_cast %186 : vector<16x1x160xbf16> to vector<16x160xbf16>
    %c0_183 = arith.constant 0 : index
    %c0_184 = arith.constant 0 : index
    %c0_185 = arith.constant 0 : index
    %188 = vector.load %arg5[%c0_183, %c0_184, %c0_185] : memref<5x160x512xbf16, #tpu.memory_space<vmem>>, vector<1x160x512xbf16>
    %189 = vector.shape_cast %188 : vector<1x160x512xbf16> to vector<160x512xbf16>
    %cst_186 = arith.constant dense<0.000000e+00> : vector<16x512xf32>
    %190 = tpu.matmul %187, %189, %cst_186 {dimension_numbers = #tpu.dot_dimension_numbers<[1], [0], [0], [1], [0, 0, 1, 1], [], []>} : vector<16x160xbf16>, vector<160x512xbf16>, vector<16x512xf32> -> vector<16x512xf32>
    %191 = arith.addf %185, %190 : vector<16x512xf32>
    %c0_187 = arith.constant 0 : index
    %c1_188 = arith.constant 1 : index
    %c0_189 = arith.constant 0 : index
    %192 = vector.load %arg15[%c0_187, %c1_188, %c0_189] : memref<16x8x160xbf16, #tpu.memory_space<vmem>>, vector<16x1x160xbf16>
    %193 = vector.shape_cast %192 : vector<16x1x160xbf16> to vector<16x160xbf16>
    %c1_190 = arith.constant 1 : index
    %c0_191 = arith.constant 0 : index
    %c0_192 = arith.constant 0 : index
    %194 = vector.load %arg5[%c1_190, %c0_191, %c0_192] : memref<5x160x512xbf16, #tpu.memory_space<vmem>>, vector<1x160x512xbf16>
    %195 = vector.shape_cast %194 : vector<1x160x512xbf16> to vector<160x512xbf16>
    %cst_193 = arith.constant dense<0.000000e+00> : vector<16x512xf32>
    %196 = tpu.matmul %193, %195, %cst_193 {dimension_numbers = #tpu.dot_dimension_numbers<[1], [0], [0], [1], [0, 0, 1, 1], [], []>} : vector<16x160xbf16>, vector<160x512xbf16>, vector<16x512xf32> -> vector<16x512xf32>
    %197 = arith.addf %191, %196 : vector<16x512xf32>
    %c0_194 = arith.constant 0 : index
    %c2_195 = arith.constant 2 : index
    %c0_196 = arith.constant 0 : index
    %198 = vector.load %arg15[%c0_194, %c2_195, %c0_196] : memref<16x8x160xbf16, #tpu.memory_space<vmem>>, vector<16x1x160xbf16>
    %199 = vector.shape_cast %198 : vector<16x1x160xbf16> to vector<16x160xbf16>
    %c2_197 = arith.constant 2 : index
    %c0_198 = arith.constant 0 : index
    %c0_199 = arith.constant 0 : index
    %200 = vector.load %arg5[%c2_197, %c0_198, %c0_199] : memref<5x160x512xbf16, #tpu.memory_space<vmem>>, vector<1x160x512xbf16>
    %201 = vector.shape_cast %200 : vector<1x160x512xbf16> to vector<160x512xbf16>
    %cst_200 = arith.constant dense<0.000000e+00> : vector<16x512xf32>
    %202 = tpu.matmul %199, %201, %cst_200 {dimension_numbers = #tpu.dot_dimension_numbers<[1], [0], [0], [1], [0, 0, 1, 1], [], []>} : vector<16x160xbf16>, vector<160x512xbf16>, vector<16x512xf32> -> vector<16x512xf32>
    %203 = arith.addf %197, %202 : vector<16x512xf32>
    %c0_201 = arith.constant 0 : index
    %c3_202 = arith.constant 3 : index
    %c0_203 = arith.constant 0 : index
    %204 = vector.load %arg15[%c0_201, %c3_202, %c0_203] : memref<16x8x160xbf16, #tpu.memory_space<vmem>>, vector<16x1x160xbf16>
    %205 = vector.shape_cast %204 : vector<16x1x160xbf16> to vector<16x160xbf16>
    %c3_204 = arith.constant 3 : index
    %c0_205 = arith.constant 0 : index
    %c0_206 = arith.constant 0 : index
    %206 = vector.load %arg5[%c3_204, %c0_205, %c0_206] : memref<5x160x512xbf16, #tpu.memory_space<vmem>>, vector<1x160x512xbf16>
    %207 = vector.shape_cast %206 : vector<1x160x512xbf16> to vector<160x512xbf16>
    %cst_207 = arith.constant dense<0.000000e+00> : vector<16x512xf32>
    %208 = tpu.matmul %205, %207, %cst_207 {dimension_numbers = #tpu.dot_dimension_numbers<[1], [0], [0], [1], [0, 0, 1, 1], [], []>} : vector<16x160xbf16>, vector<160x512xbf16>, vector<16x512xf32> -> vector<16x512xf32>
    %209 = arith.addf %203, %208 : vector<16x512xf32>
    %c0_208 = arith.constant 0 : index
    %c4_209 = arith.constant 4 : index
    %c0_210 = arith.constant 0 : index
    %210 = vector.load %arg15[%c0_208, %c4_209, %c0_210] : memref<16x8x160xbf16, #tpu.memory_space<vmem>>, vector<16x1x160xbf16>
    %211 = vector.shape_cast %210 : vector<16x1x160xbf16> to vector<16x160xbf16>
    %c4_211 = arith.constant 4 : index
    %c0_212 = arith.constant 0 : index
    %c0_213 = arith.constant 0 : index
    %212 = vector.load %arg5[%c4_211, %c0_212, %c0_213] : memref<5x160x512xbf16, #tpu.memory_space<vmem>>, vector<1x160x512xbf16>
    %213 = vector.shape_cast %212 : vector<1x160x512xbf16> to vector<160x512xbf16>
    %cst_214 = arith.constant dense<0.000000e+00> : vector<16x512xf32>
    %214 = tpu.matmul %211, %213, %cst_214 {dimension_numbers = #tpu.dot_dimension_numbers<[1], [0], [0], [1], [0, 0, 1, 1], [], []>} : vector<16x160xbf16>, vector<160x512xbf16>, vector<16x512xf32> -> vector<16x512xf32>
    %215 = arith.addf %209, %214 : vector<16x512xf32>
    %cst_215 = arith.constant 0.000000e+00 : f32
    %216 = vector.broadcast %cst_215 : f32 to vector<16x512xf32>
    %217 = arith.maximumf %215, %216 : vector<16x512xf32>
    %218 = arith.truncf %217 : vector<16x512xf32> to vector<16x512xbf16>
    %c0_216 = arith.constant 0 : index
    %c0_217 = arith.constant 0 : index
    %219 = vector.load %arg6[%c0_216, %c0_217] : memref<512x512xbf16, #tpu.memory_space<vmem>>, vector<512x512xbf16>
    %cst_218 = arith.constant dense<0.000000e+00> : vector<16x512xf32>
    %220 = tpu.matmul %218, %219, %cst_218 {dimension_numbers = #tpu.dot_dimension_numbers<[1], [0], [0], [1], [0, 0, 1, 1], [], []>} : vector<16x512xbf16>, vector<512x512xbf16>, vector<16x512xf32> -> vector<16x512xf32>
    %cst_219 = arith.constant 0.000000e+00 : f32
    %221 = vector.broadcast %cst_219 : f32 to vector<16x512xf32>
    %222 = arith.maximumf %220, %221 : vector<16x512xf32>
    %c0_220 = arith.constant 0 : index
    %c0_221 = arith.constant 0 : index
    %223 = vector.load %arg7[%c0_220, %c0_221] : memref<1x512xf32, #tpu.memory_space<vmem>>, vector<1x512xf32>
    %224 = vector.broadcast %223 : vector<1x512xf32> to vector<16x512xf32>
    %225 = arith.mulf %222, %224 : vector<16x512xf32>
    %cst_222 = arith.constant dense<0.000000e+00> : vector<16xf32>
    %226 = vector.multi_reduction <add>, %225, %cst_222 [1] : vector<16x512xf32> to vector<16xf32>
    %227 = vector.shape_cast %226 : vector<16xf32> to vector<16x1xf32>
    %c0_223 = arith.constant 0 : index
    %c0_224 = arith.constant 0 : index
    %228 = vector.load %arg11[%c0_223, %c0_224] : memref<16x1xf32, #tpu.memory_space<vmem>>, vector<16x1xf32>
    tpu.vector_store %arg11[%c0_223, %c0_224], %227 {strides = array<i32>} : memref<16x1xf32, #tpu.memory_space<vmem>>, vector<16x1xf32>,
    return
  }
  func.func @transform_0(%arg0: i32) -> (i32, i32, i32, i32) {
    %c0_i32 = arith.constant 0 : i32
    %c0_i32_0 = arith.constant 0 : i32
    %c0_i32_1 = arith.constant 0 : i32
    %c0_i32_2 = arith.constant 0 : i32
    return %arg0, %c0_i32, %c0_i32_0, %c0_i32_1 : i32, i32, i32, i32
  }
  func.func @transform_1(%arg0: i32) -> (i32, i32, i32) {
    %c0_i32 = arith.constant 0 : i32
    %c0_i32_0 = arith.constant 0 : i32
    %c0_i32_1 = arith.constant 0 : i32
    %c0_i32_2 = arith.constant 0 : i32
    return %c0_i32, %c0_i32_0, %c0_i32_1 : i32, i32, i32
  }
  func.func @transform_2(%arg0: i32) -> (i32, i32, i32) {
    %c0_i32 = arith.constant 0 : i32
    %c0_i32_0 = arith.constant 0 : i32
    %c0_i32_1 = arith.constant 0 : i32
    %c0_i32_2 = arith.constant 0 : i32
    return %c0_i32, %c0_i32_0, %c0_i32_1 : i32, i32, i32
  }
  func.func @transform_3(%arg0: i32) -> (i32, i32, i32) {
    %c0_i32 = arith.constant 0 : i32
    %c0_i32_0 = arith.constant 0 : i32
    %c0_i32_1 = arith.constant 0 : i32
    %c0_i32_2 = arith.constant 0 : i32
    return %c0_i32, %c0_i32_0, %c0_i32_1 : i32, i32, i32
  }
  func.func @transform_4(%arg0: i32) -> (i32, i32, i32) {
    %c0_i32 = arith.constant 0 : i32
    %c0_i32_0 = arith.constant 0 : i32
    %c0_i32_1 = arith.constant 0 : i32
    %c0_i32_2 = arith.constant 0 : i32
    return %c0_i32, %c0_i32_0, %c0_i32_1 : i32, i32, i32
  }
  func.func @transform_5(%arg0: i32) -> (i32, i32) {
    %c0_i32 = arith.constant 0 : i32
    %c0_i32_0 = arith.constant 0 : i32
    %c0_i32_1 = arith.constant 0 : i32
    return %c0_i32, %c0_i32_0 : i32, i32
  }
  func.func @transform_6(%arg0: i32) -> (i32, i32) {
    %c0_i32 = arith.constant 0 : i32
    %c0_i32_0 = arith.constant 0 : i32
    %c0_i32_1 = arith.constant 0 : i32
    return %c0_i32, %c0_i32_0 : i32, i32
  }
  func.func @transform_7(%arg0: i32) -> (i32, i32) {
    %c0_i32 = arith.constant 0 : i32
    %c0_i32_0 = arith.constant 0 : i32
    %c0_i32_1 = arith.constant 0 : i32
    return %c0_i32, %c0_i32_0 : i32, i32
  }
  func.func @transform_8(%arg0: i32) -> (i32, i32) {
    %c0_i32 = arith.constant 0 : i32
    %c0_i32_0 = arith.constant 0 : i32
    %c0_i32_1 = arith.constant 0 : i32
    return %c0_i32, %c0_i32_0 : i32, i32
  }
  func.func @transform_9(%arg0: i32) -> (i32, i32) {
    %c0_i32 = arith.constant 0 : i32
    %c0_i32_0 = arith.constant 0 : i32
    %c0_i32_1 = arith.constant 0 : i32
    return %c0_i32, %c0_i32_0 : i32, i32
  }
  func.func @transform_10(%arg0: i32) -> (i32, i32) {
    %c0_i32 = arith.constant 0 : i32
    %c0_i32_0 = arith.constant 0 : i32
    return %arg0, %c0_i32 : i32, i32
  }
}

</mosaic_0001>

<llo_original>
// kernel: angle_predictor_forward.1
$region0: #{angle_predictor_forward.1}
  #allocation0 [shape = 'u32[]', space=smem, size = 0x4, offset = 0x4, fixed_abs, tag = 'smem constant byte address 0x4 - core index']
  #allocation1 [shape = 'u32[144,128]{1,0:T(1,128)}', space=vmem, size = 0x12000, scoped, tag = 'internal scratch']
  #allocation2 [shape = 'bf16[16,16,112]{2,1,0:T(16,128)(2,1)}', space=vmem, size = 0x10000, scoped, tag = 'scratch operand']
  #allocation3 [shape = 'bf16[16,16,112]{2,1,0:T(16,128)(2,1)}', space=vmem, size = 0x10000, scoped, tag = 'scratch operand']
  #allocation4 [shape = 'bf16[16,16,96]{2,1,0:T(16,128)(2,1)}', space=vmem, size = 0x10000, scoped, tag = 'scratch operand']
  #allocation5 [shape = 'bf16[16,8,160]{2,1,0:T(8,128)(2,1)}', space=vmem, size = 0x10000, scoped, tag = 'scratch operand']
  %s0 = inlined_call_operand.vmem [shape: bf16[16,8,9,180], index: 0, kind: input, shape index: {}]
  %s1 = inlined_call_operand.vmem [shape: bf16[8,180,112], index: 1, kind: input, shape index: {}]
  %s2 = inlined_call_operand.vmem [shape: bf16[4,112,96], index: 2, kind: input, shape index: {}]
  %s3 = inlined_call_operand.vmem [shape: bf16[2,96,160], index: 3, kind: input, shape index: {}]
  %s4 = inlined_call_operand.vmem [shape: bf16[5,160,512], index: 4, kind: input, shape index: {}]
  %s5 = inlined_call_operand.vmem [shape: bf16[512,512], index: 5, kind: input, shape index: {}]
  %s6 = inlined_call_operand.vmem [shape: f32[1,512], index: 6, kind: input, shape index: {}]
  %s7 = inlined_call_operand.vmem [shape: f32[1,112], index: 7, kind: input, shape index: {}]
  %s8 = inlined_call_operand.vmem [shape: f32[1,96], index: 8, kind: input, shape index: {}]
  %s9 = inlined_call_operand.vmem [shape: f32[1,160], index: 9, kind: input, shape index: {}]
  %s10 = inlined_call_operand.vmem [shape: f32[16,1], index: 10, kind: output, shape index: {}]
  %s11 = sld [smem:[#allocation0]]
  $region50: #{angle_predictor_forward.1} parent=0
    _
  %s13 = ssub.s32 1, %s11
  %s14 = scalar_select 0, %s13, %s11
  // Predicated region
  $region2: #{angle_predictor_forward.1} parent=0 // pred_check
    _
  $region3: #{angle_predictor_forward.1} parent=0 // pred_check_branch
    %16 = sbr.rel (0) target = $region5
  $region4: #{angle_predictor_forward.1} parent=0 // pred_region
    _
  $region5: #{angle_predictor_forward.1} parent=0 // pred_fallthru
    _
  // Predicated region
  $region6: #{angle_predictor_forward.1} parent=0 // pred_check
    _
  $region7: #{angle_predictor_forward.1} parent=0 // pred_check_branch
    %18 = sbr.rel (0) target = $region9
  $region8: #{angle_predictor_forward.1} parent=0 // pred_region
    _
  $region9: #{angle_predictor_forward.1} parent=0 // pred_fallthru
    _
  // Predicated region
  $region10: #{angle_predictor_forward.1} parent=0 // pred_check
    _
  $region11: #{angle_predictor_forward.1} parent=0 // pred_check_branch
    %20 = sbr.rel (0) target = $region13
  $region12: #{angle_predictor_forward.1} parent=0 // pred_region
    _
  $region13: #{angle_predictor_forward.1} parent=0 // pred_fallthru
    _
  // Predicated region
  $region14: #{angle_predictor_forward.1} parent=0 // pred_check
    _
  $region15: #{angle_predictor_forward.1} parent=0 // pred_check_branch
    %22 = sbr.rel (0) target = $region17
  $region16: #{angle_predictor_forward.1} parent=0 // pred_region
    _
  $region17: #{angle_predictor_forward.1} parent=0 // pred_fallthru
    _
  // Predicated region
  $region18: #{angle_predictor_forward.1} parent=0 // pred_check
    _
  $region19: #{angle_predictor_forward.1} parent=0 // pred_check_branch
    %24 = sbr.rel (0) target = $region21
  $region20: #{angle_predictor_forward.1} parent=0 // pred_region
    _
  $region21: #{angle_predictor_forward.1} parent=0 // pred_fallthru
    _
  // Predicated region
  $region22: #{angle_predictor_forward.1} parent=0 // pred_check
    _
  $region23: #{angle_predictor_forward.1} parent=0 // pred_check_branch
    %26 = sbr.rel (0) target = $region25
  $region24: #{angle_predictor_forward.1} parent=0 // pred_region
    _
  $region25: #{angle_predictor_forward.1} parent=0 // pred_fallthru
    _
  // Predicated region
  $region26: #{angle_predictor_forward.1} parent=0 // pred_check
    _
  $region27: #{angle_predictor_forward.1} parent=0 // pred_check_branch
    %28 = sbr.rel (0) target = $region29
  $region28: #{angle_predictor_forward.1} parent=0 // pred_region
    _
  $region29: #{angle_predictor_forward.1} parent=0 // pred_fallthru
    _
  // Predicated region
  $region30: #{angle_predictor_forward.1} parent=0 // pred_check
    _
  $region31: #{angle_predictor_forward.1} parent=0 // pred_check_branch
    %30 = sbr.rel (0) target = $region33
  $region32: #{angle_predictor_forward.1} parent=0 // pred_region
    _
  $region33: #{angle_predictor_forward.1} parent=0 // pred_fallthru
    _
  // Predicated region
  $region34: #{angle_predictor_forward.1} parent=0 // pred_check
    _
  $region35: #{angle_predictor_forward.1} parent=0 // pred_check_branch
    %32 = sbr.rel (0) target = $region37
  $region36: #{angle_predictor_forward.1} parent=0 // pred_region
    _
  $region37: #{angle_predictor_forward.1} parent=0 // pred_fallthru
    _
  // Predicated region
  $region38: #{angle_predictor_forward.1} parent=0 // pred_check
    _
  $region39: #{angle_predictor_forward.1} parent=0 // pred_check_branch
    %34 = sbr.rel (0) target = $region41
  $region40: #{angle_predictor_forward.1} parent=0 // pred_region
    _
  $region41: #{angle_predictor_forward.1} parent=0 // pred_fallthru
    _
  %v36 = vld [vmem:[%s1] sm:$0xf]
  %v37 = vld [vmem:[%s1 + $0x4] sm:$0xf]
  %v38 = vld [vmem:[%s1 + $0x8] sm:$0xf]
  %v39 = vld [vmem:[%s1 + $0xc] sm:$0xf]
  %v40 = vld [vmem:[%s1 + $0x10] sm:$0xf]
  %v41 = vld [vmem:[%s1 + $0x14] sm:$0xf]
  %v42 = vld [vmem:[%s1 + $0x18] sm:$0xf]
  %v43 = vld [vmem:[%s1 + $0x1c] sm:$0xf]
  %v44 = vld [vmem:[%s1 + $0x20] sm:$0xf]
  %v45 = vld [vmem:[%s1 + $0x24] sm:$0xf]
  %v46 = vld [vmem:[%s1 + $0x28] sm:$0xf]
  %v47 = vld [vmem:[%s1 + $0x2c] sm:$0xf]
  %v48 = vld [vmem:[%s1 + $0x30] sm:$0xf]
  %v49 = vld [vmem:[%s1 + $0x34] sm:$0xf]
  %v50 = vld [vmem:[%s1 + $0x38] sm:$0xf]
  %v51 = vld [vmem:[%s1 + $0x3c] sm:$0xf]
  %v52 = vld [vmem:[%s1 + $0x40] sm:$0xf]
  %v53 = vld [vmem:[%s1 + $0x44] sm:$0xf]
  %v54 = vld [vmem:[%s1 + $0x48] sm:$0xf]
  %v55 = vld [vmem:[%s1 + $0x4c] sm:$0xf]
  %v56 = vld [vmem:[%s1 + $0x50] sm:$0xf]
  %v57 = vld [vmem:[%s1 + $0x54] sm:$0xf]
  %v58 = vld [vmem:[%s1 + $0x58] sm:$0x3]
  %v59 = vld [vmem:[%s0] sm:$0xff]
  %v60 = vld [vmem:[%s0 + $0x80] sm:$0xff]
  %v61 = vld [vmem:[%s0 + $0x100] sm:$0xff]
  %v62 = vld [vmem:[%s0 + $0x180] sm:$0xff]
  %v63 = vld [vmem:[%s0 + $0x200] sm:$0xff]
  %v64 = vld [vmem:[%s0 + $0x280] sm:$0xff]
  %v65 = vld [vmem:[%s0 + $0x300] sm:$0xff]
  %v66 = vld [vmem:[%s0 + $0x380] sm:$0xff]
  %v67 = vld [vmem:[%s0 + $0x400] sm:$0xff]
  %v68 = vld [vmem:[%s0 + $0x480] sm:$0xff]
  %v69 = vld [vmem:[%s0 + $0x500] sm:$0xff]
  %v70 = vld [vmem:[%s0 + $0x580] sm:$0xff]
  %v71 = vld [vmem:[%s0 + $0x600] sm:$0xff]
  %v72 = vld [vmem:[%s0 + $0x680] sm:$0xff]
  %v73 = vld [vmem:[%s0 + $0x700] sm:$0xff]
  %v74 = vld [vmem:[%s0 + $0x780] sm:$0xff]
  %s75 = scalar_lea.vmem %s0, 64
  %v76 = vld [vmem:[%s75] sm:$0xff]
  %v77 = vld [vmem:[%s75 + $0x80] sm:$0xff]
  %v78 = vld [vmem:[%s75 + $0x100] sm:$0xff]
  %v79 = vld [vmem:[%s75 + $0x180] sm:$0xff]
  %v80 = vld [vmem:[%s75 + $0x200] sm:$0xff]
  %v81 = vld [vmem:[%s75 + $0x280] sm:$0xff]
  %v82 = vld [vmem:[%s75 + $0x300] sm:$0xff]
  %v83 = vld [vmem:[%s75 + $0x380] sm:$0xff]
  %v84 = vld [vmem:[%s75 + $0x400] sm:$0xff]
  %v85 = vld [vmem:[%s75 + $0x480] sm:$0xff]
  %v86 = vld [vmem:[%s75 + $0x500] sm:$0xff]
  %v87 = vld [vmem:[%s75 + $0x580] sm:$0xff]
  %v88 = vld [vmem:[%s75 + $0x600] sm:$0xff]
  %v89 = vld [vmem:[%s75 + $0x680] sm:$0xff]
  %v90 = vld [vmem:[%s75 + $0x700] sm:$0xff]
  %v91 = vld [vmem:[%s75 + $0x780] sm:$0xff]
  %s92 = scalar_lea.vmem %s1, 92
  %v93 = vld [vmem:[%s92] sm:$0xf]
  %v94 = vld [vmem:[%s92 + $0x4] sm:$0xf]
  %v95 = vld [vmem:[%s92 + $0x8] sm:$0xf]
  %v96 = vld [vmem:[%s92 + $0xc] sm:$0xf]
  %v97 = vld [vmem:[%s92 + $0x10] sm:$0xf]
  %v98 = vld [vmem:[%s92 + $0x14] sm:$0xf]
  %v99 = vld [vmem:[%s92 + $0x18] sm:$0xf]
  %v100 = vld [vmem:[%s92 + $0x1c] sm:$0xf]
  %v101 = vld [vmem:[%s92 + $0x20] sm:$0xf]
  %v102 = vld [vmem:[%s92 + $0x24] sm:$0xf]
  %v103 = vld [vmem:[%s92 + $0x28] sm:$0xf]
  %v104 = vld [vmem:[%s92 + $0x2c] sm:$0xf]
  %v105 = vld [vmem:[%s92 + $0x30] sm:$0xf]
  %v106 = vld [vmem:[%s92 + $0x34] sm:$0xf]
  %v107 = vld [vmem:[%s92 + $0x38] sm:$0xf]
  %v108 = vld [vmem:[%s92 + $0x3c] sm:$0xf]
  %v109 = vld [vmem:[%s92 + $0x40] sm:$0xf]
  %v110 = vld [vmem:[%s92 + $0x44] sm:$0xf]
  %v111 = vld [vmem:[%s92 + $0x48] sm:$0xf]
  %v112 = vld [vmem:[%s92 + $0x4c] sm:$0xf]
  %v113 = vld [vmem:[%s92 + $0x50] sm:$0xf]
  %v114 = vld [vmem:[%s92 + $0x54] sm:$0xf]
  %v115 = vld [vmem:[%s92 + $0x58] sm:$0x3]
  %s116 = scalar_lea.vmem %s0, 16
  %v117 = vld [vmem:[%s116] sm:$0xff]
  %v118 = vld [vmem:[%s116 + $0x80] sm:$0xff]
  %v119 = vld [vmem:[%s116 + $0x100] sm:$0xff]
  %v120 = vld [vmem:[%s116 + $0x180] sm:$0xff]
  %v121 = vld [vmem:[%s116 + $0x200] sm:$0xff]
  %v122 = vld [vmem:[%s116 + $0x280] sm:$0xff]
  %v123 = vld [vmem:[%s116 + $0x300] sm:$0xff]
  %v124 = vld [vmem:[%s116 + $0x380] sm:$0xff]
  %v125 = vld [vmem:[%s116 + $0x400] sm:$0xff]
  %v126 = vld [vmem:[%s116 + $0x480] sm:$0xff]
  %v127 = vld [vmem:[%s116 + $0x500] sm:$0xff]
  %v128 = vld [vmem:[%s116 + $0x580] sm:$0xff]
  %v129 = vld [vmem:[%s116 + $0x600] sm:$0xff]
  %v130 = vld [vmem:[%s116 + $0x680] sm:$0xff]
  %v131 = vld [vmem:[%s116 + $0x700] sm:$0xff]
  %v132 = vld [vmem:[%s116 + $0x780] sm:$0xff]
  %s133 = scalar_lea.vmem %s0, 80
  %v134 = vld [vmem:[%s133] sm:$0xff]
  %v135 = vld [vmem:[%s133 + $0x80] sm:$0xff]
  %v136 = vld [vmem:[%s133 + $0x100] sm:$0xff]
  %v137 = vld [vmem:[%s133 + $0x180] sm:$0xff]
  %v138 = vld [vmem:[%s133 + $0x200] sm:$0xff]
  %v139 = vld [vmem:[%s133 + $0x280] sm:$0xff]
  %v140 = vld [vmem:[%s133 + $0x300] sm:$0xff]
  %v141 = vld [vmem:[%s133 + $0x380] sm:$0xff]
  %v142 = vld [vmem:[%s133 + $0x400] sm:$0xff]
  %v143 = vld [vmem:[%s133 + $0x480] sm:$0xff]
  %v144 = vld [vmem:[%s133 + $0x500] sm:$0xff]
  %v145 = vld [vmem:[%s133 + $0x580] sm:$0xff]
  %v146 = vld [vmem:[%s133 + $0x600] sm:$0xff]
  %v147 = vld [vmem:[%s133 + $0x680] sm:$0xff]
  %v148 = vld [vmem:[%s133 + $0x700] sm:$0xff]
  %v149 = vld [vmem:[%s133 + $0x780] sm:$0xff]
  %v166 = vunpack.c.l.b16 %v117
  %v167 = vunpack.c.h.b16 %v117
  %v168 = vunpack.c.l.b16 %v118
  %v169 = vunpack.c.h.b16 %v118
  %v170 = vunpack.c.l.b16 %v119
  %v171 = vunpack.c.h.b16 %v119
  %v172 = vunpack.c.l.b16 %v120
  %v173 = vunpack.c.h.b16 %v120
  %v174 = vunpack.c.l.b16 %v121
  %v175 = vunpack.c.h.b16 %v121
  %v176 = vunpack.c.l.b16 %v122
  %v177 = vunpack.c.h.b16 %v122
  %v178 = vunpack.c.l.b16 %v123
  %v179 = vunpack.c.h.b16 %v123
  %v180 = vunpack.c.l.b16 %v124
  %v181 = vunpack.c.h.b16 %v124
  %v182 = vunpack.c.l.b16 %v125
  %v183 = vunpack.c.h.b16 %v125
  %v184 = vunpack.c.l.b16 %v126
  %v185 = vunpack.c.h.b16 %v126
  %v186 = vunpack.c.l.b16 %v127
  %v187 = vunpack.c.h.b16 %v127
  %v188 = vunpack.c.l.b16 %v128
  %v189 = vunpack.c.h.b16 %v128
  %v190 = vunpack.c.l.b16 %v129
  %v191 = vunpack.c.h.b16 %v129
  %v192 = vunpack.c.l.b16 %v130
  %v193 = vunpack.c.h.b16 %v130
  %v194 = vunpack.c.l.b16 %v131
  %v195 = vunpack.c.h.b16 %v131
  %v196 = vunpack.c.l.b16 %v132
  %v197 = vunpack.c.h.b16 %v132
  %v198 = vpack.c.b16 %v168, %v166
  %v199 = vpack.c.b16 %v169, %v167
  %v200 = vpack.c.b16 %v172, %v170
  %v201 = vpack.c.b16 %v173, %v171
  %v202 = vpack.c.b16 %v176, %v174
  %v203 = vpack.c.b16 %v177, %v175
  %v204 = vpack.c.b16 %v180, %v178
  %v205 = vpack.c.b16 %v181, %v179
  %v206 = vpack.c.b16 %v184, %v182
  %v207 = vpack.c.b16 %v185, %v183
  %v208 = vpack.c.b16 %v188, %v186
  %v209 = vpack.c.b16 %v189, %v187
  %v210 = vpack.c.b16 %v192, %v190
  %v211 = vpack.c.b16 %v193, %v191
  %v212 = vpack.c.b16 %v196, %v194
  %v213 = vpack.c.b16 %v197, %v195
  %v245 = vunpack.c.l.b16 %v93
  %v246 = vunpack.c.l.b16 %v94
  %v247 = vunpack.c.l.b16 %v95
  %v248 = vunpack.c.l.b16 %v96
  %v249 = vunpack.c.l.b16 %v97
  %v250 = vunpack.c.l.b16 %v98
  %v251 = vunpack.c.l.b16 %v99
  %v252 = vunpack.c.l.b16 %v100
  %v253 = vunpack.c.l.b16 %v101
  %v254 = vunpack.c.l.b16 %v102
  %v255 = vunpack.c.l.b16 %v103
  %v256 = vunpack.c.l.b16 %v104
  %v257 = vunpack.c.l.b16 %v105
  %v258 = vunpack.c.l.b16 %v106
  %v259 = vunpack.c.l.b16 %v107
  %v260 = vunpack.c.l.b16 %v108
  %v261 = vunpack.c.l.b16 %v109
  %v262 = vunpack.c.l.b16 %v110
  %v263 = vunpack.c.l.b16 %v111
  %v264 = vunpack.c.l.b16 %v112
  %v265 = vunpack.c.l.b16 %v113
  %v266 = vunpack.c.l.b16 %v114
  %v267 = vunpack.c.l.b16 %v115
  %v268 = vpack.c.b16 %v246, %v245
  %v269 = vpack.c.b16 %v248, %v247
  %v270 = vpack.c.b16 %v250, %v249
  %v271 = vpack.c.b16 %v252, %v251
  %v272 = vpack.c.b16 %v254, %v253
  %v273 = vpack.c.b16 %v256, %v255
  %v274 = vpack.c.b16 %v258, %v257
  %v275 = vpack.c.b16 %v260, %v259
  %v276 = vpack.c.b16 %v262, %v261
  %v277 = vpack.c.b16 %v264, %v263
  %v278 = vpack.c.b16 %v266, %v265
  %v279 = vpack.c.b16 %v267, %v267
  %vm291 = vcmask 424960
  %v293 = vsel %vm291, %v199, 0
  %v296 = vsel %vm291, %v201, 0
  %v299 = vsel %vm291, %v203, 0
  %v302 = vsel %vm291, %v205, 0
  %v305 = vsel %vm291, %v207, 0
  %v308 = vsel %vm291, %v209, 0
  %v311 = vsel %vm291, %v211, 0
  %v314 = vsel %vm291, %v213, 0
  %vm316 = vcmask 1041408
  %v318 = vsel %vm316, %v279, 0
  %320 = vmatprep.subr.bf16.mxu0 0
  %321 = vmatpush1.bf16.msra.mxu0 %v268
  %322 = vmatprep.subr.bf16.mxu0 0
  %323 = vmatpush1.bf16.msra.mxu0 %v269
  %324 = vmatprep.subr.bf16.mxu0 0
  %325 = vmatpush1.bf16.msra.mxu0 %v270
  %326 = vmatprep.subr.bf16.mxu0 0
  %327 = vmatpush1.bf16.msra.mxu0 %v271
  %328 = vmatprep.subr.bf16.mxu0 0
  %329 = vmatpush1.bf16.msra.mxu0 %v272
  %330 = vmatprep.subr.bf16.mxu0 0
  %331 = vmatpush1.bf16.msra.mxu0 %v273
  %332 = vmatprep.subr.bf16.mxu0 0
  %333 = vmatpush1.bf16.msra.mxu0 %v274
  %334 = vmatprep.subr.bf16.mxu0 0
  %335 = vmatpush1.bf16.msra.mxu0 %v275
  %336 = vmatprep.subr.bf16.mxu0 0
  %337 = vmatpush1.bf16.msra.mxu0 %v276
  %338 = vmatprep.subr.bf16.mxu0 0
  %339 = vmatpush1.bf16.msra.mxu0 %v277
  %340 = vmatprep.subr.bf16.mxu0 0
  %341 = vmatpush1.bf16.msra.mxu0 %v278
  %342 = vmatprep.subr.bf16.mxu0 0
  %343 = vmatpush1.bf16.msra.mxu0 %v318
  %344 = vmatprep.subr.bf16.mxu0 0
  %345 = vmatpush1.bf16.msra.mxu0 0
  %346 = vmatprep.subr.bf16.mxu0 0
  %347 = vmatpush1.bf16.msra.mxu0 0
  %348 = vmatprep.subr.bf16.mxu0 0
  %349 = vmatpush1.bf16.msra.mxu0 0
  %350 = vmatprep.subr.bf16.mxu0 0
  %351 = vmatpush1.bf16.msra.mxu0 0
  %352 = vmatprep.mubr.bf16.mxu0 %v293
  %353 = vmatmul.mubr.bf16.gmra.mrb[0].mxu0 %v198
  %v354 = vpop.f32.mrb[0].mxu0
  %v355 = vadd.f32 0.0, %v354
  %v356 = vpop.f32.mrb[0].mxu0
  %v357 = vpop.f32.mrb[0].mxu0
  %v358 = vadd.f32 0.0, %v357
  %v359 = vpop.f32.mrb[0].mxu0
  %360 = vmatprep.mubr.bf16.mxu0 %v296
  %361 = vmatmul.mubr.bf16.gmra.mrb[0].mxu0 %v200
  %v362 = vpop.f32.mrb[0].mxu0
  %v363 = vadd.f32 0.0, %v362
  %v364 = vpop.f32.mrb[0].mxu0
  %v365 = vpop.f32.mrb[0].mxu0
  %v366 = vadd.f32 0.0, %v365
  %v367 = vpop.f32.mrb[0].mxu0
  %368 = vmatprep.mubr.bf16.mxu0 %v299
  %369 = vmatmul.mubr.bf16.gmra.mrb[0].mxu0 %v202
  %v370 = vpop.f32.mrb[0].mxu0
  %v371 = vadd.f32 0.0, %v370
  %v372 = vpop.f32.mrb[0].mxu0
  %v373 = vpop.f32.mrb[0].mxu0
  %v374 = vadd.f32 0.0, %v373
  %v375 = vpop.f32.mrb[0].mxu0
  %376 = vmatprep.mubr.bf16.mxu0 %v302
  %377 = vmatmul.mubr.bf16.gmra.mrb[0].mxu0 %v204
  %v378 = vpop.f32.mrb[0].mxu0
  %v379 = vadd.f32 0.0, %v378
  %v380 = vpop.f32.mrb[0].mxu0
  %v381 = vpop.f32.mrb[0].mxu0
  %v382 = vadd.f32 0.0, %v381
  %v383 = vpop.f32.mrb[0].mxu0
  %384 = vmatprep.mubr.bf16.mxu0 %v305
  %385 = vmatmul.mubr.bf16.gmra.mrb[0].mxu0 %v206
  %v386 = vpop.f32.mrb[0].mxu0
  %v387 = vadd.f32 0.0, %v386
  %v388 = vpop.f32.mrb[0].mxu0
  %v389 = vpop.f32.mrb[0].mxu0
  %v390 = vadd.f32 0.0, %v389
  %v391 = vpop.f32.mrb[0].mxu0
  %392 = vmatprep.mubr.bf16.mxu0 %v308
  %393 = vmatmul.mubr.bf16.gmra.mrb[0].mxu0 %v208
  %v394 = vpop.f32.mrb[0].mxu0
  %v395 = vadd.f32 0.0, %v394
  %v396 = vpop.f32.mrb[0].mxu0
  %v397 = vpop.f32.mrb[0].mxu0
  %v398 = vadd.f32 0.0, %v397
  %v399 = vpop.f32.mrb[0].mxu0
  %400 = vmatprep.mubr.bf16.mxu0 %v311
  %401 = vmatmul.mubr.bf16.gmra.mrb[0].mxu0 %v210
  %v402 = vpop.f32.mrb[0].mxu0
  %v403 = vadd.f32 0.0, %v402
  %v404 = vpop.f32.mrb[0].mxu0
  %v405 = vpop.f32.mrb[0].mxu0
  %v406 = vadd.f32 0.0, %v405
  %v407 = vpop.f32.mrb[0].mxu0
  %408 = vmatprep.mubr.bf16.mxu0 %v314
  %409 = vmatmul.mubr.bf16.gmra.mrb[0].mxu0 %v212
  %v410 = vpop.f32.mrb[0].mxu0
  %v411 = vadd.f32 0.0, %v410
  %v412 = vpop.f32.mrb[0].mxu0
  %v413 = vpop.f32.mrb[0].mxu0
  %v414 = vadd.f32 0.0, %v413
  %v415 = vpop.f32.mrb[0].mxu0
  %416 = vdwg.mxu0
  %v433 = vunpack.c.l.b16 %v59
  %v434 = vunpack.c.h.b16 %v59
  %v435 = vunpack.c.l.b16 %v60
  %v436 = vunpack.c.h.b16 %v60
  %v437 = vunpack.c.l.b16 %v61
  %v438 = vunpack.c.h.b16 %v61
  %v439 = vunpack.c.l.b16 %v62
  %v440 = vunpack.c.h.b16 %v62
  %v441 = vunpack.c.l.b16 %v63
  %v442 = vunpack.c.h.b16 %v63
  %v443 = vunpack.c.l.b16 %v64
  %v444 = vunpack.c.h.b16 %v64
  %v445 = vunpack.c.l.b16 %v65
  %v446 = vunpack.c.h.b16 %v65
  %v447 = vunpack.c.l.b16 %v66
  %v448 = vunpack.c.h.b16 %v66
  %v449 = vunpack.c.l.b16 %v67
  %v450 = vunpack.c.h.b16 %v67
  %v451 = vunpack.c.l.b16 %v68
  %v452 = vunpack.c.h.b16 %v68
  %v453 = vunpack.c.l.b16 %v69
  %v454 = vunpack.c.h.b16 %v69
  %v455 = vunpack.c.l.b16 %v70
  %v456 = vunpack.c.h.b16 %v70
  %v457 = vunpack.c.l.b16 %v71
  %v458 = vunpack.c.h.b16 %v71
  %v459 = vunpack.c.l.b16 %v72
  %v460 = vunpack.c.h.b16 %v72
  %v461 = vunpack.c.l.b16 %v73
  %v462 = vunpack.c.h.b16 %v73
  %v463 = vunpack.c.l.b16 %v74
  %v464 = vunpack.c.h.b16 %v74
  %v465 = vpack.c.b16 %v435, %v433
  %v466 = vpack.c.b16 %v436, %v434
  %v467 = vpack.c.b16 %v439, %v437
  %v468 = vpack.c.b16 %v440, %v438
  %v469 = vpack.c.b16 %v443, %v441
  %v470 = vpack.c.b16 %v444, %v442
  %v471 = vpack.c.b16 %v447, %v445
  %v472 = vpack.c.b16 %v448, %v446
  %v473 = vpack.c.b16 %v451, %v449
  %v474 = vpack.c.b16 %v452, %v450
  %v475 = vpack.c.b16 %v455, %v453
  %v476 = vpack.c.b16 %v456, %v454
  %v477 = vpack.c.b16 %v459, %v457
  %v478 = vpack.c.b16 %v460, %v458
  %v479 = vpack.c.b16 %v463, %v461
  %v480 = vpack.c.b16 %v464, %v462
  %v512 = vunpack.c.l.b16 %v36
  %v513 = vunpack.c.l.b16 %v37
  %v514 = vunpack.c.l.b16 %v38
  %v515 = vunpack.c.l.b16 %v39
  %v516 = vunpack.c.l.b16 %v40
  %v517 = vunpack.c.l.b16 %v41
  %v518 = vunpack.c.l.b16 %v42
  %v519 = vunpack.c.l.b16 %v43
  %v520 = vunpack.c.l.b16 %v44
  %v521 = vunpack.c.l.b16 %v45
  %v522 = vunpack.c.l.b16 %v46
  %v523 = vunpack.c.l.b16 %v47
  %v524 = vunpack.c.l.b16 %v48
  %v525 = vunpack.c.l.b16 %v49
  %v526 = vunpack.c.l.b16 %v50
  %v527 = vunpack.c.l.b16 %v51
  %v528 = vunpack.c.l.b16 %v52
  %v529 = vunpack.c.l.b16 %v53
  %v530 = vunpack.c.l.b16 %v54
  %v531 = vunpack.c.l.b16 %v55
  %v532 = vunpack.c.l.b16 %v56
  %v533 = vunpack.c.l.b16 %v57
  %v534 = vunpack.c.l.b16 %v58
  %v535 = vpack.c.b16 %v513, %v512
  %v536 = vpack.c.b16 %v515, %v514
  %v537 = vpack.c.b16 %v517, %v516
  %v538 = vpack.c.b16 %v519, %v518
  %v539 = vpack.c.b16 %v521, %v520
  %v540 = vpack.c.b16 %v523, %v522
  %v541 = vpack.c.b16 %v525, %v524
  %v542 = vpack.c.b16 %v527, %v526
  %v543 = vpack.c.b16 %v529, %v528
  %v544 = vpack.c.b16 %v531, %v530
  %v545 = vpack.c.b16 %v533, %v532
  %v546 = vpack.c.b16 %v534, %v534
  %v559 = vsel %vm291, %v466, 0
  %v562 = vsel %vm291, %v468, 0
  %v565 = vsel %vm291, %v470, 0
  %v568 = vsel %vm291, %v472, 0
  %v571 = vsel %vm291, %v474, 0
  %v574 = vsel %vm291, %v476, 0
  %v577 = vsel %vm291, %v478, 0
  %v580 = vsel %vm291, %v480, 0
  %v583 = vsel %vm316, %v546, 0
  %585 = vmatprep.subr.bf16.mxu0 0
  %586 = vmatpush1.bf16.msra.mxu0 %v535
  %587 = vmatprep.subr.bf16.mxu0 0
  %588 = vmatpush1.bf16.msra.mxu0 %v536
  %589 = vmatprep.subr.bf16.mxu0 0
  %590 = vmatpush1.bf16.msra.mxu0 %v537
  %591 = vmatprep.subr.bf16.mxu0 0
  %592 = vmatpush1.bf16.msra.mxu0 %v538
  %593 = vmatprep.subr.bf16.mxu0 0
  %594 = vmatpush1.bf16.msra.mxu0 %v539
  %595 = vmatprep.subr.bf16.mxu0 0
  %596 = vmatpush1.bf16.msra.mxu0 %v540
  %597 = vmatprep.subr.bf16.mxu0 0
  %598 = vmatpush1.bf16.msra.mxu0 %v541
  %599 = vmatprep.subr.bf16.mxu0 0
  %600 = vmatpush1.bf16.msra.mxu0 %v542
  %601 = vmatprep.subr.bf16.mxu0 0
  %602 = vmatpush1.bf16.msra.mxu0 %v543
  %603 = vmatprep.subr.bf16.mxu0 0
  %604 = vmatpush1.bf16.msra.mxu0 %v544
  %605 = vmatprep.subr.bf16.mxu0 0
  %606 = vmatpush1.bf16.msra.mxu0 %v545
  %607 = vmatprep.subr.bf16.mxu0 0
  %608 = vmatpush1.bf16.msra.mxu0 %v583
  %609 = vmatprep.subr.bf16.mxu0 0
  %610 = vmatpush1.bf16.msra.mxu0 0
  %611 = vmatprep.subr.bf16.mxu0 0
  %612 = vmatpush1.bf16.msra.mxu0 0
  %613 = vmatprep.subr.bf16.mxu0 0
  %614 = vmatpush1.bf16.msra.mxu0 0
  %615 = vmatprep.subr.bf16.mxu0 0
  %616 = vmatpush1.bf16.msra.mxu0 0
  %617 = vmatprep.mubr.bf16.mxu0 %v559
  %618 = vmatmul.mubr.bf16.gmra.mrb[0].mxu0 %v465
  %v619 = vpop.f32.mrb[0].mxu0
  %v620 = vadd.f32 %v355, %v619
  %v621 = vpop.f32.mrb[0].mxu0
  %v622 = vpop.f32.mrb[0].mxu0
  %v623 = vadd.f32 %v358, %v622
  %v624 = vpop.f32.mrb[0].mxu0
  %625 = vmatprep.mubr.bf16.mxu0 %v562
  %626 = vmatmul.mubr.bf16.gmra.mrb[0].mxu0 %v467
  %v627 = vpop.f32.mrb[0].mxu0
  %v628 = vadd.f32 %v363, %v627
  %v629 = vpop.f32.mrb[0].mxu0
  %v630 = vpop.f32.mrb[0].mxu0
  %v631 = vadd.f32 %v366, %v630
  %v632 = vpop.f32.mrb[0].mxu0
  %633 = vmatprep.mubr.bf16.mxu0 %v565
  %634 = vmatmul.mubr.bf16.gmra.mrb[0].mxu0 %v469
  %v635 = vpop.f32.mrb[0].mxu0
  %v636 = vadd.f32 %v371, %v635
  %v637 = vpop.f32.mrb[0].mxu0
  %v638 = vpop.f32.mrb[0].mxu0
  %v639 = vadd.f32 %v374, %v638
  %v640 = vpop.f32.mrb[0].mxu0
  %641 = vmatprep.mubr.bf16.mxu0 %v568
  %642 = vmatmul.mubr.bf16.gmra.mrb[0].mxu0 %v471
  %v643 = vpop.f32.mrb[0].mxu0
  %v644 = vadd.f32 %v379, %v643
  %v645 = vpop.f32.mrb[0].mxu0
  %v646 = vpop.f32.mrb[0].mxu0
  %v647 = vadd.f32 %v382, %v646
  %v648 = vpop.f32.mrb[0].mxu0
  %649 = vmatprep.mubr.bf16.mxu0 %v571
  %650 = vmatmul.mubr.bf16.gmra.mrb[0].mxu0 %v473
  %v651 = vpop.f32.mrb[0].mxu0
  %v652 = vadd.f32 %v387, %v651
  %v653 = vpop.f32.mrb[0].mxu0
  %v654 = vpop.f32.mrb[0].mxu0
  %v655 = vadd.f32 %v390, %v654
  %v656 = vpop.f32.mrb[0].mxu0
  %657 = vmatprep.mubr.bf16.mxu0 %v574
  %658 = vmatmul.mubr.bf16.gmra.mrb[0].mxu0 %v475
  %v659 = vpop.f32.mrb[0].mxu0
  %v660 = vadd.f32 %v395, %v659
  %v661 = vpop.f32.mrb[0].mxu0
  %v662 = vpop.f32.mrb[0].mxu0
  %v663 = vadd.f32 %v398, %v662
  %v664 = vpop.f32.mrb[0].mxu0
  %665 = vmatprep.mubr.bf16.mxu0 %v577
  %666 = vmatmul.mubr.bf16.gmra.mrb[0].mxu0 %v477
  %v667 = vpop.f32.mrb[0].mxu0
  %v668 = vadd.f32 %v403, %v667
  %v669 = vpop.f32.mrb[0].mxu0
  %v670 = vpop.f32.mrb[0].mxu0
  %v671 = vadd.f32 %v406, %v670
  %v672 = vpop.f32.mrb[0].mxu0
  %673 = vmatprep.mubr.bf16.mxu0 %v580
  %674 = vmatmul.mubr.bf16.gmra.mrb[0].mxu0 %v479
  %v675 = vpop.f32.mrb[0].mxu0
  %v676 = vadd.f32 %v411, %v675
  %v677 = vpop.f32.mrb[0].mxu0
  %v678 = vpop.f32.mrb[0].mxu0
  %v679 = vadd.f32 %v414, %v678
  %v680 = vpop.f32.mrb[0].mxu0
  %681 = vdwg.mxu0
  %v698 = vunpack.c.l.b16 %v134
  %v699 = vunpack.c.h.b16 %v134
  %v700 = vunpack.c.l.b16 %v135
  %v701 = vunpack.c.h.b16 %v135
  %v702 = vunpack.c.l.b16 %v136
  %v703 = vunpack.c.h.b16 %v136
  %v704 = vunpack.c.l.b16 %v137
  %v705 = vunpack.c.h.b16 %v137
  %v706 = vunpack.c.l.b16 %v138
  %v707 = vunpack.c.h.b16 %v138
  %v708 = vunpack.c.l.b16 %v139
  %v709 = vunpack.c.h.b16 %v139
  %v710 = vunpack.c.l.b16 %v140
  %v711 = vunpack.c.h.b16 %v140
  %v712 = vunpack.c.l.b16 %v141
  %v713 = vunpack.c.h.b16 %v141
  %v714 = vunpack.c.l.b16 %v142
  %v715 = vunpack.c.h.b16 %v142
  %v716 = vunpack.c.l.b16 %v143
  %v717 = vunpack.c.h.b16 %v143
  %v718 = vunpack.c.l.b16 %v144
  %v719 = vunpack.c.h.b16 %v144
  %v720 = vunpack.c.l.b16 %v145
  %v721 = vunpack.c.h.b16 %v145
  %v722 = vunpack.c.l.b16 %v146
  %v723 = vunpack.c.h.b16 %v146
  %v724 = vunpack.c.l.b16 %v147
  %v725 = vunpack.c.h.b16 %v147
  %v726 = vunpack.c.l.b16 %v148
  %v727 = vunpack.c.h.b16 %v148
  %v728 = vunpack.c.l.b16 %v149
  %v729 = vunpack.c.h.b16 %v149
  %v730 = vpack.c.b16 %v700, %v698
  %v731 = vpack.c.b16 %v701, %v699
  %v732 = vpack.c.b16 %v704, %v702
  %v733 = vpack.c.b16 %v705, %v703
  %v734 = vpack.c.b16 %v708, %v706
  %v735 = vpack.c.b16 %v709, %v707
  %v736 = vpack.c.b16 %v712, %v710
  %v737 = vpack.c.b16 %v713, %v711
  %v738 = vpack.c.b16 %v716, %v714
  %v739 = vpack.c.b16 %v717, %v715
  %v740 = vpack.c.b16 %v720, %v718
  %v741 = vpack.c.b16 %v721, %v719
  %v742 = vpack.c.b16 %v724, %v722
  %v743 = vpack.c.b16 %v725, %v723
  %v744 = vpack.c.b16 %v728, %v726
  %v745 = vpack.c.b16 %v729, %v727
  %v755 = vsel %vm291, %v731, 0
  %v758 = vsel %vm291, %v733, 0
  %v761 = vsel %vm291, %v735, 0
  %v764 = vsel %vm291, %v737, 0
  %v767 = vsel %vm291, %v739, 0
  %v770 = vsel %vm291, %v741, 0
  %v773 = vsel %vm291, %v743, 0
  %v776 = vsel %vm291, %v745, 0
  %778 = vmatprep.subr.bf16.mxu0 0
  %779 = vmatpush1.bf16.msra.mxu0 %v268
  %780 = vmatprep.subr.bf16.mxu0 0
  %781 = vmatpush1.bf16.msra.mxu0 %v269
  %782 = vmatprep.subr.bf16.mxu0 0
  %783 = vmatpush1.bf16.msra.mxu0 %v270
  %784 = vmatprep.subr.bf16.mxu0 0
  %785 = vmatpush1.bf16.msra.mxu0 %v271
  %786 = vmatprep.subr.bf16.mxu0 0
  %787 = vmatpush1.bf16.msra.mxu0 %v272
  %788 = vmatprep.subr.bf16.mxu0 0
  %789 = vmatpush1.bf16.msra.mxu0 %v273
  %790 = vmatprep.subr.bf16.mxu0 0
  %791 = vmatpush1.bf16.msra.mxu0 %v274
  %792 = vmatprep.subr.bf16.mxu0 0
  %793 = vmatpush1.bf16.msra.mxu0 %v275
  %794 = vmatprep.subr.bf16.mxu0 0
  %795 = vmatpush1.bf16.msra.mxu0 %v276
  %796 = vmatprep.subr.bf16.mxu0 0
  %797 = vmatpush1.bf16.msra.mxu0 %v277
  %798 = vmatprep.subr.bf16.mxu0 0
  %799 = vmatpush1.bf16.msra.mxu0 %v278
  %800 = vmatprep.subr.bf16.mxu0 0
  %801 = vmatpush1.bf16.msra.mxu0 %v318
  %802 = vmatprep.subr.bf16.mxu0 0
  %803 = vmatpush1.bf16.msra.mxu0 0
  %804 = vmatprep.subr.bf16.mxu0 0
  %805 = vmatpush1.bf16.msra.mxu0 0
  %806 = vmatprep.subr.bf16.mxu0 0
  %807 = vmatpush1.bf16.msra.mxu0 0
  %808 = vmatprep.subr.bf16.mxu0 0
  %809 = vmatpush1.bf16.msra.mxu0 0
  %810 = vmatprep.mubr.bf16.mxu0 %v755
  %811 = vmatmul.mubr.bf16.gmra.mrb[0].mxu0 %v730
  %v812 = vpop.f32.mrb[0].mxu0
  %v813 = vadd.f32 0.0, %v812
  %v814 = vpop.f32.mrb[0].mxu0
  %v815 = vpop.f32.mrb[0].mxu0
  %v816 = vadd.f32 0.0, %v815
  %v817 = vpop.f32.mrb[0].mxu0
  %818 = vmatprep.mubr.bf16.mxu0 %v758
  %819 = vmatmul.mubr.bf16.gmra.mrb[0].mxu0 %v732
  %v820 = vpop.f32.mrb[0].mxu0
  %v821 = vadd.f32 0.0, %v820
  %v822 = vpop.f32.mrb[0].mxu0
  %v823 = vpop.f32.mrb[0].mxu0
  %v824 = vadd.f32 0.0, %v823
  %v825 = vpop.f32.mrb[0].mxu0
  %826 = vmatprep.mubr.bf16.mxu0 %v761
  %827 = vmatmul.mubr.bf16.gmra.mrb[0].mxu0 %v734
  %v828 = vpop.f32.mrb[0].mxu0
  %v829 = vadd.f32 0.0, %v828
  %v830 = vpop.f32.mrb[0].mxu0
  %v831 = vpop.f32.mrb[0].mxu0
  %v832 = vadd.f32 0.0, %v831
  %v833 = vpop.f32.mrb[0].mxu0
  %834 = vmatprep.mubr.bf16.mxu0 %v764
  %835 = vmatmul.mubr.bf16.gmra.mrb[0].mxu0 %v736
  %v836 = vpop.f32.mrb[0].mxu0
  %v837 = vadd.f32 0.0, %v836
  %v838 = vpop.f32.mrb[0].mxu0
  %v839 = vpop.f32.mrb[0].mxu0
  %v840 = vadd.f32 0.0, %v839
  %v841 = vpop.f32.mrb[0].mxu0
  %842 = vmatprep.mubr.bf16.mxu0 %v767
  %843 = vmatmul.mubr.bf16.gmra.mrb[0].mxu0 %v738
  %v844 = vpop.f32.mrb[0].mxu0
  %v845 = vadd.f32 0.0, %v844
  %v846 = vpop.f32.mrb[0].mxu0
  %v847 = vpop.f32.mrb[0].mxu0
  %v848 = vadd.f32 0.0, %v847
  %v849 = vpop.f32.mrb[0].mxu0
  %850 = vmatprep.mubr.bf16.mxu0 %v770
  %851 = vmatmul.mubr.bf16.gmra.mrb[0].mxu0 %v740
  %v852 = vpop.f32.mrb[0].mxu0
  %v853 = vadd.f32 0.0, %v852
  %v854 = vpop.f32.mrb[0].mxu0
  %v855 = vpop.f32.mrb[0].mxu0
  %v856 = vadd.f32 0.0, %v855
  %v857 = vpop.f32.mrb[0].mxu0
  %858 = vmatprep.mubr.bf16.mxu0 %v773
  %859 = vmatmul.mubr.bf16.gmra.mrb[0].mxu0 %v742
  %v860 = vpop.f32.mrb[0].mxu0
  %v861 = vadd.f32 0.0, %v860
  %v862 = vpop.f32.mrb[0].mxu0
  %v863 = vpop.f32.mrb[0].mxu0
  %v864 = vadd.f32 0.0, %v863
  %v865 = vpop.f32.mrb[0].mxu0
  %866 = vmatprep.mubr.bf16.mxu0 %v776
  %867 = vmatmul.mubr.bf16.gmra.mrb[0].mxu0 %v744
  %v868 = vpop.f32.mrb[0].mxu0
  %v869 = vadd.f32 0.0, %v868
  %v870 = vpop.f32.mrb[0].mxu0
  %v871 = vpop.f32.mrb[0].mxu0
  %v872 = vadd.f32 0.0, %v871
  %v873 = vpop.f32.mrb[0].mxu0
  %874 = vdwg.mxu0
  %v891 = vunpack.c.l.b16 %v76
  %v892 = vunpack.c.h.b16 %v76
  %v893 = vunpack.c.l.b16 %v77
  %v894 = vunpack.c.h.b16 %v77
  %v895 = vunpack.c.l.b16 %v78
  %v896 = vunpack.c.h.b16 %v78
  %v897 = vunpack.c.l.b16 %v79
  %v898 = vunpack.c.h.b16 %v79
  %v899 = vunpack.c.l.b16 %v80
  %v900 = vunpack.c.h.b16 %v80
  %v901 = vunpack.c.l.b16 %v81
  %v902 = vunpack.c.h.b16 %v81
  %v903 = vunpack.c.l.b16 %v82
  %v904 = vunpack.c.h.b16 %v82
  %v905 = vunpack.c.l.b16 %v83
  %v906 = vunpack.c.h.b16 %v83
  %v907 = vunpack.c.l.b16 %v84
  %v908 = vunpack.c.h.b16 %v84
  %v909 = vunpack.c.l.b16 %v85
  %v910 = vunpack.c.h.b16 %v85
  %v911 = vunpack.c.l.b16 %v86
  %v912 = vunpack.c.h.b16 %v86
  %v913 = vunpack.c.l.b16 %v87
  %v914 = vunpack.c.h.b16 %v87
  %v915 = vunpack.c.l.b16 %v88
  %v916 = vunpack.c.h.b16 %v88
  %v917 = vunpack.c.l.b16 %v89
  %v918 = vunpack.c.h.b16 %v89
  %v919 = vunpack.c.l.b16 %v90
  %v920 = vunpack.c.h.b16 %v90
  %v921 = vunpack.c.l.b16 %v91
  %v922 = vunpack.c.h.b16 %v91
  %v923 = vpack.c.b16 %v893, %v891
  %v924 = vpack.c.b16 %v894, %v892
  %v925 = vpack.c.b16 %v897, %v895
  %v926 = vpack.c.b16 %v898, %v896
  %v927 = vpack.c.b16 %v901, %v899
  %v928 = vpack.c.b16 %v902, %v900
  %v929 = vpack.c.b16 %v905, %v903
  %v930 = vpack.c.b16 %v906, %v904
  %v931 = vpack.c.b16 %v909, %v907
  %v932 = vpack.c.b16 %v910, %v908
  %v933 = vpack.c.b16 %v913, %v911
  %v934 = vpack.c.b16 %v914, %v912
  %v935 = vpack.c.b16 %v917, %v915
  %v936 = vpack.c.b16 %v918, %v916
  %v937 = vpack.c.b16 %v921, %v919
  %v938 = vpack.c.b16 %v922, %v920
  %v948 = vsel %vm291, %v924, 0
  %v951 = vsel %vm291, %v926, 0
  %v954 = vsel %vm291, %v928, 0
  %v957 = vsel %vm291, %v930, 0
  %v960 = vsel %vm291, %v932, 0
  %v963 = vsel %vm291, %v934, 0
  %v966 = vsel %vm291, %v936, 0
  %v969 = vsel %vm291, %v938, 0
  %971 = vmatprep.subr.bf16.mxu0 0
  %972 = vmatpush1.bf16.msra.mxu0 %v535
  %973 = vmatprep.subr.bf16.mxu0 0
  %974 = vmatpush1.bf16.msra.mxu0 %v536
  %975 = vmatprep.subr.bf16.mxu0 0
  %976 = vmatpush1.bf16.msra.mxu0 %v537
  %977 = vmatprep.subr.bf16.mxu0 0
  %978 = vmatpush1.bf16.msra.mxu0 %v538
  %979 = vmatprep.subr.bf16.mxu0 0
  %980 = vmatpush1.bf16.msra.mxu0 %v539
  %981 = vmatprep.subr.bf16.mxu0 0
  %982 = vmatpush1.bf16.msra.mxu0 %v540
  %983 = vmatprep.subr.bf16.mxu0 0
  %984 = vmatpush1.bf16.msra.mxu0 %v541
  %985 = vmatprep.subr.bf16.mxu0 0
  %986 = vmatpush1.bf16.msra.mxu0 %v542
  %987 = vmatprep.subr.bf16.mxu0 0
  %988 = vmatpush1.bf16.msra.mxu0 %v543
  %989 = vmatprep.subr.bf16.mxu0 0
  %990 = vmatpush1.bf16.msra.mxu0 %v544
  %991 = vmatprep.subr.bf16.mxu0 0
  %992 = vmatpush1.bf16.msra.mxu0 %v545
  %993 = vmatprep.subr.bf16.mxu0 0
  %994 = vmatpush1.bf16.msra.mxu0 %v583
  %995 = vmatprep.subr.bf16.mxu0 0
  %996 = vmatpush1.bf16.msra.mxu0 0
  %997 = vmatprep.subr.bf16.mxu0 0
  %998 = vmatpush1.bf16.msra.mxu0 0
  %999 = vmatprep.subr.bf16.mxu0 0
  %1000 = vmatpush1.bf16.msra.mxu0 0
  %1001 = vmatprep.subr.bf16.mxu0 0
  %1002 = vmatpush1.bf16.msra.mxu0 0
  %1003 = vmatprep.mubr.bf16.mxu0 %v948
  %1004 = vmatmul.mubr.bf16.gmra.mrb[0].mxu0 %v923
  %v1005 = vpop.f32.mrb[0].mxu0
  %v1006 = vadd.f32 %v813, %v1005
  %v1007 = vpop.f32.mrb[0].mxu0
  %v1008 = vpop.f32.mrb[0].mxu0
  %v1009 = vadd.f32 %v816, %v1008
  %v1010 = vpop.f32.mrb[0].mxu0
  %1011 = vmatprep.mubr.bf16.mxu0 %v951
  %1012 = vmatmul.mubr.bf16.gmra.mrb[0].mxu0 %v925
  %v1013 = vpop.f32.mrb[0].mxu0
  %v1014 = vadd.f32 %v821, %v1013
  %v1015 = vpop.f32.mrb[0].mxu0
  %v1016 = vpop.f32.mrb[0].mxu0
  %v1017 = vadd.f32 %v824, %v1016
  %v1018 = vpop.f32.mrb[0].mxu0
  %1019 = vmatprep.mubr.bf16.mxu0 %v954
  %1020 = vmatmul.mubr.bf16.gmra.mrb[0].mxu0 %v927
  %v1021 = vpop.f32.mrb[0].mxu0
  %v1022 = vadd.f32 %v829, %v1021
  %v1023 = vpop.f32.mrb[0].mxu0
  %v1024 = vpop.f32.mrb[0].mxu0
  %v1025 = vadd.f32 %v832, %v1024
  %v1026 = vpop.f32.mrb[0].mxu0
  %1027 = vmatprep.mubr.bf16.mxu0 %v957
  %1028 = vmatmul.mubr.bf16.gmra.mrb[0].mxu0 %v929
  %v1029 = vpop.f32.mrb[0].mxu0
  %v1030 = vadd.f32 %v837, %v1029
  %v1031 = vpop.f32.mrb[0].mxu0
  %v1032 = vpop.f32.mrb[0].mxu0
  %v1033 = vadd.f32 %v840, %v1032
  %v1034 = vpop.f32.mrb[0].mxu0
  %1035 = vmatprep.mubr.bf16.mxu0 %v960
  %1036 = vmatmul.mubr.bf16.gmra.mrb[0].mxu0 %v931
  %v1037 = vpop.f32.mrb[0].mxu0
  %v1038 = vadd.f32 %v845, %v1037
  %v1039 = vpop.f32.mrb[0].mxu0
  %v1040 = vpop.f32.mrb[0].mxu0
  %v1041 = vadd.f32 %v848, %v1040
  %v1042 = vpop.f32.mrb[0].mxu0
  %1043 = vmatprep.mubr.bf16.mxu0 %v963
  %1044 = vmatmul.mubr.bf16.gmra.mrb[0].mxu0 %v933
  %v1045 = vpop.f32.mrb[0].mxu0
  %v1046 = vadd.f32 %v853, %v1045
  %v1047 = vpop.f32.mrb[0].mxu0
  %v1048 = vpop.f32.mrb[0].mxu0
  %v1049 = vadd.f32 %v856, %v1048
  %v1050 = vpop.f32.mrb[0].mxu0
  %1051 = vmatprep.mubr.bf16.mxu0 %v966
  %1052 = vmatmul.mubr.bf16.gmra.mrb[0].mxu0 %v935
  %v1053 = vpop.f32.mrb[0].mxu0
  %v1054 = vadd.f32 %v861, %v1053
  %v1055 = vpop.f32.mrb[0].mxu0
  %v1056 = vpop.f32.mrb[0].mxu0
  %v1057 = vadd.f32 %v864, %v1056
  %v1058 = vpop.f32.mrb[0].mxu0
  %1059 = vmatprep.mubr.bf16.mxu0 %v969
  %1060 = vmatmul.mubr.bf16.gmra.mrb[0].mxu0 %v937
  %v1061 = vpop.f32.mrb[0].mxu0
  %v1062 = vadd.f32 %v869, %v1061
  %v1063 = vpop.f32.mrb[0].mxu0
  %v1064 = vpop.f32.mrb[0].mxu0
  %v1065 = vadd.f32 %v872, %v1064
  %v1066 = vpop.f32.mrb[0].mxu0
  %1067 = vdwg.mxu0
  %s1068 = scalar_lea.vmem %s1, 184
  %v1069 = vld [vmem:[%s1068] sm:$0xf]
  %v1070 = vld [vmem:[%s1068 + $0x4] sm:$0xf]
  %v1071 = vld [vmem:[%s1068 + $0x8] sm:$0xf]
  %v1072 = vld [vmem:[%s1068 + $0xc] sm:$0xf]
  %v1073 = vld [vmem:[%s1068 + $0x10] sm:$0xf]
  %v1074 = vld [vmem:[%s1068 + $0x14] sm:$0xf]
  %v1075 = vld [vmem:[%s1068 + $0x18] sm:$0xf]
  %v1076 = vld [vmem:[%s1068 + $0x1c] sm:$0xf]
  %v1077 = vld [vmem:[%s1068 + $0x20] sm:$0xf]
  %v1078 = vld [vmem:[%s1068 + $0x24] sm:$0xf]
  %v1079 = vld [vmem:[%s1068 + $0x28] sm:$0xf]
  %v1080 = vld [vmem:[%s1068 + $0x2c] sm:$0xf]
  %v1081 = vld [vmem:[%s1068 + $0x30] sm:$0xf]
  %v1082 = vld [vmem:[%s1068 + $0x34] sm:$0xf]
  %v1083 = vld [vmem:[%s1068 + $0x38] sm:$0xf]
  %v1084 = vld [vmem:[%s1068 + $0x3c] sm:$0xf]
  %v1085 = vld [vmem:[%s1068 + $0x40] sm:$0xf]
  %v1086 = vld [vmem:[%s1068 + $0x44] sm:$0xf]
  %v1087 = vld [vmem:[%s1068 + $0x48] sm:$0xf]
  %v1088 = vld [vmem:[%s1068 + $0x4c] sm:$0xf]
  %v1089 = vld [vmem:[%s1068 + $0x50] sm:$0xf]
  %v1090 = vld [vmem:[%s1068 + $0x54] sm:$0xf]
  %v1091 = vld [vmem:[%s1068 + $0x58] sm:$0x3]
  %s1092 = scalar_lea.vmem %s0, 32
  %v1093 = vld [vmem:[%s1092] sm:$0xff]
  %v1094 = vld [vmem:[%s1092 + $0x80] sm:$0xff]
  %v1095 = vld [vmem:[%s1092 + $0x100] sm:$0xff]
  %v1096 = vld [vmem:[%s1092 + $0x180] sm:$0xff]
  %v1097 = vld [vmem:[%s1092 + $0x200] sm:$0xff]
  %v1098 = vld [vmem:[%s1092 + $0x280] sm:$0xff]
  %v1099 = vld [vmem:[%s1092 + $0x300] sm:$0xff]
  %v1100 = vld [vmem:[%s1092 + $0x380] sm:$0xff]
  %v1101 = vld [vmem:[%s1092 + $0x400] sm:$0xff]
  %v1102 = vld [vmem:[%s1092 + $0x480] sm:$0xff]
  %v1103 = vld [vmem:[%s1092 + $0x500] sm:$0xff]
  %v1104 = vld [vmem:[%s1092 + $0x580] sm:$0xff]
  %v1105 = vld [vmem:[%s1092 + $0x600] sm:$0xff]
  %v1106 = vld [vmem:[%s1092 + $0x680] sm:$0xff]
  %v1107 = vld [vmem:[%s1092 + $0x700] sm:$0xff]
  %v1108 = vld [vmem:[%s1092 + $0x780] sm:$0xff]
  %s1109 = scalar_lea.vmem %s0, 96
  %v1110 = vld [vmem:[%s1109] sm:$0xff]
  %v1111 = vld [vmem:[%s1109 + $0x80] sm:$0xff]
  %v1112 = vld [vmem:[%s1109 + $0x100] sm:$0xff]
  %v1113 = vld [vmem:[%s1109 + $0x180] sm:$0xff]
  %v1114 = vld [vmem:[%s1109 + $0x200] sm:$0xff]
  %v1115 = vld [vmem:[%s1109 + $0x280] sm:$0xff]
  %v1116 = vld [vmem:[%s1109 + $0x300] sm:$0xff]
  %v1117 = vld [vmem:[%s1109 + $0x380] sm:$0xff]
  %v1118 = vld [vmem:[%s1109 + $0x400] sm:$0xff]
  %v1119 = vld [vmem:[%s1109 + $0x480] sm:$0xff]
  %v1120 = vld [vmem:[%s1109 + $0x500] sm:$0xff]
  %v1121 = vld [vmem:[%s1109 + $0x580] sm:$0xff]
  %v1122 = vld [vmem:[%s1109 + $0x600] sm:$0xff]
  %v1123 = vld [vmem:[%s1109 + $0x680] sm:$0xff]
  %v1124 = vld [vmem:[%s1109 + $0x700] sm:$0xff]
  %v1125 = vld [vmem:[%s1109 + $0x780] sm:$0xff]
  %v1142 = vunpack.c.l.b16 %v1093
  %v1143 = vunpack.c.h.b16 %v1093
  %v1144 = vunpack.c.l.b16 %v1094
  %v1145 = vunpack.c.h.b16 %v1094
  %v1146 = vunpack.c.l.b16 %v1095
  %v1147 = vunpack.c.h.b16 %v1095
  %v1148 = vunpack.c.l.b16 %v1096
  %v1149 = vunpack.c.h.b16 %v1096
  %v1150 = vunpack.c.l.b16 %v1097
  %v1151 = vunpack.c.h.b16 %v1097
  %v1152 = vunpack.c.l.b16 %v1098
  %v1153 = vunpack.c.h.b16 %v1098
  %v1154 = vunpack.c.l.b16 %v1099
  %v1155 = vunpack.c.h.b16 %v1099
  %v1156 = vunpack.c.l.b16 %v1100
  %v1157 = vunpack.c.h.b16 %v1100
  %v1158 = vunpack.c.l.b16 %v1101
  %v1159 = vunpack.c.h.b16 %v1101
  %v1160 = vunpack.c.l.b16 %v1102
  %v1161 = vunpack.c.h.b16 %v1102
  %v1162 = vunpack.c.l.b16 %v1103
  %v1163 = vunpack.c.h.b16 %v1103
  %v1164 = vunpack.c.l.b16 %v1104
  %v1165 = vunpack.c.h.b16 %v1104
  %v1166 = vunpack.c.l.b16 %v1105
  %v1167 = vunpack.c.h.b16 %v1105
  %v1168 = vunpack.c.l.b16 %v1106
  %v1169 = vunpack.c.h.b16 %v1106
  %v1170 = vunpack.c.l.b16 %v1107
  %v1171 = vunpack.c.h.b16 %v1107
  %v1172 = vunpack.c.l.b16 %v1108
  %v1173 = vunpack.c.h.b16 %v1108
  %v1174 = vpack.c.b16 %v1144, %v1142
  %v1175 = vpack.c.b16 %v1145, %v1143
  %v1176 = vpack.c.b16 %v1148, %v1146
  %v1177 = vpack.c.b16 %v1149, %v1147
  %v1178 = vpack.c.b16 %v1152, %v1150
  %v1179 = vpack.c.b16 %v1153, %v1151
  %v1180 = vpack.c.b16 %v1156, %v1154
  %v1181 = vpack.c.b16 %v1157, %v1155
  %v1182 = vpack.c.b16 %v1160, %v1158
  %v1183 = vpack.c.b16 %v1161, %v1159
  %v1184 = vpack.c.b16 %v1164, %v1162
  %v1185 = vpack.c.b16 %v1165, %v1163
  %v1186 = vpack.c.b16 %v1168, %v1166
  %v1187 = vpack.c.b16 %v1169, %v1167
  %v1188 = vpack.c.b16 %v1172, %v1170
  %v1189 = vpack.c.b16 %v1173, %v1171
  %v1221 = vunpack.c.l.b16 %v1069
  %v1222 = vunpack.c.l.b16 %v1070
  %v1223 = vunpack.c.l.b16 %v1071
  %v1224 = vunpack.c.l.b16 %v1072
  %v1225 = vunpack.c.l.b16 %v1073
  %v1226 = vunpack.c.l.b16 %v1074
  %v1227 = vunpack.c.l.b16 %v1075
  %v1228 = vunpack.c.l.b16 %v1076
  %v1229 = vunpack.c.l.b16 %v1077
  %v1230 = vunpack.c.l.b16 %v1078
  %v1231 = vunpack.c.l.b16 %v1079
  %v1232 = vunpack.c.l.b16 %v1080
  %v1233 = vunpack.c.l.b16 %v1081
  %v1234 = vunpack.c.l.b16 %v1082
  %v1235 = vunpack.c.l.b16 %v1083
  %v1236 = vunpack.c.l.b16 %v1084
  %v1237 = vunpack.c.l.b16 %v1085
  %v1238 = vunpack.c.l.b16 %v1086
  %v1239 = vunpack.c.l.b16 %v1087
  %v1240 = vunpack.c.l.b16 %v1088
  %v1241 = vunpack.c.l.b16 %v1089
  %v1242 = vunpack.c.l.b16 %v1090
  %v1243 = vunpack.c.l.b16 %v1091
  %v1244 = vpack.c.b16 %v1222, %v1221
  %v1245 = vpack.c.b16 %v1224, %v1223
  %v1246 = vpack.c.b16 %v1226, %v1225
  %v1247 = vpack.c.b16 %v1228, %v1227
  %v1248 = vpack.c.b16 %v1230, %v1229
  %v1249 = vpack.c.b16 %v1232, %v1231
  %v1250 = vpack.c.b16 %v1234, %v1233
  %v1251 = vpack.c.b16 %v1236, %v1235
  %v1252 = vpack.c.b16 %v1238, %v1237
  %v1253 = vpack.c.b16 %v1240, %v1239
  %v1254 = vpack.c.b16 %v1242, %v1241
  %v1255 = vpack.c.b16 %v1243, %v1243
  %v1268 = vsel %vm291, %v1175, 0
  %v1271 = vsel %vm291, %v1177, 0
  %v1274 = vsel %vm291, %v1179, 0
  %v1277 = vsel %vm291, %v1181, 0
  %v1280 = vsel %vm291, %v1183, 0
  %v1283 = vsel %vm291, %v1185, 0
  %v1286 = vsel %vm291, %v1187, 0
  %v1289 = vsel %vm291, %v1189, 0
  %v1292 = vsel %vm316, %v1255, 0
  %1294 = vmatprep.subr.bf16.mxu0 0
  %1295 = vmatpush1.bf16.msra.mxu0 %v1244
  %1296 = vmatprep.subr.bf16.mxu0 0
  %1297 = vmatpush1.bf16.msra.mxu0 %v1245
  %1298 = vmatprep.subr.bf16.mxu0 0
  %1299 = vmatpush1.bf16.msra.mxu0 %v1246
  %1300 = vmatprep.subr.bf16.mxu0 0
  %1301 = vmatpush1.bf16.msra.mxu0 %v1247
  %1302 = vmatprep.subr.bf16.mxu0 0
  %1303 = vmatpush1.bf16.msra.mxu0 %v1248
  %1304 = vmatprep.subr.bf16.mxu0 0
  %1305 = vmatpush1.bf16.msra.mxu0 %v1249
  %1306 = vmatprep.subr.bf16.mxu0 0
  %1307 = vmatpush1.bf16.msra.mxu0 %v1250
  %1308 = vmatprep.subr.bf16.mxu0 0
  %1309 = vmatpush1.bf16.msra.mxu0 %v1251
  %1310 = vmatprep.subr.bf16.mxu0 0
  %1311 = vmatpush1.bf16.msra.mxu0 %v1252
  %1312 = vmatprep.subr.bf16.mxu0 0
  %1313 = vmatpush1.bf16.msra.mxu0 %v1253
  %1314 = vmatprep.subr.bf16.mxu0 0
  %1315 = vmatpush1.bf16.msra.mxu0 %v1254
  %1316 = vmatprep.subr.bf16.mxu0 0
  %1317 = vmatpush1.bf16.msra.mxu0 %v1292
  %1318 = vmatprep.subr.bf16.mxu0 0
  %1319 = vmatpush1.bf16.msra.mxu0 0
  %1320 = vmatprep.subr.bf16.mxu0 0
  %1321 = vmatpush1.bf16.msra.mxu0 0
  %1322 = vmatprep.subr.bf16.mxu0 0
  %1323 = vmatpush1.bf16.msra.mxu0 0
  %1324 = vmatprep.subr.bf16.mxu0 0
  %1325 = vmatpush1.bf16.msra.mxu0 0
  %1326 = vmatprep.mubr.bf16.mxu0 %v1268
  %1327 = vmatmul.mubr.bf16.gmra.mrb[0].mxu0 %v1174
  %v1328 = vpop.f32.mrb[0].mxu0
  %v1329 = vadd.f32 0.0, %v1328
  %v1330 = vpop.f32.mrb[0].mxu0
  %v1331 = vpop.f32.mrb[0].mxu0
  %v1332 = vadd.f32 0.0, %v1331
  %v1333 = vpop.f32.mrb[0].mxu0
  %1334 = vmatprep.mubr.bf16.mxu0 %v1271
  %1335 = vmatmul.mubr.bf16.gmra.mrb[0].mxu0 %v1176
  %v1336 = vpop.f32.mrb[0].mxu0
  %v1337 = vadd.f32 0.0, %v1336
  %v1338 = vpop.f32.mrb[0].mxu0
  %v1339 = vpop.f32.mrb[0].mxu0
  %v1340 = vadd.f32 0.0, %v1339
  %v1341 = vpop.f32.mrb[0].mxu0
  %1342 = vmatprep.mubr.bf16.mxu0 %v1274
  %1343 = vmatmul.mubr.bf16.gmra.mrb[0].mxu0 %v1178
  %v1344 = vpop.f32.mrb[0].mxu0
  %v1345 = vadd.f32 0.0, %v1344
  %v1346 = vpop.f32.mrb[0].mxu0
  %v1347 = vpop.f32.mrb[0].mxu0
  %v1348 = vadd.f32 0.0, %v1347
  %v1349 = vpop.f32.mrb[0].mxu0
  %1350 = vmatprep.mubr.bf16.mxu0 %v1277
  %1351 = vmatmul.mubr.bf16.gmra.mrb[0].mxu0 %v1180
  %v1352 = vpop.f32.mrb[0].mxu0
  %v1353 = vadd.f32 0.0, %v1352
  %v1354 = vpop.f32.mrb[0].mxu0
  %v1355 = vpop.f32.mrb[0].mxu0
  %v1356 = vadd.f32 0.0, %v1355
  %v1357 = vpop.f32.mrb[0].mxu0
  %1358 = vmatprep.mubr.bf16.mxu0 %v1280
  %1359 = vmatmul.mubr.bf16.gmra.mrb[0].mxu0 %v1182
  %v1360 = vpop.f32.mrb[0].mxu0
  %v1361 = vadd.f32 0.0, %v1360
  %v1362 = vpop.f32.mrb[0].mxu0
  %v1363 = vpop.f32.mrb[0].mxu0
  %v1364 = vadd.f32 0.0, %v1363
  %v1365 = vpop.f32.mrb[0].mxu0
  %1366 = vmatprep.mubr.bf16.mxu0 %v1283
  %1367 = vmatmul.mubr.bf16.gmra.mrb[0].mxu0 %v1184
  %v1368 = vpop.f32.mrb[0].mxu0
  %v1369 = vadd.f32 0.0, %v1368
  %v1370 = vpop.f32.mrb[0].mxu0
  %v1371 = vpop.f32.mrb[0].mxu0
  %v1372 = vadd.f32 0.0, %v1371
  %v1373 = vpop.f32.mrb[0].mxu0
  %1374 = vmatprep.mubr.bf16.mxu0 %v1286
  %1375 = vmatmul.mubr.bf16.gmra.mrb[0].mxu0 %v1186
  %v1376 = vpop.f32.mrb[0].mxu0
  %v1377 = vadd.f32 0.0, %v1376
  %v1378 = vpop.f32.mrb[0].mxu0
  %v1379 = vpop.f32.mrb[0].mxu0
  %v1380 = vadd.f32 0.0, %v1379
  %v1381 = vpop.f32.mrb[0].mxu0
  %1382 = vmatprep.mubr.bf16.mxu0 %v1289
  %1383 = vmatmul.mubr.bf16.gmra.mrb[0].mxu0 %v1188
  %v1384 = vpop.f32.mrb[0].mxu0
  %v1385 = vadd.f32 0.0, %v1384
  %v1386 = vpop.f32.mrb[0].mxu0
  %v1387 = vpop.f32.mrb[0].mxu0
  %v1388 = vadd.f32 0.0, %v1387
  %v1389 = vpop.f32.mrb[0].mxu0
  %1390 = vdwg.mxu0
  %v1391 = vadd.f32 %v620, %v1329
  %v1392 = vadd.f32 %v623, %v1332
  %v1393 = vadd.f32 %v628, %v1337
  %v1394 = vadd.f32 %v631, %v1340
  %v1395 = vadd.f32 %v636, %v1345
  %v1396 = vadd.f32 %v639, %v1348
  %v1397 = vadd.f32 %v644, %v1353
  %v1398 = vadd.f32 %v647, %v1356
  %v1399 = vadd.f32 %v652, %v1361
  %v1400 = vadd.f32 %v655, %v1364
  %v1401 = vadd.f32 %v660, %v1369
  %v1402 = vadd.f32 %v663, %v1372
  %v1403 = vadd.f32 %v668, %v1377
  %v1404 = vadd.f32 %v671, %v1380
  %v1405 = vadd.f32 %v676, %v1385
  %v1406 = vadd.f32 %v679, %v1388
  %v1423 = vunpack.c.l.b16 %v1110
  %v1424 = vunpack.c.h.b16 %v1110
  %v1425 = vunpack.c.l.b16 %v1111
  %v1426 = vunpack.c.h.b16 %v1111
  %v1427 = vunpack.c.l.b16 %v1112
  %v1428 = vunpack.c.h.b16 %v1112
  %v1429 = vunpack.c.l.b16 %v1113
  %v1430 = vunpack.c.h.b16 %v1113
  %v1431 = vunpack.c.l.b16 %v1114
  %v1432 = vunpack.c.h.b16 %v1114
  %v1433 = vunpack.c.l.b16 %v1115
  %v1434 = vunpack.c.h.b16 %v1115
  %v1435 = vunpack.c.l.b16 %v1116
  %v1436 = vunpack.c.h.b16 %v1116
  %v1437 = vunpack.c.l.b16 %v1117
  %v1438 = vunpack.c.h.b16 %v1117
  %v1439 = vunpack.c.l.b16 %v1118
  %v1440 = vunpack.c.h.b16 %v1118
  %v1441 = vunpack.c.l.b16 %v1119
  %v1442 = vunpack.c.h.b16 %v1119
  %v1443 = vunpack.c.l.b16 %v1120
  %v1444 = vunpack.c.h.b16 %v1120
  %v1445 = vunpack.c.l.b16 %v1121
  %v1446 = vunpack.c.h.b16 %v1121
  %v1447 = vunpack.c.l.b16 %v1122
  %v1448 = vunpack.c.h.b16 %v1122
  %v1449 = vunpack.c.l.b16 %v1123
  %v1450 = vunpack.c.h.b16 %v1123
  %v1451 = vunpack.c.l.b16 %v1124
  %v1452 = vunpack.c.h.b16 %v1124
  %v1453 = vunpack.c.l.b16 %v1125
  %v1454 = vunpack.c.h.b16 %v1125
  %v1455 = vpack.c.b16 %v1425, %v1423
  %v1456 = vpack.c.b16 %v1426, %v1424
  %v1457 = vpack.c.b16 %v1429, %v1427
  %v1458 = vpack.c.b16 %v1430, %v1428
  %v1459 = vpack.c.b16 %v1433, %v1431
  %v1460 = vpack.c.b16 %v1434, %v1432
  %v1461 = vpack.c.b16 %v1437, %v1435
  %v1462 = vpack.c.b16 %v1438, %v1436
  %v1463 = vpack.c.b16 %v1441, %v1439
  %v1464 = vpack.c.b16 %v1442, %v1440
  %v1465 = vpack.c.b16 %v1445, %v1443
  %v1466 = vpack.c.b16 %v1446, %v1444
  %v1467 = vpack.c.b16 %v1449, %v1447
  %v1468 = vpack.c.b16 %v1450, %v1448
  %v1469 = vpack.c.b16 %v1453, %v1451
  %v1470 = vpack.c.b16 %v1454, %v1452
  %v1480 = vsel %vm291, %v1456, 0
  %v1483 = vsel %vm291, %v1458, 0
  %v1486 = vsel %vm291, %v1460, 0
  %v1489 = vsel %vm291, %v1462, 0
  %v1492 = vsel %vm291, %v1464, 0
  %v1495 = vsel %vm291, %v1466, 0
  %v1498 = vsel %vm291, %v1468, 0
  %v1501 = vsel %vm291, %v1470, 0
  %1503 = vmatprep.subr.bf16.mxu0 0
  %1504 = vmatpush1.bf16.msra.mxu0 %v1244
  %1505 = vmatprep.subr.bf16.mxu0 0
  %1506 = vmatpush1.bf16.msra.mxu0 %v1245
  %1507 = vmatprep.subr.bf16.mxu0 0
  %1508 = vmatpush1.bf16.msra.mxu0 %v1246
  %1509 = vmatprep.subr.bf16.mxu0 0
  %1510 = vmatpush1.bf16.msra.mxu0 %v1247
  %1511 = vmatprep.subr.bf16.mxu0 0
  %1512 = vmatpush1.bf16.msra.mxu0 %v1248
  %1513 = vmatprep.subr.bf16.mxu0 0
  %1514 = vmatpush1.bf16.msra.mxu0 %v1249
  %1515 = vmatprep.subr.bf16.mxu0 0
  %1516 = vmatpush1.bf16.msra.mxu0 %v1250
  %1517 = vmatprep.subr.bf16.mxu0 0
  %1518 = vmatpush1.bf16.msra.mxu0 %v1251
  %1519 = vmatprep.subr.bf16.mxu0 0
  %1520 = vmatpush1.bf16.msra.mxu0 %v1252
  %1521 = vmatprep.subr.bf16.mxu0 0
  %1522 = vmatpush1.bf16.msra.mxu0 %v1253
  %1523 = vmatprep.subr.bf16.mxu0 0
  %1524 = vmatpush1.bf16.msra.mxu0 %v1254
  %1525 = vmatprep.subr.bf16.mxu0 0
  %1526 = vmatpush1.bf16.msra.mxu0 %v1292
  %1527 = vmatprep.subr.bf16.mxu0 0
  %1528 = vmatpush1.bf16.msra.mxu0 0
  %1529 = vmatprep.subr.bf16.mxu0 0
  %1530 = vmatpush1.bf16.msra.mxu0 0
  %1531 = vmatprep.subr.bf16.mxu0 0
  %1532 = vmatpush1.bf16.msra.mxu0 0
  %1533 = vmatprep.subr.bf16.mxu0 0
  %1534 = vmatpush1.bf16.msra.mxu0 0
  %1535 = vmatprep.mubr.bf16.mxu0 %v1480
  %1536 = vmatmul.mubr.bf16.gmra.mrb[0].mxu0 %v1455
  %v1537 = vpop.f32.mrb[0].mxu0
  %v1538 = vadd.f32 0.0, %v1537
  %v1539 = vpop.f32.mrb[0].mxu0
  %v1540 = vpop.f32.mrb[0].mxu0
  %v1541 = vadd.f32 0.0, %v1540
  %v1542 = vpop.f32.mrb[0].mxu0
  %1543 = vmatprep.mubr.bf16.mxu0 %v1483
  %1544 = vmatmul.mubr.bf16.gmra.mrb[0].mxu0 %v1457
  %v1545 = vpop.f32.mrb[0].mxu0
  %v1546 = vadd.f32 0.0, %v1545
  %v1547 = vpop.f32.mrb[0].mxu0
  %v1548 = vpop.f32.mrb[0].mxu0
  %v1549 = vadd.f32 0.0, %v1548
  %v1550 = vpop.f32.mrb[0].mxu0
  %1551 = vmatprep.mubr.bf16.mxu0 %v1486
  %1552 = vmatmul.mubr.bf16.gmra.mrb[0].mxu0 %v1459
  %v1553 = vpop.f32.mrb[0].mxu0
  %v1554 = vadd.f32 0.0, %v1553
  %v1555 = vpop.f32.mrb[0].mxu0
  %v1556 = vpop.f32.mrb[0].mxu0
  %v1557 = vadd.f32 0.0, %v1556
  %v1558 = vpop.f32.mrb[0].mxu0
  %1559 = vmatprep.mubr.bf16.mxu0 %v1489
  %1560 = vmatmul.mubr.bf16.gmra.mrb[0].mxu0 %v1461
  %v1561 = vpop.f32.mrb[0].mxu0
  %v1562 = vadd.f32 0.0, %v1561
  %v1563 = vpop.f32.mrb[0].mxu0
  %v1564 = vpop.f32.mrb[0].mxu0
  %v1565 = vadd.f32 0.0, %v1564
  %v1566 = vpop.f32.mrb[0].mxu0
  %1567 = vmatprep.mubr.bf16.mxu0 %v1492
  %1568 = vmatmul.mubr.bf16.gmra.mrb[0].mxu0 %v1463
  %v1569 = vpop.f32.mrb[0].mxu0
  %v1570 = vadd.f32 0.0, %v1569
  %v1571 = vpop.f32.mrb[0].mxu0
  %v1572 = vpop.f32.mrb[0].mxu0
  %v1573 = vadd.f32 0.0, %v1572
  %v1574 = vpop.f32.mrb[0].mxu0
  %1575 = vmatprep.mubr.bf16.mxu0 %v1495
  %1576 = vmatmul.mubr.bf16.gmra.mrb[0].mxu0 %v1465
  %v1577 = vpop.f32.mrb[0].mxu0
  %v1578 = vadd.f32 0.0, %v1577
  %v1579 = vpop.f32.mrb[0].mxu0
  %v1580 = vpop.f32.mrb[0].mxu0
  %v1581 = vadd.f32 0.0, %v1580
  %v1582 = vpop.f32.mrb[0].mxu0
  %1583 = vmatprep.mubr.bf16.mxu0 %v1498
  %1584 = vmatmul.mubr.bf16.gmra.mrb[0].mxu0 %v1467
  %v1585 = vpop.f32.mrb[0].mxu0
  %v1586 = vadd.f32 0.0, %v1585
  %v1587 = vpop.f32.mrb[0].mxu0
  %v1588 = vpop.f32.mrb[0].mxu0
  %v1589 = vadd.f32 0.0, %v1588
  %v1590 = vpop.f32.mrb[0].mxu0
  %1591 = vmatprep.mubr.bf16.mxu0 %v1501
  %1592 = vmatmul.mubr.bf16.gmra.mrb[0].mxu0 %v1469
  %v1593 = vpop.f32.mrb[0].mxu0
  %v1594 = vadd.f32 0.0, %v1593
  %v1595 = vpop.f32.mrb[0].mxu0
  %v1596 = vpop.f32.mrb[0].mxu0
  %v1597 = vadd.f32 0.0, %v1596
  %v1598 = vpop.f32.mrb[0].mxu0
  %1599 = vdwg.mxu0
  %v1600 = vadd.f32 %v1006, %v1538
  %v1601 = vadd.f32 %v1009, %v1541
  %v1602 = vadd.f32 %v1014, %v1546
  %v1603 = vadd.f32 %v1017, %v1549
  %v1604 = vadd.f32 %v1022, %v1554
  %v1605 = vadd.f32 %v1025, %v1557
  %v1606 = vadd.f32 %v1030, %v1562
  %v1607 = vadd.f32 %v1033, %v1565
  %v1608 = vadd.f32 %v1038, %v1570
  %v1609 = vadd.f32 %v1041, %v1573
  %v1610 = vadd.f32 %v1046, %v1578
  %v1611 = vadd.f32 %v1049, %v1581
  %v1612 = vadd.f32 %v1054, %v1586
  %v1613 = vadd.f32 %v1057, %v1589
  %v1614 = vadd.f32 %v1062, %v1594
  %v1615 = vadd.f32 %v1065, %v1597
  %s1616 = scalar_lea.vmem %s1, 276
  %v1617 = vld [vmem:[%s1616] sm:$0xf]
  %v1618 = vld [vmem:[%s1616 + $0x4] sm:$0xf]
  %v1619 = vld [vmem:[%s1616 + $0x8] sm:$0xf]
  %v1620 = vld [vmem:[%s1616 + $0xc] sm:$0xf]
  %v1621 = vld [vmem:[%s1616 + $0x10] sm:$0xf]
  %v1622 = vld [vmem:[%s1616 + $0x14] sm:$0xf]
  %v1623 = vld [vmem:[%s1616 + $0x18] sm:$0xf]
  %v1624 = vld [vmem:[%s1616 + $0x1c] sm:$0xf]
  %v1625 = vld [vmem:[%s1616 + $0x20] sm:$0xf]
  %v1626 = vld [vmem:[%s1616 + $0x24] sm:$0xf]
  %v1627 = vld [vmem:[%s1616 + $0x28] sm:$0xf]
  %v1628 = vld [vmem:[%s1616 + $0x2c] sm:$0xf]
  %v1629 = vld [vmem:[%s1616 + $0x30] sm:$0xf]
  %v1630 = vld [vmem:[%s1616 + $0x34] sm:$0xf]
  %v1631 = vld [vmem:[%s1616 + $0x38] sm:$0xf]
  %v1632 = vld [vmem:[%s1616 + $0x3c] sm:$0xf]
  %v1633 = vld [vmem:[%s1616 + $0x40] sm:$0xf]
  %v1634 = vld [vmem:[%s1616 + $0x44] sm:$0xf]
  %v1635 = vld [vmem:[%s1616 + $0x48] sm:$0xf]
  %v1636 = vld [vmem:[%s1616 + $0x4c] sm:$0xf]
  %v1637 = vld [vmem:[%s1616 + $0x50] sm:$0xf]
  %v1638 = vld [vmem:[%s1616 + $0x54] sm:$0xf]
  %v1639 = vld [vmem:[%s1616 + $0x58] sm:$0x3]
  %s1640 = scalar_lea.vmem %s0, 48
  %v1641 = vld [vmem:[%s1640] sm:$0xff]
  %v1642 = vld [vmem:[%s1640 + $0x80] sm:$0xff]
  %v1643 = vld [vmem:[%s1640 + $0x100] sm:$0xff]
  %v1644 = vld [vmem:[%s1640 + $0x180] sm:$0xff]
  %v1645 = vld [vmem:[%s1640 + $0x200] sm:$0xff]
  %v1646 = vld [vmem:[%s1640 + $0x280] sm:$0xff]
  %v1647 = vld [vmem:[%s1640 + $0x300] sm:$0xff]
  %v1648 = vld [vmem:[%s1640 + $0x380] sm:$0xff]
  %v1649 = vld [vmem:[%s1640 + $0x400] sm:$0xff]
  %v1650 = vld [vmem:[%s1640 + $0x480] sm:$0xff]
  %v1651 = vld [vmem:[%s1640 + $0x500] sm:$0xff]
  %v1652 = vld [vmem:[%s1640 + $0x580] sm:$0xff]
  %v1653 = vld [vmem:[%s1640 + $0x600] sm:$0xff]
  %v1654 = vld [vmem:[%s1640 + $0x680] sm:$0xff]
  %v1655 = vld [vmem:[%s1640 + $0x700] sm:$0xff]
  %v1656 = vld [vmem:[%s1640 + $0x780] sm:$0xff]
  %s1657 = scalar_lea.vmem %s0, 112
  %v1658 = vld [vmem:[%s1657] sm:$0xff]
  %v1659 = vld [vmem:[%s1657 + $0x80] sm:$0xff]
  %v1660 = vld [vmem:[%s1657 + $0x100] sm:$0xff]
  %v1661 = vld [vmem:[%s1657 + $0x180] sm:$0xff]
  %v1662 = vld [vmem:[%s1657 + $0x200] sm:$0xff]
  %v1663 = vld [vmem:[%s1657 + $0x280] sm:$0xff]
  %v1664 = vld [vmem:[%s1657 + $0x300] sm:$0xff]
  %v1665 = vld [vmem:[%s1657 + $0x380] sm:$0xff]
  %v1666 = vld [vmem:[%s1657 + $0x400] sm:$0xff]
  %v1667 = vld [vmem:[%s1657 + $0x480] sm:$0xff]
  %v1668 = vld [vmem:[%s1657 + $0x500] sm:$0xff]
  %v1669 = vld [vmem:[%s1657 + $0x580] sm:$0xff]
  %v1670 = vld [vmem:[%s1657 + $0x600] sm:$0xff]
  %v1671 = vld [vmem:[%s1657 + $0x680] sm:$0xff]
  %v1672 = vld [vmem:[%s1657 + $0x700] sm:$0xff]
  %v1673 = vld [vmem:[%s1657 + $0x780] sm:$0xff]
  %v1690 = vunpack.c.l.b16 %v1641
  %v1691 = vunpack.c.h.b16 %v1641
  %v1692 = vunpack.c.l.b16 %v1642
  %v1693 = vunpack.c.h.b16 %v1642
  %v1694 = vunpack.c.l.b16 %v1643
  %v1695 = vunpack.c.h.b16 %v1643
  %v1696 = vunpack.c.l.b16 %v1644
  %v1697 = vunpack.c.h.b16 %v1644
  %v1698 = vunpack.c.l.b16 %v1645
  %v1699 = vunpack.c.h.b16 %v1645
  %v1700 = vunpack.c.l.b16 %v1646
  %v1701 = vunpack.c.h.b16 %v1646
  %v1702 = vunpack.c.l.b16 %v1647
  %v1703 = vunpack.c.h.b16 %v1647
  %v1704 = vunpack.c.l.b16 %v1648
  %v1705 = vunpack.c.h.b16 %v1648
  %v1706 = vunpack.c.l.b16 %v1649
  %v1707 = vunpack.c.h.b16 %v1649
  %v1708 = vunpack.c.l.b16 %v1650
  %v1709 = vunpack.c.h.b16 %v1650
  %v1710 = vunpack.c.l.b16 %v1651
  %v1711 = vunpack.c.h.b16 %v1651
  %v1712 = vunpack.c.l.b16 %v1652
  %v1713 = vunpack.c.h.b16 %v1652
  %v1714 = vunpack.c.l.b16 %v1653
  %v1715 = vunpack.c.h.b16 %v1653
  %v1716 = vunpack.c.l.b16 %v1654
  %v1717 = vunpack.c.h.b16 %v1654
  %v1718 = vunpack.c.l.b16 %v1655
  %v1719 = vunpack.c.h.b16 %v1655
  %v1720 = vunpack.c.l.b16 %v1656
  %v1721 = vunpack.c.h.b16 %v1656
  %v1722 = vpack.c.b16 %v1692, %v1690
  %v1723 = vpack.c.b16 %v1693, %v1691
  %v1724 = vpack.c.b16 %v1696, %v1694
  %v1725 = vpack.c.b16 %v1697, %v1695
  %v1726 = vpack.c.b16 %v1700, %v1698
  %v1727 = vpack.c.b16 %v1701, %v1699
  %v1728 = vpack.c.b16 %v1704, %v1702
  %v1729 = vpack.c.b16 %v1705, %v1703
  %v1730 = vpack.c.b16 %v1708, %v1706
  %v1731 = vpack.c.b16 %v1709, %v1707
  %v1732 = vpack.c.b16 %v1712, %v1710
  %v1733 = vpack.c.b16 %v1713, %v1711
  %v1734 = vpack.c.b16 %v1716, %v1714
  %v1735 = vpack.c.b16 %v1717, %v1715
  %v1736 = vpack.c.b16 %v1720, %v1718
  %v1737 = vpack.c.b16 %v1721, %v1719
  %v1769 = vunpack.c.l.b16 %v1617
  %v1770 = vunpack.c.l.b16 %v1618
  %v1771 = vunpack.c.l.b16 %v1619
  %v1772 = vunpack.c.l.b16 %v1620
  %v1773 = vunpack.c.l.b16 %v1621
  %v1774 = vunpack.c.l.b16 %v1622
  %v1775 = vunpack.c.l.b16 %v1623
  %v1776 = vunpack.c.l.b16 %v1624
  %v1777 = vunpack.c.l.b16 %v1625
  %v1778 = vunpack.c.l.b16 %v1626
  %v1779 = vunpack.c.l.b16 %v1627
  %v1780 = vunpack.c.l.b16 %v1628
  %v1781 = vunpack.c.l.b16 %v1629
  %v1782 = vunpack.c.l.b16 %v1630
  %v1783 = vunpack.c.l.b16 %v1631
  %v1784 = vunpack.c.l.b16 %v1632
  %v1785 = vunpack.c.l.b16 %v1633
  %v1786 = vunpack.c.l.b16 %v1634
  %v1787 = vunpack.c.l.b16 %v1635
  %v1788 = vunpack.c.l.b16 %v1636
  %v1789 = vunpack.c.l.b16 %v1637
  %v1790 = vunpack.c.l.b16 %v1638
  %v1791 = vunpack.c.l.b16 %v1639
  %v1792 = vpack.c.b16 %v1770, %v1769
  %v1793 = vpack.c.b16 %v1772, %v1771
  %v1794 = vpack.c.b16 %v1774, %v1773
  %v1795 = vpack.c.b16 %v1776, %v1775
  %v1796 = vpack.c.b16 %v1778, %v1777
  %v1797 = vpack.c.b16 %v1780, %v1779
  %v1798 = vpack.c.b16 %v1782, %v1781
  %v1799 = vpack.c.b16 %v1784, %v1783
  %v1800 = vpack.c.b16 %v1786, %v1785
  %v1801 = vpack.c.b16 %v1788, %v1787
  %v1802 = vpack.c.b16 %v1790, %v1789
  %v1803 = vpack.c.b16 %v1791, %v1791
  %v1816 = vsel %vm291, %v1723, 0
  %v1819 = vsel %vm291, %v1725, 0
  %v1822 = vsel %vm291, %v1727, 0
  %v1825 = vsel %vm291, %v1729, 0
  %v1828 = vsel %vm291, %v1731, 0
  %v1831 = vsel %vm291, %v1733, 0
  %v1834 = vsel %vm291, %v1735, 0
  %v1837 = vsel %vm291, %v1737, 0
  %v1840 = vsel %vm316, %v1803, 0
  %1842 = vmatprep.subr.bf16.mxu0 0
  %1843 = vmatpush1.bf16.msra.mxu0 %v1792
  %1844 = vmatprep.subr.bf16.mxu0 0
  %1845 = vmatpush1.bf16.msra.mxu0 %v1793
  %1846 = vmatprep.subr.bf16.mxu0 0
  %1847 = vmatpush1.bf16.msra.mxu0 %v1794
  %1848 = vmatprep.subr.bf16.mxu0 0
  %1849 = vmatpush1.bf16.msra.mxu0 %v1795
  %1850 = vmatprep.subr.bf16.mxu0 0
  %1851 = vmatpush1.bf16.msra.mxu0 %v1796
  %1852 = vmatprep.subr.bf16.mxu0 0
  %1853 = vmatpush1.bf16.msra.mxu0 %v1797
  %1854 = vmatprep.subr.bf16.mxu0 0
  %1855 = vmatpush1.bf16.msra.mxu0 %v1798
  %1856 = vmatprep.subr.bf16.mxu0 0
  %1857 = vmatpush1.bf16.msra.mxu0 %v1799
  %1858 = vmatprep.subr.bf16.mxu0 0
  %1859 = vmatpush1.bf16.msra.mxu0 %v1800
  %1860 = vmatprep.subr.bf16.mxu0 0
  %1861 = vmatpush1.bf16.msra.mxu0 %v1801
  %1862 = vmatprep.subr.bf16.mxu0 0
  %1863 = vmatpush1.bf16.msra.mxu0 %v1802
  %1864 = vmatprep.subr.bf16.mxu0 0
  %1865 = vmatpush1.bf16.msra.mxu0 %v1840
  %1866 = vmatprep.subr.bf16.mxu0 0
  %1867 = vmatpush1.bf16.msra.mxu0 0
  %1868 = vmatprep.subr.bf16.mxu0 0
  %1869 = vmatpush1.bf16.msra.mxu0 0
  %1870 = vmatprep.subr.bf16.mxu0 0
  %1871 = vmatpush1.bf16.msra.mxu0 0
  %1872 = vmatprep.subr.bf16.mxu0 0
  %1873 = vmatpush1.bf16.msra.mxu0 0
  %1874 = vmatprep.mubr.bf16.mxu0 %v1816
  %1875 = vmatmul.mubr.bf16.gmra.mrb[0].mxu0 %v1722
  %v1876 = vpop.f32.mrb[0].mxu0
  %v1877 = vadd.f32 0.0, %v1876
  %v1878 = vpop.f32.mrb[0].mxu0
  %v1879 = vpop.f32.mrb[0].mxu0
  %v1880 = vadd.f32 0.0, %v1879
  %v1881 = vpop.f32.mrb[0].mxu0
  %1882 = vmatprep.mubr.bf16.mxu0 %v1819
  %1883 = vmatmul.mubr.bf16.gmra.mrb[0].mxu0 %v1724
  %v1884 = vpop.f32.mrb[0].mxu0
  %v1885 = vadd.f32 0.0, %v1884
  %v1886 = vpop.f32.mrb[0].mxu0
  %v1887 = vpop.f32.mrb[0].mxu0
  %v1888 = vadd.f32 0.0, %v1887
  %v1889 = vpop.f32.mrb[0].mxu0
  %1890 = vmatprep.mubr.bf16.mxu0 %v1822
  %1891 = vmatmul.mubr.bf16.gmra.mrb[0].mxu0 %v1726
  %v1892 = vpop.f32.mrb[0].mxu0
  %v1893 = vadd.f32 0.0, %v1892
  %v1894 = vpop.f32.mrb[0].mxu0
  %v1895 = vpop.f32.mrb[0].mxu0
  %v1896 = vadd.f32 0.0, %v1895
  %v1897 = vpop.f32.mrb[0].mxu0
  %1898 = vmatprep.mubr.bf16.mxu0 %v1825
  %1899 = vmatmul.mubr.bf16.gmra.mrb[0].mxu0 %v1728
  %v1900 = vpop.f32.mrb[0].mxu0
  %v1901 = vadd.f32 0.0, %v1900
  %v1902 = vpop.f32.mrb[0].mxu0
  %v1903 = vpop.f32.mrb[0].mxu0
  %v1904 = vadd.f32 0.0, %v1903
  %v1905 = vpop.f32.mrb[0].mxu0
  %1906 = vmatprep.mubr.bf16.mxu0 %v1828
  %1907 = vmatmul.mubr.bf16.gmra.mrb[0].mxu0 %v1730
  %v1908 = vpop.f32.mrb[0].mxu0
  %v1909 = vadd.f32 0.0, %v1908
  %v1910 = vpop.f32.mrb[0].mxu0
  %v1911 = vpop.f32.mrb[0].mxu0
  %v1912 = vadd.f32 0.0, %v1911
  %v1913 = vpop.f32.mrb[0].mxu0
  %1914 = vmatprep.mubr.bf16.mxu0 %v1831
  %1915 = vmatmul.mubr.bf16.gmra.mrb[0].mxu0 %v1732
  %v1916 = vpop.f32.mrb[0].mxu0
  %v1917 = vadd.f32 0.0, %v1916
  %v1918 = vpop.f32.mrb[0].mxu0
  %v1919 = vpop.f32.mrb[0].mxu0
  %v1920 = vadd.f32 0.0, %v1919
  %v1921 = vpop.f32.mrb[0].mxu0
  %1922 = vmatprep.mubr.bf16.mxu0 %v1834
  %1923 = vmatmul.mubr.bf16.gmra.mrb[0].mxu0 %v1734
  %v1924 = vpop.f32.mrb[0].mxu0
  %v1925 = vadd.f32 0.0, %v1924
  %v1926 = vpop.f32.mrb[0].mxu0
  %v1927 = vpop.f32.mrb[0].mxu0
  %v1928 = vadd.f32 0.0, %v1927
  %v1929 = vpop.f32.mrb[0].mxu0
  %1930 = vmatprep.mubr.bf16.mxu0 %v1837
  %1931 = vmatmul.mubr.bf16.gmra.mrb[0].mxu0 %v1736
  %v1932 = vpop.f32.mrb[0].mxu0
  %v1933 = vadd.f32 0.0, %v1932
  %v1934 = vpop.f32.mrb[0].mxu0
  %v1935 = vpop.f32.mrb[0].mxu0
  %v1936 = vadd.f32 0.0, %v1935
  %v1937 = vpop.f32.mrb[0].mxu0
  %1938 = vdwg.mxu0
  %v1939 = vadd.f32 %v1391, %v1877
  %v1940 = vadd.f32 %v1392, %v1880
  %v1941 = vadd.f32 %v1393, %v1885
  %v1942 = vadd.f32 %v1394, %v1888
  %v1943 = vadd.f32 %v1395, %v1893
  %v1944 = vadd.f32 %v1396, %v1896
  %v1945 = vadd.f32 %v1397, %v1901
  %v1946 = vadd.f32 %v1398, %v1904
  %v1947 = vadd.f32 %v1399, %v1909
  %v1948 = vadd.f32 %v1400, %v1912
  %v1949 = vadd.f32 %v1401, %v1917
  %v1950 = vadd.f32 %v1402, %v1920
  %v1951 = vadd.f32 %v1403, %v1925
  %v1952 = vadd.f32 %v1404, %v1928
  %v1953 = vadd.f32 %v1405, %v1933
  %v1954 = vadd.f32 %v1406, %v1936
  %v1971 = vunpack.c.l.b16 %v1658
  %v1972 = vunpack.c.h.b16 %v1658
  %v1973 = vunpack.c.l.b16 %v1659
  %v1974 = vunpack.c.h.b16 %v1659
  %v1975 = vunpack.c.l.b16 %v1660
  %v1976 = vunpack.c.h.b16 %v1660
  %v1977 = vunpack.c.l.b16 %v1661
  %v1978 = vunpack.c.h.b16 %v1661
  %v1979 = vunpack.c.l.b16 %v1662
  %v1980 = vunpack.c.h.b16 %v1662
  %v1981 = vunpack.c.l.b16 %v1663
  %v1982 = vunpack.c.h.b16 %v1663
  %v1983 = vunpack.c.l.b16 %v1664
  %v1984 = vunpack.c.h.b16 %v1664
  %v1985 = vunpack.c.l.b16 %v1665
  %v1986 = vunpack.c.h.b16 %v1665
  %v1987 = vunpack.c.l.b16 %v1666
  %v1988 = vunpack.c.h.b16 %v1666
  %v1989 = vunpack.c.l.b16 %v1667
  %v1990 = vunpack.c.h.b16 %v1667
  %v1991 = vunpack.c.l.b16 %v1668
  %v1992 = vunpack.c.h.b16 %v1668
  %v1993 = vunpack.c.l.b16 %v1669
  %v1994 = vunpack.c.h.b16 %v1669
  %v1995 = vunpack.c.l.b16 %v1670
  %v1996 = vunpack.c.h.b16 %v1670
  %v1997 = vunpack.c.l.b16 %v1671
  %v1998 = vunpack.c.h.b16 %v1671
  %v1999 = vunpack.c.l.b16 %v1672
  %v2000 = vunpack.c.h.b16 %v1672
  %v2001 = vunpack.c.l.b16 %v1673
  %v2002 = vunpack.c.h.b16 %v1673
  %v2003 = vpack.c.b16 %v1973, %v1971
  %v2004 = vpack.c.b16 %v1974, %v1972
  %v2005 = vpack.c.b16 %v1977, %v1975
  %v2006 = vpack.c.b16 %v1978, %v1976
  %v2007 = vpack.c.b16 %v1981, %v1979
  %v2008 = vpack.c.b16 %v1982, %v1980
  %v2009 = vpack.c.b16 %v1985, %v1983
  %v2010 = vpack.c.b16 %v1986, %v1984
  %v2011 = vpack.c.b16 %v1989, %v1987
  %v2012 = vpack.c.b16 %v1990, %v1988
  %v2013 = vpack.c.b16 %v1993, %v1991
  %v2014 = vpack.c.b16 %v1994, %v1992
  %v2015 = vpack.c.b16 %v1997, %v1995
  %v2016 = vpack.c.b16 %v1998, %v1996
  %v2017 = vpack.c.b16 %v2001, %v1999
  %v2018 = vpack.c.b16 %v2002, %v2000
  %v2028 = vsel %vm291, %v2004, 0
  %v2031 = vsel %vm291, %v2006, 0
  %v2034 = vsel %vm291, %v2008, 0
  %v2037 = vsel %vm291, %v2010, 0
  %v2040 = vsel %vm291, %v2012, 0
  %v2043 = vsel %vm291, %v2014, 0
  %v2046 = vsel %vm291, %v2016, 0
  %v2049 = vsel %vm291, %v2018, 0
  %2051 = vmatprep.subr.bf16.mxu0 0
  %2052 = vmatpush1.bf16.msra.mxu0 %v1792
  %2053 = vmatprep.subr.bf16.mxu0 0
  %2054 = vmatpush1.bf16.msra.mxu0 %v1793
  %2055 = vmatprep.subr.bf16.mxu0 0
  %2056 = vmatpush1.bf16.msra.mxu0 %v1794
  %2057 = vmatprep.subr.bf16.mxu0 0
  %2058 = vmatpush1.bf16.msra.mxu0 %v1795
  %2059 = vmatprep.subr.bf16.mxu0 0
  %2060 = vmatpush1.bf16.msra.mxu0 %v1796
  %2061 = vmatprep.subr.bf16.mxu0 0
  %2062 = vmatpush1.bf16.msra.mxu0 %v1797
  %2063 = vmatprep.subr.bf16.mxu0 0
  %2064 = vmatpush1.bf16.msra.mxu0 %v1798
  %2065 = vmatprep.subr.bf16.mxu0 0
  %2066 = vmatpush1.bf16.msra.mxu0 %v1799
  %2067 = vmatprep.subr.bf16.mxu0 0
  %2068 = vmatpush1.bf16.msra.mxu0 %v1800
  %2069 = vmatprep.subr.bf16.mxu0 0
  %2070 = vmatpush1.bf16.msra.mxu0 %v1801
  %2071 = vmatprep.subr.bf16.mxu0 0
  %2072 = vmatpush1.bf16.msra.mxu0 %v1802
  %2073 = vmatprep.subr.bf16.mxu0 0
  %2074 = vmatpush1.bf16.msra.mxu0 %v1840
  %2075 = vmatprep.subr.bf16.mxu0 0
  %2076 = vmatpush1.bf16.msra.mxu0 0
  %2077 = vmatprep.subr.bf16.mxu0 0
  %2078 = vmatpush1.bf16.msra.mxu0 0
  %2079 = vmatprep.subr.bf16.mxu0 0
  %2080 = vmatpush1.bf16.msra.mxu0 0
  %2081 = vmatprep.subr.bf16.mxu0 0
  %2082 = vmatpush1.bf16.msra.mxu0 0
  %2083 = vmatprep.mubr.bf16.mxu0 %v2028
  %2084 = vmatmul.mubr.bf16.gmra.mrb[0].mxu0 %v2003
  %v2085 = vpop.f32.mrb[0].mxu0
  %v2086 = vadd.f32 0.0, %v2085
  %v2087 = vpop.f32.mrb[0].mxu0
  %v2088 = vpop.f32.mrb[0].mxu0
  %v2089 = vadd.f32 0.0, %v2088
  %v2090 = vpop.f32.mrb[0].mxu0
  %2091 = vmatprep.mubr.bf16.mxu0 %v2031
  %2092 = vmatmul.mubr.bf16.gmra.mrb[0].mxu0 %v2005
  %v2093 = vpop.f32.mrb[0].mxu0
  %v2094 = vadd.f32 0.0, %v2093
  %v2095 = vpop.f32.mrb[0].mxu0
  %v2096 = vpop.f32.mrb[0].mxu0
  %v2097 = vadd.f32 0.0, %v2096
  %v2098 = vpop.f32.mrb[0].mxu0
  %2099 = vmatprep.mubr.bf16.mxu0 %v2034
  %2100 = vmatmul.mubr.bf16.gmra.mrb[0].mxu0 %v2007
  %v2101 = vpop.f32.mrb[0].mxu0
  %v2102 = vadd.f32 0.0, %v2101
  %v2103 = vpop.f32.mrb[0].mxu0
  %v2104 = vpop.f32.mrb[0].mxu0
  %v2105 = vadd.f32 0.0, %v2104
  %v2106 = vpop.f32.mrb[0].mxu0
  %2107 = vmatprep.mubr.bf16.mxu0 %v2037
  %2108 = vmatmul.mubr.bf16.gmra.mrb[0].mxu0 %v2009
  %v2109 = vpop.f32.mrb[0].mxu0
  %v2110 = vadd.f32 0.0, %v2109
  %v2111 = vpop.f32.mrb[0].mxu0
  %v2112 = vpop.f32.mrb[0].mxu0
  %v2113 = vadd.f32 0.0, %v2112
  %v2114 = vpop.f32.mrb[0].mxu0
  %2115 = vmatprep.mubr.bf16.mxu0 %v2040
  %2116 = vmatmul.mubr.bf16.gmra.mrb[0].mxu0 %v2011
  %v2117 = vpop.f32.mrb[0].mxu0
  %v2118 = vadd.f32 0.0, %v2117
  %v2119 = vpop.f32.mrb[0].mxu0
  %v2120 = vpop.f32.mrb[0].mxu0
  %v2121 = vadd.f32 0.0, %v2120
  %v2122 = vpop.f32.mrb[0].mxu0
  %2123 = vmatprep.mubr.bf16.mxu0 %v2043
  %2124 = vmatmul.mubr.bf16.gmra.mrb[0].mxu0 %v2013
  %v2125 = vpop.f32.mrb[0].mxu0
  %v2126 = vadd.f32 0.0, %v2125
  %v2127 = vpop.f32.mrb[0].mxu0
  %v2128 = vpop.f32.mrb[0].mxu0
  %v2129 = vadd.f32 0.0, %v2128
  %v2130 = vpop.f32.mrb[0].mxu0
  %2131 = vmatprep.mubr.bf16.mxu0 %v2046
  %2132 = vmatmul.mubr.bf16.gmra.mrb[0].mxu0 %v2015
  %v2133 = vpop.f32.mrb[0].mxu0
  %v2134 = vadd.f32 0.0, %v2133
  %v2135 = vpop.f32.mrb[0].mxu0
  %v2136 = vpop.f32.mrb[0].mxu0
  %v2137 = vadd.f32 0.0, %v2136
  %v2138 = vpop.f32.mrb[0].mxu0
  %2139 = vmatprep.mubr.bf16.mxu0 %v2049
  %2140 = vmatmul.mubr.bf16.gmra.mrb[0].mxu0 %v2017
  %v2141 = vpop.f32.mrb[0].mxu0
  %v2142 = vadd.f32 0.0, %v2141
  %v2143 = vpop.f32.mrb[0].mxu0
  %v2144 = vpop.f32.mrb[0].mxu0
  %v2145 = vadd.f32 0.0, %v2144
  %v2146 = vpop.f32.mrb[0].mxu0
  %2147 = vdwg.mxu0
  %v2148 = vadd.f32 %v1600, %v2086
  %v2149 = vadd.f32 %v1601, %v2089
  %v2150 = vadd.f32 %v1602, %v2094
  %v2151 = vadd.f32 %v1603, %v2097
  %v2152 = vadd.f32 %v1604, %v2102
  %v2153 = vadd.f32 %v1605, %v2105
  %v2154 = vadd.f32 %v1606, %v2110
  %v2155 = vadd.f32 %v1607, %v2113
  %v2156 = vadd.f32 %v1608, %v2118
  %v2157 = vadd.f32 %v1609, %v2121
  %v2158 = vadd.f32 %v1610, %v2126
  %v2159 = vadd.f32 %v1611, %v2129
  %v2160 = vadd.f32 %v1612, %v2134
  %v2161 = vadd.f32 %v1613, %v2137
  %v2162 = vadd.f32 %v1614, %v2142
  %v2163 = vadd.f32 %v1615, %v2145
  %s2164 = scalar_lea.vmem %s1, 368
  %v2165 = vld [vmem:[%s2164] sm:$0xf]
  %v2166 = vld [vmem:[%s2164 + $0x4] sm:$0xf]
  %v2167 = vld [vmem:[%s2164 + $0x8] sm:$0xf]
  %v2168 = vld [vmem:[%s2164 + $0xc] sm:$0xf]
  %v2169 = vld [vmem:[%s2164 + $0x10] sm:$0xf]
  %v2170 = vld [vmem:[%s2164 + $0x14] sm:$0xf]
  %v2171 = vld [vmem:[%s2164 + $0x18] sm:$0xf]
  %v2172 = vld [vmem:[%s2164 + $0x1c] sm:$0xf]
  %v2173 = vld [vmem:[%s2164 + $0x20] sm:$0xf]
  %v2174 = vld [vmem:[%s2164 + $0x24] sm:$0xf]
  %v2175 = vld [vmem:[%s2164 + $0x28] sm:$0xf]
  %v2176 = vld [vmem:[%s2164 + $0x2c] sm:$0xf]
  %v2177 = vld [vmem:[%s2164 + $0x30] sm:$0xf]
  %v2178 = vld [vmem:[%s2164 + $0x34] sm:$0xf]
  %v2179 = vld [vmem:[%s2164 + $0x38] sm:$0xf]
  %v2180 = vld [vmem:[%s2164 + $0x3c] sm:$0xf]
  %v2181 = vld [vmem:[%s2164 + $0x40] sm:$0xf]
  %v2182 = vld [vmem:[%s2164 + $0x44] sm:$0xf]
  %v2183 = vld [vmem:[%s2164 + $0x48] sm:$0xf]
  %v2184 = vld [vmem:[%s2164 + $0x4c] sm:$0xf]
  %v2185 = vld [vmem:[%s2164 + $0x50] sm:$0xf]
  %v2186 = vld [vmem:[%s2164 + $0x54] sm:$0xf]
  %v2187 = vld [vmem:[%s2164 + $0x58] sm:$0x3]
  %v2188 = vld [vmem:[%s0] sm:$0xff]
  %v2189 = vld [vmem:[%s0 + $0x8] sm:$0x11]
  %v2190 = vld [vmem:[%s0 + $0x80] sm:$0xff]
  %v2191 = vld [vmem:[%s0 + $0x88] sm:$0x11]
  %v2192 = vld [vmem:[%s0 + $0x100] sm:$0xff]
  %v2193 = vld [vmem:[%s0 + $0x108] sm:$0x11]
  %v2194 = vld [vmem:[%s0 + $0x180] sm:$0xff]
  %v2195 = vld [vmem:[%s0 + $0x188] sm:$0x11]
  %v2196 = vld [vmem:[%s0 + $0x200] sm:$0xff]
  %v2197 = vld [vmem:[%s0 + $0x208] sm:$0x11]
  %v2198 = vld [vmem:[%s0 + $0x280] sm:$0xff]
  %v2199 = vld [vmem:[%s0 + $0x288] sm:$0x11]
  %v2200 = vld [vmem:[%s0 + $0x300] sm:$0xff]
  %v2201 = vld [vmem:[%s0 + $0x308] sm:$0x11]
  %v2202 = vld [vmem:[%s0 + $0x380] sm:$0xff]
  %v2203 = vld [vmem:[%s0 + $0x388] sm:$0x11]
  %v2204 = vld [vmem:[%s0 + $0x400] sm:$0xff]
  %v2205 = vld [vmem:[%s0 + $0x408] sm:$0x11]
  %v2206 = vld [vmem:[%s0 + $0x480] sm:$0xff]
  %v2207 = vld [vmem:[%s0 + $0x488] sm:$0x11]
  %v2208 = vld [vmem:[%s0 + $0x500] sm:$0xff]
  %v2209 = vld [vmem:[%s0 + $0x508] sm:$0x11]
  %v2210 = vld [vmem:[%s0 + $0x580] sm:$0xff]
  %v2211 = vld [vmem:[%s0 + $0x588] sm:$0x11]
  %v2212 = vld [vmem:[%s0 + $0x600] sm:$0xff]
  %v2213 = vld [vmem:[%s0 + $0x608] sm:$0x11]
  %v2214 = vld [vmem:[%s0 + $0x680] sm:$0xff]
  %v2215 = vld [vmem:[%s0 + $0x688] sm:$0x11]
  %v2216 = vld [vmem:[%s0 + $0x700] sm:$0xff]
  %v2217 = vld [vmem:[%s0 + $0x708] sm:$0x11]
  %v2218 = vld [vmem:[%s0 + $0x780] sm:$0xff]
  %v2219 = vld [vmem:[%s0 + $0x788] sm:$0x11]
  %vm2220 = vsmask.f32 3328
  %vm2221 = vsmask.f32 7440
  %vm2222 = vmor %vm2220, %vm2221
  %v2224 = vshrl.u32 %v2188, 16
  %v2226 = vrot.slane %v2224, 4
  %v2227 = vshll.u32 %v2188, 16
  %v2229 = vrot.slane %v2227, 5
  %v2230 = vor.u32 %v2226, %v2229
  %v2231 = vrot.slane %v2230, 4
  %v2233 = vshll.u32 %v2189, 16
  %v2235 = vrot.slane %v2233, 5
  %v2236 = vsel %vm2222, %v2231, %v2235
  %v2238 = vshrl.u32 %v2190, 16
  %v2240 = vrot.slane %v2238, 4
  %v2241 = vshll.u32 %v2190, 16
  %v2243 = vrot.slane %v2241, 5
  %v2244 = vor.u32 %v2240, %v2243
  %v2245 = vrot.slane %v2244, 4
  %v2247 = vshll.u32 %v2191, 16
  %v2249 = vrot.slane %v2247, 5
  %v2250 = vsel %vm2222, %v2245, %v2249
  %v2252 = vshrl.u32 %v2192, 16
  %v2254 = vrot.slane %v2252, 4
  %v2255 = vshll.u32 %v2192, 16
  %v2257 = vrot.slane %v2255, 5
  %v2258 = vor.u32 %v2254, %v2257
  %v2259 = vrot.slane %v2258, 4
  %v2261 = vshll.u32 %v2193, 16
  %v2263 = vrot.slane %v2261, 5
  %v2264 = vsel %vm2222, %v2259, %v2263
  %v2266 = vshrl.u32 %v2194, 16
  %v2268 = vrot.slane %v2266, 4
  %v2269 = vshll.u32 %v2194, 16
  %v2271 = vrot.slane %v2269, 5
  %v2272 = vor.u32 %v2268, %v2271
  %v2273 = vrot.slane %v2272, 4
  %v2275 = vshll.u32 %v2195, 16
  %v2277 = vrot.slane %v2275, 5
  %v2278 = vsel %vm2222, %v2273, %v2277
  %v2280 = vshrl.u32 %v2196, 16
  %v2282 = vrot.slane %v2280, 4
  %v2283 = vshll.u32 %v2196, 16
  %v2285 = vrot.slane %v2283, 5
  %v2286 = vor.u32 %v2282, %v2285
  %v2287 = vrot.slane %v2286, 4
  %v2289 = vshll.u32 %v2197, 16
  %v2291 = vrot.slane %v2289, 5
  %v2292 = vsel %vm2222, %v2287, %v2291
  %v2294 = vshrl.u32 %v2198, 16
  %v2296 = vrot.slane %v2294, 4
  %v2297 = vshll.u32 %v2198, 16
  %v2299 = vrot.slane %v2297, 5
  %v2300 = vor.u32 %v2296, %v2299
  %v2301 = vrot.slane %v2300, 4
  %v2303 = vshll.u32 %v2199, 16
  %v2305 = vrot.slane %v2303, 5
  %v2306 = vsel %vm2222, %v2301, %v2305
  %v2308 = vshrl.u32 %v2200, 16
  %v2310 = vrot.slane %v2308, 4
  %v2311 = vshll.u32 %v2200, 16
  %v2313 = vrot.slane %v2311, 5
  %v2314 = vor.u32 %v2310, %v2313
  %v2315 = vrot.slane %v2314, 4
  %v2317 = vshll.u32 %v2201, 16
  %v2319 = vrot.slane %v2317, 5
  %v2320 = vsel %vm2222, %v2315, %v2319
  %v2322 = vshrl.u32 %v2202, 16
  %v2324 = vrot.slane %v2322, 4
  %v2325 = vshll.u32 %v2202, 16
  %v2327 = vrot.slane %v2325, 5
  %v2328 = vor.u32 %v2324, %v2327
  %v2329 = vrot.slane %v2328, 4
  %v2331 = vshll.u32 %v2203, 16
  %v2333 = vrot.slane %v2331, 5
  %v2334 = vsel %vm2222, %v2329, %v2333
  %v2336 = vshrl.u32 %v2204, 16
  %v2338 = vrot.slane %v2336, 4
  %v2339 = vshll.u32 %v2204, 16
  %v2341 = vrot.slane %v2339, 5
  %v2342 = vor.u32 %v2338, %v2341
  %v2343 = vrot.slane %v2342, 4
  %v2345 = vshll.u32 %v2205, 16
  %v2347 = vrot.slane %v2345, 5
  %v2348 = vsel %vm2222, %v2343, %v2347
  %v2350 = vshrl.u32 %v2206, 16
  %v2352 = vrot.slane %v2350, 4
  %v2353 = vshll.u32 %v2206, 16
  %v2355 = vrot.slane %v2353, 5
  %v2356 = vor.u32 %v2352, %v2355
  %v2357 = vrot.slane %v2356, 4
  %v2359 = vshll.u32 %v2207, 16
  %v2361 = vrot.slane %v2359, 5
  %v2362 = vsel %vm2222, %v2357, %v2361
  %v2364 = vshrl.u32 %v2208, 16
  %v2366 = vrot.slane %v2364, 4
  %v2367 = vshll.u32 %v2208, 16
  %v2369 = vrot.slane %v2367, 5
  %v2370 = vor.u32 %v2366, %v2369
  %v2371 = vrot.slane %v2370, 4
  %v2373 = vshll.u32 %v2209, 16
  %v2375 = vrot.slane %v2373, 5
  %v2376 = vsel %vm2222, %v2371, %v2375
  %v2378 = vshrl.u32 %v2210, 16
  %v2380 = vrot.slane %v2378, 4
  %v2381 = vshll.u32 %v2210, 16
  %v2383 = vrot.slane %v2381, 5
  %v2384 = vor.u32 %v2380, %v2383
  %v2385 = vrot.slane %v2384, 4
  %v2387 = vshll.u32 %v2211, 16
  %v2389 = vrot.slane %v2387, 5
  %v2390 = vsel %vm2222, %v2385, %v2389
  %v2392 = vshrl.u32 %v2212, 16
  %v2394 = vrot.slane %v2392, 4
  %v2395 = vshll.u32 %v2212, 16
  %v2397 = vrot.slane %v2395, 5
  %v2398 = vor.u32 %v2394, %v2397
  %v2399 = vrot.slane %v2398, 4
  %v2401 = vshll.u32 %v2213, 16
  %v2403 = vrot.slane %v2401, 5
  %v2404 = vsel %vm2222, %v2399, %v2403
  %v2406 = vshrl.u32 %v2214, 16
  %v2408 = vrot.slane %v2406, 4
  %v2409 = vshll.u32 %v2214, 16
  %v2411 = vrot.slane %v2409, 5
  %v2412 = vor.u32 %v2408, %v2411
  %v2413 = vrot.slane %v2412, 4
  %v2415 = vshll.u32 %v2215, 16
  %v2417 = vrot.slane %v2415, 5
  %v2418 = vsel %vm2222, %v2413, %v2417
  %v2420 = vshrl.u32 %v2216, 16
  %v2422 = vrot.slane %v2420, 4
  %v2423 = vshll.u32 %v2216, 16
  %v2425 = vrot.slane %v2423, 5
  %v2426 = vor.u32 %v2422, %v2425
  %v2427 = vrot.slane %v2426, 4
  %v2429 = vshll.u32 %v2217, 16
  %v2431 = vrot.slane %v2429, 5
  %v2432 = vsel %vm2222, %v2427, %v2431
  %v2434 = vshrl.u32 %v2218, 16
  %v2436 = vrot.slane %v2434, 4
  %v2437 = vshll.u32 %v2218, 16
  %v2439 = vrot.slane %v2437, 5
  %v2440 = vor.u32 %v2436, %v2439
  %v2441 = vrot.slane %v2440, 4
  %v2443 = vshll.u32 %v2219, 16
  %v2445 = vrot.slane %v2443, 5
  %v2446 = vsel %vm2222, %v2441, %v2445
  %v2470 = vunpack.c.l.b16 %v2165
  %v2471 = vunpack.c.l.b16 %v2166
  %v2472 = vunpack.c.l.b16 %v2167
  %v2473 = vunpack.c.l.b16 %v2168
  %v2474 = vunpack.c.l.b16 %v2169
  %v2475 = vunpack.c.l.b16 %v2170
  %v2476 = vunpack.c.l.b16 %v2171
  %v2477 = vunpack.c.l.b16 %v2172
  %v2478 = vunpack.c.l.b16 %v2173
  %v2479 = vunpack.c.l.b16 %v2174
  %v2480 = vunpack.c.l.b16 %v2175
  %v2481 = vunpack.c.l.b16 %v2176
  %v2482 = vunpack.c.l.b16 %v2177
  %v2483 = vunpack.c.l.b16 %v2178
  %v2484 = vunpack.c.l.b16 %v2179
  %v2485 = vunpack.c.l.b16 %v2180
  %v2486 = vunpack.c.l.b16 %v2181
  %v2487 = vunpack.c.l.b16 %v2182
  %v2488 = vunpack.c.l.b16 %v2183
  %v2489 = vunpack.c.l.b16 %v2184
  %v2490 = vunpack.c.l.b16 %v2185
  %v2491 = vunpack.c.l.b16 %v2186
  %v2492 = vunpack.c.l.b16 %v2187
  %v2493 = vpack.c.b16 %v2471, %v2470
  %v2494 = vpack.c.b16 %v2473, %v2472
  %v2495 = vpack.c.b16 %v2475, %v2474
  %v2496 = vpack.c.b16 %v2477, %v2476
  %v2497 = vpack.c.b16 %v2479, %v2478
  %v2498 = vpack.c.b16 %v2481, %v2480
  %v2499 = vpack.c.b16 %v2483, %v2482
  %v2500 = vpack.c.b16 %v2485, %v2484
  %v2501 = vpack.c.b16 %v2487, %v2486
  %v2502 = vpack.c.b16 %v2489, %v2488
  %v2503 = vpack.c.b16 %v2491, %v2490
  %v2504 = vpack.c.b16 %v2492, %v2492
  %v2517 = vsel %vm316, %v2504, 0
  %2519 = vmatprep.subr.bf16.mxu0 0
  %2520 = vmatpush1.bf16.msra.mxu0 %v2493
  %2521 = vmatprep.subr.bf16.mxu0 0
  %2522 = vmatpush1.bf16.msra.mxu0 %v2494
  %2523 = vmatprep.subr.bf16.mxu0 0
  %2524 = vmatpush1.bf16.msra.mxu0 %v2495
  %2525 = vmatprep.subr.bf16.mxu0 0
  %2526 = vmatpush1.bf16.msra.mxu0 %v2496
  %2527 = vmatprep.subr.bf16.mxu0 0
  %2528 = vmatpush1.bf16.msra.mxu0 %v2497
  %2529 = vmatprep.subr.bf16.mxu0 0
  %2530 = vmatpush1.bf16.msra.mxu0 %v2498
  %2531 = vmatprep.subr.bf16.mxu0 0
  %2532 = vmatpush1.bf16.msra.mxu0 %v2499
  %2533 = vmatprep.subr.bf16.mxu0 0
  %2534 = vmatpush1.bf16.msra.mxu0 %v2500
  %2535 = vmatprep.subr.bf16.mxu0 0
  %2536 = vmatpush1.bf16.msra.mxu0 %v2501
  %2537 = vmatprep.subr.bf16.mxu0 0
  %2538 = vmatpush1.bf16.msra.mxu0 %v2502
  %2539 = vmatprep.subr.bf16.mxu0 0
  %2540 = vmatpush1.bf16.msra.mxu0 %v2503
  %2541 = vmatprep.subr.bf16.mxu0 0
  %2542 = vmatpush1.bf16.msra.mxu0 %v2517
  %2543 = vmatprep.subr.bf16.mxu0 0
  %2544 = vmatpush1.bf16.msra.mxu0 0
  %2545 = vmatprep.subr.bf16.mxu0 0
  %2546 = vmatpush1.bf16.msra.mxu0 0
  %2547 = vmatprep.subr.bf16.mxu0 0
  %2548 = vmatpush1.bf16.msra.mxu0 0
  %2549 = vmatprep.subr.bf16.mxu0 0
  %2550 = vmatpush1.bf16.msra.mxu0 0
  %2551 = vmatprep.mubr.bf16.mxu0 %v948
  %2552 = vmatmul.mubr.bf16.gmra.mrb[0].mxu0 %v923
  %v2553 = vpop.f32.mrb[0].mxu0
  %v2554 = vadd.f32 0.0, %v2553
  %v2555 = vpop.f32.mrb[0].mxu0
  %v2556 = vpop.f32.mrb[0].mxu0
  %v2557 = vadd.f32 0.0, %v2556
  %v2558 = vpop.f32.mrb[0].mxu0
  %2559 = vmatprep.mubr.bf16.mxu0 %v951
  %2560 = vmatmul.mubr.bf16.gmra.mrb[0].mxu0 %v925
  %v2561 = vpop.f32.mrb[0].mxu0
  %v2562 = vadd.f32 0.0, %v2561
  %v2563 = vpop.f32.mrb[0].mxu0
  %v2564 = vpop.f32.mrb[0].mxu0
  %v2565 = vadd.f32 0.0, %v2564
  %v2566 = vpop.f32.mrb[0].mxu0
  %2567 = vmatprep.mubr.bf16.mxu0 %v954
  %2568 = vmatmul.mubr.bf16.gmra.mrb[0].mxu0 %v927
  %v2569 = vpop.f32.mrb[0].mxu0
  %v2570 = vadd.f32 0.0, %v2569
  %v2571 = vpop.f32.mrb[0].mxu0
  %v2572 = vpop.f32.mrb[0].mxu0
  %v2573 = vadd.f32 0.0, %v2572
  %v2574 = vpop.f32.mrb[0].mxu0
  %2575 = vmatprep.mubr.bf16.mxu0 %v957
  %2576 = vmatmul.mubr.bf16.gmra.mrb[0].mxu0 %v929
  %v2577 = vpop.f32.mrb[0].mxu0
  %v2578 = vadd.f32 0.0, %v2577
  %v2579 = vpop.f32.mrb[0].mxu0
  %v2580 = vpop.f32.mrb[0].mxu0
  %v2581 = vadd.f32 0.0, %v2580
  %v2582 = vpop.f32.mrb[0].mxu0
  %2583 = vmatprep.mubr.bf16.mxu0 %v960
  %2584 = vmatmul.mubr.bf16.gmra.mrb[0].mxu0 %v931
  %v2585 = vpop.f32.mrb[0].mxu0
  %v2586 = vadd.f32 0.0, %v2585
  %v2587 = vpop.f32.mrb[0].mxu0
  %v2588 = vpop.f32.mrb[0].mxu0
  %v2589 = vadd.f32 0.0, %v2588
  %v2590 = vpop.f32.mrb[0].mxu0
  %2591 = vmatprep.mubr.bf16.mxu0 %v963
  %2592 = vmatmul.mubr.bf16.gmra.mrb[0].mxu0 %v933
  %v2593 = vpop.f32.mrb[0].mxu0
  %v2594 = vadd.f32 0.0, %v2593
  %v2595 = vpop.f32.mrb[0].mxu0
  %v2596 = vpop.f32.mrb[0].mxu0
  %v2597 = vadd.f32 0.0, %v2596
  %v2598 = vpop.f32.mrb[0].mxu0
  %2599 = vmatprep.mubr.bf16.mxu0 %v966
  %2600 = vmatmul.mubr.bf16.gmra.mrb[0].mxu0 %v935
  %v2601 = vpop.f32.mrb[0].mxu0
  %v2602 = vadd.f32 0.0, %v2601
  %v2603 = vpop.f32.mrb[0].mxu0
  %v2604 = vpop.f32.mrb[0].mxu0
  %v2605 = vadd.f32 0.0, %v2604
  %v2606 = vpop.f32.mrb[0].mxu0
  %2607 = vmatprep.mubr.bf16.mxu0 %v969
  %2608 = vmatmul.mubr.bf16.gmra.mrb[0].mxu0 %v937
  %v2609 = vpop.f32.mrb[0].mxu0
  %v2610 = vadd.f32 0.0, %v2609
  %v2611 = vpop.f32.mrb[0].mxu0
  %v2612 = vpop.f32.mrb[0].mxu0
  %v2613 = vadd.f32 0.0, %v2612
  %v2614 = vpop.f32.mrb[0].mxu0
  %2615 = vdwg.mxu0
  %v2616 = vadd.f32 %v1939, %v2554
  %v2617 = vadd.f32 %v1940, %v2557
  %v2618 = vadd.f32 %v1941, %v2562
  %v2619 = vadd.f32 %v1942, %v2565
  %v2620 = vadd.f32 %v1943, %v2570
  %v2621 = vadd.f32 %v1944, %v2573
  %v2622 = vadd.f32 %v1945, %v2578
  %v2623 = vadd.f32 %v1946, %v2581
  %v2624 = vadd.f32 %v1947, %v2586
  %v2625 = vadd.f32 %v1948, %v2589
  %v2626 = vadd.f32 %v1949, %v2594
  %v2627 = vadd.f32 %v1950, %v2597
  %v2628 = vadd.f32 %v1951, %v2602
  %v2629 = vadd.f32 %v1952, %v2605
  %v2630 = vadd.f32 %v1953, %v2610
  %v2631 = vadd.f32 %v1954, %v2613
  %v2632 = vunpack.c.l.b16 %v2236
  %v2633 = vunpack.c.h.b16 %v2236
  %v2634 = vunpack.c.l.b16 %v2250
  %v2635 = vunpack.c.h.b16 %v2250
  %v2636 = vunpack.c.l.b16 %v2264
  %v2637 = vunpack.c.h.b16 %v2264
  %v2638 = vunpack.c.l.b16 %v2278
  %v2639 = vunpack.c.h.b16 %v2278
  %v2640 = vunpack.c.l.b16 %v2292
  %v2641 = vunpack.c.h.b16 %v2292
  %v2642 = vunpack.c.l.b16 %v2306
  %v2643 = vunpack.c.h.b16 %v2306
  %v2644 = vunpack.c.l.b16 %v2320
  %v2645 = vunpack.c.h.b16 %v2320
  %v2646 = vunpack.c.l.b16 %v2334
  %v2647 = vunpack.c.h.b16 %v2334
  %v2648 = vunpack.c.l.b16 %v2348
  %v2649 = vunpack.c.h.b16 %v2348
  %v2650 = vunpack.c.l.b16 %v2362
  %v2651 = vunpack.c.h.b16 %v2362
  %v2652 = vunpack.c.l.b16 %v2376
  %v2653 = vunpack.c.h.b16 %v2376
  %v2654 = vunpack.c.l.b16 %v2390
  %v2655 = vunpack.c.h.b16 %v2390
  %v2656 = vunpack.c.l.b16 %v2404
  %v2657 = vunpack.c.h.b16 %v2404
  %v2658 = vunpack.c.l.b16 %v2418
  %v2659 = vunpack.c.h.b16 %v2418
  %v2660 = vunpack.c.l.b16 %v2432
  %v2661 = vunpack.c.h.b16 %v2432
  %v2662 = vunpack.c.l.b16 %v2446
  %v2663 = vunpack.c.h.b16 %v2446
  %v2664 = vpack.c.b16 %v2634, %v2632
  %v2665 = vpack.c.b16 %v2635, %v2633
  %v2666 = vpack.c.b16 %v2638, %v2636
  %v2667 = vpack.c.b16 %v2639, %v2637
  %v2668 = vpack.c.b16 %v2642, %v2640
  %v2669 = vpack.c.b16 %v2643, %v2641
  %v2670 = vpack.c.b16 %v2646, %v2644
  %v2671 = vpack.c.b16 %v2647, %v2645
  %v2672 = vpack.c.b16 %v2650, %v2648
  %v2673 = vpack.c.b16 %v2651, %v2649
  %v2674 = vpack.c.b16 %v2654, %v2652
  %v2675 = vpack.c.b16 %v2655, %v2653
  %v2676 = vpack.c.b16 %v2658, %v2656
  %v2677 = vpack.c.b16 %v2659, %v2657
  %v2678 = vpack.c.b16 %v2662, %v2660
  %v2679 = vpack.c.b16 %v2663, %v2661
  %v2689 = vsel %vm291, %v2665, 0
  %v2692 = vsel %vm291, %v2667, 0
  %v2695 = vsel %vm291, %v2669, 0
  %v2698 = vsel %vm291, %v2671, 0
  %v2701 = vsel %vm291, %v2673, 0
  %v2704 = vsel %vm291, %v2675, 0
  %v2707 = vsel %vm291, %v2677, 0
  %v2710 = vsel %vm291, %v2679, 0
  %2712 = vmatprep.subr.bf16.mxu0 0
  %2713 = vmatpush1.bf16.msra.mxu0 %v2493
  %2714 = vmatprep.subr.bf16.mxu0 0
  %2715 = vmatpush1.bf16.msra.mxu0 %v2494
  %2716 = vmatprep.subr.bf16.mxu0 0
  %2717 = vmatpush1.bf16.msra.mxu0 %v2495
  %2718 = vmatprep.subr.bf16.mxu0 0
  %2719 = vmatpush1.bf16.msra.mxu0 %v2496
  %2720 = vmatprep.subr.bf16.mxu0 0
  %2721 = vmatpush1.bf16.msra.mxu0 %v2497
  %2722 = vmatprep.subr.bf16.mxu0 0
  %2723 = vmatpush1.bf16.msra.mxu0 %v2498
  %2724 = vmatprep.subr.bf16.mxu0 0
  %2725 = vmatpush1.bf16.msra.mxu0 %v2499
  %2726 = vmatprep.subr.bf16.mxu0 0
  %2727 = vmatpush1.bf16.msra.mxu0 %v2500
  %2728 = vmatprep.subr.bf16.mxu0 0
  %2729 = vmatpush1.bf16.msra.mxu0 %v2501
  %2730 = vmatprep.subr.bf16.mxu0 0
  %2731 = vmatpush1.bf16.msra.mxu0 %v2502
  %2732 = vmatprep.subr.bf16.mxu0 0
  %2733 = vmatpush1.bf16.msra.mxu0 %v2503
  %2734 = vmatprep.subr.bf16.mxu0 0
  %2735 = vmatpush1.bf16.msra.mxu0 %v2517
  %2736 = vmatprep.subr.bf16.mxu0 0
  %2737 = vmatpush1.bf16.msra.mxu0 0
  %2738 = vmatprep.subr.bf16.mxu0 0
  %2739 = vmatpush1.bf16.msra.mxu0 0
  %2740 = vmatprep.subr.bf16.mxu0 0
  %2741 = vmatpush1.bf16.msra.mxu0 0
  %2742 = vmatprep.subr.bf16.mxu0 0
  %2743 = vmatpush1.bf16.msra.mxu0 0
  %2744 = vmatprep.mubr.bf16.mxu0 %v2689
  %2745 = vmatmul.mubr.bf16.gmra.mrb[0].mxu0 %v2664
  %v2746 = vpop.f32.mrb[0].mxu0
  %v2747 = vadd.f32 0.0, %v2746
  %v2748 = vpop.f32.mrb[0].mxu0
  %v2749 = vpop.f32.mrb[0].mxu0
  %v2750 = vadd.f32 0.0, %v2749
  %v2751 = vpop.f32.mrb[0].mxu0
  %2752 = vmatprep.mubr.bf16.mxu0 %v2692
  %2753 = vmatmul.mubr.bf16.gmra.mrb[0].mxu0 %v2666
  %v2754 = vpop.f32.mrb[0].mxu0
  %v2755 = vadd.f32 0.0, %v2754
  %v2756 = vpop.f32.mrb[0].mxu0
  %v2757 = vpop.f32.mrb[0].mxu0
  %v2758 = vadd.f32 0.0, %v2757
  %v2759 = vpop.f32.mrb[0].mxu0
  %2760 = vmatprep.mubr.bf16.mxu0 %v2695
  %2761 = vmatmul.mubr.bf16.gmra.mrb[0].mxu0 %v2668
  %v2762 = vpop.f32.mrb[0].mxu0
  %v2763 = vadd.f32 0.0, %v2762
  %v2764 = vpop.f32.mrb[0].mxu0
  %v2765 = vpop.f32.mrb[0].mxu0
  %v2766 = vadd.f32 0.0, %v2765
  %v2767 = vpop.f32.mrb[0].mxu0
  %2768 = vmatprep.mubr.bf16.mxu0 %v2698
  %2769 = vmatmul.mubr.bf16.gmra.mrb[0].mxu0 %v2670
  %v2770 = vpop.f32.mrb[0].mxu0
  %v2771 = vadd.f32 0.0, %v2770
  %v2772 = vpop.f32.mrb[0].mxu0
  %v2773 = vpop.f32.mrb[0].mxu0
  %v2774 = vadd.f32 0.0, %v2773
  %v2775 = vpop.f32.mrb[0].mxu0
  %2776 = vmatprep.mubr.bf16.mxu0 %v2701
  %2777 = vmatmul.mubr.bf16.gmra.mrb[0].mxu0 %v2672
  %v2778 = vpop.f32.mrb[0].mxu0
  %v2779 = vadd.f32 0.0, %v2778
  %v2780 = vpop.f32.mrb[0].mxu0
  %v2781 = vpop.f32.mrb[0].mxu0
  %v2782 = vadd.f32 0.0, %v2781
  %v2783 = vpop.f32.mrb[0].mxu0
  %2784 = vmatprep.mubr.bf16.mxu0 %v2704
  %2785 = vmatmul.mubr.bf16.gmra.mrb[0].mxu0 %v2674
  %v2786 = vpop.f32.mrb[0].mxu0
  %v2787 = vadd.f32 0.0, %v2786
  %v2788 = vpop.f32.mrb[0].mxu0
  %v2789 = vpop.f32.mrb[0].mxu0
  %v2790 = vadd.f32 0.0, %v2789
  %v2791 = vpop.f32.mrb[0].mxu0
  %2792 = vmatprep.mubr.bf16.mxu0 %v2707
  %2793 = vmatmul.mubr.bf16.gmra.mrb[0].mxu0 %v2676
  %v2794 = vpop.f32.mrb[0].mxu0
  %v2795 = vadd.f32 0.0, %v2794
  %v2796 = vpop.f32.mrb[0].mxu0
  %v2797 = vpop.f32.mrb[0].mxu0
  %v2798 = vadd.f32 0.0, %v2797
  %v2799 = vpop.f32.mrb[0].mxu0
  %2800 = vmatprep.mubr.bf16.mxu0 %v2710
  %2801 = vmatmul.mubr.bf16.gmra.mrb[0].mxu0 %v2678
  %v2802 = vpop.f32.mrb[0].mxu0
  %v2803 = vadd.f32 0.0, %v2802
  %v2804 = vpop.f32.mrb[0].mxu0
  %v2805 = vpop.f32.mrb[0].mxu0
  %v2806 = vadd.f32 0.0, %v2805
  %v2807 = vpop.f32.mrb[0].mxu0
  %2808 = vdwg.mxu0
  %v2809 = vadd.f32 %v2148, %v2747
  %v2810 = vadd.f32 %v2149, %v2750
  %v2811 = vadd.f32 %v2150, %v2755
  %v2812 = vadd.f32 %v2151, %v2758
  %v2813 = vadd.f32 %v2152, %v2763
  %v2814 = vadd.f32 %v2153, %v2766
  %v2815 = vadd.f32 %v2154, %v2771
  %v2816 = vadd.f32 %v2155, %v2774
  %v2817 = vadd.f32 %v2156, %v2779
  %v2818 = vadd.f32 %v2157, %v2782
  %v2819 = vadd.f32 %v2158, %v2787
  %v2820 = vadd.f32 %v2159, %v2790
  %v2821 = vadd.f32 %v2160, %v2795
  %v2822 = vadd.f32 %v2161, %v2798
  %v2823 = vadd.f32 %v2162, %v2803
  %v2824 = vadd.f32 %v2163, %v2806
  %s2825 = scalar_lea.vmem %s1, 460
  %v2826 = vld [vmem:[%s2825] sm:$0xf]
  %v2827 = vld [vmem:[%s2825 + $0x4] sm:$0xf]
  %v2828 = vld [vmem:[%s2825 + $0x8] sm:$0xf]
  %v2829 = vld [vmem:[%s2825 + $0xc] sm:$0xf]
  %v2830 = vld [vmem:[%s2825 + $0x10] sm:$0xf]
  %v2831 = vld [vmem:[%s2825 + $0x14] sm:$0xf]
  %v2832 = vld [vmem:[%s2825 + $0x18] sm:$0xf]
  %v2833 = vld [vmem:[%s2825 + $0x1c] sm:$0xf]
  %v2834 = vld [vmem:[%s2825 + $0x20] sm:$0xf]
  %v2835 = vld [vmem:[%s2825 + $0x24] sm:$0xf]
  %v2836 = vld [vmem:[%s2825 + $0x28] sm:$0xf]
  %v2837 = vld [vmem:[%s2825 + $0x2c] sm:$0xf]
  %v2838 = vld [vmem:[%s2825 + $0x30] sm:$0xf]
  %v2839 = vld [vmem:[%s2825 + $0x34] sm:$0xf]
  %v2840 = vld [vmem:[%s2825 + $0x38] sm:$0xf]
  %v2841 = vld [vmem:[%s2825 + $0x3c] sm:$0xf]
  %v2842 = vld [vmem:[%s2825 + $0x40] sm:$0xf]
  %v2843 = vld [vmem:[%s2825 + $0x44] sm:$0xf]
  %v2844 = vld [vmem:[%s2825 + $0x48] sm:$0xf]
  %v2845 = vld [vmem:[%s2825 + $0x4c] sm:$0xf]
  %v2846 = vld [vmem:[%s2825 + $0x50] sm:$0xf]
  %v2847 = vld [vmem:[%s2825 + $0x54] sm:$0xf]
  %v2848 = vld [vmem:[%s2825 + $0x58] sm:$0x3]
  %v2849 = vld [vmem:[%s116] sm:$0xff]
  %v2850 = vld [vmem:[%s116 + $0x8] sm:$0x11]
  %v2851 = vld [vmem:[%s116 + $0x80] sm:$0xff]
  %v2852 = vld [vmem:[%s116 + $0x88] sm:$0x11]
  %v2853 = vld [vmem:[%s116 + $0x100] sm:$0xff]
  %v2854 = vld [vmem:[%s116 + $0x108] sm:$0x11]
  %v2855 = vld [vmem:[%s116 + $0x180] sm:$0xff]
  %v2856 = vld [vmem:[%s116 + $0x188] sm:$0x11]
  %v2857 = vld [vmem:[%s116 + $0x200] sm:$0xff]
  %v2858 = vld [vmem:[%s116 + $0x208] sm:$0x11]
  %v2859 = vld [vmem:[%s116 + $0x280] sm:$0xff]
  %v2860 = vld [vmem:[%s116 + $0x288] sm:$0x11]
  %v2861 = vld [vmem:[%s116 + $0x300] sm:$0xff]
  %v2862 = vld [vmem:[%s116 + $0x308] sm:$0x11]
  %v2863 = vld [vmem:[%s116 + $0x380] sm:$0xff]
  %v2864 = vld [vmem:[%s116 + $0x388] sm:$0x11]
  %v2865 = vld [vmem:[%s116 + $0x400] sm:$0xff]
  %v2866 = vld [vmem:[%s116 + $0x408] sm:$0x11]
  %v2867 = vld [vmem:[%s116 + $0x480] sm:$0xff]
  %v2868 = vld [vmem:[%s116 + $0x488] sm:$0x11]
  %v2869 = vld [vmem:[%s116 + $0x500] sm:$0xff]
  %v2870 = vld [vmem:[%s116 + $0x508] sm:$0x11]
  %v2871 = vld [vmem:[%s116 + $0x580] sm:$0xff]
  %v2872 = vld [vmem:[%s116 + $0x588] sm:$0x11]
  %v2873 = vld [vmem:[%s116 + $0x600] sm:$0xff]
  %v2874 = vld [vmem:[%s116 + $0x608] sm:$0x11]
  %v2875 = vld [vmem:[%s116 + $0x680] sm:$0xff]
  %v2876 = vld [vmem:[%s116 + $0x688] sm:$0x11]
  %v2877 = vld [vmem:[%s116 + $0x700] sm:$0xff]
  %v2878 = vld [vmem:[%s116 + $0x708] sm:$0x11]
  %v2879 = vld [vmem:[%s116 + $0x780] sm:$0xff]
  %v2880 = vld [vmem:[%s116 + $0x788] sm:$0x11]
  %v2882 = vshrl.u32 %v2849, 16
  %v2884 = vrot.slane %v2882, 4
  %v2885 = vshll.u32 %v2849, 16
  %v2887 = vrot.slane %v2885, 5
  %v2888 = vor.u32 %v2884, %v2887
  %v2889 = vrot.slane %v2888, 4
  %v2891 = vshll.u32 %v2850, 16
  %v2893 = vrot.slane %v2891, 5
  %v2894 = vsel %vm2222, %v2889, %v2893
  %v2896 = vshrl.u32 %v2851, 16
  %v2898 = vrot.slane %v2896, 4
  %v2899 = vshll.u32 %v2851, 16
  %v2901 = vrot.slane %v2899, 5
  %v2902 = vor.u32 %v2898, %v2901
  %v2903 = vrot.slane %v2902, 4
  %v2905 = vshll.u32 %v2852, 16
  %v2907 = vrot.slane %v2905, 5
  %v2908 = vsel %vm2222, %v2903, %v2907
  %v2910 = vshrl.u32 %v2853, 16
  %v2912 = vrot.slane %v2910, 4
  %v2913 = vshll.u32 %v2853, 16
  %v2915 = vrot.slane %v2913, 5
  %v2916 = vor.u32 %v2912, %v2915
  %v2917 = vrot.slane %v2916, 4
  %v2919 = vshll.u32 %v2854, 16
  %v2921 = vrot.slane %v2919, 5
  %v2922 = vsel %vm2222, %v2917, %v2921
  %v2924 = vshrl.u32 %v2855, 16
  %v2926 = vrot.slane %v2924, 4
  %v2927 = vshll.u32 %v2855, 16
  %v2929 = vrot.slane %v2927, 5
  %v2930 = vor.u32 %v2926, %v2929
  %v2931 = vrot.slane %v2930, 4
  %v2933 = vshll.u32 %v2856, 16
  %v2935 = vrot.slane %v2933, 5
  %v2936 = vsel %vm2222, %v2931, %v2935
  %v2938 = vshrl.u32 %v2857, 16
  %v2940 = vrot.slane %v2938, 4
  %v2941 = vshll.u32 %v2857, 16
  %v2943 = vrot.slane %v2941, 5
  %v2944 = vor.u32 %v2940, %v2943
  %v2945 = vrot.slane %v2944, 4
  %v2947 = vshll.u32 %v2858, 16
  %v2949 = vrot.slane %v2947, 5
  %v2950 = vsel %vm2222, %v2945, %v2949
  %v2952 = vshrl.u32 %v2859, 16
  %v2954 = vrot.slane %v2952, 4
  %v2955 = vshll.u32 %v2859, 16
  %v2957 = vrot.slane %v2955, 5
  %v2958 = vor.u32 %v2954, %v2957
  %v2959 = vrot.slane %v2958, 4
  %v2961 = vshll.u32 %v2860, 16
  %v2963 = vrot.slane %v2961, 5
  %v2964 = vsel %vm2222, %v2959, %v2963
  %v2966 = vshrl.u32 %v2861, 16
  %v2968 = vrot.slane %v2966, 4
  %v2969 = vshll.u32 %v2861, 16
  %v2971 = vrot.slane %v2969, 5
  %v2972 = vor.u32 %v2968, %v2971
  %v2973 = vrot.slane %v2972, 4
  %v2975 = vshll.u32 %v2862, 16
  %v2977 = vrot.slane %v2975, 5
  %v2978 = vsel %vm2222, %v2973, %v2977
  %v2980 = vshrl.u32 %v2863, 16
  %v2982 = vrot.slane %v2980, 4
  %v2983 = vshll.u32 %v2863, 16
  %v2985 = vrot.slane %v2983, 5
  %v2986 = vor.u32 %v2982, %v2985
  %v2987 = vrot.slane %v2986, 4
  %v2989 = vshll.u32 %v2864, 16
  %v2991 = vrot.slane %v2989, 5
  %v2992 = vsel %vm2222, %v2987, %v2991
  %v2994 = vshrl.u32 %v2865, 16
  %v2996 = vrot.slane %v2994, 4
  %v2997 = vshll.u32 %v2865, 16
  %v2999 = vrot.slane %v2997, 5
  %v3000 = vor.u32 %v2996, %v2999
  %v3001 = vrot.slane %v3000, 4
  %v3003 = vshll.u32 %v2866, 16
  %v3005 = vrot.slane %v3003, 5
  %v3006 = vsel %vm2222, %v3001, %v3005
  %v3008 = vshrl.u32 %v2867, 16
  %v3010 = vrot.slane %v3008, 4
  %v3011 = vshll.u32 %v2867, 16
  %v3013 = vrot.slane %v3011, 5
  %v3014 = vor.u32 %v3010, %v3013
  %v3015 = vrot.slane %v3014, 4
  %v3017 = vshll.u32 %v2868, 16
  %v3019 = vrot.slane %v3017, 5
  %v3020 = vsel %vm2222, %v3015, %v3019
  %v3022 = vshrl.u32 %v2869, 16
  %v3024 = vrot.slane %v3022, 4
  %v3025 = vshll.u32 %v2869, 16
  %v3027 = vrot.slane %v3025, 5
  %v3028 = vor.u32 %v3024, %v3027
  %v3029 = vrot.slane %v3028, 4
  %v3031 = vshll.u32 %v2870, 16
  %v3033 = vrot.slane %v3031, 5
  %v3034 = vsel %vm2222, %v3029, %v3033
  %v3036 = vshrl.u32 %v2871, 16
  %v3038 = vrot.slane %v3036, 4
  %v3039 = vshll.u32 %v2871, 16
  %v3041 = vrot.slane %v3039, 5
  %v3042 = vor.u32 %v3038, %v3041
  %v3043 = vrot.slane %v3042, 4
  %v3045 = vshll.u32 %v2872, 16
  %v3047 = vrot.slane %v3045, 5
  %v3048 = vsel %vm2222, %v3043, %v3047
  %v3050 = vshrl.u32 %v2873, 16
  %v3052 = vrot.slane %v3050, 4
  %v3053 = vshll.u32 %v2873, 16
  %v3055 = vrot.slane %v3053, 5
  %v3056 = vor.u32 %v3052, %v3055
  %v3057 = vrot.slane %v3056, 4
  %v3059 = vshll.u32 %v2874, 16
  %v3061 = vrot.slane %v3059, 5
  %v3062 = vsel %vm2222, %v3057, %v3061
  %v3064 = vshrl.u32 %v2875, 16
  %v3066 = vrot.slane %v3064, 4
  %v3067 = vshll.u32 %v2875, 16
  %v3069 = vrot.slane %v3067, 5
  %v3070 = vor.u32 %v3066, %v3069
  %v3071 = vrot.slane %v3070, 4
  %v3073 = vshll.u32 %v2876, 16
  %v3075 = vrot.slane %v3073, 5
  %v3076 = vsel %vm2222, %v3071, %v3075
  %v3078 = vshrl.u32 %v2877, 16
  %v3080 = vrot.slane %v3078, 4
  %v3081 = vshll.u32 %v2877, 16
  %v3083 = vrot.slane %v3081, 5
  %v3084 = vor.u32 %v3080, %v3083
  %v3085 = vrot.slane %v3084, 4
  %v3087 = vshll.u32 %v2878, 16
  %v3089 = vrot.slane %v3087, 5
  %v3090 = vsel %vm2222, %v3085, %v3089
  %v3092 = vshrl.u32 %v2879, 16
  %v3094 = vrot.slane %v3092, 4
  %v3095 = vshll.u32 %v2879, 16
  %v3097 = vrot.slane %v3095, 5
  %v3098 = vor.u32 %v3094, %v3097
  %v3099 = vrot.slane %v3098, 4
  %v3101 = vshll.u32 %v2880, 16
  %v3103 = vrot.slane %v3101, 5
  %v3104 = vsel %vm2222, %v3099, %v3103
  %v3128 = vunpack.c.l.b16 %v2826
  %v3129 = vunpack.c.l.b16 %v2827
  %v3130 = vunpack.c.l.b16 %v2828
  %v3131 = vunpack.c.l.b16 %v2829
  %v3132 = vunpack.c.l.b16 %v2830
  %v3133 = vunpack.c.l.b16 %v2831
  %v3134 = vunpack.c.l.b16 %v2832
  %v3135 = vunpack.c.l.b16 %v2833
  %v3136 = vunpack.c.l.b16 %v2834
  %v3137 = vunpack.c.l.b16 %v2835
  %v3138 = vunpack.c.l.b16 %v2836
  %v3139 = vunpack.c.l.b16 %v2837
  %v3140 = vunpack.c.l.b16 %v2838
  %v3141 = vunpack.c.l.b16 %v2839
  %v3142 = vunpack.c.l.b16 %v2840
  %v3143 = vunpack.c.l.b16 %v2841
  %v3144 = vunpack.c.l.b16 %v2842
  %v3145 = vunpack.c.l.b16 %v2843
  %v3146 = vunpack.c.l.b16 %v2844
  %v3147 = vunpack.c.l.b16 %v2845
  %v3148 = vunpack.c.l.b16 %v2846
  %v3149 = vunpack.c.l.b16 %v2847
  %v3150 = vunpack.c.l.b16 %v2848
  %v3151 = vpack.c.b16 %v3129, %v3128
  %v3152 = vpack.c.b16 %v3131, %v3130
  %v3153 = vpack.c.b16 %v3133, %v3132
  %v3154 = vpack.c.b16 %v3135, %v3134
  %v3155 = vpack.c.b16 %v3137, %v3136
  %v3156 = vpack.c.b16 %v3139, %v3138
  %v3157 = vpack.c.b16 %v3141, %v3140
  %v3158 = vpack.c.b16 %v3143, %v3142
  %v3159 = vpack.c.b16 %v3145, %v3144
  %v3160 = vpack.c.b16 %v3147, %v3146
  %v3161 = vpack.c.b16 %v3149, %v3148
  %v3162 = vpack.c.b16 %v3150, %v3150
  %v3175 = vsel %vm316, %v3162, 0
  %3177 = vmatprep.subr.bf16.mxu0 0
  %3178 = vmatpush1.bf16.msra.mxu0 %v3151
  %3179 = vmatprep.subr.bf16.mxu0 0
  %3180 = vmatpush1.bf16.msra.mxu0 %v3152
  %3181 = vmatprep.subr.bf16.mxu0 0
  %3182 = vmatpush1.bf16.msra.mxu0 %v3153
  %3183 = vmatprep.subr.bf16.mxu0 0
  %3184 = vmatpush1.bf16.msra.mxu0 %v3154
  %3185 = vmatprep.subr.bf16.mxu0 0
  %3186 = vmatpush1.bf16.msra.mxu0 %v3155
  %3187 = vmatprep.subr.bf16.mxu0 0
  %3188 = vmatpush1.bf16.msra.mxu0 %v3156
  %3189 = vmatprep.subr.bf16.mxu0 0
  %3190 = vmatpush1.bf16.msra.mxu0 %v3157
  %3191 = vmatprep.subr.bf16.mxu0 0
  %3192 = vmatpush1.bf16.msra.mxu0 %v3158
  %3193 = vmatprep.subr.bf16.mxu0 0
  %3194 = vmatpush1.bf16.msra.mxu0 %v3159
  %3195 = vmatprep.subr.bf16.mxu0 0
  %3196 = vmatpush1.bf16.msra.mxu0 %v3160
  %3197 = vmatprep.subr.bf16.mxu0 0
  %3198 = vmatpush1.bf16.msra.mxu0 %v3161
  %3199 = vmatprep.subr.bf16.mxu0 0
  %3200 = vmatpush1.bf16.msra.mxu0 %v3175
  %3201 = vmatprep.subr.bf16.mxu0 0
  %3202 = vmatpush1.bf16.msra.mxu0 0
  %3203 = vmatprep.subr.bf16.mxu0 0
  %3204 = vmatpush1.bf16.msra.mxu0 0
  %3205 = vmatprep.subr.bf16.mxu0 0
  %3206 = vmatpush1.bf16.msra.mxu0 0
  %3207 = vmatprep.subr.bf16.mxu0 0
  %3208 = vmatpush1.bf16.msra.mxu0 0
  %3209 = vmatprep.mubr.bf16.mxu0 %v755
  %3210 = vmatmul.mubr.bf16.gmra.mrb[0].mxu0 %v730
  %v3211 = vpop.f32.mrb[0].mxu0
  %v3212 = vadd.f32 0.0, %v3211
  %v3213 = vpop.f32.mrb[0].mxu0
  %v3214 = vpop.f32.mrb[0].mxu0
  %v3215 = vadd.f32 0.0, %v3214
  %v3216 = vpop.f32.mrb[0].mxu0
  %3217 = vmatprep.mubr.bf16.mxu0 %v758
  %3218 = vmatmul.mubr.bf16.gmra.mrb[0].mxu0 %v732
  %v3219 = vpop.f32.mrb[0].mxu0
  %v3220 = vadd.f32 0.0, %v3219
  %v3221 = vpop.f32.mrb[0].mxu0
  %v3222 = vpop.f32.mrb[0].mxu0
  %v3223 = vadd.f32 0.0, %v3222
  %v3224 = vpop.f32.mrb[0].mxu0
  %3225 = vmatprep.mubr.bf16.mxu0 %v761
  %3226 = vmatmul.mubr.bf16.gmra.mrb[0].mxu0 %v734
  %v3227 = vpop.f32.mrb[0].mxu0
  %v3228 = vadd.f32 0.0, %v3227
  %v3229 = vpop.f32.mrb[0].mxu0
  %v3230 = vpop.f32.mrb[0].mxu0
  %v3231 = vadd.f32 0.0, %v3230
  %v3232 = vpop.f32.mrb[0].mxu0
  %3233 = vmatprep.mubr.bf16.mxu0 %v764
  %3234 = vmatmul.mubr.bf16.gmra.mrb[0].mxu0 %v736
  %v3235 = vpop.f32.mrb[0].mxu0
  %v3236 = vadd.f32 0.0, %v3235
  %v3237 = vpop.f32.mrb[0].mxu0
  %v3238 = vpop.f32.mrb[0].mxu0
  %v3239 = vadd.f32 0.0, %v3238
  %v3240 = vpop.f32.mrb[0].mxu0
  %3241 = vmatprep.mubr.bf16.mxu0 %v767
  %3242 = vmatmul.mubr.bf16.gmra.mrb[0].mxu0 %v738
  %v3243 = vpop.f32.mrb[0].mxu0
  %v3244 = vadd.f32 0.0, %v3243
  %v3245 = vpop.f32.mrb[0].mxu0
  %v3246 = vpop.f32.mrb[0].mxu0
  %v3247 = vadd.f32 0.0, %v3246
  %v3248 = vpop.f32.mrb[0].mxu0
  %3249 = vmatprep.mubr.bf16.mxu0 %v770
  %3250 = vmatmul.mubr.bf16.gmra.mrb[0].mxu0 %v740
  %v3251 = vpop.f32.mrb[0].mxu0
  %v3252 = vadd.f32 0.0, %v3251
  %v3253 = vpop.f32.mrb[0].mxu0
  %v3254 = vpop.f32.mrb[0].mxu0
  %v3255 = vadd.f32 0.0, %v3254
  %v3256 = vpop.f32.mrb[0].mxu0
  %3257 = vmatprep.mubr.bf16.mxu0 %v773
  %3258 = vmatmul.mubr.bf16.gmra.mrb[0].mxu0 %v742
  %v3259 = vpop.f32.mrb[0].mxu0
  %v3260 = vadd.f32 0.0, %v3259
  %v3261 = vpop.f32.mrb[0].mxu0
  %v3262 = vpop.f32.mrb[0].mxu0
  %v3263 = vadd.f32 0.0, %v3262
  %v3264 = vpop.f32.mrb[0].mxu0
  %3265 = vmatprep.mubr.bf16.mxu0 %v776
  %3266 = vmatmul.mubr.bf16.gmra.mrb[0].mxu0 %v744
  %v3267 = vpop.f32.mrb[0].mxu0
  %v3268 = vadd.f32 0.0, %v3267
  %v3269 = vpop.f32.mrb[0].mxu0
  %v3270 = vpop.f32.mrb[0].mxu0
  %v3271 = vadd.f32 0.0, %v3270
  %v3272 = vpop.f32.mrb[0].mxu0
  %3273 = vdwg.mxu0
  %v3274 = vadd.f32 %v2616, %v3212
  %v3275 = vadd.f32 %v2617, %v3215
  %v3276 = vadd.f32 %v2618, %v3220
  %v3277 = vadd.f32 %v2619, %v3223
  %v3278 = vadd.f32 %v2620, %v3228
  %v3279 = vadd.f32 %v2621, %v3231
  %v3280 = vadd.f32 %v2622, %v3236
  %v3281 = vadd.f32 %v2623, %v3239
  %v3282 = vadd.f32 %v2624, %v3244
  %v3283 = vadd.f32 %v2625, %v3247
  %v3284 = vadd.f32 %v2626, %v3252
  %v3285 = vadd.f32 %v2627, %v3255
  %v3286 = vadd.f32 %v2628, %v3260
  %v3287 = vadd.f32 %v2629, %v3263
  %v3288 = vadd.f32 %v2630, %v3268
  %v3289 = vadd.f32 %v2631, %v3271
  %v3290 = vunpack.c.l.b16 %v2894
  %v3291 = vunpack.c.h.b16 %v2894
  %v3292 = vunpack.c.l.b16 %v2908
  %v3293 = vunpack.c.h.b16 %v2908
  %v3294 = vunpack.c.l.b16 %v2922
  %v3295 = vunpack.c.h.b16 %v2922
  %v3296 = vunpack.c.l.b16 %v2936
  %v3297 = vunpack.c.h.b16 %v2936
  %v3298 = vunpack.c.l.b16 %v2950
  %v3299 = vunpack.c.h.b16 %v2950
  %v3300 = vunpack.c.l.b16 %v2964
  %v3301 = vunpack.c.h.b16 %v2964
  %v3302 = vunpack.c.l.b16 %v2978
  %v3303 = vunpack.c.h.b16 %v2978
  %v3304 = vunpack.c.l.b16 %v2992
  %v3305 = vunpack.c.h.b16 %v2992
  %v3306 = vunpack.c.l.b16 %v3006
  %v3307 = vunpack.c.h.b16 %v3006
  %v3308 = vunpack.c.l.b16 %v3020
  %v3309 = vunpack.c.h.b16 %v3020
  %v3310 = vunpack.c.l.b16 %v3034
  %v3311 = vunpack.c.h.b16 %v3034
  %v3312 = vunpack.c.l.b16 %v3048
  %v3313 = vunpack.c.h.b16 %v3048
  %v3314 = vunpack.c.l.b16 %v3062
  %v3315 = vunpack.c.h.b16 %v3062
  %v3316 = vunpack.c.l.b16 %v3076
  %v3317 = vunpack.c.h.b16 %v3076
  %v3318 = vunpack.c.l.b16 %v3090
  %v3319 = vunpack.c.h.b16 %v3090
  %v3320 = vunpack.c.l.b16 %v3104
  %v3321 = vunpack.c.h.b16 %v3104
  %v3322 = vpack.c.b16 %v3292, %v3290
  %v3323 = vpack.c.b16 %v3293, %v3291
  %v3324 = vpack.c.b16 %v3296, %v3294
  %v3325 = vpack.c.b16 %v3297, %v3295
  %v3326 = vpack.c.b16 %v3300, %v3298
  %v3327 = vpack.c.b16 %v3301, %v3299
  %v3328 = vpack.c.b16 %v3304, %v3302
  %v3329 = vpack.c.b16 %v3305, %v3303
  %v3330 = vpack.c.b16 %v3308, %v3306
  %v3331 = vpack.c.b16 %v3309, %v3307
  %v3332 = vpack.c.b16 %v3312, %v3310
  %v3333 = vpack.c.b16 %v3313, %v3311
  %v3334 = vpack.c.b16 %v3316, %v3314
  %v3335 = vpack.c.b16 %v3317, %v3315
  %v3336 = vpack.c.b16 %v3320, %v3318
  %v3337 = vpack.c.b16 %v3321, %v3319
  %v3347 = vsel %vm291, %v3323, 0
  %v3350 = vsel %vm291, %v3325, 0
  %v3353 = vsel %vm291, %v3327, 0
  %v3356 = vsel %vm291, %v3329, 0
  %v3359 = vsel %vm291, %v3331, 0
  %v3362 = vsel %vm291, %v3333, 0
  %v3365 = vsel %vm291, %v3335, 0
  %v3368 = vsel %vm291, %v3337, 0
  %3370 = vmatprep.subr.bf16.mxu0 0
  %3371 = vmatpush1.bf16.msra.mxu0 %v3151
  %3372 = vmatprep.subr.bf16.mxu0 0
  %3373 = vmatpush1.bf16.msra.mxu0 %v3152
  %3374 = vmatprep.subr.bf16.mxu0 0
  %3375 = vmatpush1.bf16.msra.mxu0 %v3153
  %3376 = vmatprep.subr.bf16.mxu0 0
  %3377 = vmatpush1.bf16.msra.mxu0 %v3154
  %3378 = vmatprep.subr.bf16.mxu0 0
  %3379 = vmatpush1.bf16.msra.mxu0 %v3155
  %3380 = vmatprep.subr.bf16.mxu0 0
  %3381 = vmatpush1.bf16.msra.mxu0 %v3156
  %3382 = vmatprep.subr.bf16.mxu0 0
  %3383 = vmatpush1.bf16.msra.mxu0 %v3157
  %3384 = vmatprep.subr.bf16.mxu0 0
  %3385 = vmatpush1.bf16.msra.mxu0 %v3158
  %3386 = vmatprep.subr.bf16.mxu0 0
  %3387 = vmatpush1.bf16.msra.mxu0 %v3159
  %3388 = vmatprep.subr.bf16.mxu0 0
  %3389 = vmatpush1.bf16.msra.mxu0 %v3160
  %3390 = vmatprep.subr.bf16.mxu0 0
  %3391 = vmatpush1.bf16.msra.mxu0 %v3161
  %3392 = vmatprep.subr.bf16.mxu0 0
  %3393 = vmatpush1.bf16.msra.mxu0 %v3175
  %3394 = vmatprep.subr.bf16.mxu0 0
  %3395 = vmatpush1.bf16.msra.mxu0 0
  %3396 = vmatprep.subr.bf16.mxu0 0
  %3397 = vmatpush1.bf16.msra.mxu0 0
  %3398 = vmatprep.subr.bf16.mxu0 0
  %3399 = vmatpush1.bf16.msra.mxu0 0
  %3400 = vmatprep.subr.bf16.mxu0 0
  %3401 = vmatpush1.bf16.msra.mxu0 0
  %3402 = vmatprep.mubr.bf16.mxu0 %v3347
  %3403 = vmatmul.mubr.bf16.gmra.mrb[0].mxu0 %v3322
  %v3404 = vpop.f32.mrb[0].mxu0
  %v3405 = vadd.f32 0.0, %v3404
  %v3406 = vpop.f32.mrb[0].mxu0
  %v3407 = vpop.f32.mrb[0].mxu0
  %v3408 = vadd.f32 0.0, %v3407
  %v3409 = vpop.f32.mrb[0].mxu0
  %3410 = vmatprep.mubr.bf16.mxu0 %v3350
  %3411 = vmatmul.mubr.bf16.gmra.mrb[0].mxu0 %v3324
  %v3412 = vpop.f32.mrb[0].mxu0
  %v3413 = vadd.f32 0.0, %v3412
  %v3414 = vpop.f32.mrb[0].mxu0
  %v3415 = vpop.f32.mrb[0].mxu0
  %v3416 = vadd.f32 0.0, %v3415
  %v3417 = vpop.f32.mrb[0].mxu0
  %3418 = vmatprep.mubr.bf16.mxu0 %v3353
  %3419 = vmatmul.mubr.bf16.gmra.mrb[0].mxu0 %v3326
  %v3420 = vpop.f32.mrb[0].mxu0
  %v3421 = vadd.f32 0.0, %v3420
  %v3422 = vpop.f32.mrb[0].mxu0
  %v3423 = vpop.f32.mrb[0].mxu0
  %v3424 = vadd.f32 0.0, %v3423
  %v3425 = vpop.f32.mrb[0].mxu0
  %3426 = vmatprep.mubr.bf16.mxu0 %v3356
  %3427 = vmatmul.mubr.bf16.gmra.mrb[0].mxu0 %v3328
  %v3428 = vpop.f32.mrb[0].mxu0
  %v3429 = vadd.f32 0.0, %v3428
  %v3430 = vpop.f32.mrb[0].mxu0
  %v3431 = vpop.f32.mrb[0].mxu0
  %v3432 = vadd.f32 0.0, %v3431
  %v3433 = vpop.f32.mrb[0].mxu0
  %3434 = vmatprep.mubr.bf16.mxu0 %v3359
  %3435 = vmatmul.mubr.bf16.gmra.mrb[0].mxu0 %v3330
  %v3436 = vpop.f32.mrb[0].mxu0
  %v3437 = vadd.f32 0.0, %v3436
  %v3438 = vpop.f32.mrb[0].mxu0
  %v3439 = vpop.f32.mrb[0].mxu0
  %v3440 = vadd.f32 0.0, %v3439
  %v3441 = vpop.f32.mrb[0].mxu0
  %3442 = vmatprep.mubr.bf16.mxu0 %v3362
  %3443 = vmatmul.mubr.bf16.gmra.mrb[0].mxu0 %v3332
  %v3444 = vpop.f32.mrb[0].mxu0
  %v3445 = vadd.f32 0.0, %v3444
  %v3446 = vpop.f32.mrb[0].mxu0
  %v3447 = vpop.f32.mrb[0].mxu0
  %v3448 = vadd.f32 0.0, %v3447
  %v3449 = vpop.f32.mrb[0].mxu0
  %3450 = vmatprep.mubr.bf16.mxu0 %v3365
  %3451 = vmatmul.mubr.bf16.gmra.mrb[0].mxu0 %v3334
  %v3452 = vpop.f32.mrb[0].mxu0
  %v3453 = vadd.f32 0.0, %v3452
  %v3454 = vpop.f32.mrb[0].mxu0
  %v3455 = vpop.f32.mrb[0].mxu0
  %v3456 = vadd.f32 0.0, %v3455
  %v3457 = vpop.f32.mrb[0].mxu0
  %3458 = vmatprep.mubr.bf16.mxu0 %v3368
  %3459 = vmatmul.mubr.bf16.gmra.mrb[0].mxu0 %v3336
  %v3460 = vpop.f32.mrb[0].mxu0
  %v3461 = vadd.f32 0.0, %v3460
  %v3462 = vpop.f32.mrb[0].mxu0
  %v3463 = vpop.f32.mrb[0].mxu0
  %v3464 = vadd.f32 0.0, %v3463
  %v3465 = vpop.f32.mrb[0].mxu0
  %3466 = vdwg.mxu0
  %v3467 = vadd.f32 %v2809, %v3405
  %v3468 = vadd.f32 %v2810, %v3408
  %v3469 = vadd.f32 %v2811, %v3413
  %v3470 = vadd.f32 %v2812, %v3416
  %v3471 = vadd.f32 %v2813, %v3421
  %v3472 = vadd.f32 %v2814, %v3424
  %v3473 = vadd.f32 %v2815, %v3429
  %v3474 = vadd.f32 %v2816, %v3432
  %v3475 = vadd.f32 %v2817, %v3437
  %v3476 = vadd.f32 %v2818, %v3440
  %v3477 = vadd.f32 %v2819, %v3445
  %v3478 = vadd.f32 %v2820, %v3448
  %v3479 = vadd.f32 %v2821, %v3453
  %v3480 = vadd.f32 %v2822, %v3456
  %v3481 = vadd.f32 %v2823, %v3461
  %v3482 = vadd.f32 %v2824, %v3464
  %s3483 = scalar_lea.vmem %s1, 552
  %v3484 = vld [vmem:[%s3483] sm:$0xf]
  %v3485 = vld [vmem:[%s3483 + $0x4] sm:$0xf]
  %v3486 = vld [vmem:[%s3483 + $0x8] sm:$0xf]
  %v3487 = vld [vmem:[%s3483 + $0xc] sm:$0xf]
  %v3488 = vld [vmem:[%s3483 + $0x10] sm:$0xf]
  %v3489 = vld [vmem:[%s3483 + $0x14] sm:$0xf]
  %v3490 = vld [vmem:[%s3483 + $0x18] sm:$0xf]
  %v3491 = vld [vmem:[%s3483 + $0x1c] sm:$0xf]
  %v3492 = vld [vmem:[%s3483 + $0x20] sm:$0xf]
  %v3493 = vld [vmem:[%s3483 + $0x24] sm:$0xf]
  %v3494 = vld [vmem:[%s3483 + $0x28] sm:$0xf]
  %v3495 = vld [vmem:[%s3483 + $0x2c] sm:$0xf]
  %v3496 = vld [vmem:[%s3483 + $0x30] sm:$0xf]
  %v3497 = vld [vmem:[%s3483 + $0x34] sm:$0xf]
  %v3498 = vld [vmem:[%s3483 + $0x38] sm:$0xf]
  %v3499 = vld [vmem:[%s3483 + $0x3c] sm:$0xf]
  %v3500 = vld [vmem:[%s3483 + $0x40] sm:$0xf]
  %v3501 = vld [vmem:[%s3483 + $0x44] sm:$0xf]
  %v3502 = vld [vmem:[%s3483 + $0x48] sm:$0xf]
  %v3503 = vld [vmem:[%s3483 + $0x4c] sm:$0xf]
  %v3504 = vld [vmem:[%s3483 + $0x50] sm:$0xf]
  %v3505 = vld [vmem:[%s3483 + $0x54] sm:$0xf]
  %v3506 = vld [vmem:[%s3483 + $0x58] sm:$0x3]
  %v3507 = vld [vmem:[%s1092] sm:$0xff]
  %v3508 = vld [vmem:[%s1092 + $0x8] sm:$0x11]
  %v3509 = vld [vmem:[%s1092 + $0x80] sm:$0xff]
  %v3510 = vld [vmem:[%s1092 + $0x88] sm:$0x11]
  %v3511 = vld [vmem:[%s1092 + $0x100] sm:$0xff]
  %v3512 = vld [vmem:[%s1092 + $0x108] sm:$0x11]
  %v3513 = vld [vmem:[%s1092 + $0x180] sm:$0xff]
  %v3514 = vld [vmem:[%s1092 + $0x188] sm:$0x11]
  %v3515 = vld [vmem:[%s1092 + $0x200] sm:$0xff]
  %v3516 = vld [vmem:[%s1092 + $0x208] sm:$0x11]
  %v3517 = vld [vmem:[%s1092 + $0x280] sm:$0xff]
  %v3518 = vld [vmem:[%s1092 + $0x288] sm:$0x11]
  %v3519 = vld [vmem:[%s1092 + $0x300] sm:$0xff]
  %v3520 = vld [vmem:[%s1092 + $0x308] sm:$0x11]
  %v3521 = vld [vmem:[%s1092 + $0x380] sm:$0xff]
  %v3522 = vld [vmem:[%s1092 + $0x388] sm:$0x11]
  %v3523 = vld [vmem:[%s1092 + $0x400] sm:$0xff]
  %v3524 = vld [vmem:[%s1092 + $0x408] sm:$0x11]
  %v3525 = vld [vmem:[%s1092 + $0x480] sm:$0xff]
  %v3526 = vld [vmem:[%s1092 + $0x488] sm:$0x11]
  %v3527 = vld [vmem:[%s1092 + $0x500] sm:$0xff]
  %v3528 = vld [vmem:[%s1092 + $0x508] sm:$0x11]
  %v3529 = vld [vmem:[%s1092 + $0x580] sm:$0xff]
  %v3530 = vld [vmem:[%s1092 + $0x588] sm:$0x11]
  %v3531 = vld [vmem:[%s1092 + $0x600] sm:$0xff]
  %v3532 = vld [vmem:[%s1092 + $0x608] sm:$0x11]
  %v3533 = vld [vmem:[%s1092 + $0x680] sm:$0xff]
  %v3534 = vld [vmem:[%s1092 + $0x688] sm:$0x11]
  %v3535 = vld [vmem:[%s1092 + $0x700] sm:$0xff]
  %v3536 = vld [vmem:[%s1092 + $0x708] sm:$0x11]
  %v3537 = vld [vmem:[%s1092 + $0x780] sm:$0xff]
  %v3538 = vld [vmem:[%s1092 + $0x788] sm:$0x11]
  %v3540 = vshrl.u32 %v3507, 16
  %v3542 = vrot.slane %v3540, 4
  %v3543 = vshll.u32 %v3507, 16
  %v3545 = vrot.slane %v3543, 5
  %v3546 = vor.u32 %v3542, %v3545
  %v3547 = vrot.slane %v3546, 4
  %v3549 = vshll.u32 %v3508, 16
  %v3551 = vrot.slane %v3549, 5
  %v3552 = vsel %vm2222, %v3547, %v3551
  %v3554 = vshrl.u32 %v3509, 16
  %v3556 = vrot.slane %v3554, 4
  %v3557 = vshll.u32 %v3509, 16
  %v3559 = vrot.slane %v3557, 5
  %v3560 = vor.u32 %v3556, %v3559
  %v3561 = vrot.slane %v3560, 4
  %v3563 = vshll.u32 %v3510, 16
  %v3565 = vrot.slane %v3563, 5
  %v3566 = vsel %vm2222, %v3561, %v3565
  %v3568 = vshrl.u32 %v3511, 16
  %v3570 = vrot.slane %v3568, 4
  %v3571 = vshll.u32 %v3511, 16
  %v3573 = vrot.slane %v3571, 5
  %v3574 = vor.u32 %v3570, %v3573
  %v3575 = vrot.slane %v3574, 4
  %v3577 = vshll.u32 %v3512, 16
  %v3579 = vrot.slane %v3577, 5
  %v3580 = vsel %vm2222, %v3575, %v3579
  %v3582 = vshrl.u32 %v3513, 16
  %v3584 = vrot.slane %v3582, 4
  %v3585 = vshll.u32 %v3513, 16
  %v3587 = vrot.slane %v3585, 5
  %v3588 = vor.u32 %v3584, %v3587
  %v3589 = vrot.slane %v3588, 4
  %v3591 = vshll.u32 %v3514, 16
  %v3593 = vrot.slane %v3591, 5
  %v3594 = vsel %vm2222, %v3589, %v3593
  %v3596 = vshrl.u32 %v3515, 16
  %v3598 = vrot.slane %v3596, 4
  %v3599 = vshll.u32 %v3515, 16
  %v3601 = vrot.slane %v3599, 5
  %v3602 = vor.u32 %v3598, %v3601
  %v3603 = vrot.slane %v3602, 4
  %v3605 = vshll.u32 %v3516, 16
  %v3607 = vrot.slane %v3605, 5
  %v3608 = vsel %vm2222, %v3603, %v3607
  %v3610 = vshrl.u32 %v3517, 16
  %v3612 = vrot.slane %v3610, 4
  %v3613 = vshll.u32 %v3517, 16
  %v3615 = vrot.slane %v3613, 5
  %v3616 = vor.u32 %v3612, %v3615
  %v3617 = vrot.slane %v3616, 4
  %v3619 = vshll.u32 %v3518, 16
  %v3621 = vrot.slane %v3619, 5
  %v3622 = vsel %vm2222, %v3617, %v3621
  %v3624 = vshrl.u32 %v3519, 16
  %v3626 = vrot.slane %v3624, 4
  %v3627 = vshll.u32 %v3519, 16
  %v3629 = vrot.slane %v3627, 5
  %v3630 = vor.u32 %v3626, %v3629
  %v3631 = vrot.slane %v3630, 4
  %v3633 = vshll.u32 %v3520, 16
  %v3635 = vrot.slane %v3633, 5
  %v3636 = vsel %vm2222, %v3631, %v3635
  %v3638 = vshrl.u32 %v3521, 16
  %v3640 = vrot.slane %v3638, 4
  %v3641 = vshll.u32 %v3521, 16
  %v3643 = vrot.slane %v3641, 5
  %v3644 = vor.u32 %v3640, %v3643
  %v3645 = vrot.slane %v3644, 4
  %v3647 = vshll.u32 %v3522, 16
  %v3649 = vrot.slane %v3647, 5
  %v3650 = vsel %vm2222, %v3645, %v3649
  %v3652 = vshrl.u32 %v3523, 16
  %v3654 = vrot.slane %v3652, 4
  %v3655 = vshll.u32 %v3523, 16
  %v3657 = vrot.slane %v3655, 5
  %v3658 = vor.u32 %v3654, %v3657
  %v3659 = vrot.slane %v3658, 4
  %v3661 = vshll.u32 %v3524, 16
  %v3663 = vrot.slane %v3661, 5
  %v3664 = vsel %vm2222, %v3659, %v3663
  %v3666 = vshrl.u32 %v3525, 16
  %v3668 = vrot.slane %v3666, 4
  %v3669 = vshll.u32 %v3525, 16
  %v3671 = vrot.slane %v3669, 5
  %v3672 = vor.u32 %v3668, %v3671
  %v3673 = vrot.slane %v3672, 4
  %v3675 = vshll.u32 %v3526, 16
  %v3677 = vrot.slane %v3675, 5
  %v3678 = vsel %vm2222, %v3673, %v3677
  %v3680 = vshrl.u32 %v3527, 16
  %v3682 = vrot.slane %v3680, 4
  %v3683 = vshll.u32 %v3527, 16
  %v3685 = vrot.slane %v3683, 5
  %v3686 = vor.u32 %v3682, %v3685
  %v3687 = vrot.slane %v3686, 4
  %v3689 = vshll.u32 %v3528, 16
  %v3691 = vrot.slane %v3689, 5
  %v3692 = vsel %vm2222, %v3687, %v3691
  %v3694 = vshrl.u32 %v3529, 16
  %v3696 = vrot.slane %v3694, 4
  %v3697 = vshll.u32 %v3529, 16
  %v3699 = vrot.slane %v3697, 5
  %v3700 = vor.u32 %v3696, %v3699
  %v3701 = vrot.slane %v3700, 4
  %v3703 = vshll.u32 %v3530, 16
  %v3705 = vrot.slane %v3703, 5
  %v3706 = vsel %vm2222, %v3701, %v3705
  %v3708 = vshrl.u32 %v3531, 16
  %v3710 = vrot.slane %v3708, 4
  %v3711 = vshll.u32 %v3531, 16
  %v3713 = vrot.slane %v3711, 5
  %v3714 = vor.u32 %v3710, %v3713
  %v3715 = vrot.slane %v3714, 4
  %v3717 = vshll.u32 %v3532, 16
  %v3719 = vrot.slane %v3717, 5
  %v3720 = vsel %vm2222, %v3715, %v3719
  %v3722 = vshrl.u32 %v3533, 16
  %v3724 = vrot.slane %v3722, 4
  %v3725 = vshll.u32 %v3533, 16
  %v3727 = vrot.slane %v3725, 5
  %v3728 = vor.u32 %v3724, %v3727
  %v3729 = vrot.slane %v3728, 4
  %v3731 = vshll.u32 %v3534, 16
  %v3733 = vrot.slane %v3731, 5
  %v3734 = vsel %vm2222, %v3729, %v3733
  %v3736 = vshrl.u32 %v3535, 16
  %v3738 = vrot.slane %v3736, 4
  %v3739 = vshll.u32 %v3535, 16
  %v3741 = vrot.slane %v3739, 5
  %v3742 = vor.u32 %v3738, %v3741
  %v3743 = vrot.slane %v3742, 4
  %v3745 = vshll.u32 %v3536, 16
  %v3747 = vrot.slane %v3745, 5
  %v3748 = vsel %vm2222, %v3743, %v3747
  %v3750 = vshrl.u32 %v3537, 16
  %v3752 = vrot.slane %v3750, 4
  %v3753 = vshll.u32 %v3537, 16
  %v3755 = vrot.slane %v3753, 5
  %v3756 = vor.u32 %v3752, %v3755
  %v3757 = vrot.slane %v3756, 4
  %v3759 = vshll.u32 %v3538, 16
  %v3761 = vrot.slane %v3759, 5
  %v3762 = vsel %vm2222, %v3757, %v3761
  %v3786 = vunpack.c.l.b16 %v3484
  %v3787 = vunpack.c.l.b16 %v3485
  %v3788 = vunpack.c.l.b16 %v3486
  %v3789 = vunpack.c.l.b16 %v3487
  %v3790 = vunpack.c.l.b16 %v3488
  %v3791 = vunpack.c.l.b16 %v3489
  %v3792 = vunpack.c.l.b16 %v3490
  %v3793 = vunpack.c.l.b16 %v3491
  %v3794 = vunpack.c.l.b16 %v3492
  %v3795 = vunpack.c.l.b16 %v3493
  %v3796 = vunpack.c.l.b16 %v3494
  %v3797 = vunpack.c.l.b16 %v3495
  %v3798 = vunpack.c.l.b16 %v3496
  %v3799 = vunpack.c.l.b16 %v3497
  %v3800 = vunpack.c.l.b16 %v3498
  %v3801 = vunpack.c.l.b16 %v3499
  %v3802 = vunpack.c.l.b16 %v3500
  %v3803 = vunpack.c.l.b16 %v3501
  %v3804 = vunpack.c.l.b16 %v3502
  %v3805 = vunpack.c.l.b16 %v3503
  %v3806 = vunpack.c.l.b16 %v3504
  %v3807 = vunpack.c.l.b16 %v3505
  %v3808 = vunpack.c.l.b16 %v3506
  %v3809 = vpack.c.b16 %v3787, %v3786
  %v3810 = vpack.c.b16 %v3789, %v3788
  %v3811 = vpack.c.b16 %v3791, %v3790
  %v3812 = vpack.c.b16 %v3793, %v3792
  %v3813 = vpack.c.b16 %v3795, %v3794
  %v3814 = vpack.c.b16 %v3797, %v3796
  %v3815 = vpack.c.b16 %v3799, %v3798
  %v3816 = vpack.c.b16 %v3801, %v3800
  %v3817 = vpack.c.b16 %v3803, %v3802
  %v3818 = vpack.c.b16 %v3805, %v3804
  %v3819 = vpack.c.b16 %v3807, %v3806
  %v3820 = vpack.c.b16 %v3808, %v3808
  %v3833 = vsel %vm316, %v3820, 0
  %3835 = vmatprep.subr.bf16.mxu0 0
  %3836 = vmatpush1.bf16.msra.mxu0 %v3809
  %3837 = vmatprep.subr.bf16.mxu0 0
  %3838 = vmatpush1.bf16.msra.mxu0 %v3810
  %3839 = vmatprep.subr.bf16.mxu0 0
  %3840 = vmatpush1.bf16.msra.mxu0 %v3811
  %3841 = vmatprep.subr.bf16.mxu0 0
  %3842 = vmatpush1.bf16.msra.mxu0 %v3812
  %3843 = vmatprep.subr.bf16.mxu0 0
  %3844 = vmatpush1.bf16.msra.mxu0 %v3813
  %3845 = vmatprep.subr.bf16.mxu0 0
  %3846 = vmatpush1.bf16.msra.mxu0 %v3814
  %3847 = vmatprep.subr.bf16.mxu0 0
  %3848 = vmatpush1.bf16.msra.mxu0 %v3815
  %3849 = vmatprep.subr.bf16.mxu0 0
  %3850 = vmatpush1.bf16.msra.mxu0 %v3816
  %3851 = vmatprep.subr.bf16.mxu0 0
  %3852 = vmatpush1.bf16.msra.mxu0 %v3817
  %3853 = vmatprep.subr.bf16.mxu0 0
  %3854 = vmatpush1.bf16.msra.mxu0 %v3818
  %3855 = vmatprep.subr.bf16.mxu0 0
  %3856 = vmatpush1.bf16.msra.mxu0 %v3819
  %3857 = vmatprep.subr.bf16.mxu0 0
  %3858 = vmatpush1.bf16.msra.mxu0 %v3833
  %3859 = vmatprep.subr.bf16.mxu0 0
  %3860 = vmatpush1.bf16.msra.mxu0 0
  %3861 = vmatprep.subr.bf16.mxu0 0
  %3862 = vmatpush1.bf16.msra.mxu0 0
  %3863 = vmatprep.subr.bf16.mxu0 0
  %3864 = vmatpush1.bf16.msra.mxu0 0
  %3865 = vmatprep.subr.bf16.mxu0 0
  %3866 = vmatpush1.bf16.msra.mxu0 0
  %3867 = vmatprep.mubr.bf16.mxu0 %v1480
  %3868 = vmatmul.mubr.bf16.gmra.mrb[0].mxu0 %v1455
  %v3869 = vpop.f32.mrb[0].mxu0
  %v3870 = vadd.f32 0.0, %v3869
  %v3871 = vpop.f32.mrb[0].mxu0
  %v3872 = vpop.f32.mrb[0].mxu0
  %v3873 = vadd.f32 0.0, %v3872
  %v3874 = vpop.f32.mrb[0].mxu0
  %3875 = vmatprep.mubr.bf16.mxu0 %v1483
  %3876 = vmatmul.mubr.bf16.gmra.mrb[0].mxu0 %v1457
  %v3877 = vpop.f32.mrb[0].mxu0
  %v3878 = vadd.f32 0.0, %v3877
  %v3879 = vpop.f32.mrb[0].mxu0
  %v3880 = vpop.f32.mrb[0].mxu0
  %v3881 = vadd.f32 0.0, %v3880
  %v3882 = vpop.f32.mrb[0].mxu0
  %3883 = vmatprep.mubr.bf16.mxu0 %v1486
  %3884 = vmatmul.mubr.bf16.gmra.mrb[0].mxu0 %v1459
  %v3885 = vpop.f32.mrb[0].mxu0
  %v3886 = vadd.f32 0.0, %v3885
  %v3887 = vpop.f32.mrb[0].mxu0
  %v3888 = vpop.f32.mrb[0].mxu0
  %v3889 = vadd.f32 0.0, %v3888
  %v3890 = vpop.f32.mrb[0].mxu0
  %3891 = vmatprep.mubr.bf16.mxu0 %v1489
  %3892 = vmatmul.mubr.bf16.gmra.mrb[0].mxu0 %v1461
  %v3893 = vpop.f32.mrb[0].mxu0
  %v3894 = vadd.f32 0.0, %v3893
  %v3895 = vpop.f32.mrb[0].mxu0
  %v3896 = vpop.f32.mrb[0].mxu0
  %v3897 = vadd.f32 0.0, %v3896
  %v3898 = vpop.f32.mrb[0].mxu0
  %3899 = vmatprep.mubr.bf16.mxu0 %v1492
  %3900 = vmatmul.mubr.bf16.gmra.mrb[0].mxu0 %v1463
  %v3901 = vpop.f32.mrb[0].mxu0
  %v3902 = vadd.f32 0.0, %v3901
  %v3903 = vpop.f32.mrb[0].mxu0
  %v3904 = vpop.f32.mrb[0].mxu0
  %v3905 = vadd.f32 0.0, %v3904
  %v3906 = vpop.f32.mrb[0].mxu0
  %3907 = vmatprep.mubr.bf16.mxu0 %v1495
  %3908 = vmatmul.mubr.bf16.gmra.mrb[0].mxu0 %v1465
  %v3909 = vpop.f32.mrb[0].mxu0
  %v3910 = vadd.f32 0.0, %v3909
  %v3911 = vpop.f32.mrb[0].mxu0
  %v3912 = vpop.f32.mrb[0].mxu0
  %v3913 = vadd.f32 0.0, %v3912
  %v3914 = vpop.f32.mrb[0].mxu0
  %3915 = vmatprep.mubr.bf16.mxu0 %v1498
  %3916 = vmatmul.mubr.bf16.gmra.mrb[0].mxu0 %v1467
  %v3917 = vpop.f32.mrb[0].mxu0
  %v3918 = vadd.f32 0.0, %v3917
  %v3919 = vpop.f32.mrb[0].mxu0
  %v3920 = vpop.f32.mrb[0].mxu0
  %v3921 = vadd.f32 0.0, %v3920
  %v3922 = vpop.f32.mrb[0].mxu0
  %3923 = vmatprep.mubr.bf16.mxu0 %v1501
  %3924 = vmatmul.mubr.bf16.gmra.mrb[0].mxu0 %v1469
  %v3925 = vpop.f32.mrb[0].mxu0
  %v3926 = vadd.f32 0.0, %v3925
  %v3927 = vpop.f32.mrb[0].mxu0
  %v3928 = vpop.f32.mrb[0].mxu0
  %v3929 = vadd.f32 0.0, %v3928
  %v3930 = vpop.f32.mrb[0].mxu0
  %3931 = vdwg.mxu0
  %v3932 = vadd.f32 %v3274, %v3870
  %v3933 = vadd.f32 %v3275, %v3873
  %v3934 = vadd.f32 %v3276, %v3878
  %v3935 = vadd.f32 %v3277, %v3881
  %v3936 = vadd.f32 %v3278, %v3886
  %v3937 = vadd.f32 %v3279, %v3889
  %v3938 = vadd.f32 %v3280, %v3894
  %v3939 = vadd.f32 %v3281, %v3897
  %v3940 = vadd.f32 %v3282, %v3902
  %v3941 = vadd.f32 %v3283, %v3905
  %v3942 = vadd.f32 %v3284, %v3910
  %v3943 = vadd.f32 %v3285, %v3913
  %v3944 = vadd.f32 %v3286, %v3918
  %v3945 = vadd.f32 %v3287, %v3921
  %v3946 = vadd.f32 %v3288, %v3926
  %v3947 = vadd.f32 %v3289, %v3929
  %v3948 = vunpack.c.l.b16 %v3552
  %v3949 = vunpack.c.h.b16 %v3552
  %v3950 = vunpack.c.l.b16 %v3566
  %v3951 = vunpack.c.h.b16 %v3566
  %v3952 = vunpack.c.l.b16 %v3580
  %v3953 = vunpack.c.h.b16 %v3580
  %v3954 = vunpack.c.l.b16 %v3594
  %v3955 = vunpack.c.h.b16 %v3594
  %v3956 = vunpack.c.l.b16 %v3608
  %v3957 = vunpack.c.h.b16 %v3608
  %v3958 = vunpack.c.l.b16 %v3622
  %v3959 = vunpack.c.h.b16 %v3622
  %v3960 = vunpack.c.l.b16 %v3636
  %v3961 = vunpack.c.h.b16 %v3636
  %v3962 = vunpack.c.l.b16 %v3650
  %v3963 = vunpack.c.h.b16 %v3650
  %v3964 = vunpack.c.l.b16 %v3664
  %v3965 = vunpack.c.h.b16 %v3664
  %v3966 = vunpack.c.l.b16 %v3678
  %v3967 = vunpack.c.h.b16 %v3678
  %v3968 = vunpack.c.l.b16 %v3692
  %v3969 = vunpack.c.h.b16 %v3692
  %v3970 = vunpack.c.l.b16 %v3706
  %v3971 = vunpack.c.h.b16 %v3706
  %v3972 = vunpack.c.l.b16 %v3720
  %v3973 = vunpack.c.h.b16 %v3720
  %v3974 = vunpack.c.l.b16 %v3734
  %v3975 = vunpack.c.h.b16 %v3734
  %v3976 = vunpack.c.l.b16 %v3748
  %v3977 = vunpack.c.h.b16 %v3748
  %v3978 = vunpack.c.l.b16 %v3762
  %v3979 = vunpack.c.h.b16 %v3762
  %v3980 = vpack.c.b16 %v3950, %v3948
  %v3981 = vpack.c.b16 %v3951, %v3949
  %v3982 = vpack.c.b16 %v3954, %v3952
  %v3983 = vpack.c.b16 %v3955, %v3953
  %v3984 = vpack.c.b16 %v3958, %v3956
  %v3985 = vpack.c.b16 %v3959, %v3957
  %v3986 = vpack.c.b16 %v3962, %v3960
  %v3987 = vpack.c.b16 %v3963, %v3961
  %v3988 = vpack.c.b16 %v3966, %v3964
  %v3989 = vpack.c.b16 %v3967, %v3965
  %v3990 = vpack.c.b16 %v3970, %v3968
  %v3991 = vpack.c.b16 %v3971, %v3969
  %v3992 = vpack.c.b16 %v3974, %v3972
  %v3993 = vpack.c.b16 %v3975, %v3973
  %v3994 = vpack.c.b16 %v3978, %v3976
  %v3995 = vpack.c.b16 %v3979, %v3977
  %v4005 = vsel %vm291, %v3981, 0
  %v4008 = vsel %vm291, %v3983, 0
  %v4011 = vsel %vm291, %v3985, 0
  %v4014 = vsel %vm291, %v3987, 0
  %v4017 = vsel %vm291, %v3989, 0
  %v4020 = vsel %vm291, %v3991, 0
  %v4023 = vsel %vm291, %v3993, 0
  %v4026 = vsel %vm291, %v3995, 0
  %4028 = vmatprep.subr.bf16.mxu0 0
  %4029 = vmatpush1.bf16.msra.mxu0 %v3809
  %4030 = vmatprep.subr.bf16.mxu0 0
  %4031 = vmatpush1.bf16.msra.mxu0 %v3810
  %4032 = vmatprep.subr.bf16.mxu0 0
  %4033 = vmatpush1.bf16.msra.mxu0 %v3811
  %4034 = vmatprep.subr.bf16.mxu0 0
  %4035 = vmatpush1.bf16.msra.mxu0 %v3812
  %4036 = vmatprep.subr.bf16.mxu0 0
  %4037 = vmatpush1.bf16.msra.mxu0 %v3813
  %4038 = vmatprep.subr.bf16.mxu0 0
  %4039 = vmatpush1.bf16.msra.mxu0 %v3814
  %4040 = vmatprep.subr.bf16.mxu0 0
  %4041 = vmatpush1.bf16.msra.mxu0 %v3815
  %4042 = vmatprep.subr.bf16.mxu0 0
  %4043 = vmatpush1.bf16.msra.mxu0 %v3816
  %4044 = vmatprep.subr.bf16.mxu0 0
  %4045 = vmatpush1.bf16.msra.mxu0 %v3817
  %4046 = vmatprep.subr.bf16.mxu0 0
  %4047 = vmatpush1.bf16.msra.mxu0 %v3818
  %4048 = vmatprep.subr.bf16.mxu0 0
  %4049 = vmatpush1.bf16.msra.mxu0 %v3819
  %4050 = vmatprep.subr.bf16.mxu0 0
  %4051 = vmatpush1.bf16.msra.mxu0 %v3833
  %4052 = vmatprep.subr.bf16.mxu0 0
  %4053 = vmatpush1.bf16.msra.mxu0 0
  %4054 = vmatprep.subr.bf16.mxu0 0
  %4055 = vmatpush1.bf16.msra.mxu0 0
  %4056 = vmatprep.subr.bf16.mxu0 0
  %4057 = vmatpush1.bf16.msra.mxu0 0
  %4058 = vmatprep.subr.bf16.mxu0 0
  %4059 = vmatpush1.bf16.msra.mxu0 0
  %4060 = vmatprep.mubr.bf16.mxu0 %v4005
  %4061 = vmatmul.mubr.bf16.gmra.mrb[0].mxu0 %v3980
  %v4062 = vpop.f32.mrb[0].mxu0
  %v4063 = vadd.f32 0.0, %v4062
  %v4064 = vpop.f32.mrb[0].mxu0
  %v4065 = vpop.f32.mrb[0].mxu0
  %v4066 = vadd.f32 0.0, %v4065
  %v4067 = vpop.f32.mrb[0].mxu0
  %4068 = vmatprep.mubr.bf16.mxu0 %v4008
  %4069 = vmatmul.mubr.bf16.gmra.mrb[0].mxu0 %v3982
  %v4070 = vpop.f32.mrb[0].mxu0
  %v4071 = vadd.f32 0.0, %v4070
  %v4072 = vpop.f32.mrb[0].mxu0
  %v4073 = vpop.f32.mrb[0].mxu0
  %v4074 = vadd.f32 0.0, %v4073
  %v4075 = vpop.f32.mrb[0].mxu0
  %4076 = vmatprep.mubr.bf16.mxu0 %v4011
  %4077 = vmatmul.mubr.bf16.gmra.mrb[0].mxu0 %v3984
  %v4078 = vpop.f32.mrb[0].mxu0
  %v4079 = vadd.f32 0.0, %v4078
  %v4080 = vpop.f32.mrb[0].mxu0
  %v4081 = vpop.f32.mrb[0].mxu0
  %v4082 = vadd.f32 0.0, %v4081
  %v4083 = vpop.f32.mrb[0].mxu0
  %4084 = vmatprep.mubr.bf16.mxu0 %v4014
  %4085 = vmatmul.mubr.bf16.gmra.mrb[0].mxu0 %v3986
  %v4086 = vpop.f32.mrb[0].mxu0
  %v4087 = vadd.f32 0.0, %v4086
  %v4088 = vpop.f32.mrb[0].mxu0
  %v4089 = vpop.f32.mrb[0].mxu0
  %v4090 = vadd.f32 0.0, %v4089
  %v4091 = vpop.f32.mrb[0].mxu0
  %4092 = vmatprep.mubr.bf16.mxu0 %v4017
  %4093 = vmatmul.mubr.bf16.gmra.mrb[0].mxu0 %v3988
  %v4094 = vpop.f32.mrb[0].mxu0
  %v4095 = vadd.f32 0.0, %v4094
  %v4096 = vpop.f32.mrb[0].mxu0
  %v4097 = vpop.f32.mrb[0].mxu0
  %v4098 = vadd.f32 0.0, %v4097
  %v4099 = vpop.f32.mrb[0].mxu0
  %4100 = vmatprep.mubr.bf16.mxu0 %v4020
  %4101 = vmatmul.mubr.bf16.gmra.mrb[0].mxu0 %v3990
  %v4102 = vpop.f32.mrb[0].mxu0
  %v4103 = vadd.f32 0.0, %v4102
  %v4104 = vpop.f32.mrb[0].mxu0
  %v4105 = vpop.f32.mrb[0].mxu0
  %v4106 = vadd.f32 0.0, %v4105
  %v4107 = vpop.f32.mrb[0].mxu0
  %4108 = vmatprep.mubr.bf16.mxu0 %v4023
  %4109 = vmatmul.mubr.bf16.gmra.mrb[0].mxu0 %v3992
  %v4110 = vpop.f32.mrb[0].mxu0
  %v4111 = vadd.f32 0.0, %v4110
  %v4112 = vpop.f32.mrb[0].mxu0
  %v4113 = vpop.f32.mrb[0].mxu0
  %v4114 = vadd.f32 0.0, %v4113
  %v4115 = vpop.f32.mrb[0].mxu0
  %4116 = vmatprep.mubr.bf16.mxu0 %v4026
  %4117 = vmatmul.mubr.bf16.gmra.mrb[0].mxu0 %v3994
  %v4118 = vpop.f32.mrb[0].mxu0
  %v4119 = vadd.f32 0.0, %v4118
  %v4120 = vpop.f32.mrb[0].mxu0
  %v4121 = vpop.f32.mrb[0].mxu0
  %v4122 = vadd.f32 0.0, %v4121
  %v4123 = vpop.f32.mrb[0].mxu0
  %4124 = vdwg.mxu0
  %v4125 = vadd.f32 %v3467, %v4063
  %v4126 = vadd.f32 %v3468, %v4066
  %v4127 = vadd.f32 %v3469, %v4071
  %v4128 = vadd.f32 %v3470, %v4074
  %v4129 = vadd.f32 %v3471, %v4079
  %v4130 = vadd.f32 %v3472, %v4082
  %v4131 = vadd.f32 %v3473, %v4087
  %v4132 = vadd.f32 %v3474, %v4090
  %v4133 = vadd.f32 %v3475, %v4095
  %v4134 = vadd.f32 %v3476, %v4098
  %v4135 = vadd.f32 %v3477, %v4103
  %v4136 = vadd.f32 %v3478, %v4106
  %v4137 = vadd.f32 %v3479, %v4111
  %v4138 = vadd.f32 %v3480, %v4114
  %v4139 = vadd.f32 %v3481, %v4119
  %v4140 = vadd.f32 %v3482, %v4122
  %s4141 = scalar_lea.vmem %s1, 644
  %v4142 = vld [vmem:[%s4141] sm:$0xf]
  %v4143 = vld [vmem:[%s4141 + $0x4] sm:$0xf]
  %v4144 = vld [vmem:[%s4141 + $0x8] sm:$0xf]
  %v4145 = vld [vmem:[%s4141 + $0xc] sm:$0xf]
  %v4146 = vld [vmem:[%s4141 + $0x10] sm:$0xf]
  %v4147 = vld [vmem:[%s4141 + $0x14] sm:$0xf]
  %v4148 = vld [vmem:[%s4141 + $0x18] sm:$0xf]
  %v4149 = vld [vmem:[%s4141 + $0x1c] sm:$0xf]
  %v4150 = vld [vmem:[%s4141 + $0x20] sm:$0xf]
  %v4151 = vld [vmem:[%s4141 + $0x24] sm:$0xf]
  %v4152 = vld [vmem:[%s4141 + $0x28] sm:$0xf]
  %v4153 = vld [vmem:[%s4141 + $0x2c] sm:$0xf]
  %v4154 = vld [vmem:[%s4141 + $0x30] sm:$0xf]
  %v4155 = vld [vmem:[%s4141 + $0x34] sm:$0xf]
  %v4156 = vld [vmem:[%s4141 + $0x38] sm:$0xf]
  %v4157 = vld [vmem:[%s4141 + $0x3c] sm:$0xf]
  %v4158 = vld [vmem:[%s4141 + $0x40] sm:$0xf]
  %v4159 = vld [vmem:[%s4141 + $0x44] sm:$0xf]
  %v4160 = vld [vmem:[%s4141 + $0x48] sm:$0xf]
  %v4161 = vld [vmem:[%s4141 + $0x4c] sm:$0xf]
  %v4162 = vld [vmem:[%s4141 + $0x50] sm:$0xf]
  %v4163 = vld [vmem:[%s4141 + $0x54] sm:$0xf]
  %v4164 = vld [vmem:[%s4141 + $0x58] sm:$0x3]
  %v4165 = vld [vmem:[%s1640] sm:$0xff]
  %v4166 = vld [vmem:[%s1640 + $0x8] sm:$0x11]
  %v4167 = vld [vmem:[%s1640 + $0x80] sm:$0xff]
  %v4168 = vld [vmem:[%s1640 + $0x88] sm:$0x11]
  %v4169 = vld [vmem:[%s1640 + $0x100] sm:$0xff]
  %v4170 = vld [vmem:[%s1640 + $0x108] sm:$0x11]
  %v4171 = vld [vmem:[%s1640 + $0x180] sm:$0xff]
  %v4172 = vld [vmem:[%s1640 + $0x188] sm:$0x11]
  %v4173 = vld [vmem:[%s1640 + $0x200] sm:$0xff]
  %v4174 = vld [vmem:[%s1640 + $0x208] sm:$0x11]
  %v4175 = vld [vmem:[%s1640 + $0x280] sm:$0xff]
  %v4176 = vld [vmem:[%s1640 + $0x288] sm:$0x11]
  %v4177 = vld [vmem:[%s1640 + $0x300] sm:$0xff]
  %v4178 = vld [vmem:[%s1640 + $0x308] sm:$0x11]
  %v4179 = vld [vmem:[%s1640 + $0x380] sm:$0xff]
  %v4180 = vld [vmem:[%s1640 + $0x388] sm:$0x11]
  %v4181 = vld [vmem:[%s1640 + $0x400] sm:$0xff]
  %v4182 = vld [vmem:[%s1640 + $0x408] sm:$0x11]
  %v4183 = vld [vmem:[%s1640 + $0x480] sm:$0xff]
  %v4184 = vld [vmem:[%s1640 + $0x488] sm:$0x11]
  %v4185 = vld [vmem:[%s1640 + $0x500] sm:$0xff]
  %v4186 = vld [vmem:[%s1640 + $0x508] sm:$0x11]
  %v4187 = vld [vmem:[%s1640 + $0x580] sm:$0xff]
  %v4188 = vld [vmem:[%s1640 + $0x588] sm:$0x11]
  %v4189 = vld [vmem:[%s1640 + $0x600] sm:$0xff]
  %v4190 = vld [vmem:[%s1640 + $0x608] sm:$0x11]
  %v4191 = vld [vmem:[%s1640 + $0x680] sm:$0xff]
  %v4192 = vld [vmem:[%s1640 + $0x688] sm:$0x11]
  %v4193 = vld [vmem:[%s1640 + $0x700] sm:$0xff]
  %v4194 = vld [vmem:[%s1640 + $0x708] sm:$0x11]
  %v4195 = vld [vmem:[%s1640 + $0x780] sm:$0xff]
  %v4196 = vld [vmem:[%s1640 + $0x788] sm:$0x11]
  %v4198 = vshrl.u32 %v4165, 16
  %v4200 = vrot.slane %v4198, 4
  %v4201 = vshll.u32 %v4165, 16
  %v4203 = vrot.slane %v4201, 5
  %v4204 = vor.u32 %v4200, %v4203
  %v4205 = vrot.slane %v4204, 4
  %v4207 = vshll.u32 %v4166, 16
  %v4209 = vrot.slane %v4207, 5
  %v4210 = vsel %vm2222, %v4205, %v4209
  %v4212 = vshrl.u32 %v4167, 16
  %v4214 = vrot.slane %v4212, 4
  %v4215 = vshll.u32 %v4167, 16
  %v4217 = vrot.slane %v4215, 5
  %v4218 = vor.u32 %v4214, %v4217
  %v4219 = vrot.slane %v4218, 4
  %v4221 = vshll.u32 %v4168, 16
  %v4223 = vrot.slane %v4221, 5
  %v4224 = vsel %vm2222, %v4219, %v4223
  %v4226 = vshrl.u32 %v4169, 16
  %v4228 = vrot.slane %v4226, 4
  %v4229 = vshll.u32 %v4169, 16
  %v4231 = vrot.slane %v4229, 5
  %v4232 = vor.u32 %v4228, %v4231
  %v4233 = vrot.slane %v4232, 4
  %v4235 = vshll.u32 %v4170, 16
  %v4237 = vrot.slane %v4235, 5
  %v4238 = vsel %vm2222, %v4233, %v4237
  %v4240 = vshrl.u32 %v4171, 16
  %v4242 = vrot.slane %v4240, 4
  %v4243 = vshll.u32 %v4171, 16
  %v4245 = vrot.slane %v4243, 5
  %v4246 = vor.u32 %v4242, %v4245
  %v4247 = vrot.slane %v4246, 4
  %v4249 = vshll.u32 %v4172, 16
  %v4251 = vrot.slane %v4249, 5
  %v4252 = vsel %vm2222, %v4247, %v4251
  %v4254 = vshrl.u32 %v4173, 16
  %v4256 = vrot.slane %v4254, 4
  %v4257 = vshll.u32 %v4173, 16
  %v4259 = vrot.slane %v4257, 5
  %v4260 = vor.u32 %v4256, %v4259
  %v4261 = vrot.slane %v4260, 4
  %v4263 = vshll.u32 %v4174, 16
  %v4265 = vrot.slane %v4263, 5
  %v4266 = vsel %vm2222, %v4261, %v4265
  %v4268 = vshrl.u32 %v4175, 16
  %v4270 = vrot.slane %v4268, 4
  %v4271 = vshll.u32 %v4175, 16
  %v4273 = vrot.slane %v4271, 5
  %v4274 = vor.u32 %v4270, %v4273
  %v4275 = vrot.slane %v4274, 4
  %v4277 = vshll.u32 %v4176, 16
  %v4279 = vrot.slane %v4277, 5
  %v4280 = vsel %vm2222, %v4275, %v4279
  %v4282 = vshrl.u32 %v4177, 16
  %v4284 = vrot.slane %v4282, 4
  %v4285 = vshll.u32 %v4177, 16
  %v4287 = vrot.slane %v4285, 5
  %v4288 = vor.u32 %v4284, %v4287
  %v4289 = vrot.slane %v4288, 4
  %v4291 = vshll.u32 %v4178, 16
  %v4293 = vrot.slane %v4291, 5
  %v4294 = vsel %vm2222, %v4289, %v4293
  %v4296 = vshrl.u32 %v4179, 16
  %v4298 = vrot.slane %v4296, 4
  %v4299 = vshll.u32 %v4179, 16
  %v4301 = vrot.slane %v4299, 5
  %v4302 = vor.u32 %v4298, %v4301
  %v4303 = vrot.slane %v4302, 4
  %v4305 = vshll.u32 %v4180, 16
  %v4307 = vrot.slane %v4305, 5
  %v4308 = vsel %vm2222, %v4303, %v4307
  %v4310 = vshrl.u32 %v4181, 16
  %v4312 = vrot.slane %v4310, 4
  %v4313 = vshll.u32 %v4181, 16
  %v4315 = vrot.slane %v4313, 5
  %v4316 = vor.u32 %v4312, %v4315
  %v4317 = vrot.slane %v4316, 4
  %v4319 = vshll.u32 %v4182, 16
  %v4321 = vrot.slane %v4319, 5
  %v4322 = vsel %vm2222, %v4317, %v4321
  %v4324 = vshrl.u32 %v4183, 16
  %v4326 = vrot.slane %v4324, 4
  %v4327 = vshll.u32 %v4183, 16
  %v4329 = vrot.slane %v4327, 5
  %v4330 = vor.u32 %v4326, %v4329
  %v4331 = vrot.slane %v4330, 4
  %v4333 = vshll.u32 %v4184, 16
  %v4335 = vrot.slane %v4333, 5
  %v4336 = vsel %vm2222, %v4331, %v4335
  %v4338 = vshrl.u32 %v4185, 16
  %v4340 = vrot.slane %v4338, 4
  %v4341 = vshll.u32 %v4185, 16
  %v4343 = vrot.slane %v4341, 5
  %v4344 = vor.u32 %v4340, %v4343
  %v4345 = vrot.slane %v4344, 4
  %v4347 = vshll.u32 %v4186, 16
  %v4349 = vrot.slane %v4347, 5
  %v4350 = vsel %vm2222, %v4345, %v4349
  %v4352 = vshrl.u32 %v4187, 16
  %v4354 = vrot.slane %v4352, 4
  %v4355 = vshll.u32 %v4187, 16
  %v4357 = vrot.slane %v4355, 5
  %v4358 = vor.u32 %v4354, %v4357
  %v4359 = vrot.slane %v4358, 4
  %v4361 = vshll.u32 %v4188, 16
  %v4363 = vrot.slane %v4361, 5
  %v4364 = vsel %vm2222, %v4359, %v4363
  %v4366 = vshrl.u32 %v4189, 16
  %v4368 = vrot.slane %v4366, 4
  %v4369 = vshll.u32 %v4189, 16
  %v4371 = vrot.slane %v4369, 5
  %v4372 = vor.u32 %v4368, %v4371
  %v4373 = vrot.slane %v4372, 4
  %v4375 = vshll.u32 %v4190, 16
  %v4377 = vrot.slane %v4375, 5
  %v4378 = vsel %vm2222, %v4373, %v4377
  %v4380 = vshrl.u32 %v4191, 16
  %v4382 = vrot.slane %v4380, 4
  %v4383 = vshll.u32 %v4191, 16
  %v4385 = vrot.slane %v4383, 5
  %v4386 = vor.u32 %v4382, %v4385
  %v4387 = vrot.slane %v4386, 4
  %v4389 = vshll.u32 %v4192, 16
  %v4391 = vrot.slane %v4389, 5
  %v4392 = vsel %vm2222, %v4387, %v4391
  %v4394 = vshrl.u32 %v4193, 16
  %v4396 = vrot.slane %v4394, 4
  %v4397 = vshll.u32 %v4193, 16
  %v4399 = vrot.slane %v4397, 5
  %v4400 = vor.u32 %v4396, %v4399
  %v4401 = vrot.slane %v4400, 4
  %v4403 = vshll.u32 %v4194, 16
  %v4405 = vrot.slane %v4403, 5
  %v4406 = vsel %vm2222, %v4401, %v4405
  %v4408 = vshrl.u32 %v4195, 16
  %v4410 = vrot.slane %v4408, 4
  %v4411 = vshll.u32 %v4195, 16
  %v4413 = vrot.slane %v4411, 5
  %v4414 = vor.u32 %v4410, %v4413
  %v4415 = vrot.slane %v4414, 4
  %v4417 = vshll.u32 %v4196, 16
  %v4419 = vrot.slane %v4417, 5
  %v4420 = vsel %vm2222, %v4415, %v4419
  %v4444 = vunpack.c.l.b16 %v4142
  %v4445 = vunpack.c.l.b16 %v4143
  %v4446 = vunpack.c.l.b16 %v4144
  %v4447 = vunpack.c.l.b16 %v4145
  %v4448 = vunpack.c.l.b16 %v4146
  %v4449 = vunpack.c.l.b16 %v4147
  %v4450 = vunpack.c.l.b16 %v4148
  %v4451 = vunpack.c.l.b16 %v4149
  %v4452 = vunpack.c.l.b16 %v4150
  %v4453 = vunpack.c.l.b16 %v4151
  %v4454 = vunpack.c.l.b16 %v4152
  %v4455 = vunpack.c.l.b16 %v4153
  %v4456 = vunpack.c.l.b16 %v4154
  %v4457 = vunpack.c.l.b16 %v4155
  %v4458 = vunpack.c.l.b16 %v4156
  %v4459 = vunpack.c.l.b16 %v4157
  %v4460 = vunpack.c.l.b16 %v4158
  %v4461 = vunpack.c.l.b16 %v4159
  %v4462 = vunpack.c.l.b16 %v4160
  %v4463 = vunpack.c.l.b16 %v4161
  %v4464 = vunpack.c.l.b16 %v4162
  %v4465 = vunpack.c.l.b16 %v4163
  %v4466 = vunpack.c.l.b16 %v4164
  %v4467 = vpack.c.b16 %v4445, %v4444
  %v4468 = vpack.c.b16 %v4447, %v4446
  %v4469 = vpack.c.b16 %v4449, %v4448
  %v4470 = vpack.c.b16 %v4451, %v4450
  %v4471 = vpack.c.b16 %v4453, %v4452
  %v4472 = vpack.c.b16 %v4455, %v4454
  %v4473 = vpack.c.b16 %v4457, %v4456
  %v4474 = vpack.c.b16 %v4459, %v4458
  %v4475 = vpack.c.b16 %v4461, %v4460
  %v4476 = vpack.c.b16 %v4463, %v4462
  %v4477 = vpack.c.b16 %v4465, %v4464
  %v4478 = vpack.c.b16 %v4466, %v4466
  %v4491 = vsel %vm316, %v4478, 0
  %4493 = vmatprep.subr.bf16.mxu0 0
  %4494 = vmatpush1.bf16.msra.mxu0 %v4467
  %4495 = vmatprep.subr.bf16.mxu0 0
  %4496 = vmatpush1.bf16.msra.mxu0 %v4468
  %4497 = vmatprep.subr.bf16.mxu0 0
  %4498 = vmatpush1.bf16.msra.mxu0 %v4469
  %4499 = vmatprep.subr.bf16.mxu0 0
  %4500 = vmatpush1.bf16.msra.mxu0 %v4470
  %4501 = vmatprep.subr.bf16.mxu0 0
  %4502 = vmatpush1.bf16.msra.mxu0 %v4471
  %4503 = vmatprep.subr.bf16.mxu0 0
  %4504 = vmatpush1.bf16.msra.mxu0 %v4472
  %4505 = vmatprep.subr.bf16.mxu0 0
  %4506 = vmatpush1.bf16.msra.mxu0 %v4473
  %4507 = vmatprep.subr.bf16.mxu0 0
  %4508 = vmatpush1.bf16.msra.mxu0 %v4474
  %4509 = vmatprep.subr.bf16.mxu0 0
  %4510 = vmatpush1.bf16.msra.mxu0 %v4475
  %4511 = vmatprep.subr.bf16.mxu0 0
  %4512 = vmatpush1.bf16.msra.mxu0 %v4476
  %4513 = vmatprep.subr.bf16.mxu0 0
  %4514 = vmatpush1.bf16.msra.mxu0 %v4477
  %4515 = vmatprep.subr.bf16.mxu0 0
  %4516 = vmatpush1.bf16.msra.mxu0 %v4491
  %4517 = vmatprep.subr.bf16.mxu0 0
  %4518 = vmatpush1.bf16.msra.mxu0 0
  %4519 = vmatprep.subr.bf16.mxu0 0
  %4520 = vmatpush1.bf16.msra.mxu0 0
  %4521 = vmatprep.subr.bf16.mxu0 0
  %4522 = vmatpush1.bf16.msra.mxu0 0
  %4523 = vmatprep.subr.bf16.mxu0 0
  %4524 = vmatpush1.bf16.msra.mxu0 0
  %4525 = vmatprep.mubr.bf16.mxu0 %v2028
  %4526 = vmatmul.mubr.bf16.gmra.mrb[0].mxu0 %v2003
  %v4527 = vpop.f32.mrb[0].mxu0
  %v4528 = vadd.f32 0.0, %v4527
  %v4529 = vpop.f32.mrb[0].mxu0
  %v4530 = vpop.f32.mrb[0].mxu0
  %v4531 = vadd.f32 0.0, %v4530
  %v4532 = vpop.f32.mrb[0].mxu0
  %4533 = vmatprep.mubr.bf16.mxu0 %v2031
  %4534 = vmatmul.mubr.bf16.gmra.mrb[0].mxu0 %v2005
  %v4535 = vpop.f32.mrb[0].mxu0
  %v4536 = vadd.f32 0.0, %v4535
  %v4537 = vpop.f32.mrb[0].mxu0
  %v4538 = vpop.f32.mrb[0].mxu0
  %v4539 = vadd.f32 0.0, %v4538
  %v4540 = vpop.f32.mrb[0].mxu0
  %4541 = vmatprep.mubr.bf16.mxu0 %v2034
  %4542 = vmatmul.mubr.bf16.gmra.mrb[0].mxu0 %v2007
  %v4543 = vpop.f32.mrb[0].mxu0
  %v4544 = vadd.f32 0.0, %v4543
  %v4545 = vpop.f32.mrb[0].mxu0
  %v4546 = vpop.f32.mrb[0].mxu0
  %v4547 = vadd.f32 0.0, %v4546
  %v4548 = vpop.f32.mrb[0].mxu0
  %4549 = vmatprep.mubr.bf16.mxu0 %v2037
  %4550 = vmatmul.mubr.bf16.gmra.mrb[0].mxu0 %v2009
  %v4551 = vpop.f32.mrb[0].mxu0
  %v4552 = vadd.f32 0.0, %v4551
  %v4553 = vpop.f32.mrb[0].mxu0
  %v4554 = vpop.f32.mrb[0].mxu0
  %v4555 = vadd.f32 0.0, %v4554
  %v4556 = vpop.f32.mrb[0].mxu0
  %4557 = vmatprep.mubr.bf16.mxu0 %v2040
  %4558 = vmatmul.mubr.bf16.gmra.mrb[0].mxu0 %v2011
  %v4559 = vpop.f32.mrb[0].mxu0
  %v4560 = vadd.f32 0.0, %v4559
  %v4561 = vpop.f32.mrb[0].mxu0
  %v4562 = vpop.f32.mrb[0].mxu0
  %v4563 = vadd.f32 0.0, %v4562
  %v4564 = vpop.f32.mrb[0].mxu0
  %4565 = vmatprep.mubr.bf16.mxu0 %v2043
  %4566 = vmatmul.mubr.bf16.gmra.mrb[0].mxu0 %v2013
  %v4567 = vpop.f32.mrb[0].mxu0
  %v4568 = vadd.f32 0.0, %v4567
  %v4569 = vpop.f32.mrb[0].mxu0
  %v4570 = vpop.f32.mrb[0].mxu0
  %v4571 = vadd.f32 0.0, %v4570
  %v4572 = vpop.f32.mrb[0].mxu0
  %4573 = vmatprep.mubr.bf16.mxu0 %v2046
  %4574 = vmatmul.mubr.bf16.gmra.mrb[0].mxu0 %v2015
  %v4575 = vpop.f32.mrb[0].mxu0
  %v4576 = vadd.f32 0.0, %v4575
  %v4577 = vpop.f32.mrb[0].mxu0
  %v4578 = vpop.f32.mrb[0].mxu0
  %v4579 = vadd.f32 0.0, %v4578
  %v4580 = vpop.f32.mrb[0].mxu0
  %4581 = vmatprep.mubr.bf16.mxu0 %v2049
  %4582 = vmatmul.mubr.bf16.gmra.mrb[0].mxu0 %v2017
  %v4583 = vpop.f32.mrb[0].mxu0
  %v4584 = vadd.f32 0.0, %v4583
  %v4585 = vpop.f32.mrb[0].mxu0
  %v4586 = vpop.f32.mrb[0].mxu0
  %v4587 = vadd.f32 0.0, %v4586
  %v4588 = vpop.f32.mrb[0].mxu0
  %4589 = vdwg.mxu0
  %v4590 = vadd.f32 %v3932, %v4528
  %v4591 = vadd.f32 %v3933, %v4531
  %v4592 = vadd.f32 %v3934, %v4536
  %v4593 = vadd.f32 %v3935, %v4539
  %v4594 = vadd.f32 %v3936, %v4544
  %v4595 = vadd.f32 %v3937, %v4547
  %v4596 = vadd.f32 %v3938, %v4552
  %v4597 = vadd.f32 %v3939, %v4555
  %v4598 = vadd.f32 %v3940, %v4560
  %v4599 = vadd.f32 %v3941, %v4563
  %v4600 = vadd.f32 %v3942, %v4568
  %v4601 = vadd.f32 %v3943, %v4571
  %v4602 = vadd.f32 %v3944, %v4576
  %v4603 = vadd.f32 %v3945, %v4579
  %v4604 = vadd.f32 %v3946, %v4584
  %v4605 = vadd.f32 %v3947, %v4587
  %v4606 = vunpack.c.l.b16 %v4210
  %v4607 = vunpack.c.h.b16 %v4210
  %v4608 = vunpack.c.l.b16 %v4224
  %v4609 = vunpack.c.h.b16 %v4224
  %v4610 = vunpack.c.l.b16 %v4238
  %v4611 = vunpack.c.h.b16 %v4238
  %v4612 = vunpack.c.l.b16 %v4252
  %v4613 = vunpack.c.h.b16 %v4252
  %v4614 = vunpack.c.l.b16 %v4266
  %v4615 = vunpack.c.h.b16 %v4266
  %v4616 = vunpack.c.l.b16 %v4280
  %v4617 = vunpack.c.h.b16 %v4280
  %v4618 = vunpack.c.l.b16 %v4294
  %v4619 = vunpack.c.h.b16 %v4294
  %v4620 = vunpack.c.l.b16 %v4308
  %v4621 = vunpack.c.h.b16 %v4308
  %v4622 = vunpack.c.l.b16 %v4322
  %v4623 = vunpack.c.h.b16 %v4322
  %v4624 = vunpack.c.l.b16 %v4336
  %v4625 = vunpack.c.h.b16 %v4336
  %v4626 = vunpack.c.l.b16 %v4350
  %v4627 = vunpack.c.h.b16 %v4350
  %v4628 = vunpack.c.l.b16 %v4364
  %v4629 = vunpack.c.h.b16 %v4364
  %v4630 = vunpack.c.l.b16 %v4378
  %v4631 = vunpack.c.h.b16 %v4378
  %v4632 = vunpack.c.l.b16 %v4392
  %v4633 = vunpack.c.h.b16 %v4392
  %v4634 = vunpack.c.l.b16 %v4406
  %v4635 = vunpack.c.h.b16 %v4406
  %v4636 = vunpack.c.l.b16 %v4420
  %v4637 = vunpack.c.h.b16 %v4420
  %v4638 = vpack.c.b16 %v4608, %v4606
  %v4639 = vpack.c.b16 %v4609, %v4607
  %v4640 = vpack.c.b16 %v4612, %v4610
  %v4641 = vpack.c.b16 %v4613, %v4611
  %v4642 = vpack.c.b16 %v4616, %v4614
  %v4643 = vpack.c.b16 %v4617, %v4615
  %v4644 = vpack.c.b16 %v4620, %v4618
  %v4645 = vpack.c.b16 %v4621, %v4619
  %v4646 = vpack.c.b16 %v4624, %v4622
  %v4647 = vpack.c.b16 %v4625, %v4623
  %v4648 = vpack.c.b16 %v4628, %v4626
  %v4649 = vpack.c.b16 %v4629, %v4627
  %v4650 = vpack.c.b16 %v4632, %v4630
  %v4651 = vpack.c.b16 %v4633, %v4631
  %v4652 = vpack.c.b16 %v4636, %v4634
  %v4653 = vpack.c.b16 %v4637, %v4635
  %v4663 = vsel %vm291, %v4639, 0
  %v4666 = vsel %vm291, %v4641, 0
  %v4669 = vsel %vm291, %v4643, 0
  %v4672 = vsel %vm291, %v4645, 0
  %v4675 = vsel %vm291, %v4647, 0
  %v4678 = vsel %vm291, %v4649, 0
  %v4681 = vsel %vm291, %v4651, 0
  %v4684 = vsel %vm291, %v4653, 0
  %4686 = vmatprep.subr.bf16.mxu0 0
  %4687 = vmatpush1.bf16.msra.mxu0 %v4467
  %4688 = vmatprep.subr.bf16.mxu0 0
  %4689 = vmatpush1.bf16.msra.mxu0 %v4468
  %4690 = vmatprep.subr.bf16.mxu0 0
  %4691 = vmatpush1.bf16.msra.mxu0 %v4469
  %4692 = vmatprep.subr.bf16.mxu0 0
  %4693 = vmatpush1.bf16.msra.mxu0 %v4470
  %4694 = vmatprep.subr.bf16.mxu0 0
  %4695 = vmatpush1.bf16.msra.mxu0 %v4471
  %4696 = vmatprep.subr.bf16.mxu0 0
  %4697 = vmatpush1.bf16.msra.mxu0 %v4472
  %4698 = vmatprep.subr.bf16.mxu0 0
  %4699 = vmatpush1.bf16.msra.mxu0 %v4473
  %4700 = vmatprep.subr.bf16.mxu0 0
  %4701 = vmatpush1.bf16.msra.mxu0 %v4474
  %4702 = vmatprep.subr.bf16.mxu0 0
  %4703 = vmatpush1.bf16.msra.mxu0 %v4475
  %4704 = vmatprep.subr.bf16.mxu0 0
  %4705 = vmatpush1.bf16.msra.mxu0 %v4476
  %4706 = vmatprep.subr.bf16.mxu0 0
  %4707 = vmatpush1.bf16.msra.mxu0 %v4477
  %4708 = vmatprep.subr.bf16.mxu0 0
  %4709 = vmatpush1.bf16.msra.mxu0 %v4491
  %4710 = vmatprep.subr.bf16.mxu0 0
  %4711 = vmatpush1.bf16.msra.mxu0 0
  %4712 = vmatprep.subr.bf16.mxu0 0
  %4713 = vmatpush1.bf16.msra.mxu0 0
  %4714 = vmatprep.subr.bf16.mxu0 0
  %4715 = vmatpush1.bf16.msra.mxu0 0
  %4716 = vmatprep.subr.bf16.mxu0 0
  %4717 = vmatpush1.bf16.msra.mxu0 0
  %4718 = vmatprep.mubr.bf16.mxu0 %v4663
  %4719 = vmatmul.mubr.bf16.gmra.mrb[0].mxu0 %v4638
  %v4720 = vpop.f32.mrb[0].mxu0
  %v4721 = vadd.f32 0.0, %v4720
  %v4722 = vpop.f32.mrb[0].mxu0
  %v4723 = vpop.f32.mrb[0].mxu0
  %v4724 = vadd.f32 0.0, %v4723
  %v4725 = vpop.f32.mrb[0].mxu0
  %4726 = vmatprep.mubr.bf16.mxu0 %v4666
  %4727 = vmatmul.mubr.bf16.gmra.mrb[0].mxu0 %v4640
  %v4728 = vpop.f32.mrb[0].mxu0
  %v4729 = vadd.f32 0.0, %v4728
  %v4730 = vpop.f32.mrb[0].mxu0
  %v4731 = vpop.f32.mrb[0].mxu0
  %v4732 = vadd.f32 0.0, %v4731
  %v4733 = vpop.f32.mrb[0].mxu0
  %4734 = vmatprep.mubr.bf16.mxu0 %v4669
  %4735 = vmatmul.mubr.bf16.gmra.mrb[0].mxu0 %v4642
  %v4736 = vpop.f32.mrb[0].mxu0
  %v4737 = vadd.f32 0.0, %v4736
  %v4738 = vpop.f32.mrb[0].mxu0
  %v4739 = vpop.f32.mrb[0].mxu0
  %v4740 = vadd.f32 0.0, %v4739
  %v4741 = vpop.f32.mrb[0].mxu0
  %4742 = vmatprep.mubr.bf16.mxu0 %v4672
  %4743 = vmatmul.mubr.bf16.gmra.mrb[0].mxu0 %v4644
  %v4744 = vpop.f32.mrb[0].mxu0
  %v4745 = vadd.f32 0.0, %v4744
  %v4746 = vpop.f32.mrb[0].mxu0
  %v4747 = vpop.f32.mrb[0].mxu0
  %v4748 = vadd.f32 0.0, %v4747
  %v4749 = vpop.f32.mrb[0].mxu0
  %4750 = vmatprep.mubr.bf16.mxu0 %v4675
  %4751 = vmatmul.mubr.bf16.gmra.mrb[0].mxu0 %v4646
  %v4752 = vpop.f32.mrb[0].mxu0
  %v4753 = vadd.f32 0.0, %v4752
  %v4754 = vpop.f32.mrb[0].mxu0
  %v4755 = vpop.f32.mrb[0].mxu0
  %v4756 = vadd.f32 0.0, %v4755
  %v4757 = vpop.f32.mrb[0].mxu0
  %4758 = vmatprep.mubr.bf16.mxu0 %v4678
  %4759 = vmatmul.mubr.bf16.gmra.mrb[0].mxu0 %v4648
  %v4760 = vpop.f32.mrb[0].mxu0
  %v4761 = vadd.f32 0.0, %v4760
  %v4762 = vpop.f32.mrb[0].mxu0
  %v4763 = vpop.f32.mrb[0].mxu0
  %v4764 = vadd.f32 0.0, %v4763
  %v4765 = vpop.f32.mrb[0].mxu0
  %4766 = vmatprep.mubr.bf16.mxu0 %v4681
  %4767 = vmatmul.mubr.bf16.gmra.mrb[0].mxu0 %v4650
  %v4768 = vpop.f32.mrb[0].mxu0
  %v4769 = vadd.f32 0.0, %v4768
  %v4770 = vpop.f32.mrb[0].mxu0
  %v4771 = vpop.f32.mrb[0].mxu0
  %v4772 = vadd.f32 0.0, %v4771
  %v4773 = vpop.f32.mrb[0].mxu0
  %4774 = vmatprep.mubr.bf16.mxu0 %v4684
  %4775 = vmatmul.mubr.bf16.gmra.mrb[0].mxu0 %v4652
  %v4776 = vpop.f32.mrb[0].mxu0
  %v4777 = vadd.f32 0.0, %v4776
  %v4778 = vpop.f32.mrb[0].mxu0
  %v4779 = vpop.f32.mrb[0].mxu0
  %v4780 = vadd.f32 0.0, %v4779
  %v4781 = vpop.f32.mrb[0].mxu0
  %4782 = vdwg.mxu0
  %v4783 = vadd.f32 %v4125, %v4721
  %v4784 = vadd.f32 %v4126, %v4724
  %v4785 = vadd.f32 %v4127, %v4729
  %v4786 = vadd.f32 %v4128, %v4732
  %v4787 = vadd.f32 %v4129, %v4737
  %v4788 = vadd.f32 %v4130, %v4740
  %v4789 = vadd.f32 %v4131, %v4745
  %v4790 = vadd.f32 %v4132, %v4748
  %v4791 = vadd.f32 %v4133, %v4753
  %v4792 = vadd.f32 %v4134, %v4756
  %v4793 = vadd.f32 %v4135, %v4761
  %v4794 = vadd.f32 %v4136, %v4764
  %v4795 = vadd.f32 %v4137, %v4769
  %v4796 = vadd.f32 %v4138, %v4772
  %v4797 = vadd.f32 %v4139, %v4777
  %v4798 = vadd.f32 %v4140, %v4780
  %v4799 = vld [vmem:[%s7] sm:$0x1]
  %v4801 = vlaneseq
  %v4802 = vshrl.u32 %v4801, 7
  %v4803 = vsub.s32 0, %v4802
  %v4804 = vrot.slane %v4799, %v4803
  %v4806 = vadd.f32 %v4590, %v4804
  %v4807 = vadd.f32 %v4591, %v4804
  %v4808 = vadd.f32 %v4592, %v4804
  %v4809 = vadd.f32 %v4593, %v4804
  %v4810 = vadd.f32 %v4594, %v4804
  %v4811 = vadd.f32 %v4595, %v4804
  %v4812 = vadd.f32 %v4596, %v4804
  %v4813 = vadd.f32 %v4597, %v4804
  %v4814 = vadd.f32 %v4598, %v4804
  %v4815 = vadd.f32 %v4599, %v4804
  %v4816 = vadd.f32 %v4600, %v4804
  %v4817 = vadd.f32 %v4601, %v4804
  %v4818 = vadd.f32 %v4602, %v4804
  %v4819 = vadd.f32 %v4603, %v4804
  %v4820 = vadd.f32 %v4604, %v4804
  %v4821 = vadd.f32 %v4605, %v4804
  %vm4822 = vcmp.ge.f32.partialorder %v4806, 0.0
  %vm4823 = vcmp.ge.f32.partialorder %v4807, 0.0
  %vm4824 = vcmp.ge.f32.partialorder %v4808, 0.0
  %vm4825 = vcmp.ge.f32.partialorder %v4809, 0.0
  %vm4826 = vcmp.ge.f32.partialorder %v4810, 0.0
  %vm4827 = vcmp.ge.f32.partialorder %v4811, 0.0
  %vm4828 = vcmp.ge.f32.partialorder %v4812, 0.0
  %vm4829 = vcmp.ge.f32.partialorder %v4813, 0.0
  %vm4830 = vcmp.ge.f32.partialorder %v4814, 0.0
  %vm4831 = vcmp.ge.f32.partialorder %v4815, 0.0
  %vm4832 = vcmp.ge.f32.partialorder %v4816, 0.0
  %vm4833 = vcmp.ge.f32.partialorder %v4817, 0.0
  %vm4834 = vcmp.ge.f32.partialorder %v4818, 0.0
  %vm4835 = vcmp.ge.f32.partialorder %v4819, 0.0
  %vm4836 = vcmp.ge.f32.partialorder %v4820, 0.0
  %vm4837 = vcmp.ge.f32.partialorder %v4821, 0.0
  %v4838 = vmul.f32 %v4806, 0.2
  %v4839 = vmul.f32 %v4807, 0.2
  %v4840 = vmul.f32 %v4808, 0.2
  %v4841 = vmul.f32 %v4809, 0.2
  %v4842 = vmul.f32 %v4810, 0.2
  %v4843 = vmul.f32 %v4811, 0.2
  %v4844 = vmul.f32 %v4812, 0.2
  %v4845 = vmul.f32 %v4813, 0.2
  %v4846 = vmul.f32 %v4814, 0.2
  %v4847 = vmul.f32 %v4815, 0.2
  %v4848 = vmul.f32 %v4816, 0.2
  %v4849 = vmul.f32 %v4817, 0.2
  %v4850 = vmul.f32 %v4818, 0.2
  %v4851 = vmul.f32 %v4819, 0.2
  %v4852 = vmul.f32 %v4820, 0.2
  %v4853 = vmul.f32 %v4821, 0.2
  %v4854 = vsel %vm4822, %v4806, %v4838
  %v4855 = vsel %vm4823, %v4807, %v4839
  %v4856 = vsel %vm4824, %v4808, %v4840
  %v4857 = vsel %vm4825, %v4809, %v4841
  %v4858 = vsel %vm4826, %v4810, %v4842
  %v4859 = vsel %vm4827, %v4811, %v4843
  %v4860 = vsel %vm4828, %v4812, %v4844
  %v4861 = vsel %vm4829, %v4813, %v4845
  %v4862 = vsel %vm4830, %v4814, %v4846
  %v4863 = vsel %vm4831, %v4815, %v4847
  %v4864 = vsel %vm4832, %v4816, %v4848
  %v4865 = vsel %vm4833, %v4817, %v4849
  %v4866 = vsel %vm4834, %v4818, %v4850
  %v4867 = vsel %vm4835, %v4819, %v4851
  %v4868 = vsel %vm4836, %v4820, %v4852
  %v4869 = vsel %vm4837, %v4821, %v4853
  %v4870 = vpack.c.bf16 %v4855, %v4854
  %v4871 = vpack.c.bf16 %v4857, %v4856
  %v4872 = vpack.c.bf16 %v4859, %v4858
  %v4873 = vpack.c.bf16 %v4861, %v4860
  %v4874 = vpack.c.bf16 %v4863, %v4862
  %v4875 = vpack.c.bf16 %v4865, %v4864
  %v4876 = vpack.c.bf16 %v4867, %v4866
  %v4877 = vpack.c.bf16 %v4869, %v4868
  %v4878 = vadd.f32 %v4783, %v4804
  %v4879 = vadd.f32 %v4784, %v4804
  %v4880 = vadd.f32 %v4785, %v4804
  %v4881 = vadd.f32 %v4786, %v4804
  %v4882 = vadd.f32 %v4787, %v4804
  %v4883 = vadd.f32 %v4788, %v4804
  %v4884 = vadd.f32 %v4789, %v4804
  %v4885 = vadd.f32 %v4790, %v4804
  %v4886 = vadd.f32 %v4791, %v4804
  %v4887 = vadd.f32 %v4792, %v4804
  %v4888 = vadd.f32 %v4793, %v4804
  %v4889 = vadd.f32 %v4794, %v4804
  %v4890 = vadd.f32 %v4795, %v4804
  %v4891 = vadd.f32 %v4796, %v4804
  %v4892 = vadd.f32 %v4797, %v4804
  %v4893 = vadd.f32 %v4798, %v4804
  %vm4894 = vcmp.ge.f32.partialorder %v4878, 0.0
  %vm4895 = vcmp.ge.f32.partialorder %v4879, 0.0
  %vm4896 = vcmp.ge.f32.partialorder %v4880, 0.0
  %vm4897 = vcmp.ge.f32.partialorder %v4881, 0.0
  %vm4898 = vcmp.ge.f32.partialorder %v4882, 0.0
  %vm4899 = vcmp.ge.f32.partialorder %v4883, 0.0
  %vm4900 = vcmp.ge.f32.partialorder %v4884, 0.0
  %vm4901 = vcmp.ge.f32.partialorder %v4885, 0.0
  %vm4902 = vcmp.ge.f32.partialorder %v4886, 0.0
  %vm4903 = vcmp.ge.f32.partialorder %v4887, 0.0
  %vm4904 = vcmp.ge.f32.partialorder %v4888, 0.0
  %vm4905 = vcmp.ge.f32.partialorder %v4889, 0.0
  %vm4906 = vcmp.ge.f32.partialorder %v4890, 0.0
  %vm4907 = vcmp.ge.f32.partialorder %v4891, 0.0
  %vm4908 = vcmp.ge.f32.partialorder %v4892, 0.0
  %vm4909 = vcmp.ge.f32.partialorder %v4893, 0.0
  %v4910 = vmul.f32 %v4878, 0.2
  %v4911 = vmul.f32 %v4879, 0.2
  %v4912 = vmul.f32 %v4880, 0.2
  %v4913 = vmul.f32 %v4881, 0.2
  %v4914 = vmul.f32 %v4882, 0.2
  %v4915 = vmul.f32 %v4883, 0.2
  %v4916 = vmul.f32 %v4884, 0.2
  %v4917 = vmul.f32 %v4885, 0.2
  %v4918 = vmul.f32 %v4886, 0.2
  %v4919 = vmul.f32 %v4887, 0.2
  %v4920 = vmul.f32 %v4888, 0.2
  %v4921 = vmul.f32 %v4889, 0.2
  %v4922 = vmul.f32 %v4890, 0.2
  %v4923 = vmul.f32 %v4891, 0.2
  %v4924 = vmul.f32 %v4892, 0.2
  %v4925 = vmul.f32 %v4893, 0.2
  %v4926 = vsel %vm4894, %v4878, %v4910
  %v4927 = vsel %vm4895, %v4879, %v4911
  %v4928 = vsel %vm4896, %v4880, %v4912
  %v4929 = vsel %vm4897, %v4881, %v4913
  %v4930 = vsel %vm4898, %v4882, %v4914
  %v4931 = vsel %vm4899, %v4883, %v4915
  %v4932 = vsel %vm4900, %v4884, %v4916
  %v4933 = vsel %vm4901, %v4885, %v4917
  %v4934 = vsel %vm4902, %v4886, %v4918
  %v4935 = vsel %vm4903, %v4887, %v4919
  %v4936 = vsel %vm4904, %v4888, %v4920
  %v4937 = vsel %vm4905, %v4889, %v4921
  %v4938 = vsel %vm4906, %v4890, %v4922
  %v4939 = vsel %vm4907, %v4891, %v4923
  %v4940 = vsel %vm4908, %v4892, %v4924
  %v4941 = vsel %vm4909, %v4893, %v4925
  %v4942 = vpack.c.bf16 %v4927, %v4926
  %v4943 = vpack.c.bf16 %v4929, %v4928
  %v4944 = vpack.c.bf16 %v4931, %v4930
  %v4945 = vpack.c.bf16 %v4933, %v4932
  %v4946 = vpack.c.bf16 %v4935, %v4934
  %v4947 = vpack.c.bf16 %v4937, %v4936
  %v4948 = vpack.c.bf16 %v4939, %v4938
  %v4949 = vpack.c.bf16 %v4941, %v4940
  %v4958 = vunpack.c.l.b16 %v4870
  %v4959 = vunpack.c.h.b16 %v4870
  %v4960 = vunpack.c.l.b16 %v4871
  %v4961 = vunpack.c.h.b16 %v4871
  %v4962 = vunpack.c.l.b16 %v4872
  %v4963 = vunpack.c.h.b16 %v4872
  %v4964 = vunpack.c.l.b16 %v4873
  %v4965 = vunpack.c.h.b16 %v4873
  %v4966 = vunpack.c.l.b16 %v4874
  %v4967 = vunpack.c.h.b16 %v4874
  %v4968 = vunpack.c.l.b16 %v4875
  %v4969 = vunpack.c.h.b16 %v4875
  %v4970 = vunpack.c.l.b16 %v4876
  %v4971 = vunpack.c.h.b16 %v4876
  %v4972 = vunpack.c.l.b16 %v4877
  %v4973 = vunpack.c.h.b16 %v4877
  %v4974 = vpack.c.b16 %v4958, %v4958
  %v4975 = vpack.c.b16 %v4959, %v4959
  %v4976 = vpack.c.b16 %v4960, %v4960
  %v4977 = vpack.c.b16 %v4961, %v4961
  %v4978 = vpack.c.b16 %v4962, %v4962
  %v4979 = vpack.c.b16 %v4963, %v4963
  %v4980 = vpack.c.b16 %v4964, %v4964
  %v4981 = vpack.c.b16 %v4965, %v4965
  %v4982 = vpack.c.b16 %v4966, %v4966
  %v4983 = vpack.c.b16 %v4967, %v4967
  %v4984 = vpack.c.b16 %v4968, %v4968
  %v4985 = vpack.c.b16 %v4969, %v4969
  %v4986 = vpack.c.b16 %v4970, %v4970
  %v4987 = vpack.c.b16 %v4971, %v4971
  %v4988 = vpack.c.b16 %v4972, %v4972
  %v4989 = vpack.c.b16 %v4973, %v4973
  %vm5006 = vcmask 912384
  %5007 = vst.msk [vmem:[#allocation2] sm:$0xf] %vm5006, %v4974
  %5008 = vst.msk [vmem:[#allocation2 + $0x8] sm:$0xf] %vm5006, %v4975
  %5009 = vst.msk [vmem:[#allocation2 + $0x10] sm:$0xf] %vm5006, %v4976
  %5010 = vst.msk [vmem:[#allocation2 + $0x18] sm:$0xf] %vm5006, %v4977
  %5011 = vst.msk [vmem:[#allocation2 + $0x20] sm:$0xf] %vm5006, %v4978
  %5012 = vst.msk [vmem:[#allocation2 + $0x28] sm:$0xf] %vm5006, %v4979
  %5013 = vst.msk [vmem:[#allocation2 + $0x30] sm:$0xf] %vm5006, %v4980
  %5014 = vst.msk [vmem:[#allocation2 + $0x38] sm:$0xf] %vm5006, %v4981
  %5015 = vst.msk [vmem:[#allocation2 + $0x40] sm:$0xf] %vm5006, %v4982
  %5016 = vst.msk [vmem:[#allocation2 + $0x48] sm:$0xf] %vm5006, %v4983
  %5017 = vst.msk [vmem:[#allocation2 + $0x50] sm:$0xf] %vm5006, %v4984
  %5018 = vst.msk [vmem:[#allocation2 + $0x58] sm:$0xf] %vm5006, %v4985
  %5019 = vst.msk [vmem:[#allocation2 + $0x60] sm:$0xf] %vm5006, %v4986
  %5020 = vst.msk [vmem:[#allocation2 + $0x68] sm:$0xf] %vm5006, %v4987
  %5021 = vst.msk [vmem:[#allocation2 + $0x70] sm:$0xf] %vm5006, %v4988
  %5022 = vst.msk [vmem:[#allocation2 + $0x78] sm:$0xf] %vm5006, %v4989
  %vm5023 = vcmask 916484
  %5024 = vst.msk [vmem:[#allocation2] sm:$0xf0] %vm5023, 0
  %5025 = vst.msk [vmem:[#allocation2 + $0x8] sm:$0xf0] %vm5023, 0
  %5026 = vst.msk [vmem:[#allocation2 + $0x10] sm:$0xf0] %vm5023, 0
  %5027 = vst.msk [vmem:[#allocation2 + $0x18] sm:$0xf0] %vm5023, 0
  %5028 = vst.msk [vmem:[#allocation2 + $0x20] sm:$0xf0] %vm5023, 0
  %5029 = vst.msk [vmem:[#allocation2 + $0x28] sm:$0xf0] %vm5023, 0
  %5030 = vst.msk [vmem:[#allocation2 + $0x30] sm:$0xf0] %vm5023, 0
  %5031 = vst.msk [vmem:[#allocation2 + $0x38] sm:$0xf0] %vm5023, 0
  %5032 = vst.msk [vmem:[#allocation2 + $0x40] sm:$0xf0] %vm5023, 0
  %5033 = vst.msk [vmem:[#allocation2 + $0x48] sm:$0xf0] %vm5023, 0
  %5034 = vst.msk [vmem:[#allocation2 + $0x50] sm:$0xf0] %vm5023, 0
  %5035 = vst.msk [vmem:[#allocation2 + $0x58] sm:$0xf0] %vm5023, 0
  %5036 = vst.msk [vmem:[#allocation2 + $0x60] sm:$0xf0] %vm5023, 0
  %5037 = vst.msk [vmem:[#allocation2 + $0x68] sm:$0xf0] %vm5023, 0
  %5038 = vst.msk [vmem:[#allocation2 + $0x70] sm:$0xf0] %vm5023, 0
  %5039 = vst.msk [vmem:[#allocation2 + $0x78] sm:$0xf0] %vm5023, 0
  %v5048 = vunpack.c.l.b16 %v4942
  %v5049 = vunpack.c.h.b16 %v4942
  %v5050 = vunpack.c.l.b16 %v4943
  %v5051 = vunpack.c.h.b16 %v4943
  %v5052 = vunpack.c.l.b16 %v4944
  %v5053 = vunpack.c.h.b16 %v4944
  %v5054 = vunpack.c.l.b16 %v4945
  %v5055 = vunpack.c.h.b16 %v4945
  %v5056 = vunpack.c.l.b16 %v4946
  %v5057 = vunpack.c.h.b16 %v4946
  %v5058 = vunpack.c.l.b16 %v4947
  %v5059 = vunpack.c.h.b16 %v4947
  %v5060 = vunpack.c.l.b16 %v4948
  %v5061 = vunpack.c.h.b16 %v4948
  %v5062 = vunpack.c.l.b16 %v4949
  %v5063 = vunpack.c.h.b16 %v4949
  %v5064 = vpack.c.b16 %v5048, %v5048
  %v5065 = vpack.c.b16 %v5049, %v5049
  %v5066 = vpack.c.b16 %v5050, %v5050
  %v5067 = vpack.c.b16 %v5051, %v5051
  %v5068 = vpack.c.b16 %v5052, %v5052
  %v5069 = vpack.c.b16 %v5053, %v5053
  %v5070 = vpack.c.b16 %v5054, %v5054
  %v5071 = vpack.c.b16 %v5055, %v5055
  %v5072 = vpack.c.b16 %v5056, %v5056
  %v5073 = vpack.c.b16 %v5057, %v5057
  %v5074 = vpack.c.b16 %v5058, %v5058
  %v5075 = vpack.c.b16 %v5059, %v5059
  %v5076 = vpack.c.b16 %v5060, %v5060
  %v5077 = vpack.c.b16 %v5061, %v5061
  %v5078 = vpack.c.b16 %v5062, %v5062
  %v5079 = vpack.c.b16 %v5063, %v5063
  %5096 = vst.msk [vmem:[#allocation3] sm:$0xf] %vm5006, %v5064
  %5097 = vst.msk [vmem:[#allocation3 + $0x8] sm:$0xf] %vm5006, %v5065
  %5098 = vst.msk [vmem:[#allocation3 + $0x10] sm:$0xf] %vm5006, %v5066
  %5099 = vst.msk [vmem:[#allocation3 + $0x18] sm:$0xf] %vm5006, %v5067
  %5100 = vst.msk [vmem:[#allocation3 + $0x20] sm:$0xf] %vm5006, %v5068
  %5101 = vst.msk [vmem:[#allocation3 + $0x28] sm:$0xf] %vm5006, %v5069
  %5102 = vst.msk [vmem:[#allocation3 + $0x30] sm:$0xf] %vm5006, %v5070
  %5103 = vst.msk [vmem:[#allocation3 + $0x38] sm:$0xf] %vm5006, %v5071
  %5104 = vst.msk [vmem:[#allocation3 + $0x40] sm:$0xf] %vm5006, %v5072
  %5105 = vst.msk [vmem:[#allocation3 + $0x48] sm:$0xf] %vm5006, %v5073
  %5106 = vst.msk [vmem:[#allocation3 + $0x50] sm:$0xf] %vm5006, %v5074
  %5107 = vst.msk [vmem:[#allocation3 + $0x58] sm:$0xf] %vm5006, %v5075
  %5108 = vst.msk [vmem:[#allocation3 + $0x60] sm:$0xf] %vm5006, %v5076
  %5109 = vst.msk [vmem:[#allocation3 + $0x68] sm:$0xf] %vm5006, %v5077
  %5110 = vst.msk [vmem:[#allocation3 + $0x70] sm:$0xf] %vm5006, %v5078
  %5111 = vst.msk [vmem:[#allocation3 + $0x78] sm:$0xf] %vm5006, %v5079
  %5112 = vst.msk [vmem:[#allocation3] sm:$0xf0] %vm5023, 0
  %5113 = vst.msk [vmem:[#allocation3 + $0x8] sm:$0xf0] %vm5023, 0
  %5114 = vst.msk [vmem:[#allocation3 + $0x10] sm:$0xf0] %vm5023, 0
  %5115 = vst.msk [vmem:[#allocation3 + $0x18] sm:$0xf0] %vm5023, 0
  %5116 = vst.msk [vmem:[#allocation3 + $0x20] sm:$0xf0] %vm5023, 0
  %5117 = vst.msk [vmem:[#allocation3 + $0x28] sm:$0xf0] %vm5023, 0
  %5118 = vst.msk [vmem:[#allocation3 + $0x30] sm:$0xf0] %vm5023, 0
  %5119 = vst.msk [vmem:[#allocation3 + $0x38] sm:$0xf0] %vm5023, 0
  %5120 = vst.msk [vmem:[#allocation3 + $0x40] sm:$0xf0] %vm5023, 0
  %5121 = vst.msk [vmem:[#allocation3 + $0x48] sm:$0xf0] %vm5023, 0
  %5122 = vst.msk [vmem:[#allocation3 + $0x50] sm:$0xf0] %vm5023, 0
  %5123 = vst.msk [vmem:[#allocation3 + $0x58] sm:$0xf0] %vm5023, 0
  %5124 = vst.msk [vmem:[#allocation3 + $0x60] sm:$0xf0] %vm5023, 0
  %5125 = vst.msk [vmem:[#allocation3 + $0x68] sm:$0xf0] %vm5023, 0
  %5126 = vst.msk [vmem:[#allocation3 + $0x70] sm:$0xf0] %vm5023, 0
  %5127 = vst.msk [vmem:[#allocation3 + $0x78] sm:$0xf0] %vm5023, 0
  %v5128 = vld [vmem:[#allocation2] sm:$0xf]
  %v5129 = vld [vmem:[#allocation2 + $0x8] sm:$0xf]
  %v5130 = vld [vmem:[#allocation2 + $0x10] sm:$0xf]
  %v5131 = vld [vmem:[#allocation2 + $0x18] sm:$0xf]
  %v5132 = vld [vmem:[#allocation2 + $0x20] sm:$0xf]
  %v5133 = vld [vmem:[#allocation2 + $0x28] sm:$0xf]
  %v5134 = vld [vmem:[#allocation2 + $0x30] sm:$0xf]
  %v5135 = vld [vmem:[#allocation2 + $0x38] sm:$0xf]
  %v5136 = vld [vmem:[#allocation2 + $0x40] sm:$0xf]
  %v5137 = vld [vmem:[#allocation2 + $0x48] sm:$0xf]
  %v5138 = vld [vmem:[#allocation2 + $0x50] sm:$0xf]
  %v5139 = vld [vmem:[#allocation2 + $0x58] sm:$0xf]
  %v5140 = vld [vmem:[#allocation2 + $0x60] sm:$0xf]
  %v5141 = vld [vmem:[#allocation2 + $0x68] sm:$0xf]
  %v5142 = vld [vmem:[#allocation2 + $0x70] sm:$0xf]
  %v5143 = vld [vmem:[#allocation2 + $0x78] sm:$0xf]
  %v5144 = vld [vmem:[%s2] sm:$0xf]
  %v5145 = vld [vmem:[%s2 + $0x4] sm:$0xf]
  %v5146 = vld [vmem:[%s2 + $0x8] sm:$0xf]
  %v5147 = vld [vmem:[%s2 + $0xc] sm:$0xf]
  %v5148 = vld [vmem:[%s2 + $0x10] sm:$0xf]
  %v5149 = vld [vmem:[%s2 + $0x14] sm:$0xf]
  %v5150 = vld [vmem:[%s2 + $0x18] sm:$0xf]
  %v5151 = vld [vmem:[%s2 + $0x1c] sm:$0xf]
  %v5152 = vld [vmem:[%s2 + $0x20] sm:$0xf]
  %v5153 = vld [vmem:[%s2 + $0x24] sm:$0xf]
  %v5154 = vld [vmem:[%s2 + $0x28] sm:$0xf]
  %v5155 = vld [vmem:[%s2 + $0x2c] sm:$0xf]
  %v5156 = vld [vmem:[%s2 + $0x30] sm:$0xf]
  %v5157 = vld [vmem:[%s2 + $0x34] sm:$0xf]
  %v5158 = vld [vmem:[#allocation3] sm:$0xf]
  %v5159 = vld [vmem:[#allocation3 + $0x8] sm:$0xf]
  %v5160 = vld [vmem:[#allocation3 + $0x10] sm:$0xf]
  %v5161 = vld [vmem:[#allocation3 + $0x18] sm:$0xf]
  %v5162 = vld [vmem:[#allocation3 + $0x20] sm:$0xf]
  %v5163 = vld [vmem:[#allocation3 + $0x28] sm:$0xf]
  %v5164 = vld [vmem:[#allocation3 + $0x30] sm:$0xf]
  %v5165 = vld [vmem:[#allocation3 + $0x38] sm:$0xf]
  %v5166 = vld [vmem:[#allocation3 + $0x40] sm:$0xf]
  %v5167 = vld [vmem:[#allocation3 + $0x48] sm:$0xf]
  %v5168 = vld [vmem:[#allocation3 + $0x50] sm:$0xf]
  %v5169 = vld [vmem:[#allocation3 + $0x58] sm:$0xf]
  %v5170 = vld [vmem:[#allocation3 + $0x60] sm:$0xf]
  %v5171 = vld [vmem:[#allocation3 + $0x68] sm:$0xf]
  %v5172 = vld [vmem:[#allocation3 + $0x70] sm:$0xf]
  %v5173 = vld [vmem:[#allocation3 + $0x78] sm:$0xf]
  %s5174 = scalar_lea.vmem %s2, 56
  %v5175 = vld [vmem:[%s5174] sm:$0xf]
  %v5176 = vld [vmem:[%s5174 + $0x4] sm:$0xf]
  %v5177 = vld [vmem:[%s5174 + $0x8] sm:$0xf]
  %v5178 = vld [vmem:[%s5174 + $0xc] sm:$0xf]
  %v5179 = vld [vmem:[%s5174 + $0x10] sm:$0xf]
  %v5180 = vld [vmem:[%s5174 + $0x14] sm:$0xf]
  %v5181 = vld [vmem:[%s5174 + $0x18] sm:$0xf]
  %v5182 = vld [vmem:[%s5174 + $0x1c] sm:$0xf]
  %v5183 = vld [vmem:[%s5174 + $0x20] sm:$0xf]
  %v5184 = vld [vmem:[%s5174 + $0x24] sm:$0xf]
  %v5185 = vld [vmem:[%s5174 + $0x28] sm:$0xf]
  %v5186 = vld [vmem:[%s5174 + $0x2c] sm:$0xf]
  %v5187 = vld [vmem:[%s5174 + $0x30] sm:$0xf]
  %v5188 = vld [vmem:[%s5174 + $0x34] sm:$0xf]
  %v5205 = vunpack.c.l.b16 %v5158
  %v5206 = vunpack.c.l.b16 %v5159
  %v5207 = vunpack.c.l.b16 %v5160
  %v5208 = vunpack.c.l.b16 %v5161
  %v5209 = vunpack.c.l.b16 %v5162
  %v5210 = vunpack.c.l.b16 %v5163
  %v5211 = vunpack.c.l.b16 %v5164
  %v5212 = vunpack.c.l.b16 %v5165
  %v5213 = vunpack.c.l.b16 %v5166
  %v5214 = vunpack.c.l.b16 %v5167
  %v5215 = vunpack.c.l.b16 %v5168
  %v5216 = vunpack.c.l.b16 %v5169
  %v5217 = vunpack.c.l.b16 %v5170
  %v5218 = vunpack.c.l.b16 %v5171
  %v5219 = vunpack.c.l.b16 %v5172
  %v5220 = vunpack.c.l.b16 %v5173
  %v5221 = vpack.c.b16 %v5206, %v5205
  %v5222 = vpack.c.b16 %v5208, %v5207
  %v5223 = vpack.c.b16 %v5210, %v5209
  %v5224 = vpack.c.b16 %v5212, %v5211
  %v5225 = vpack.c.b16 %v5214, %v5213
  %v5226 = vpack.c.b16 %v5216, %v5215
  %v5227 = vpack.c.b16 %v5218, %v5217
  %v5228 = vpack.c.b16 %v5220, %v5219
  %v5243 = vunpack.c.l.b16 %v5175
  %v5244 = vunpack.c.l.b16 %v5176
  %v5245 = vunpack.c.l.b16 %v5177
  %v5246 = vunpack.c.l.b16 %v5178
  %v5247 = vunpack.c.l.b16 %v5179
  %v5248 = vunpack.c.l.b16 %v5180
  %v5249 = vunpack.c.l.b16 %v5181
  %v5250 = vunpack.c.l.b16 %v5182
  %v5251 = vunpack.c.l.b16 %v5183
  %v5252 = vunpack.c.l.b16 %v5184
  %v5253 = vunpack.c.l.b16 %v5185
  %v5254 = vunpack.c.l.b16 %v5186
  %v5255 = vunpack.c.l.b16 %v5187
  %v5256 = vunpack.c.l.b16 %v5188
  %v5257 = vpack.c.b16 %v5244, %v5243
  %v5258 = vpack.c.b16 %v5246, %v5245
  %v5259 = vpack.c.b16 %v5248, %v5247
  %v5260 = vpack.c.b16 %v5250, %v5249
  %v5261 = vpack.c.b16 %v5252, %v5251
  %v5262 = vpack.c.b16 %v5254, %v5253
  %v5263 = vpack.c.b16 %v5256, %v5255
  %vm5271 = vcmask 916480
  %v5273 = vsel %vm5271, %v5221, 0
  %v5276 = vsel %vm5271, %v5222, 0
  %v5279 = vsel %vm5271, %v5223, 0
  %v5282 = vsel %vm5271, %v5224, 0
  %v5285 = vsel %vm5271, %v5225, 0
  %v5288 = vsel %vm5271, %v5226, 0
  %v5291 = vsel %vm5271, %v5227, 0
  %v5294 = vsel %vm5271, %v5228, 0
  %5296 = vmatprep.subr.bf16.mxu0 0
  %5297 = vmatpush1.bf16.msra.mxu0 %v5257
  %5298 = vmatprep.subr.bf16.mxu0 0
  %5299 = vmatpush1.bf16.msra.mxu0 %v5258
  %5300 = vmatprep.subr.bf16.mxu0 0
  %5301 = vmatpush1.bf16.msra.mxu0 %v5259
  %5302 = vmatprep.subr.bf16.mxu0 0
  %5303 = vmatpush1.bf16.msra.mxu0 %v5260
  %5304 = vmatprep.subr.bf16.mxu0 0
  %5305 = vmatpush1.bf16.msra.mxu0 %v5261
  %5306 = vmatprep.subr.bf16.mxu0 0
  %5307 = vmatpush1.bf16.msra.mxu0 %v5262
  %5308 = vmatprep.subr.bf16.mxu0 0
  %5309 = vmatpush1.bf16.msra.mxu0 %v5263
  %5310 = vmatprep.subr.bf16.mxu0 0
  %5311 = vmatpush1.bf16.msra.mxu0 0
  %5312 = vmatprep.subr.bf16.mxu0 0
  %5313 = vmatpush1.bf16.msra.mxu0 0
  %5314 = vmatprep.subr.bf16.mxu0 0
  %5315 = vmatpush1.bf16.msra.mxu0 0
  %5316 = vmatprep.subr.bf16.mxu0 0
  %5317 = vmatpush1.bf16.msra.mxu0 0
  %5318 = vmatprep.subr.bf16.mxu0 0
  %5319 = vmatpush1.bf16.msra.mxu0 0
  %5320 = vmatprep.subr.bf16.mxu0 0
  %5321 = vmatpush1.bf16.msra.mxu0 0
  %5322 = vmatprep.subr.bf16.mxu0 0
  %5323 = vmatpush1.bf16.msra.mxu0 0
  %5324 = vmatprep.subr.bf16.mxu0 0
  %5325 = vmatpush1.bf16.msra.mxu0 0
  %5326 = vmatprep.subr.bf16.mxu0 0
  %5327 = vmatpush1.bf16.msra.mxu0 0
  %5328 = vmatprep.mubr.bf16.mxu0 0
  %5329 = vmatmul.mubr.bf16.gmra.mrb[0].mxu0 %v5273
  %v5330 = vpop.f32.mrb[0].mxu0
  %v5331 = vadd.f32 0.0, %v5330
  %v5332 = vpop.f32.mrb[0].mxu0
  %v5333 = vpop.f32.mrb[0].mxu0
  %v5334 = vadd.f32 0.0, %v5333
  %v5335 = vpop.f32.mrb[0].mxu0
  %5336 = vmatprep.mubr.bf16.mxu0 0
  %5337 = vmatmul.mubr.bf16.gmra.mrb[0].mxu0 %v5276
  %v5338 = vpop.f32.mrb[0].mxu0
  %v5339 = vadd.f32 0.0, %v5338
  %v5340 = vpop.f32.mrb[0].mxu0
  %v5341 = vpop.f32.mrb[0].mxu0
  %v5342 = vadd.f32 0.0, %v5341
  %v5343 = vpop.f32.mrb[0].mxu0
  %5344 = vmatprep.mubr.bf16.mxu0 0
  %5345 = vmatmul.mubr.bf16.gmra.mrb[0].mxu0 %v5279
  %v5346 = vpop.f32.mrb[0].mxu0
  %v5347 = vadd.f32 0.0, %v5346
  %v5348 = vpop.f32.mrb[0].mxu0
  %v5349 = vpop.f32.mrb[0].mxu0
  %v5350 = vadd.f32 0.0, %v5349
  %v5351 = vpop.f32.mrb[0].mxu0
  %5352 = vmatprep.mubr.bf16.mxu0 0
  %5353 = vmatmul.mubr.bf16.gmra.mrb[0].mxu0 %v5282
  %v5354 = vpop.f32.mrb[0].mxu0
  %v5355 = vadd.f32 0.0, %v5354
  %v5356 = vpop.f32.mrb[0].mxu0
  %v5357 = vpop.f32.mrb[0].mxu0
  %v5358 = vadd.f32 0.0, %v5357
  %v5359 = vpop.f32.mrb[0].mxu0
  %5360 = vmatprep.mubr.bf16.mxu0 0
  %5361 = vmatmul.mubr.bf16.gmra.mrb[0].mxu0 %v5285
  %v5362 = vpop.f32.mrb[0].mxu0
  %v5363 = vadd.f32 0.0, %v5362
  %v5364 = vpop.f32.mrb[0].mxu0
  %v5365 = vpop.f32.mrb[0].mxu0
  %v5366 = vadd.f32 0.0, %v5365
  %v5367 = vpop.f32.mrb[0].mxu0
  %5368 = vmatprep.mubr.bf16.mxu0 0
  %5369 = vmatmul.mubr.bf16.gmra.mrb[0].mxu0 %v5288
  %v5370 = vpop.f32.mrb[0].mxu0
  %v5371 = vadd.f32 0.0, %v5370
  %v5372 = vpop.f32.mrb[0].mxu0
  %v5373 = vpop.f32.mrb[0].mxu0
  %v5374 = vadd.f32 0.0, %v5373
  %v5375 = vpop.f32.mrb[0].mxu0
  %5376 = vmatprep.mubr.bf16.mxu0 0
  %5377 = vmatmul.mubr.bf16.gmra.mrb[0].mxu0 %v5291
  %v5378 = vpop.f32.mrb[0].mxu0
  %v5379 = vadd.f32 0.0, %v5378
  %v5380 = vpop.f32.mrb[0].mxu0
  %v5381 = vpop.f32.mrb[0].mxu0
  %v5382 = vadd.f32 0.0, %v5381
  %v5383 = vpop.f32.mrb[0].mxu0
  %5384 = vmatprep.mubr.bf16.mxu0 0
  %5385 = vmatmul.mubr.bf16.gmra.mrb[0].mxu0 %v5294
  %v5386 = vpop.f32.mrb[0].mxu0
  %v5387 = vadd.f32 0.0, %v5386
  %v5388 = vpop.f32.mrb[0].mxu0
  %v5389 = vpop.f32.mrb[0].mxu0
  %v5390 = vadd.f32 0.0, %v5389
  %v5391 = vpop.f32.mrb[0].mxu0
  %5392 = vdwg.mxu0
  %v5409 = vunpack.c.l.b16 %v5128
  %v5410 = vunpack.c.l.b16 %v5129
  %v5411 = vunpack.c.l.b16 %v5130
  %v5412 = vunpack.c.l.b16 %v5131
  %v5413 = vunpack.c.l.b16 %v5132
  %v5414 = vunpack.c.l.b16 %v5133
  %v5415 = vunpack.c.l.b16 %v5134
  %v5416 = vunpack.c.l.b16 %v5135
  %v5417 = vunpack.c.l.b16 %v5136
  %v5418 = vunpack.c.l.b16 %v5137
  %v5419 = vunpack.c.l.b16 %v5138
  %v5420 = vunpack.c.l.b16 %v5139
  %v5421 = vunpack.c.l.b16 %v5140
  %v5422 = vunpack.c.l.b16 %v5141
  %v5423 = vunpack.c.l.b16 %v5142
  %v5424 = vunpack.c.l.b16 %v5143
  %v5425 = vpack.c.b16 %v5410, %v5409
  %v5426 = vpack.c.b16 %v5412, %v5411
  %v5427 = vpack.c.b16 %v5414, %v5413
  %v5428 = vpack.c.b16 %v5416, %v5415
  %v5429 = vpack.c.b16 %v5418, %v5417
  %v5430 = vpack.c.b16 %v5420, %v5419
  %v5431 = vpack.c.b16 %v5422, %v5421
  %v5432 = vpack.c.b16 %v5424, %v5423
  %v5447 = vunpack.c.l.b16 %v5144
  %v5448 = vunpack.c.l.b16 %v5145
  %v5449 = vunpack.c.l.b16 %v5146
  %v5450 = vunpack.c.l.b16 %v5147
  %v5451 = vunpack.c.l.b16 %v5148
  %v5452 = vunpack.c.l.b16 %v5149
  %v5453 = vunpack.c.l.b16 %v5150
  %v5454 = vunpack.c.l.b16 %v5151
  %v5455 = vunpack.c.l.b16 %v5152
  %v5456 = vunpack.c.l.b16 %v5153
  %v5457 = vunpack.c.l.b16 %v5154
  %v5458 = vunpack.c.l.b16 %v5155
  %v5459 = vunpack.c.l.b16 %v5156
  %v5460 = vunpack.c.l.b16 %v5157
  %v5461 = vpack.c.b16 %v5448, %v5447
  %v5462 = vpack.c.b16 %v5450, %v5449
  %v5463 = vpack.c.b16 %v5452, %v5451
  %v5464 = vpack.c.b16 %v5454, %v5453
  %v5465 = vpack.c.b16 %v5456, %v5455
  %v5466 = vpack.c.b16 %v5458, %v5457
  %v5467 = vpack.c.b16 %v5460, %v5459
  %v5476 = vsel %vm5271, %v5425, 0
  %v5479 = vsel %vm5271, %v5426, 0
  %v5482 = vsel %vm5271, %v5427, 0
  %v5485 = vsel %vm5271, %v5428, 0
  %v5488 = vsel %vm5271, %v5429, 0
  %v5491 = vsel %vm5271, %v5430, 0
  %v5494 = vsel %vm5271, %v5431, 0
  %v5497 = vsel %vm5271, %v5432, 0
  %5499 = vmatprep.subr.bf16.mxu0 0
  %5500 = vmatpush1.bf16.msra.mxu0 %v5461
  %5501 = vmatprep.subr.bf16.mxu0 0
  %5502 = vmatpush1.bf16.msra.mxu0 %v5462
  %5503 = vmatprep.subr.bf16.mxu0 0
  %5504 = vmatpush1.bf16.msra.mxu0 %v5463
  %5505 = vmatprep.subr.bf16.mxu0 0
  %5506 = vmatpush1.bf16.msra.mxu0 %v5464
  %5507 = vmatprep.subr.bf16.mxu0 0
  %5508 = vmatpush1.bf16.msra.mxu0 %v5465
  %5509 = vmatprep.subr.bf16.mxu0 0
  %5510 = vmatpush1.bf16.msra.mxu0 %v5466
  %5511 = vmatprep.subr.bf16.mxu0 0
  %5512 = vmatpush1.bf16.msra.mxu0 %v5467
  %5513 = vmatprep.subr.bf16.mxu0 0
  %5514 = vmatpush1.bf16.msra.mxu0 0
  %5515 = vmatprep.subr.bf16.mxu0 0
  %5516 = vmatpush1.bf16.msra.mxu0 0
  %5517 = vmatprep.subr.bf16.mxu0 0
  %5518 = vmatpush1.bf16.msra.mxu0 0
  %5519 = vmatprep.subr.bf16.mxu0 0
  %5520 = vmatpush1.bf16.msra.mxu0 0
  %5521 = vmatprep.subr.bf16.mxu0 0
  %5522 = vmatpush1.bf16.msra.mxu0 0
  %5523 = vmatprep.subr.bf16.mxu0 0
  %5524 = vmatpush1.bf16.msra.mxu0 0
  %5525 = vmatprep.subr.bf16.mxu0 0
  %5526 = vmatpush1.bf16.msra.mxu0 0
  %5527 = vmatprep.subr.bf16.mxu0 0
  %5528 = vmatpush1.bf16.msra.mxu0 0
  %5529 = vmatprep.subr.bf16.mxu0 0
  %5530 = vmatpush1.bf16.msra.mxu0 0
  %5531 = vmatprep.mubr.bf16.mxu0 0
  %5532 = vmatmul.mubr.bf16.gmra.mrb[0].mxu0 %v5476
  %v5533 = vpop.f32.mrb[0].mxu0
  %v5534 = vadd.f32 %v5331, %v5533
  %v5535 = vpop.f32.mrb[0].mxu0
  %v5536 = vpop.f32.mrb[0].mxu0
  %v5537 = vadd.f32 %v5334, %v5536
  %v5538 = vpop.f32.mrb[0].mxu0
  %5539 = vmatprep.mubr.bf16.mxu0 0
  %5540 = vmatmul.mubr.bf16.gmra.mrb[0].mxu0 %v5479
  %v5541 = vpop.f32.mrb[0].mxu0
  %v5542 = vadd.f32 %v5339, %v5541
  %v5543 = vpop.f32.mrb[0].mxu0
  %v5544 = vpop.f32.mrb[0].mxu0
  %v5545 = vadd.f32 %v5342, %v5544
  %v5546 = vpop.f32.mrb[0].mxu0
  %5547 = vmatprep.mubr.bf16.mxu0 0
  %5548 = vmatmul.mubr.bf16.gmra.mrb[0].mxu0 %v5482
  %v5549 = vpop.f32.mrb[0].mxu0
  %v5550 = vadd.f32 %v5347, %v5549
  %v5551 = vpop.f32.mrb[0].mxu0
  %v5552 = vpop.f32.mrb[0].mxu0
  %v5553 = vadd.f32 %v5350, %v5552
  %v5554 = vpop.f32.mrb[0].mxu0
  %5555 = vmatprep.mubr.bf16.mxu0 0
  %5556 = vmatmul.mubr.bf16.gmra.mrb[0].mxu0 %v5485
  %v5557 = vpop.f32.mrb[0].mxu0
  %v5558 = vadd.f32 %v5355, %v5557
  %v5559 = vpop.f32.mrb[0].mxu0
  %v5560 = vpop.f32.mrb[0].mxu0
  %v5561 = vadd.f32 %v5358, %v5560
  %v5562 = vpop.f32.mrb[0].mxu0
  %5563 = vmatprep.mubr.bf16.mxu0 0
  %5564 = vmatmul.mubr.bf16.gmra.mrb[0].mxu0 %v5488
  %v5565 = vpop.f32.mrb[0].mxu0
  %v5566 = vadd.f32 %v5363, %v5565
  %v5567 = vpop.f32.mrb[0].mxu0
  %v5568 = vpop.f32.mrb[0].mxu0
  %v5569 = vadd.f32 %v5366, %v5568
  %v5570 = vpop.f32.mrb[0].mxu0
  %5571 = vmatprep.mubr.bf16.mxu0 0
  %5572 = vmatmul.mubr.bf16.gmra.mrb[0].mxu0 %v5491
  %v5573 = vpop.f32.mrb[0].mxu0
  %v5574 = vadd.f32 %v5371, %v5573
  %v5575 = vpop.f32.mrb[0].mxu0
  %v5576 = vpop.f32.mrb[0].mxu0
  %v5577 = vadd.f32 %v5374, %v5576
  %v5578 = vpop.f32.mrb[0].mxu0
  %5579 = vmatprep.mubr.bf16.mxu0 0
  %5580 = vmatmul.mubr.bf16.gmra.mrb[0].mxu0 %v5494
  %v5581 = vpop.f32.mrb[0].mxu0
  %v5582 = vadd.f32 %v5379, %v5581
  %v5583 = vpop.f32.mrb[0].mxu0
  %v5584 = vpop.f32.mrb[0].mxu0
  %v5585 = vadd.f32 %v5382, %v5584
  %v5586 = vpop.f32.mrb[0].mxu0
  %5587 = vmatprep.mubr.bf16.mxu0 0
  %5588 = vmatmul.mubr.bf16.gmra.mrb[0].mxu0 %v5497
  %v5589 = vpop.f32.mrb[0].mxu0
  %v5590 = vadd.f32 %v5387, %v5589
  %v5591 = vpop.f32.mrb[0].mxu0
  %v5592 = vpop.f32.mrb[0].mxu0
  %v5593 = vadd.f32 %v5390, %v5592
  %v5594 = vpop.f32.mrb[0].mxu0
  %5595 = vdwg.mxu0
  %v5596 = vld [vmem:[#allocation2] sm:$0x1f]
  %v5597 = vld [vmem:[#allocation2 + $0x8] sm:$0x1f]
  %v5598 = vld [vmem:[#allocation2 + $0x10] sm:$0x1f]
  %v5599 = vld [vmem:[#allocation2 + $0x18] sm:$0x1f]
  %v5600 = vld [vmem:[#allocation2 + $0x20] sm:$0x1f]
  %v5601 = vld [vmem:[#allocation2 + $0x28] sm:$0x1f]
  %v5602 = vld [vmem:[#allocation2 + $0x30] sm:$0x1f]
  %v5603 = vld [vmem:[#allocation2 + $0x38] sm:$0x1f]
  %v5604 = vld [vmem:[#allocation2 + $0x40] sm:$0x1f]
  %v5605 = vld [vmem:[#allocation2 + $0x48] sm:$0x1f]
  %v5606 = vld [vmem:[#allocation2 + $0x50] sm:$0x1f]
  %v5607 = vld [vmem:[#allocation2 + $0x58] sm:$0x1f]
  %v5608 = vld [vmem:[#allocation2 + $0x60] sm:$0x1f]
  %v5609 = vld [vmem:[#allocation2 + $0x68] sm:$0x1f]
  %v5610 = vld [vmem:[#allocation2 + $0x70] sm:$0x1f]
  %v5611 = vld [vmem:[#allocation2 + $0x78] sm:$0x1f]
  %v5628 = vunpack.c.l.b16 %v5596
  %v5629 = vunpack.c.h.b16 %v5596
  %v5630 = vunpack.c.l.b16 %v5597
  %v5631 = vunpack.c.h.b16 %v5597
  %v5632 = vunpack.c.l.b16 %v5598
  %v5633 = vunpack.c.h.b16 %v5598
  %v5634 = vunpack.c.l.b16 %v5599
  %v5635 = vunpack.c.h.b16 %v5599
  %v5636 = vunpack.c.l.b16 %v5600
  %v5637 = vunpack.c.h.b16 %v5600
  %v5638 = vunpack.c.l.b16 %v5601
  %v5639 = vunpack.c.h.b16 %v5601
  %v5640 = vunpack.c.l.b16 %v5602
  %v5641 = vunpack.c.h.b16 %v5602
  %v5642 = vunpack.c.l.b16 %v5603
  %v5643 = vunpack.c.h.b16 %v5603
  %v5644 = vunpack.c.l.b16 %v5604
  %v5645 = vunpack.c.h.b16 %v5604
  %v5646 = vunpack.c.l.b16 %v5605
  %v5647 = vunpack.c.h.b16 %v5605
  %v5648 = vunpack.c.l.b16 %v5606
  %v5649 = vunpack.c.h.b16 %v5606
  %v5650 = vunpack.c.l.b16 %v5607
  %v5651 = vunpack.c.h.b16 %v5607
  %v5652 = vunpack.c.l.b16 %v5608
  %v5653 = vunpack.c.h.b16 %v5608
  %v5654 = vunpack.c.l.b16 %v5609
  %v5655 = vunpack.c.h.b16 %v5609
  %v5656 = vunpack.c.l.b16 %v5610
  %v5657 = vunpack.c.h.b16 %v5610
  %v5658 = vunpack.c.l.b16 %v5611
  %v5659 = vunpack.c.h.b16 %v5611
  %v5660 = vpack.c.b16 %v5628, %v5628
  %v5661 = vpack.c.b16 %v5629, %v5629
  %v5662 = vpack.c.b16 %v5630, %v5630
  %v5663 = vpack.c.b16 %v5631, %v5631
  %v5664 = vpack.c.b16 %v5632, %v5632
  %v5665 = vpack.c.b16 %v5633, %v5633
  %v5666 = vpack.c.b16 %v5634, %v5634
  %v5667 = vpack.c.b16 %v5635, %v5635
  %v5668 = vpack.c.b16 %v5636, %v5636
  %v5669 = vpack.c.b16 %v5637, %v5637
  %v5670 = vpack.c.b16 %v5638, %v5638
  %v5671 = vpack.c.b16 %v5639, %v5639
  %v5672 = vpack.c.b16 %v5640, %v5640
  %v5673 = vpack.c.b16 %v5641, %v5641
  %v5674 = vpack.c.b16 %v5642, %v5642
  %v5675 = vpack.c.b16 %v5643, %v5643
  %v5676 = vpack.c.b16 %v5644, %v5644
  %v5677 = vpack.c.b16 %v5645, %v5645
  %v5678 = vpack.c.b16 %v5646, %v5646
  %v5679 = vpack.c.b16 %v5647, %v5647
  %v5680 = vpack.c.b16 %v5648, %v5648
  %v5681 = vpack.c.b16 %v5649, %v5649
  %v5682 = vpack.c.b16 %v5650, %v5650
  %v5683 = vpack.c.b16 %v5651, %v5651
  %v5684 = vpack.c.b16 %v5652, %v5652
  %v5685 = vpack.c.b16 %v5653, %v5653
  %v5686 = vpack.c.b16 %v5654, %v5654
  %v5687 = vpack.c.b16 %v5655, %v5655
  %v5688 = vpack.c.b16 %v5656, %v5656
  %v5689 = vpack.c.b16 %v5657, %v5657
  %v5690 = vpack.c.b16 %v5658, %v5658
  %v5691 = vpack.c.b16 %v5659, %v5659
  %v5693 = vshrl.u32 %v5660, 16
  %v5695 = vrot.slane %v5693, 4
  %v5696 = vshll.u32 %v5660, 16
  %v5698 = vrot.slane %v5696, 5
  %v5699 = vor.u32 %v5695, %v5698
  %v5700 = vrot.slane %v5699, 4
  %v5702 = vshll.u32 %v5661, 16
  %v5704 = vrot.slane %v5702, 5
  %v5705 = vsel %vm2222, %v5700, %v5704
  %v5707 = vshrl.u32 %v5662, 16
  %v5709 = vrot.slane %v5707, 4
  %v5710 = vshll.u32 %v5662, 16
  %v5712 = vrot.slane %v5710, 5
  %v5713 = vor.u32 %v5709, %v5712
  %v5714 = vrot.slane %v5713, 4
  %v5716 = vshll.u32 %v5663, 16
  %v5718 = vrot.slane %v5716, 5
  %v5719 = vsel %vm2222, %v5714, %v5718
  %v5721 = vshrl.u32 %v5664, 16
  %v5723 = vrot.slane %v5721, 4
  %v5724 = vshll.u32 %v5664, 16
  %v5726 = vrot.slane %v5724, 5
  %v5727 = vor.u32 %v5723, %v5726
  %v5728 = vrot.slane %v5727, 4
  %v5730 = vshll.u32 %v5665, 16
  %v5732 = vrot.slane %v5730, 5
  %v5733 = vsel %vm2222, %v5728, %v5732
  %v5735 = vshrl.u32 %v5666, 16
  %v5737 = vrot.slane %v5735, 4
  %v5738 = vshll.u32 %v5666, 16
  %v5740 = vrot.slane %v5738, 5
  %v5741 = vor.u32 %v5737, %v5740
  %v5742 = vrot.slane %v5741, 4
  %v5744 = vshll.u32 %v5667, 16
  %v5746 = vrot.slane %v5744, 5
  %v5747 = vsel %vm2222, %v5742, %v5746
  %v5749 = vshrl.u32 %v5668, 16
  %v5751 = vrot.slane %v5749, 4
  %v5752 = vshll.u32 %v5668, 16
  %v5754 = vrot.slane %v5752, 5
  %v5755 = vor.u32 %v5751, %v5754
  %v5756 = vrot.slane %v5755, 4
  %v5758 = vshll.u32 %v5669, 16
  %v5760 = vrot.slane %v5758, 5
  %v5761 = vsel %vm2222, %v5756, %v5760
  %v5763 = vshrl.u32 %v5670, 16
  %v5765 = vrot.slane %v5763, 4
  %v5766 = vshll.u32 %v5670, 16
  %v5768 = vrot.slane %v5766, 5
  %v5769 = vor.u32 %v5765, %v5768
  %v5770 = vrot.slane %v5769, 4
  %v5772 = vshll.u32 %v5671, 16
  %v5774 = vrot.slane %v5772, 5
  %v5775 = vsel %vm2222, %v5770, %v5774
  %v5777 = vshrl.u32 %v5672, 16
  %v5779 = vrot.slane %v5777, 4
  %v5780 = vshll.u32 %v5672, 16
  %v5782 = vrot.slane %v5780, 5
  %v5783 = vor.u32 %v5779, %v5782
  %v5784 = vrot.slane %v5783, 4
  %v5786 = vshll.u32 %v5673, 16
  %v5788 = vrot.slane %v5786, 5
  %v5789 = vsel %vm2222, %v5784, %v5788
  %v5791 = vshrl.u32 %v5674, 16
  %v5793 = vrot.slane %v5791, 4
  %v5794 = vshll.u32 %v5674, 16
  %v5796 = vrot.slane %v5794, 5
  %v5797 = vor.u32 %v5793, %v5796
  %v5798 = vrot.slane %v5797, 4
  %v5800 = vshll.u32 %v5675, 16
  %v5802 = vrot.slane %v5800, 5
  %v5803 = vsel %vm2222, %v5798, %v5802
  %v5805 = vshrl.u32 %v5676, 16
  %v5807 = vrot.slane %v5805, 4
  %v5808 = vshll.u32 %v5676, 16
  %v5810 = vrot.slane %v5808, 5
  %v5811 = vor.u32 %v5807, %v5810
  %v5812 = vrot.slane %v5811, 4
  %v5814 = vshll.u32 %v5677, 16
  %v5816 = vrot.slane %v5814, 5
  %v5817 = vsel %vm2222, %v5812, %v5816
  %v5819 = vshrl.u32 %v5678, 16
  %v5821 = vrot.slane %v5819, 4
  %v5822 = vshll.u32 %v5678, 16
  %v5824 = vrot.slane %v5822, 5
  %v5825 = vor.u32 %v5821, %v5824
  %v5826 = vrot.slane %v5825, 4
  %v5828 = vshll.u32 %v5679, 16
  %v5830 = vrot.slane %v5828, 5
  %v5831 = vsel %vm2222, %v5826, %v5830
  %v5833 = vshrl.u32 %v5680, 16
  %v5835 = vrot.slane %v5833, 4
  %v5836 = vshll.u32 %v5680, 16
  %v5838 = vrot.slane %v5836, 5
  %v5839 = vor.u32 %v5835, %v5838
  %v5840 = vrot.slane %v5839, 4
  %v5842 = vshll.u32 %v5681, 16
  %v5844 = vrot.slane %v5842, 5
  %v5845 = vsel %vm2222, %v5840, %v5844
  %v5847 = vshrl.u32 %v5682, 16
  %v5849 = vrot.slane %v5847, 4
  %v5850 = vshll.u32 %v5682, 16
  %v5852 = vrot.slane %v5850, 5
  %v5853 = vor.u32 %v5849, %v5852
  %v5854 = vrot.slane %v5853, 4
  %v5856 = vshll.u32 %v5683, 16
  %v5858 = vrot.slane %v5856, 5
  %v5859 = vsel %vm2222, %v5854, %v5858
  %v5861 = vshrl.u32 %v5684, 16
  %v5863 = vrot.slane %v5861, 4
  %v5864 = vshll.u32 %v5684, 16
  %v5866 = vrot.slane %v5864, 5
  %v5867 = vor.u32 %v5863, %v5866
  %v5868 = vrot.slane %v5867, 4
  %v5870 = vshll.u32 %v5685, 16
  %v5872 = vrot.slane %v5870, 5
  %v5873 = vsel %vm2222, %v5868, %v5872
  %v5875 = vshrl.u32 %v5686, 16
  %v5877 = vrot.slane %v5875, 4
  %v5878 = vshll.u32 %v5686, 16
  %v5880 = vrot.slane %v5878, 5
  %v5881 = vor.u32 %v5877, %v5880
  %v5882 = vrot.slane %v5881, 4
  %v5884 = vshll.u32 %v5687, 16
  %v5886 = vrot.slane %v5884, 5
  %v5887 = vsel %vm2222, %v5882, %v5886
  %v5889 = vshrl.u32 %v5688, 16
  %v5891 = vrot.slane %v5889, 4
  %v5892 = vshll.u32 %v5688, 16
  %v5894 = vrot.slane %v5892, 5
  %v5895 = vor.u32 %v5891, %v5894
  %v5896 = vrot.slane %v5895, 4
  %v5898 = vshll.u32 %v5689, 16
  %v5900 = vrot.slane %v5898, 5
  %v5901 = vsel %vm2222, %v5896, %v5900
  %v5903 = vshrl.u32 %v5690, 16
  %v5905 = vrot.slane %v5903, 4
  %v5906 = vshll.u32 %v5690, 16
  %v5908 = vrot.slane %v5906, 5
  %v5909 = vor.u32 %v5905, %v5908
  %v5910 = vrot.slane %v5909, 4
  %v5912 = vshll.u32 %v5691, 16
  %v5914 = vrot.slane %v5912, 5
  %v5915 = vsel %vm2222, %v5910, %v5914
  %s5916 = scalar_lea.vmem %s2, 112
  %v5917 = vld [vmem:[%s5916] sm:$0xf]
  %v5918 = vld [vmem:[%s5916 + $0x4] sm:$0xf]
  %v5919 = vld [vmem:[%s5916 + $0x8] sm:$0xf]
  %v5920 = vld [vmem:[%s5916 + $0xc] sm:$0xf]
  %v5921 = vld [vmem:[%s5916 + $0x10] sm:$0xf]
  %v5922 = vld [vmem:[%s5916 + $0x14] sm:$0xf]
  %v5923 = vld [vmem:[%s5916 + $0x18] sm:$0xf]
  %v5924 = vld [vmem:[%s5916 + $0x1c] sm:$0xf]
  %v5925 = vld [vmem:[%s5916 + $0x20] sm:$0xf]
  %v5926 = vld [vmem:[%s5916 + $0x24] sm:$0xf]
  %v5927 = vld [vmem:[%s5916 + $0x28] sm:$0xf]
  %v5928 = vld [vmem:[%s5916 + $0x2c] sm:$0xf]
  %v5929 = vld [vmem:[%s5916 + $0x30] sm:$0xf]
  %v5930 = vld [vmem:[%s5916 + $0x34] sm:$0xf]
  %v5931 = vunpack.c.l.b16 %v5705
  %v5932 = vunpack.c.l.b16 %v5719
  %v5933 = vunpack.c.l.b16 %v5733
  %v5934 = vunpack.c.l.b16 %v5747
  %v5935 = vunpack.c.l.b16 %v5761
  %v5936 = vunpack.c.l.b16 %v5775
  %v5937 = vunpack.c.l.b16 %v5789
  %v5938 = vunpack.c.l.b16 %v5803
  %v5939 = vunpack.c.l.b16 %v5817
  %v5940 = vunpack.c.l.b16 %v5831
  %v5941 = vunpack.c.l.b16 %v5845
  %v5942 = vunpack.c.l.b16 %v5859
  %v5943 = vunpack.c.l.b16 %v5873
  %v5944 = vunpack.c.l.b16 %v5887
  %v5945 = vunpack.c.l.b16 %v5901
  %v5946 = vunpack.c.l.b16 %v5915
  %v5947 = vpack.c.b16 %v5932, %v5931
  %v5948 = vpack.c.b16 %v5934, %v5933
  %v5949 = vpack.c.b16 %v5936, %v5935
  %v5950 = vpack.c.b16 %v5938, %v5937
  %v5951 = vpack.c.b16 %v5940, %v5939
  %v5952 = vpack.c.b16 %v5942, %v5941
  %v5953 = vpack.c.b16 %v5944, %v5943
  %v5954 = vpack.c.b16 %v5946, %v5945
  %v5969 = vunpack.c.l.b16 %v5917
  %v5970 = vunpack.c.l.b16 %v5918
  %v5971 = vunpack.c.l.b16 %v5919
  %v5972 = vunpack.c.l.b16 %v5920
  %v5973 = vunpack.c.l.b16 %v5921
  %v5974 = vunpack.c.l.b16 %v5922
  %v5975 = vunpack.c.l.b16 %v5923
  %v5976 = vunpack.c.l.b16 %v5924
  %v5977 = vunpack.c.l.b16 %v5925
  %v5978 = vunpack.c.l.b16 %v5926
  %v5979 = vunpack.c.l.b16 %v5927
  %v5980 = vunpack.c.l.b16 %v5928
  %v5981 = vunpack.c.l.b16 %v5929
  %v5982 = vunpack.c.l.b16 %v5930
  %v5983 = vpack.c.b16 %v5970, %v5969
  %v5984 = vpack.c.b16 %v5972, %v5971
  %v5985 = vpack.c.b16 %v5974, %v5973
  %v5986 = vpack.c.b16 %v5976, %v5975
  %v5987 = vpack.c.b16 %v5978, %v5977
  %v5988 = vpack.c.b16 %v5980, %v5979
  %v5989 = vpack.c.b16 %v5982, %v5981
  %v5998 = vsel %vm5271, %v5947, 0
  %v6001 = vsel %vm5271, %v5948, 0
  %v6004 = vsel %vm5271, %v5949, 0
  %v6007 = vsel %vm5271, %v5950, 0
  %v6010 = vsel %vm5271, %v5951, 0
  %v6013 = vsel %vm5271, %v5952, 0
  %v6016 = vsel %vm5271, %v5953, 0
  %v6019 = vsel %vm5271, %v5954, 0
  %6021 = vmatprep.subr.bf16.mxu0 0
  %6022 = vmatpush1.bf16.msra.mxu0 %v5983
  %6023 = vmatprep.subr.bf16.mxu0 0
  %6024 = vmatpush1.bf16.msra.mxu0 %v5984
  %6025 = vmatprep.subr.bf16.mxu0 0
  %6026 = vmatpush1.bf16.msra.mxu0 %v5985
  %6027 = vmatprep.subr.bf16.mxu0 0
  %6028 = vmatpush1.bf16.msra.mxu0 %v5986
  %6029 = vmatprep.subr.bf16.mxu0 0
  %6030 = vmatpush1.bf16.msra.mxu0 %v5987
  %6031 = vmatprep.subr.bf16.mxu0 0
  %6032 = vmatpush1.bf16.msra.mxu0 %v5988
  %6033 = vmatprep.subr.bf16.mxu0 0
  %6034 = vmatpush1.bf16.msra.mxu0 %v5989
  %6035 = vmatprep.subr.bf16.mxu0 0
  %6036 = vmatpush1.bf16.msra.mxu0 0
  %6037 = vmatprep.subr.bf16.mxu0 0
  %6038 = vmatpush1.bf16.msra.mxu0 0
  %6039 = vmatprep.subr.bf16.mxu0 0
  %6040 = vmatpush1.bf16.msra.mxu0 0
  %6041 = vmatprep.subr.bf16.mxu0 0
  %6042 = vmatpush1.bf16.msra.mxu0 0
  %6043 = vmatprep.subr.bf16.mxu0 0
  %6044 = vmatpush1.bf16.msra.mxu0 0
  %6045 = vmatprep.subr.bf16.mxu0 0
  %6046 = vmatpush1.bf16.msra.mxu0 0
  %6047 = vmatprep.subr.bf16.mxu0 0
  %6048 = vmatpush1.bf16.msra.mxu0 0
  %6049 = vmatprep.subr.bf16.mxu0 0
  %6050 = vmatpush1.bf16.msra.mxu0 0
  %6051 = vmatprep.subr.bf16.mxu0 0
  %6052 = vmatpush1.bf16.msra.mxu0 0
  %6053 = vmatprep.mubr.bf16.mxu0 0
  %6054 = vmatmul.mubr.bf16.gmra.mrb[0].mxu0 %v5998
  %v6055 = vpop.f32.mrb[0].mxu0
  %v6056 = vadd.f32 0.0, %v6055
  %v6057 = vpop.f32.mrb[0].mxu0
  %v6058 = vpop.f32.mrb[0].mxu0
  %v6059 = vadd.f32 0.0, %v6058
  %v6060 = vpop.f32.mrb[0].mxu0
  %6061 = vmatprep.mubr.bf16.mxu0 0
  %6062 = vmatmul.mubr.bf16.gmra.mrb[0].mxu0 %v6001
  %v6063 = vpop.f32.mrb[0].mxu0
  %v6064 = vadd.f32 0.0, %v6063
  %v6065 = vpop.f32.mrb[0].mxu0
  %v6066 = vpop.f32.mrb[0].mxu0
  %v6067 = vadd.f32 0.0, %v6066
  %v6068 = vpop.f32.mrb[0].mxu0
  %6069 = vmatprep.mubr.bf16.mxu0 0
  %6070 = vmatmul.mubr.bf16.gmra.mrb[0].mxu0 %v6004
  %v6071 = vpop.f32.mrb[0].mxu0
  %v6072 = vadd.f32 0.0, %v6071
  %v6073 = vpop.f32.mrb[0].mxu0
  %v6074 = vpop.f32.mrb[0].mxu0
  %v6075 = vadd.f32 0.0, %v6074
  %v6076 = vpop.f32.mrb[0].mxu0
  %6077 = vmatprep.mubr.bf16.mxu0 0
  %6078 = vmatmul.mubr.bf16.gmra.mrb[0].mxu0 %v6007
  %v6079 = vpop.f32.mrb[0].mxu0
  %v6080 = vadd.f32 0.0, %v6079
  %v6081 = vpop.f32.mrb[0].mxu0
  %v6082 = vpop.f32.mrb[0].mxu0
  %v6083 = vadd.f32 0.0, %v6082
  %v6084 = vpop.f32.mrb[0].mxu0
  %6085 = vmatprep.mubr.bf16.mxu0 0
  %6086 = vmatmul.mubr.bf16.gmra.mrb[0].mxu0 %v6010
  %v6087 = vpop.f32.mrb[0].mxu0
  %v6088 = vadd.f32 0.0, %v6087
  %v6089 = vpop.f32.mrb[0].mxu0
  %v6090 = vpop.f32.mrb[0].mxu0
  %v6091 = vadd.f32 0.0, %v6090
  %v6092 = vpop.f32.mrb[0].mxu0
  %6093 = vmatprep.mubr.bf16.mxu0 0
  %6094 = vmatmul.mubr.bf16.gmra.mrb[0].mxu0 %v6013
  %v6095 = vpop.f32.mrb[0].mxu0
  %v6096 = vadd.f32 0.0, %v6095
  %v6097 = vpop.f32.mrb[0].mxu0
  %v6098 = vpop.f32.mrb[0].mxu0
  %v6099 = vadd.f32 0.0, %v6098
  %v6100 = vpop.f32.mrb[0].mxu0
  %6101 = vmatprep.mubr.bf16.mxu0 0
  %6102 = vmatmul.mubr.bf16.gmra.mrb[0].mxu0 %v6016
  %v6103 = vpop.f32.mrb[0].mxu0
  %v6104 = vadd.f32 0.0, %v6103
  %v6105 = vpop.f32.mrb[0].mxu0
  %v6106 = vpop.f32.mrb[0].mxu0
  %v6107 = vadd.f32 0.0, %v6106
  %v6108 = vpop.f32.mrb[0].mxu0
  %6109 = vmatprep.mubr.bf16.mxu0 0
  %6110 = vmatmul.mubr.bf16.gmra.mrb[0].mxu0 %v6019
  %v6111 = vpop.f32.mrb[0].mxu0
  %v6112 = vadd.f32 0.0, %v6111
  %v6113 = vpop.f32.mrb[0].mxu0
  %v6114 = vpop.f32.mrb[0].mxu0
  %v6115 = vadd.f32 0.0, %v6114
  %v6116 = vpop.f32.mrb[0].mxu0
  %6117 = vdwg.mxu0
  %v6118 = vadd.f32 %v5534, %v6056
  %v6119 = vadd.f32 %v5537, %v6059
  %v6120 = vadd.f32 %v5542, %v6064
  %v6121 = vadd.f32 %v5545, %v6067
  %v6122 = vadd.f32 %v5550, %v6072
  %v6123 = vadd.f32 %v5553, %v6075
  %v6124 = vadd.f32 %v5558, %v6080
  %v6125 = vadd.f32 %v5561, %v6083
  %v6126 = vadd.f32 %v5566, %v6088
  %v6127 = vadd.f32 %v5569, %v6091
  %v6128 = vadd.f32 %v5574, %v6096
  %v6129 = vadd.f32 %v5577, %v6099
  %v6130 = vadd.f32 %v5582, %v6104
  %v6131 = vadd.f32 %v5585, %v6107
  %v6132 = vadd.f32 %v5590, %v6112
  %v6133 = vadd.f32 %v5593, %v6115
  %v6134 = vld [vmem:[#allocation3] sm:$0x1f]
  %v6135 = vld [vmem:[#allocation3 + $0x8] sm:$0x1f]
  %v6136 = vld [vmem:[#allocation3 + $0x10] sm:$0x1f]
  %v6137 = vld [vmem:[#allocation3 + $0x18] sm:$0x1f]
  %v6138 = vld [vmem:[#allocation3 + $0x20] sm:$0x1f]
  %v6139 = vld [vmem:[#allocation3 + $0x28] sm:$0x1f]
  %v6140 = vld [vmem:[#allocation3 + $0x30] sm:$0x1f]
  %v6141 = vld [vmem:[#allocation3 + $0x38] sm:$0x1f]
  %v6142 = vld [vmem:[#allocation3 + $0x40] sm:$0x1f]
  %v6143 = vld [vmem:[#allocation3 + $0x48] sm:$0x1f]
  %v6144 = vld [vmem:[#allocation3 + $0x50] sm:$0x1f]
  %v6145 = vld [vmem:[#allocation3 + $0x58] sm:$0x1f]
  %v6146 = vld [vmem:[#allocation3 + $0x60] sm:$0x1f]
  %v6147 = vld [vmem:[#allocation3 + $0x68] sm:$0x1f]
  %v6148 = vld [vmem:[#allocation3 + $0x70] sm:$0x1f]
  %v6149 = vld [vmem:[#allocation3 + $0x78] sm:$0x1f]
  %v6166 = vunpack.c.l.b16 %v6134
  %v6167 = vunpack.c.h.b16 %v6134
  %v6168 = vunpack.c.l.b16 %v6135
  %v6169 = vunpack.c.h.b16 %v6135
  %v6170 = vunpack.c.l.b16 %v6136
  %v6171 = vunpack.c.h.b16 %v6136
  %v6172 = vunpack.c.l.b16 %v6137
  %v6173 = vunpack.c.h.b16 %v6137
  %v6174 = vunpack.c.l.b16 %v6138
  %v6175 = vunpack.c.h.b16 %v6138
  %v6176 = vunpack.c.l.b16 %v6139
  %v6177 = vunpack.c.h.b16 %v6139
  %v6178 = vunpack.c.l.b16 %v6140
  %v6179 = vunpack.c.h.b16 %v6140
  %v6180 = vunpack.c.l.b16 %v6141
  %v6181 = vunpack.c.h.b16 %v6141
  %v6182 = vunpack.c.l.b16 %v6142
  %v6183 = vunpack.c.h.b16 %v6142
  %v6184 = vunpack.c.l.b16 %v6143
  %v6185 = vunpack.c.h.b16 %v6143
  %v6186 = vunpack.c.l.b16 %v6144
  %v6187 = vunpack.c.h.b16 %v6144
  %v6188 = vunpack.c.l.b16 %v6145
  %v6189 = vunpack.c.h.b16 %v6145
  %v6190 = vunpack.c.l.b16 %v6146
  %v6191 = vunpack.c.h.b16 %v6146
  %v6192 = vunpack.c.l.b16 %v6147
  %v6193 = vunpack.c.h.b16 %v6147
  %v6194 = vunpack.c.l.b16 %v6148
  %v6195 = vunpack.c.h.b16 %v6148
  %v6196 = vunpack.c.l.b16 %v6149
  %v6197 = vunpack.c.h.b16 %v6149
  %v6198 = vpack.c.b16 %v6166, %v6166
  %v6199 = vpack.c.b16 %v6167, %v6167
  %v6200 = vpack.c.b16 %v6168, %v6168
  %v6201 = vpack.c.b16 %v6169, %v6169
  %v6202 = vpack.c.b16 %v6170, %v6170
  %v6203 = vpack.c.b16 %v6171, %v6171
  %v6204 = vpack.c.b16 %v6172, %v6172
  %v6205 = vpack.c.b16 %v6173, %v6173
  %v6206 = vpack.c.b16 %v6174, %v6174
  %v6207 = vpack.c.b16 %v6175, %v6175
  %v6208 = vpack.c.b16 %v6176, %v6176
  %v6209 = vpack.c.b16 %v6177, %v6177
  %v6210 = vpack.c.b16 %v6178, %v6178
  %v6211 = vpack.c.b16 %v6179, %v6179
  %v6212 = vpack.c.b16 %v6180, %v6180
  %v6213 = vpack.c.b16 %v6181, %v6181
  %v6214 = vpack.c.b16 %v6182, %v6182
  %v6215 = vpack.c.b16 %v6183, %v6183
  %v6216 = vpack.c.b16 %v6184, %v6184
  %v6217 = vpack.c.b16 %v6185, %v6185
  %v6218 = vpack.c.b16 %v6186, %v6186
  %v6219 = vpack.c.b16 %v6187, %v6187
  %v6220 = vpack.c.b16 %v6188, %v6188
  %v6221 = vpack.c.b16 %v6189, %v6189
  %v6222 = vpack.c.b16 %v6190, %v6190
  %v6223 = vpack.c.b16 %v6191, %v6191
  %v6224 = vpack.c.b16 %v6192, %v6192
  %v6225 = vpack.c.b16 %v6193, %v6193
  %v6226 = vpack.c.b16 %v6194, %v6194
  %v6227 = vpack.c.b16 %v6195, %v6195
  %v6228 = vpack.c.b16 %v6196, %v6196
  %v6229 = vpack.c.b16 %v6197, %v6197
  %v6231 = vshrl.u32 %v6198, 16
  %v6233 = vrot.slane %v6231, 4
  %v6234 = vshll.u32 %v6198, 16
  %v6236 = vrot.slane %v6234, 5
  %v6237 = vor.u32 %v6233, %v6236
  %v6238 = vrot.slane %v6237, 4
  %v6240 = vshll.u32 %v6199, 16
  %v6242 = vrot.slane %v6240, 5
  %v6243 = vsel %vm2222, %v6238, %v6242
  %v6245 = vshrl.u32 %v6200, 16
  %v6247 = vrot.slane %v6245, 4
  %v6248 = vshll.u32 %v6200, 16
  %v6250 = vrot.slane %v6248, 5
  %v6251 = vor.u32 %v6247, %v6250
  %v6252 = vrot.slane %v6251, 4
  %v6254 = vshll.u32 %v6201, 16
  %v6256 = vrot.slane %v6254, 5
  %v6257 = vsel %vm2222, %v6252, %v6256
  %v6259 = vshrl.u32 %v6202, 16
  %v6261 = vrot.slane %v6259, 4
  %v6262 = vshll.u32 %v6202, 16
  %v6264 = vrot.slane %v6262, 5
  %v6265 = vor.u32 %v6261, %v6264
  %v6266 = vrot.slane %v6265, 4
  %v6268 = vshll.u32 %v6203, 16
  %v6270 = vrot.slane %v6268, 5
  %v6271 = vsel %vm2222, %v6266, %v6270
  %v6273 = vshrl.u32 %v6204, 16
  %v6275 = vrot.slane %v6273, 4
  %v6276 = vshll.u32 %v6204, 16
  %v6278 = vrot.slane %v6276, 5
  %v6279 = vor.u32 %v6275, %v6278
  %v6280 = vrot.slane %v6279, 4
  %v6282 = vshll.u32 %v6205, 16
  %v6284 = vrot.slane %v6282, 5
  %v6285 = vsel %vm2222, %v6280, %v6284
  %v6287 = vshrl.u32 %v6206, 16
  %v6289 = vrot.slane %v6287, 4
  %v6290 = vshll.u32 %v6206, 16
  %v6292 = vrot.slane %v6290, 5
  %v6293 = vor.u32 %v6289, %v6292
  %v6294 = vrot.slane %v6293, 4
  %v6296 = vshll.u32 %v6207, 16
  %v6298 = vrot.slane %v6296, 5
  %v6299 = vsel %vm2222, %v6294, %v6298
  %v6301 = vshrl.u32 %v6208, 16
  %v6303 = vrot.slane %v6301, 4
  %v6304 = vshll.u32 %v6208, 16
  %v6306 = vrot.slane %v6304, 5
  %v6307 = vor.u32 %v6303, %v6306
  %v6308 = vrot.slane %v6307, 4
  %v6310 = vshll.u32 %v6209, 16
  %v6312 = vrot.slane %v6310, 5
  %v6313 = vsel %vm2222, %v6308, %v6312
  %v6315 = vshrl.u32 %v6210, 16
  %v6317 = vrot.slane %v6315, 4
  %v6318 = vshll.u32 %v6210, 16
  %v6320 = vrot.slane %v6318, 5
  %v6321 = vor.u32 %v6317, %v6320
  %v6322 = vrot.slane %v6321, 4
  %v6324 = vshll.u32 %v6211, 16
  %v6326 = vrot.slane %v6324, 5
  %v6327 = vsel %vm2222, %v6322, %v6326
  %v6329 = vshrl.u32 %v6212, 16
  %v6331 = vrot.slane %v6329, 4
  %v6332 = vshll.u32 %v6212, 16
  %v6334 = vrot.slane %v6332, 5
  %v6335 = vor.u32 %v6331, %v6334
  %v6336 = vrot.slane %v6335, 4
  %v6338 = vshll.u32 %v6213, 16
  %v6340 = vrot.slane %v6338, 5
  %v6341 = vsel %vm2222, %v6336, %v6340
  %v6343 = vshrl.u32 %v6214, 16
  %v6345 = vrot.slane %v6343, 4
  %v6346 = vshll.u32 %v6214, 16
  %v6348 = vrot.slane %v6346, 5
  %v6349 = vor.u32 %v6345, %v6348
  %v6350 = vrot.slane %v6349, 4
  %v6352 = vshll.u32 %v6215, 16
  %v6354 = vrot.slane %v6352, 5
  %v6355 = vsel %vm2222, %v6350, %v6354
  %v6357 = vshrl.u32 %v6216, 16
  %v6359 = vrot.slane %v6357, 4
  %v6360 = vshll.u32 %v6216, 16
  %v6362 = vrot.slane %v6360, 5
  %v6363 = vor.u32 %v6359, %v6362
  %v6364 = vrot.slane %v6363, 4
  %v6366 = vshll.u32 %v6217, 16
  %v6368 = vrot.slane %v6366, 5
  %v6369 = vsel %vm2222, %v6364, %v6368
  %v6371 = vshrl.u32 %v6218, 16
  %v6373 = vrot.slane %v6371, 4
  %v6374 = vshll.u32 %v6218, 16
  %v6376 = vrot.slane %v6374, 5
  %v6377 = vor.u32 %v6373, %v6376
  %v6378 = vrot.slane %v6377, 4
  %v6380 = vshll.u32 %v6219, 16
  %v6382 = vrot.slane %v6380, 5
  %v6383 = vsel %vm2222, %v6378, %v6382
  %v6385 = vshrl.u32 %v6220, 16
  %v6387 = vrot.slane %v6385, 4
  %v6388 = vshll.u32 %v6220, 16
  %v6390 = vrot.slane %v6388, 5
  %v6391 = vor.u32 %v6387, %v6390
  %v6392 = vrot.slane %v6391, 4
  %v6394 = vshll.u32 %v6221, 16
  %v6396 = vrot.slane %v6394, 5
  %v6397 = vsel %vm2222, %v6392, %v6396
  %v6399 = vshrl.u32 %v6222, 16
  %v6401 = vrot.slane %v6399, 4
  %v6402 = vshll.u32 %v6222, 16
  %v6404 = vrot.slane %v6402, 5
  %v6405 = vor.u32 %v6401, %v6404
  %v6406 = vrot.slane %v6405, 4
  %v6408 = vshll.u32 %v6223, 16
  %v6410 = vrot.slane %v6408, 5
  %v6411 = vsel %vm2222, %v6406, %v6410
  %v6413 = vshrl.u32 %v6224, 16
  %v6415 = vrot.slane %v6413, 4
  %v6416 = vshll.u32 %v6224, 16
  %v6418 = vrot.slane %v6416, 5
  %v6419 = vor.u32 %v6415, %v6418
  %v6420 = vrot.slane %v6419, 4
  %v6422 = vshll.u32 %v6225, 16
  %v6424 = vrot.slane %v6422, 5
  %v6425 = vsel %vm2222, %v6420, %v6424
  %v6427 = vshrl.u32 %v6226, 16
  %v6429 = vrot.slane %v6427, 4
  %v6430 = vshll.u32 %v6226, 16
  %v6432 = vrot.slane %v6430, 5
  %v6433 = vor.u32 %v6429, %v6432
  %v6434 = vrot.slane %v6433, 4
  %v6436 = vshll.u32 %v6227, 16
  %v6438 = vrot.slane %v6436, 5
  %v6439 = vsel %vm2222, %v6434, %v6438
  %v6441 = vshrl.u32 %v6228, 16
  %v6443 = vrot.slane %v6441, 4
  %v6444 = vshll.u32 %v6228, 16
  %v6446 = vrot.slane %v6444, 5
  %v6447 = vor.u32 %v6443, %v6446
  %v6448 = vrot.slane %v6447, 4
  %v6450 = vshll.u32 %v6229, 16
  %v6452 = vrot.slane %v6450, 5
  %v6453 = vsel %vm2222, %v6448, %v6452
  %s6454 = scalar_lea.vmem %s2, 168
  %v6455 = vld [vmem:[%s6454] sm:$0xf]
  %v6456 = vld [vmem:[%s6454 + $0x4] sm:$0xf]
  %v6457 = vld [vmem:[%s6454 + $0x8] sm:$0xf]
  %v6458 = vld [vmem:[%s6454 + $0xc] sm:$0xf]
  %v6459 = vld [vmem:[%s6454 + $0x10] sm:$0xf]
  %v6460 = vld [vmem:[%s6454 + $0x14] sm:$0xf]
  %v6461 = vld [vmem:[%s6454 + $0x18] sm:$0xf]
  %v6462 = vld [vmem:[%s6454 + $0x1c] sm:$0xf]
  %v6463 = vld [vmem:[%s6454 + $0x20] sm:$0xf]
  %v6464 = vld [vmem:[%s6454 + $0x24] sm:$0xf]
  %v6465 = vld [vmem:[%s6454 + $0x28] sm:$0xf]
  %v6466 = vld [vmem:[%s6454 + $0x2c] sm:$0xf]
  %v6467 = vld [vmem:[%s6454 + $0x30] sm:$0xf]
  %v6468 = vld [vmem:[%s6454 + $0x34] sm:$0xf]
  %v6469 = vunpack.c.l.b16 %v6243
  %v6470 = vunpack.c.l.b16 %v6257
  %v6471 = vunpack.c.l.b16 %v6271
  %v6472 = vunpack.c.l.b16 %v6285
  %v6473 = vunpack.c.l.b16 %v6299
  %v6474 = vunpack.c.l.b16 %v6313
  %v6475 = vunpack.c.l.b16 %v6327
  %v6476 = vunpack.c.l.b16 %v6341
  %v6477 = vunpack.c.l.b16 %v6355
  %v6478 = vunpack.c.l.b16 %v6369
  %v6479 = vunpack.c.l.b16 %v6383
  %v6480 = vunpack.c.l.b16 %v6397
  %v6481 = vunpack.c.l.b16 %v6411
  %v6482 = vunpack.c.l.b16 %v6425
  %v6483 = vunpack.c.l.b16 %v6439
  %v6484 = vunpack.c.l.b16 %v6453
  %v6485 = vpack.c.b16 %v6470, %v6469
  %v6486 = vpack.c.b16 %v6472, %v6471
  %v6487 = vpack.c.b16 %v6474, %v6473
  %v6488 = vpack.c.b16 %v6476, %v6475
  %v6489 = vpack.c.b16 %v6478, %v6477
  %v6490 = vpack.c.b16 %v6480, %v6479
  %v6491 = vpack.c.b16 %v6482, %v6481
  %v6492 = vpack.c.b16 %v6484, %v6483
  %v6507 = vunpack.c.l.b16 %v6455
  %v6508 = vunpack.c.l.b16 %v6456
  %v6509 = vunpack.c.l.b16 %v6457
  %v6510 = vunpack.c.l.b16 %v6458
  %v6511 = vunpack.c.l.b16 %v6459
  %v6512 = vunpack.c.l.b16 %v6460
  %v6513 = vunpack.c.l.b16 %v6461
  %v6514 = vunpack.c.l.b16 %v6462
  %v6515 = vunpack.c.l.b16 %v6463
  %v6516 = vunpack.c.l.b16 %v6464
  %v6517 = vunpack.c.l.b16 %v6465
  %v6518 = vunpack.c.l.b16 %v6466
  %v6519 = vunpack.c.l.b16 %v6467
  %v6520 = vunpack.c.l.b16 %v6468
  %v6521 = vpack.c.b16 %v6508, %v6507
  %v6522 = vpack.c.b16 %v6510, %v6509
  %v6523 = vpack.c.b16 %v6512, %v6511
  %v6524 = vpack.c.b16 %v6514, %v6513
  %v6525 = vpack.c.b16 %v6516, %v6515
  %v6526 = vpack.c.b16 %v6518, %v6517
  %v6527 = vpack.c.b16 %v6520, %v6519
  %v6536 = vsel %vm5271, %v6485, 0
  %v6539 = vsel %vm5271, %v6486, 0
  %v6542 = vsel %vm5271, %v6487, 0
  %v6545 = vsel %vm5271, %v6488, 0
  %v6548 = vsel %vm5271, %v6489, 0
  %v6551 = vsel %vm5271, %v6490, 0
  %v6554 = vsel %vm5271, %v6491, 0
  %v6557 = vsel %vm5271, %v6492, 0
  %6559 = vmatprep.subr.bf16.mxu0 0
  %6560 = vmatpush1.bf16.msra.mxu0 %v6521
  %6561 = vmatprep.subr.bf16.mxu0 0
  %6562 = vmatpush1.bf16.msra.mxu0 %v6522
  %6563 = vmatprep.subr.bf16.mxu0 0
  %6564 = vmatpush1.bf16.msra.mxu0 %v6523
  %6565 = vmatprep.subr.bf16.mxu0 0
  %6566 = vmatpush1.bf16.msra.mxu0 %v6524
  %6567 = vmatprep.subr.bf16.mxu0 0
  %6568 = vmatpush1.bf16.msra.mxu0 %v6525
  %6569 = vmatprep.subr.bf16.mxu0 0
  %6570 = vmatpush1.bf16.msra.mxu0 %v6526
  %6571 = vmatprep.subr.bf16.mxu0 0
  %6572 = vmatpush1.bf16.msra.mxu0 %v6527
  %6573 = vmatprep.subr.bf16.mxu0 0
  %6574 = vmatpush1.bf16.msra.mxu0 0
  %6575 = vmatprep.subr.bf16.mxu0 0
  %6576 = vmatpush1.bf16.msra.mxu0 0
  %6577 = vmatprep.subr.bf16.mxu0 0
  %6578 = vmatpush1.bf16.msra.mxu0 0
  %6579 = vmatprep.subr.bf16.mxu0 0
  %6580 = vmatpush1.bf16.msra.mxu0 0
  %6581 = vmatprep.subr.bf16.mxu0 0
  %6582 = vmatpush1.bf16.msra.mxu0 0
  %6583 = vmatprep.subr.bf16.mxu0 0
  %6584 = vmatpush1.bf16.msra.mxu0 0
  %6585 = vmatprep.subr.bf16.mxu0 0
  %6586 = vmatpush1.bf16.msra.mxu0 0
  %6587 = vmatprep.subr.bf16.mxu0 0
  %6588 = vmatpush1.bf16.msra.mxu0 0
  %6589 = vmatprep.subr.bf16.mxu0 0
  %6590 = vmatpush1.bf16.msra.mxu0 0
  %6591 = vmatprep.mubr.bf16.mxu0 0
  %6592 = vmatmul.mubr.bf16.gmra.mrb[0].mxu0 %v6536
  %v6593 = vpop.f32.mrb[0].mxu0
  %v6594 = vadd.f32 0.0, %v6593
  %v6595 = vpop.f32.mrb[0].mxu0
  %v6596 = vpop.f32.mrb[0].mxu0
  %v6597 = vadd.f32 0.0, %v6596
  %v6598 = vpop.f32.mrb[0].mxu0
  %6599 = vmatprep.mubr.bf16.mxu0 0
  %6600 = vmatmul.mubr.bf16.gmra.mrb[0].mxu0 %v6539
  %v6601 = vpop.f32.mrb[0].mxu0
  %v6602 = vadd.f32 0.0, %v6601
  %v6603 = vpop.f32.mrb[0].mxu0
  %v6604 = vpop.f32.mrb[0].mxu0
  %v6605 = vadd.f32 0.0, %v6604
  %v6606 = vpop.f32.mrb[0].mxu0
  %6607 = vmatprep.mubr.bf16.mxu0 0
  %6608 = vmatmul.mubr.bf16.gmra.mrb[0].mxu0 %v6542
  %v6609 = vpop.f32.mrb[0].mxu0
  %v6610 = vadd.f32 0.0, %v6609
  %v6611 = vpop.f32.mrb[0].mxu0
  %v6612 = vpop.f32.mrb[0].mxu0
  %v6613 = vadd.f32 0.0, %v6612
  %v6614 = vpop.f32.mrb[0].mxu0
  %6615 = vmatprep.mubr.bf16.mxu0 0
  %6616 = vmatmul.mubr.bf16.gmra.mrb[0].mxu0 %v6545
  %v6617 = vpop.f32.mrb[0].mxu0
  %v6618 = vadd.f32 0.0, %v6617
  %v6619 = vpop.f32.mrb[0].mxu0
  %v6620 = vpop.f32.mrb[0].mxu0
  %v6621 = vadd.f32 0.0, %v6620
  %v6622 = vpop.f32.mrb[0].mxu0
  %6623 = vmatprep.mubr.bf16.mxu0 0
  %6624 = vmatmul.mubr.bf16.gmra.mrb[0].mxu0 %v6548
  %v6625 = vpop.f32.mrb[0].mxu0
  %v6626 = vadd.f32 0.0, %v6625
  %v6627 = vpop.f32.mrb[0].mxu0
  %v6628 = vpop.f32.mrb[0].mxu0
  %v6629 = vadd.f32 0.0, %v6628
  %v6630 = vpop.f32.mrb[0].mxu0
  %6631 = vmatprep.mubr.bf16.mxu0 0
  %6632 = vmatmul.mubr.bf16.gmra.mrb[0].mxu0 %v6551
  %v6633 = vpop.f32.mrb[0].mxu0
  %v6634 = vadd.f32 0.0, %v6633
  %v6635 = vpop.f32.mrb[0].mxu0
  %v6636 = vpop.f32.mrb[0].mxu0
  %v6637 = vadd.f32 0.0, %v6636
  %v6638 = vpop.f32.mrb[0].mxu0
  %6639 = vmatprep.mubr.bf16.mxu0 0
  %6640 = vmatmul.mubr.bf16.gmra.mrb[0].mxu0 %v6554
  %v6641 = vpop.f32.mrb[0].mxu0
  %v6642 = vadd.f32 0.0, %v6641
  %v6643 = vpop.f32.mrb[0].mxu0
  %v6644 = vpop.f32.mrb[0].mxu0
  %v6645 = vadd.f32 0.0, %v6644
  %v6646 = vpop.f32.mrb[0].mxu0
  %6647 = vmatprep.mubr.bf16.mxu0 0
  %6648 = vmatmul.mubr.bf16.gmra.mrb[0].mxu0 %v6557
  %v6649 = vpop.f32.mrb[0].mxu0
  %v6650 = vadd.f32 0.0, %v6649
  %v6651 = vpop.f32.mrb[0].mxu0
  %v6652 = vpop.f32.mrb[0].mxu0
  %v6653 = vadd.f32 0.0, %v6652
  %v6654 = vpop.f32.mrb[0].mxu0
  %6655 = vdwg.mxu0
  %v6656 = vadd.f32 %v6118, %v6594
  %v6657 = vadd.f32 %v6119, %v6597
  %v6658 = vadd.f32 %v6120, %v6602
  %v6659 = vadd.f32 %v6121, %v6605
  %v6660 = vadd.f32 %v6122, %v6610
  %v6661 = vadd.f32 %v6123, %v6613
  %v6662 = vadd.f32 %v6124, %v6618
  %v6663 = vadd.f32 %v6125, %v6621
  %v6664 = vadd.f32 %v6126, %v6626
  %v6665 = vadd.f32 %v6127, %v6629
  %v6666 = vadd.f32 %v6128, %v6634
  %v6667 = vadd.f32 %v6129, %v6637
  %v6668 = vadd.f32 %v6130, %v6642
  %v6669 = vadd.f32 %v6131, %v6645
  %v6670 = vadd.f32 %v6132, %v6650
  %v6671 = vadd.f32 %v6133, %v6653
  %v6672 = vld [vmem:[%s8] sm:$0x1]
  %v6674 = vlaneseq
  %v6675 = vshrl.u32 %v6674, 7
  %v6676 = vsub.s32 0, %v6675
  %v6677 = vrot.slane %v6672, %v6676
  %v6679 = vadd.f32 %v6656, %v6677
  %v6680 = vadd.f32 %v6657, %v6677
  %v6681 = vadd.f32 %v6658, %v6677
  %v6682 = vadd.f32 %v6659, %v6677
  %v6683 = vadd.f32 %v6660, %v6677
  %v6684 = vadd.f32 %v6661, %v6677
  %v6685 = vadd.f32 %v6662, %v6677
  %v6686 = vadd.f32 %v6663, %v6677
  %v6687 = vadd.f32 %v6664, %v6677
  %v6688 = vadd.f32 %v6665, %v6677
  %v6689 = vadd.f32 %v6666, %v6677
  %v6690 = vadd.f32 %v6667, %v6677
  %v6691 = vadd.f32 %v6668, %v6677
  %v6692 = vadd.f32 %v6669, %v6677
  %v6693 = vadd.f32 %v6670, %v6677
  %v6694 = vadd.f32 %v6671, %v6677
  %vm6695 = vcmp.ge.f32.partialorder %v6679, 0.0
  %vm6696 = vcmp.ge.f32.partialorder %v6680, 0.0
  %vm6697 = vcmp.ge.f32.partialorder %v6681, 0.0
  %vm6698 = vcmp.ge.f32.partialorder %v6682, 0.0
  %vm6699 = vcmp.ge.f32.partialorder %v6683, 0.0
  %vm6700 = vcmp.ge.f32.partialorder %v6684, 0.0
  %vm6701 = vcmp.ge.f32.partialorder %v6685, 0.0
  %vm6702 = vcmp.ge.f32.partialorder %v6686, 0.0
  %vm6703 = vcmp.ge.f32.partialorder %v6687, 0.0
  %vm6704 = vcmp.ge.f32.partialorder %v6688, 0.0
  %vm6705 = vcmp.ge.f32.partialorder %v6689, 0.0
  %vm6706 = vcmp.ge.f32.partialorder %v6690, 0.0
  %vm6707 = vcmp.ge.f32.partialorder %v6691, 0.0
  %vm6708 = vcmp.ge.f32.partialorder %v6692, 0.0
  %vm6709 = vcmp.ge.f32.partialorder %v6693, 0.0
  %vm6710 = vcmp.ge.f32.partialorder %v6694, 0.0
  %v6711 = vmul.f32 %v6679, 0.2
  %v6712 = vmul.f32 %v6680, 0.2
  %v6713 = vmul.f32 %v6681, 0.2
  %v6714 = vmul.f32 %v6682, 0.2
  %v6715 = vmul.f32 %v6683, 0.2
  %v6716 = vmul.f32 %v6684, 0.2
  %v6717 = vmul.f32 %v6685, 0.2
  %v6718 = vmul.f32 %v6686, 0.2
  %v6719 = vmul.f32 %v6687, 0.2
  %v6720 = vmul.f32 %v6688, 0.2
  %v6721 = vmul.f32 %v6689, 0.2
  %v6722 = vmul.f32 %v6690, 0.2
  %v6723 = vmul.f32 %v6691, 0.2
  %v6724 = vmul.f32 %v6692, 0.2
  %v6725 = vmul.f32 %v6693, 0.2
  %v6726 = vmul.f32 %v6694, 0.2
  %v6727 = vsel %vm6695, %v6679, %v6711
  %v6728 = vsel %vm6696, %v6680, %v6712
  %v6729 = vsel %vm6697, %v6681, %v6713
  %v6730 = vsel %vm6698, %v6682, %v6714
  %v6731 = vsel %vm6699, %v6683, %v6715
  %v6732 = vsel %vm6700, %v6684, %v6716
  %v6733 = vsel %vm6701, %v6685, %v6717
  %v6734 = vsel %vm6702, %v6686, %v6718
  %v6735 = vsel %vm6703, %v6687, %v6719
  %v6736 = vsel %vm6704, %v6688, %v6720
  %v6737 = vsel %vm6705, %v6689, %v6721
  %v6738 = vsel %vm6706, %v6690, %v6722
  %v6739 = vsel %vm6707, %v6691, %v6723
  %v6740 = vsel %vm6708, %v6692, %v6724
  %v6741 = vsel %vm6709, %v6693, %v6725
  %v6742 = vsel %vm6710, %v6694, %v6726
  %v6743 = vpack.c.bf16 %v6728, %v6727
  %v6744 = vpack.c.bf16 %v6730, %v6729
  %v6745 = vpack.c.bf16 %v6732, %v6731
  %v6746 = vpack.c.bf16 %v6734, %v6733
  %v6747 = vpack.c.bf16 %v6736, %v6735
  %v6748 = vpack.c.bf16 %v6738, %v6737
  %v6749 = vpack.c.bf16 %v6740, %v6739
  %v6750 = vpack.c.bf16 %v6742, %v6741
  %v6759 = vunpack.c.l.b16 %v6743
  %v6760 = vunpack.c.h.b16 %v6743
  %v6761 = vunpack.c.l.b16 %v6744
  %v6762 = vunpack.c.h.b16 %v6744
  %v6763 = vunpack.c.l.b16 %v6745
  %v6764 = vunpack.c.h.b16 %v6745
  %v6765 = vunpack.c.l.b16 %v6746
  %v6766 = vunpack.c.h.b16 %v6746
  %v6767 = vunpack.c.l.b16 %v6747
  %v6768 = vunpack.c.h.b16 %v6747
  %v6769 = vunpack.c.l.b16 %v6748
  %v6770 = vunpack.c.h.b16 %v6748
  %v6771 = vunpack.c.l.b16 %v6749
  %v6772 = vunpack.c.h.b16 %v6749
  %v6773 = vunpack.c.l.b16 %v6750
  %v6774 = vunpack.c.h.b16 %v6750
  %v6775 = vpack.c.b16 %v6759, %v6759
  %v6776 = vpack.c.b16 %v6760, %v6760
  %v6777 = vpack.c.b16 %v6761, %v6761
  %v6778 = vpack.c.b16 %v6762, %v6762
  %v6779 = vpack.c.b16 %v6763, %v6763
  %v6780 = vpack.c.b16 %v6764, %v6764
  %v6781 = vpack.c.b16 %v6765, %v6765
  %v6782 = vpack.c.b16 %v6766, %v6766
  %v6783 = vpack.c.b16 %v6767, %v6767
  %v6784 = vpack.c.b16 %v6768, %v6768
  %v6785 = vpack.c.b16 %v6769, %v6769
  %v6786 = vpack.c.b16 %v6770, %v6770
  %v6787 = vpack.c.b16 %v6771, %v6771
  %v6788 = vpack.c.b16 %v6772, %v6772
  %v6789 = vpack.c.b16 %v6773, %v6773
  %v6790 = vpack.c.b16 %v6774, %v6774
  %vm6807 = vcmask 781312
  %6808 = vst.msk [vmem:[#allocation4] sm:$0xf] %vm6807, %v6775
  %6809 = vst.msk [vmem:[#allocation4 + $0x8] sm:$0xf] %vm6807, %v6776
  %6810 = vst.msk [vmem:[#allocation4 + $0x10] sm:$0xf] %vm6807, %v6777
  %6811 = vst.msk [vmem:[#allocation4 + $0x18] sm:$0xf] %vm6807, %v6778
  %6812 = vst.msk [vmem:[#allocation4 + $0x20] sm:$0xf] %vm6807, %v6779
  %6813 = vst.msk [vmem:[#allocation4 + $0x28] sm:$0xf] %vm6807, %v6780
  %6814 = vst.msk [vmem:[#allocation4 + $0x30] sm:$0xf] %vm6807, %v6781
  %6815 = vst.msk [vmem:[#allocation4 + $0x38] sm:$0xf] %vm6807, %v6782
  %6816 = vst.msk [vmem:[#allocation4 + $0x40] sm:$0xf] %vm6807, %v6783
  %6817 = vst.msk [vmem:[#allocation4 + $0x48] sm:$0xf] %vm6807, %v6784
  %6818 = vst.msk [vmem:[#allocation4 + $0x50] sm:$0xf] %vm6807, %v6785
  %6819 = vst.msk [vmem:[#allocation4 + $0x58] sm:$0xf] %vm6807, %v6786
  %6820 = vst.msk [vmem:[#allocation4 + $0x60] sm:$0xf] %vm6807, %v6787
  %6821 = vst.msk [vmem:[#allocation4 + $0x68] sm:$0xf] %vm6807, %v6788
  %6822 = vst.msk [vmem:[#allocation4 + $0x70] sm:$0xf] %vm6807, %v6789
  %6823 = vst.msk [vmem:[#allocation4 + $0x78] sm:$0xf] %vm6807, %v6790
  %vm6824 = vcmask 785412
  %6825 = vst.msk [vmem:[#allocation4] sm:$0xf0] %vm6824, 0
  %6826 = vst.msk [vmem:[#allocation4 + $0x8] sm:$0xf0] %vm6824, 0
  %6827 = vst.msk [vmem:[#allocation4 + $0x10] sm:$0xf0] %vm6824, 0
  %6828 = vst.msk [vmem:[#allocation4 + $0x18] sm:$0xf0] %vm6824, 0
  %6829 = vst.msk [vmem:[#allocation4 + $0x20] sm:$0xf0] %vm6824, 0
  %6830 = vst.msk [vmem:[#allocation4 + $0x28] sm:$0xf0] %vm6824, 0
  %6831 = vst.msk [vmem:[#allocation4 + $0x30] sm:$0xf0] %vm6824, 0
  %6832 = vst.msk [vmem:[#allocation4 + $0x38] sm:$0xf0] %vm6824, 0
  %6833 = vst.msk [vmem:[#allocation4 + $0x40] sm:$0xf0] %vm6824, 0
  %6834 = vst.msk [vmem:[#allocation4 + $0x48] sm:$0xf0] %vm6824, 0
  %6835 = vst.msk [vmem:[#allocation4 + $0x50] sm:$0xf0] %vm6824, 0
  %6836 = vst.msk [vmem:[#allocation4 + $0x58] sm:$0xf0] %vm6824, 0
  %6837 = vst.msk [vmem:[#allocation4 + $0x60] sm:$0xf0] %vm6824, 0
  %6838 = vst.msk [vmem:[#allocation4 + $0x68] sm:$0xf0] %vm6824, 0
  %6839 = vst.msk [vmem:[#allocation4 + $0x70] sm:$0xf0] %vm6824, 0
  %6840 = vst.msk [vmem:[#allocation4 + $0x78] sm:$0xf0] %vm6824, 0
  %v6841 = vld [vmem:[#allocation4] sm:$0xf]
  %v6842 = vld [vmem:[#allocation4 + $0x8] sm:$0xf]
  %v6843 = vld [vmem:[#allocation4 + $0x10] sm:$0xf]
  %v6844 = vld [vmem:[#allocation4 + $0x18] sm:$0xf]
  %v6845 = vld [vmem:[#allocation4 + $0x20] sm:$0xf]
  %v6846 = vld [vmem:[#allocation4 + $0x28] sm:$0xf]
  %v6847 = vld [vmem:[#allocation4 + $0x30] sm:$0xf]
  %v6848 = vld [vmem:[#allocation4 + $0x38] sm:$0xf]
  %v6849 = vld [vmem:[#allocation4 + $0x40] sm:$0xf]
  %v6850 = vld [vmem:[#allocation4 + $0x48] sm:$0xf]
  %v6851 = vld [vmem:[#allocation4 + $0x50] sm:$0xf]
  %v6852 = vld [vmem:[#allocation4 + $0x58] sm:$0xf]
  %v6853 = vld [vmem:[#allocation4 + $0x60] sm:$0xf]
  %v6854 = vld [vmem:[#allocation4 + $0x68] sm:$0xf]
  %v6855 = vld [vmem:[#allocation4 + $0x70] sm:$0xf]
  %v6856 = vld [vmem:[#allocation4 + $0x78] sm:$0xf]
  %v6857 = vld [vmem:[%s3] sm:$0xff]
  %v6858 = vld [vmem:[%s3 + $0x8] sm:$0xff]
  %v6859 = vld [vmem:[%s3 + $0x10] sm:$0xff]
  %v6860 = vld [vmem:[%s3 + $0x18] sm:$0xff]
  %v6861 = vld [vmem:[%s3 + $0x20] sm:$0xff]
  %v6862 = vld [vmem:[%s3 + $0x28] sm:$0xff]
  %v6863 = vld [vmem:[%s3 + $0x30] sm:$0xff]
  %v6864 = vld [vmem:[%s3 + $0x38] sm:$0xff]
  %v6865 = vld [vmem:[%s3 + $0x40] sm:$0xff]
  %v6866 = vld [vmem:[%s3 + $0x48] sm:$0xff]
  %v6867 = vld [vmem:[%s3 + $0x50] sm:$0xff]
  %v6868 = vld [vmem:[%s3 + $0x58] sm:$0xff]
  %v6869 = vld [vmem:[#allocation4] sm:$0x1f]
  %v6870 = vld [vmem:[#allocation4 + $0x8] sm:$0x1f]
  %v6871 = vld [vmem:[#allocation4 + $0x10] sm:$0x1f]
  %v6872 = vld [vmem:[#allocation4 + $0x18] sm:$0x1f]
  %v6873 = vld [vmem:[#allocation4 + $0x20] sm:$0x1f]
  %v6874 = vld [vmem:[#allocation4 + $0x28] sm:$0x1f]
  %v6875 = vld [vmem:[#allocation4 + $0x30] sm:$0x1f]
  %v6876 = vld [vmem:[#allocation4 + $0x38] sm:$0x1f]
  %v6877 = vld [vmem:[#allocation4 + $0x40] sm:$0x1f]
  %v6878 = vld [vmem:[#allocation4 + $0x48] sm:$0x1f]
  %v6879 = vld [vmem:[#allocation4 + $0x50] sm:$0x1f]
  %v6880 = vld [vmem:[#allocation4 + $0x58] sm:$0x1f]
  %v6881 = vld [vmem:[#allocation4 + $0x60] sm:$0x1f]
  %v6882 = vld [vmem:[#allocation4 + $0x68] sm:$0x1f]
  %v6883 = vld [vmem:[#allocation4 + $0x70] sm:$0x1f]
  %v6884 = vld [vmem:[#allocation4 + $0x78] sm:$0x1f]
  %v6901 = vunpack.c.l.b16 %v6869
  %v6902 = vunpack.c.h.b16 %v6869
  %v6903 = vunpack.c.l.b16 %v6870
  %v6904 = vunpack.c.h.b16 %v6870
  %v6905 = vunpack.c.l.b16 %v6871
  %v6906 = vunpack.c.h.b16 %v6871
  %v6907 = vunpack.c.l.b16 %v6872
  %v6908 = vunpack.c.h.b16 %v6872
  %v6909 = vunpack.c.l.b16 %v6873
  %v6910 = vunpack.c.h.b16 %v6873
  %v6911 = vunpack.c.l.b16 %v6874
  %v6912 = vunpack.c.h.b16 %v6874
  %v6913 = vunpack.c.l.b16 %v6875
  %v6914 = vunpack.c.h.b16 %v6875
  %v6915 = vunpack.c.l.b16 %v6876
  %v6916 = vunpack.c.h.b16 %v6876
  %v6917 = vunpack.c.l.b16 %v6877
  %v6918 = vunpack.c.h.b16 %v6877
  %v6919 = vunpack.c.l.b16 %v6878
  %v6920 = vunpack.c.h.b16 %v6878
  %v6921 = vunpack.c.l.b16 %v6879
  %v6922 = vunpack.c.h.b16 %v6879
  %v6923 = vunpack.c.l.b16 %v6880
  %v6924 = vunpack.c.h.b16 %v6880
  %v6925 = vunpack.c.l.b16 %v6881
  %v6926 = vunpack.c.h.b16 %v6881
  %v6927 = vunpack.c.l.b16 %v6882
  %v6928 = vunpack.c.h.b16 %v6882
  %v6929 = vunpack.c.l.b16 %v6883
  %v6930 = vunpack.c.h.b16 %v6883
  %v6931 = vunpack.c.l.b16 %v6884
  %v6932 = vunpack.c.h.b16 %v6884
  %v6933 = vpack.c.b16 %v6901, %v6901
  %v6934 = vpack.c.b16 %v6902, %v6902
  %v6935 = vpack.c.b16 %v6903, %v6903
  %v6936 = vpack.c.b16 %v6904, %v6904
  %v6937 = vpack.c.b16 %v6905, %v6905
  %v6938 = vpack.c.b16 %v6906, %v6906
  %v6939 = vpack.c.b16 %v6907, %v6907
  %v6940 = vpack.c.b16 %v6908, %v6908
  %v6941 = vpack.c.b16 %v6909, %v6909
  %v6942 = vpack.c.b16 %v6910, %v6910
  %v6943 = vpack.c.b16 %v6911, %v6911
  %v6944 = vpack.c.b16 %v6912, %v6912
  %v6945 = vpack.c.b16 %v6913, %v6913
  %v6946 = vpack.c.b16 %v6914, %v6914
  %v6947 = vpack.c.b16 %v6915, %v6915
  %v6948 = vpack.c.b16 %v6916, %v6916
  %v6949 = vpack.c.b16 %v6917, %v6917
  %v6950 = vpack.c.b16 %v6918, %v6918
  %v6951 = vpack.c.b16 %v6919, %v6919
  %v6952 = vpack.c.b16 %v6920, %v6920
  %v6953 = vpack.c.b16 %v6921, %v6921
  %v6954 = vpack.c.b16 %v6922, %v6922
  %v6955 = vpack.c.b16 %v6923, %v6923
  %v6956 = vpack.c.b16 %v6924, %v6924
  %v6957 = vpack.c.b16 %v6925, %v6925
  %v6958 = vpack.c.b16 %v6926, %v6926
  %v6959 = vpack.c.b16 %v6927, %v6927
  %v6960 = vpack.c.b16 %v6928, %v6928
  %v6961 = vpack.c.b16 %v6929, %v6929
  %v6962 = vpack.c.b16 %v6930, %v6930
  %v6963 = vpack.c.b16 %v6931, %v6931
  %v6964 = vpack.c.b16 %v6932, %v6932
  %v6966 = vshrl.u32 %v6933, 16
  %v6968 = vrot.slane %v6966, 4
  %v6969 = vshll.u32 %v6933, 16
  %v6971 = vrot.slane %v6969, 5
  %v6972 = vor.u32 %v6968, %v6971
  %v6973 = vrot.slane %v6972, 4
  %v6975 = vshll.u32 %v6934, 16
  %v6977 = vrot.slane %v6975, 5
  %v6978 = vsel %vm2222, %v6973, %v6977
  %v6980 = vshrl.u32 %v6935, 16
  %v6982 = vrot.slane %v6980, 4
  %v6983 = vshll.u32 %v6935, 16
  %v6985 = vrot.slane %v6983, 5
  %v6986 = vor.u32 %v6982, %v6985
  %v6987 = vrot.slane %v6986, 4
  %v6989 = vshll.u32 %v6936, 16
  %v6991 = vrot.slane %v6989, 5
  %v6992 = vsel %vm2222, %v6987, %v6991
  %v6994 = vshrl.u32 %v6937, 16
  %v6996 = vrot.slane %v6994, 4
  %v6997 = vshll.u32 %v6937, 16
  %v6999 = vrot.slane %v6997, 5
  %v7000 = vor.u32 %v6996, %v6999
  %v7001 = vrot.slane %v7000, 4
  %v7003 = vshll.u32 %v6938, 16
  %v7005 = vrot.slane %v7003, 5
  %v7006 = vsel %vm2222, %v7001, %v7005
  %v7008 = vshrl.u32 %v6939, 16
  %v7010 = vrot.slane %v7008, 4
  %v7011 = vshll.u32 %v6939, 16
  %v7013 = vrot.slane %v7011, 5
  %v7014 = vor.u32 %v7010, %v7013
  %v7015 = vrot.slane %v7014, 4
  %v7017 = vshll.u32 %v6940, 16
  %v7019 = vrot.slane %v7017, 5
  %v7020 = vsel %vm2222, %v7015, %v7019
  %v7022 = vshrl.u32 %v6941, 16
  %v7024 = vrot.slane %v7022, 4
  %v7025 = vshll.u32 %v6941, 16
  %v7027 = vrot.slane %v7025, 5
  %v7028 = vor.u32 %v7024, %v7027
  %v7029 = vrot.slane %v7028, 4
  %v7031 = vshll.u32 %v6942, 16
  %v7033 = vrot.slane %v7031, 5
  %v7034 = vsel %vm2222, %v7029, %v7033
  %v7036 = vshrl.u32 %v6943, 16
  %v7038 = vrot.slane %v7036, 4
  %v7039 = vshll.u32 %v6943, 16
  %v7041 = vrot.slane %v7039, 5
  %v7042 = vor.u32 %v7038, %v7041
  %v7043 = vrot.slane %v7042, 4
  %v7045 = vshll.u32 %v6944, 16
  %v7047 = vrot.slane %v7045, 5
  %v7048 = vsel %vm2222, %v7043, %v7047
  %v7050 = vshrl.u32 %v6945, 16
  %v7052 = vrot.slane %v7050, 4
  %v7053 = vshll.u32 %v6945, 16
  %v7055 = vrot.slane %v7053, 5
  %v7056 = vor.u32 %v7052, %v7055
  %v7057 = vrot.slane %v7056, 4
  %v7059 = vshll.u32 %v6946, 16
  %v7061 = vrot.slane %v7059, 5
  %v7062 = vsel %vm2222, %v7057, %v7061
  %v7064 = vshrl.u32 %v6947, 16
  %v7066 = vrot.slane %v7064, 4
  %v7067 = vshll.u32 %v6947, 16
  %v7069 = vrot.slane %v7067, 5
  %v7070 = vor.u32 %v7066, %v7069
  %v7071 = vrot.slane %v7070, 4
  %v7073 = vshll.u32 %v6948, 16
  %v7075 = vrot.slane %v7073, 5
  %v7076 = vsel %vm2222, %v7071, %v7075
  %v7078 = vshrl.u32 %v6949, 16
  %v7080 = vrot.slane %v7078, 4
  %v7081 = vshll.u32 %v6949, 16
  %v7083 = vrot.slane %v7081, 5
  %v7084 = vor.u32 %v7080, %v7083
  %v7085 = vrot.slane %v7084, 4
  %v7087 = vshll.u32 %v6950, 16
  %v7089 = vrot.slane %v7087, 5
  %v7090 = vsel %vm2222, %v7085, %v7089
  %v7092 = vshrl.u32 %v6951, 16
  %v7094 = vrot.slane %v7092, 4
  %v7095 = vshll.u32 %v6951, 16
  %v7097 = vrot.slane %v7095, 5
  %v7098 = vor.u32 %v7094, %v7097
  %v7099 = vrot.slane %v7098, 4
  %v7101 = vshll.u32 %v6952, 16
  %v7103 = vrot.slane %v7101, 5
  %v7104 = vsel %vm2222, %v7099, %v7103
  %v7106 = vshrl.u32 %v6953, 16
  %v7108 = vrot.slane %v7106, 4
  %v7109 = vshll.u32 %v6953, 16
  %v7111 = vrot.slane %v7109, 5
  %v7112 = vor.u32 %v7108, %v7111
  %v7113 = vrot.slane %v7112, 4
  %v7115 = vshll.u32 %v6954, 16
  %v7117 = vrot.slane %v7115, 5
  %v7118 = vsel %vm2222, %v7113, %v7117
  %v7120 = vshrl.u32 %v6955, 16
  %v7122 = vrot.slane %v7120, 4
  %v7123 = vshll.u32 %v6955, 16
  %v7125 = vrot.slane %v7123, 5
  %v7126 = vor.u32 %v7122, %v7125
  %v7127 = vrot.slane %v7126, 4
  %v7129 = vshll.u32 %v6956, 16
  %v7131 = vrot.slane %v7129, 5
  %v7132 = vsel %vm2222, %v7127, %v7131
  %v7134 = vshrl.u32 %v6957, 16
  %v7136 = vrot.slane %v7134, 4
  %v7137 = vshll.u32 %v6957, 16
  %v7139 = vrot.slane %v7137, 5
  %v7140 = vor.u32 %v7136, %v7139
  %v7141 = vrot.slane %v7140, 4
  %v7143 = vshll.u32 %v6958, 16
  %v7145 = vrot.slane %v7143, 5
  %v7146 = vsel %vm2222, %v7141, %v7145
  %v7148 = vshrl.u32 %v6959, 16
  %v7150 = vrot.slane %v7148, 4
  %v7151 = vshll.u32 %v6959, 16
  %v7153 = vrot.slane %v7151, 5
  %v7154 = vor.u32 %v7150, %v7153
  %v7155 = vrot.slane %v7154, 4
  %v7157 = vshll.u32 %v6960, 16
  %v7159 = vrot.slane %v7157, 5
  %v7160 = vsel %vm2222, %v7155, %v7159
  %v7162 = vshrl.u32 %v6961, 16
  %v7164 = vrot.slane %v7162, 4
  %v7165 = vshll.u32 %v6961, 16
  %v7167 = vrot.slane %v7165, 5
  %v7168 = vor.u32 %v7164, %v7167
  %v7169 = vrot.slane %v7168, 4
  %v7171 = vshll.u32 %v6962, 16
  %v7173 = vrot.slane %v7171, 5
  %v7174 = vsel %vm2222, %v7169, %v7173
  %v7176 = vshrl.u32 %v6963, 16
  %v7178 = vrot.slane %v7176, 4
  %v7179 = vshll.u32 %v6963, 16
  %v7181 = vrot.slane %v7179, 5
  %v7182 = vor.u32 %v7178, %v7181
  %v7183 = vrot.slane %v7182, 4
  %v7185 = vshll.u32 %v6964, 16
  %v7187 = vrot.slane %v7185, 5
  %v7188 = vsel %vm2222, %v7183, %v7187
  %s7189 = scalar_lea.vmem %s3, 96
  %v7190 = vld [vmem:[%s7189] sm:$0xff]
  %v7191 = vld [vmem:[%s7189 + $0x8] sm:$0xff]
  %v7192 = vld [vmem:[%s7189 + $0x10] sm:$0xff]
  %v7193 = vld [vmem:[%s7189 + $0x18] sm:$0xff]
  %v7194 = vld [vmem:[%s7189 + $0x20] sm:$0xff]
  %v7195 = vld [vmem:[%s7189 + $0x28] sm:$0xff]
  %v7196 = vld [vmem:[%s7189 + $0x30] sm:$0xff]
  %v7197 = vld [vmem:[%s7189 + $0x38] sm:$0xff]
  %v7198 = vld [vmem:[%s7189 + $0x40] sm:$0xff]
  %v7199 = vld [vmem:[%s7189 + $0x48] sm:$0xff]
  %v7200 = vld [vmem:[%s7189 + $0x50] sm:$0xff]
  %v7201 = vld [vmem:[%s7189 + $0x58] sm:$0xff]
  %v7202 = vunpack.c.l.b16 %v6978
  %v7203 = vunpack.c.l.b16 %v6992
  %v7204 = vunpack.c.l.b16 %v7006
  %v7205 = vunpack.c.l.b16 %v7020
  %v7206 = vunpack.c.l.b16 %v7034
  %v7207 = vunpack.c.l.b16 %v7048
  %v7208 = vunpack.c.l.b16 %v7062
  %v7209 = vunpack.c.l.b16 %v7076
  %v7210 = vunpack.c.l.b16 %v7090
  %v7211 = vunpack.c.l.b16 %v7104
  %v7212 = vunpack.c.l.b16 %v7118
  %v7213 = vunpack.c.l.b16 %v7132
  %v7214 = vunpack.c.l.b16 %v7146
  %v7215 = vunpack.c.l.b16 %v7160
  %v7216 = vunpack.c.l.b16 %v7174
  %v7217 = vunpack.c.l.b16 %v7188
  %v7218 = vpack.c.b16 %v7203, %v7202
  %v7219 = vpack.c.b16 %v7205, %v7204
  %v7220 = vpack.c.b16 %v7207, %v7206
  %v7221 = vpack.c.b16 %v7209, %v7208
  %v7222 = vpack.c.b16 %v7211, %v7210
  %v7223 = vpack.c.b16 %v7213, %v7212
  %v7224 = vpack.c.b16 %v7215, %v7214
  %v7225 = vpack.c.b16 %v7217, %v7216
  %v7238 = vunpack.c.l.b16 %v7190
  %v7239 = vunpack.c.h.b16 %v7190
  %v7240 = vunpack.c.l.b16 %v7191
  %v7241 = vunpack.c.h.b16 %v7191
  %v7242 = vunpack.c.l.b16 %v7192
  %v7243 = vunpack.c.h.b16 %v7192
  %v7244 = vunpack.c.l.b16 %v7193
  %v7245 = vunpack.c.h.b16 %v7193
  %v7246 = vunpack.c.l.b16 %v7194
  %v7247 = vunpack.c.h.b16 %v7194
  %v7248 = vunpack.c.l.b16 %v7195
  %v7249 = vunpack.c.h.b16 %v7195
  %v7250 = vunpack.c.l.b16 %v7196
  %v7251 = vunpack.c.h.b16 %v7196
  %v7252 = vunpack.c.l.b16 %v7197
  %v7253 = vunpack.c.h.b16 %v7197
  %v7254 = vunpack.c.l.b16 %v7198
  %v7255 = vunpack.c.h.b16 %v7198
  %v7256 = vunpack.c.l.b16 %v7199
  %v7257 = vunpack.c.h.b16 %v7199
  %v7258 = vunpack.c.l.b16 %v7200
  %v7259 = vunpack.c.h.b16 %v7200
  %v7260 = vunpack.c.l.b16 %v7201
  %v7261 = vunpack.c.h.b16 %v7201
  %v7262 = vpack.c.b16 %v7240, %v7238
  %v7263 = vpack.c.b16 %v7241, %v7239
  %v7264 = vpack.c.b16 %v7244, %v7242
  %v7265 = vpack.c.b16 %v7245, %v7243
  %v7266 = vpack.c.b16 %v7248, %v7246
  %v7267 = vpack.c.b16 %v7249, %v7247
  %v7268 = vpack.c.b16 %v7252, %v7250
  %v7269 = vpack.c.b16 %v7253, %v7251
  %v7270 = vpack.c.b16 %v7256, %v7254
  %v7271 = vpack.c.b16 %v7257, %v7255
  %v7272 = vpack.c.b16 %v7260, %v7258
  %v7273 = vpack.c.b16 %v7261, %v7259
  %vm7286 = vcmask 785408
  %v7288 = vsel %vm7286, %v7218, 0
  %v7291 = vsel %vm7286, %v7219, 0
  %v7294 = vsel %vm7286, %v7220, 0
  %v7297 = vsel %vm7286, %v7221, 0
  %v7300 = vsel %vm7286, %v7222, 0
  %v7303 = vsel %vm7286, %v7223, 0
  %v7306 = vsel %vm7286, %v7224, 0
  %v7309 = vsel %vm7286, %v7225, 0
  %7311 = vmatprep.subr.bf16.mxu0 %v7263
  %7312 = vmatpush1.bf16.msra.mxu0 %v7262
  %7313 = vmatprep.subr.bf16.mxu0 %v7265
  %7314 = vmatpush1.bf16.msra.mxu0 %v7264
  %7315 = vmatprep.subr.bf16.mxu0 %v7267
  %7316 = vmatpush1.bf16.msra.mxu0 %v7266
  %7317 = vmatprep.subr.bf16.mxu0 %v7269
  %7318 = vmatpush1.bf16.msra.mxu0 %v7268
  %7319 = vmatprep.subr.bf16.mxu0 %v7271
  %7320 = vmatpush1.bf16.msra.mxu0 %v7270
  %7321 = vmatprep.subr.bf16.mxu0 %v7273
  %7322 = vmatpush1.bf16.msra.mxu0 %v7272
  %7323 = vmatprep.subr.bf16.mxu0 0
  %7324 = vmatpush1.bf16.msra.mxu0 0
  %7325 = vmatprep.subr.bf16.mxu0 0
  %7326 = vmatpush1.bf16.msra.mxu0 0
  %7327 = vmatprep.subr.bf16.mxu0 0
  %7328 = vmatpush1.bf16.msra.mxu0 0
  %7329 = vmatprep.subr.bf16.mxu0 0
  %7330 = vmatpush1.bf16.msra.mxu0 0
  %7331 = vmatprep.subr.bf16.mxu0 0
  %7332 = vmatpush1.bf16.msra.mxu0 0
  %7333 = vmatprep.subr.bf16.mxu0 0
  %7334 = vmatpush1.bf16.msra.mxu0 0
  %7335 = vmatprep.subr.bf16.mxu0 0
  %7336 = vmatpush1.bf16.msra.mxu0 0
  %7337 = vmatprep.subr.bf16.mxu0 0
  %7338 = vmatpush1.bf16.msra.mxu0 0
  %7339 = vmatprep.subr.bf16.mxu0 0
  %7340 = vmatpush1.bf16.msra.mxu0 0
  %7341 = vmatprep.subr.bf16.mxu0 0
  %7342 = vmatpush1.bf16.msra.mxu0 0
  %7343 = vmatprep.mubr.bf16.mxu0 0
  %7344 = vmatmul.mubr.bf16.gmra.mrb[0].mxu0 %v7288
  %v7345 = vpop.f32.mrb[0].mxu0
  %v7346 = vadd.f32 0.0, %v7345
  %v7347 = vpop.f32.mrb[0].mxu0
  %v7348 = vadd.f32 0.0, %v7347
  %v7349 = vpop.f32.mrb[0].mxu0
  %v7350 = vadd.f32 0.0, %v7349
  %v7351 = vpop.f32.mrb[0].mxu0
  %v7352 = vadd.f32 0.0, %v7351
  %7353 = vmatprep.mubr.bf16.mxu0 0
  %7354 = vmatmul.mubr.bf16.gmra.mrb[0].mxu0 %v7291
  %v7355 = vpop.f32.mrb[0].mxu0
  %v7356 = vadd.f32 0.0, %v7355
  %v7357 = vpop.f32.mrb[0].mxu0
  %v7358 = vadd.f32 0.0, %v7357
  %v7359 = vpop.f32.mrb[0].mxu0
  %v7360 = vadd.f32 0.0, %v7359
  %v7361 = vpop.f32.mrb[0].mxu0
  %v7362 = vadd.f32 0.0, %v7361
  %7363 = vmatprep.mubr.bf16.mxu0 0
  %7364 = vmatmul.mubr.bf16.gmra.mrb[0].mxu0 %v7294
  %v7365 = vpop.f32.mrb[0].mxu0
  %v7366 = vadd.f32 0.0, %v7365
  %v7367 = vpop.f32.mrb[0].mxu0
  %v7368 = vadd.f32 0.0, %v7367
  %v7369 = vpop.f32.mrb[0].mxu0
  %v7370 = vadd.f32 0.0, %v7369
  %v7371 = vpop.f32.mrb[0].mxu0
  %v7372 = vadd.f32 0.0, %v7371
  %7373 = vmatprep.mubr.bf16.mxu0 0
  %7374 = vmatmul.mubr.bf16.gmra.mrb[0].mxu0 %v7297
  %v7375 = vpop.f32.mrb[0].mxu0
  %v7376 = vadd.f32 0.0, %v7375
  %v7377 = vpop.f32.mrb[0].mxu0
  %v7378 = vadd.f32 0.0, %v7377
  %v7379 = vpop.f32.mrb[0].mxu0
  %v7380 = vadd.f32 0.0, %v7379
  %v7381 = vpop.f32.mrb[0].mxu0
  %v7382 = vadd.f32 0.0, %v7381
  %7383 = vmatprep.mubr.bf16.mxu0 0
  %7384 = vmatmul.mubr.bf16.gmra.mrb[0].mxu0 %v7300
  %v7385 = vpop.f32.mrb[0].mxu0
  %v7386 = vadd.f32 0.0, %v7385
  %v7387 = vpop.f32.mrb[0].mxu0
  %v7388 = vadd.f32 0.0, %v7387
  %v7389 = vpop.f32.mrb[0].mxu0
  %v7390 = vadd.f32 0.0, %v7389
  %v7391 = vpop.f32.mrb[0].mxu0
  %v7392 = vadd.f32 0.0, %v7391
  %7393 = vmatprep.mubr.bf16.mxu0 0
  %7394 = vmatmul.mubr.bf16.gmra.mrb[0].mxu0 %v7303
  %v7395 = vpop.f32.mrb[0].mxu0
  %v7396 = vadd.f32 0.0, %v7395
  %v7397 = vpop.f32.mrb[0].mxu0
  %v7398 = vadd.f32 0.0, %v7397
  %v7399 = vpop.f32.mrb[0].mxu0
  %v7400 = vadd.f32 0.0, %v7399
  %v7401 = vpop.f32.mrb[0].mxu0
  %v7402 = vadd.f32 0.0, %v7401
  %7403 = vmatprep.mubr.bf16.mxu0 0
  %7404 = vmatmul.mubr.bf16.gmra.mrb[0].mxu0 %v7306
  %v7405 = vpop.f32.mrb[0].mxu0
  %v7406 = vadd.f32 0.0, %v7405
  %v7407 = vpop.f32.mrb[0].mxu0
  %v7408 = vadd.f32 0.0, %v7407
  %v7409 = vpop.f32.mrb[0].mxu0
  %v7410 = vadd.f32 0.0, %v7409
  %v7411 = vpop.f32.mrb[0].mxu0
  %v7412 = vadd.f32 0.0, %v7411
  %7413 = vmatprep.mubr.bf16.mxu0 0
  %7414 = vmatmul.mubr.bf16.gmra.mrb[0].mxu0 %v7309
  %v7415 = vpop.f32.mrb[0].mxu0
  %v7416 = vadd.f32 0.0, %v7415
  %v7417 = vpop.f32.mrb[0].mxu0
  %v7418 = vadd.f32 0.0, %v7417
  %v7419 = vpop.f32.mrb[0].mxu0
  %v7420 = vadd.f32 0.0, %v7419
  %v7421 = vpop.f32.mrb[0].mxu0
  %v7422 = vadd.f32 0.0, %v7421
  %7423 = vdwg.mxu0
  %v7440 = vunpack.c.l.b16 %v6841
  %v7441 = vunpack.c.l.b16 %v6842
  %v7442 = vunpack.c.l.b16 %v6843
  %v7443 = vunpack.c.l.b16 %v6844
  %v7444 = vunpack.c.l.b16 %v6845
  %v7445 = vunpack.c.l.b16 %v6846
  %v7446 = vunpack.c.l.b16 %v6847
  %v7447 = vunpack.c.l.b16 %v6848
  %v7448 = vunpack.c.l.b16 %v6849
  %v7449 = vunpack.c.l.b16 %v6850
  %v7450 = vunpack.c.l.b16 %v6851
  %v7451 = vunpack.c.l.b16 %v6852
  %v7452 = vunpack.c.l.b16 %v6853
  %v7453 = vunpack.c.l.b16 %v6854
  %v7454 = vunpack.c.l.b16 %v6855
  %v7455 = vunpack.c.l.b16 %v6856
  %v7456 = vpack.c.b16 %v7441, %v7440
  %v7457 = vpack.c.b16 %v7443, %v7442
  %v7458 = vpack.c.b16 %v7445, %v7444
  %v7459 = vpack.c.b16 %v7447, %v7446
  %v7460 = vpack.c.b16 %v7449, %v7448
  %v7461 = vpack.c.b16 %v7451, %v7450
  %v7462 = vpack.c.b16 %v7453, %v7452
  %v7463 = vpack.c.b16 %v7455, %v7454
  %v7476 = vunpack.c.l.b16 %v6857
  %v7477 = vunpack.c.h.b16 %v6857
  %v7478 = vunpack.c.l.b16 %v6858
  %v7479 = vunpack.c.h.b16 %v6858
  %v7480 = vunpack.c.l.b16 %v6859
  %v7481 = vunpack.c.h.b16 %v6859
  %v7482 = vunpack.c.l.b16 %v6860
  %v7483 = vunpack.c.h.b16 %v6860
  %v7484 = vunpack.c.l.b16 %v6861
  %v7485 = vunpack.c.h.b16 %v6861
  %v7486 = vunpack.c.l.b16 %v6862
  %v7487 = vunpack.c.h.b16 %v6862
  %v7488 = vunpack.c.l.b16 %v6863
  %v7489 = vunpack.c.h.b16 %v6863
  %v7490 = vunpack.c.l.b16 %v6864
  %v7491 = vunpack.c.h.b16 %v6864
  %v7492 = vunpack.c.l.b16 %v6865
  %v7493 = vunpack.c.h.b16 %v6865
  %v7494 = vunpack.c.l.b16 %v6866
  %v7495 = vunpack.c.h.b16 %v6866
  %v7496 = vunpack.c.l.b16 %v6867
  %v7497 = vunpack.c.h.b16 %v6867
  %v7498 = vunpack.c.l.b16 %v6868
  %v7499 = vunpack.c.h.b16 %v6868
  %v7500 = vpack.c.b16 %v7478, %v7476
  %v7501 = vpack.c.b16 %v7479, %v7477
  %v7502 = vpack.c.b16 %v7482, %v7480
  %v7503 = vpack.c.b16 %v7483, %v7481
  %v7504 = vpack.c.b16 %v7486, %v7484
  %v7505 = vpack.c.b16 %v7487, %v7485
  %v7506 = vpack.c.b16 %v7490, %v7488
  %v7507 = vpack.c.b16 %v7491, %v7489
  %v7508 = vpack.c.b16 %v7494, %v7492
  %v7509 = vpack.c.b16 %v7495, %v7493
  %v7510 = vpack.c.b16 %v7498, %v7496
  %v7511 = vpack.c.b16 %v7499, %v7497
  %v7525 = vsel %vm7286, %v7456, 0
  %v7528 = vsel %vm7286, %v7457, 0
  %v7531 = vsel %vm7286, %v7458, 0
  %v7534 = vsel %vm7286, %v7459, 0
  %v7537 = vsel %vm7286, %v7460, 0
  %v7540 = vsel %vm7286, %v7461, 0
  %v7543 = vsel %vm7286, %v7462, 0
  %v7546 = vsel %vm7286, %v7463, 0
  %7548 = vmatprep.subr.bf16.mxu0 %v7501
  %7549 = vmatpush1.bf16.msra.mxu0 %v7500
  %7550 = vmatprep.subr.bf16.mxu0 %v7503
  %7551 = vmatpush1.bf16.msra.mxu0 %v7502
  %7552 = vmatprep.subr.bf16.mxu0 %v7505
  %7553 = vmatpush1.bf16.msra.mxu0 %v7504
  %7554 = vmatprep.subr.bf16.mxu0 %v7507
  %7555 = vmatpush1.bf16.msra.mxu0 %v7506
  %7556 = vmatprep.subr.bf16.mxu0 %v7509
  %7557 = vmatpush1.bf16.msra.mxu0 %v7508
  %7558 = vmatprep.subr.bf16.mxu0 %v7511
  %7559 = vmatpush1.bf16.msra.mxu0 %v7510
  %7560 = vmatprep.subr.bf16.mxu0 0
  %7561 = vmatpush1.bf16.msra.mxu0 0
  %7562 = vmatprep.subr.bf16.mxu0 0
  %7563 = vmatpush1.bf16.msra.mxu0 0
  %7564 = vmatprep.subr.bf16.mxu0 0
  %7565 = vmatpush1.bf16.msra.mxu0 0
  %7566 = vmatprep.subr.bf16.mxu0 0
  %7567 = vmatpush1.bf16.msra.mxu0 0
  %7568 = vmatprep.subr.bf16.mxu0 0
  %7569 = vmatpush1.bf16.msra.mxu0 0
  %7570 = vmatprep.subr.bf16.mxu0 0
  %7571 = vmatpush1.bf16.msra.mxu0 0
  %7572 = vmatprep.subr.bf16.mxu0 0
  %7573 = vmatpush1.bf16.msra.mxu0 0
  %7574 = vmatprep.subr.bf16.mxu0 0
  %7575 = vmatpush1.bf16.msra.mxu0 0
  %7576 = vmatprep.subr.bf16.mxu0 0
  %7577 = vmatpush1.bf16.msra.mxu0 0
  %7578 = vmatprep.subr.bf16.mxu0 0
  %7579 = vmatpush1.bf16.msra.mxu0 0
  %7580 = vmatprep.mubr.bf16.mxu0 0
  %7581 = vmatmul.mubr.bf16.gmra.mrb[0].mxu0 %v7525
  %v7582 = vpop.f32.mrb[0].mxu0
  %v7583 = vadd.f32 %v7346, %v7582
  %v7584 = vpop.f32.mrb[0].mxu0
  %v7585 = vadd.f32 %v7348, %v7584
  %v7586 = vpop.f32.mrb[0].mxu0
  %v7587 = vadd.f32 %v7350, %v7586
  %v7588 = vpop.f32.mrb[0].mxu0
  %v7589 = vadd.f32 %v7352, %v7588
  %7590 = vmatprep.mubr.bf16.mxu0 0
  %7591 = vmatmul.mubr.bf16.gmra.mrb[0].mxu0 %v7528
  %v7592 = vpop.f32.mrb[0].mxu0
  %v7593 = vadd.f32 %v7356, %v7592
  %v7594 = vpop.f32.mrb[0].mxu0
  %v7595 = vadd.f32 %v7358, %v7594
  %v7596 = vpop.f32.mrb[0].mxu0
  %v7597 = vadd.f32 %v7360, %v7596
  %v7598 = vpop.f32.mrb[0].mxu0
  %v7599 = vadd.f32 %v7362, %v7598
  %7600 = vmatprep.mubr.bf16.mxu0 0
  %7601 = vmatmul.mubr.bf16.gmra.mrb[0].mxu0 %v7531
  %v7602 = vpop.f32.mrb[0].mxu0
  %v7603 = vadd.f32 %v7366, %v7602
  %v7604 = vpop.f32.mrb[0].mxu0
  %v7605 = vadd.f32 %v7368, %v7604
  %v7606 = vpop.f32.mrb[0].mxu0
  %v7607 = vadd.f32 %v7370, %v7606
  %v7608 = vpop.f32.mrb[0].mxu0
  %v7609 = vadd.f32 %v7372, %v7608
  %7610 = vmatprep.mubr.bf16.mxu0 0
  %7611 = vmatmul.mubr.bf16.gmra.mrb[0].mxu0 %v7534
  %v7612 = vpop.f32.mrb[0].mxu0
  %v7613 = vadd.f32 %v7376, %v7612
  %v7614 = vpop.f32.mrb[0].mxu0
  %v7615 = vadd.f32 %v7378, %v7614
  %v7616 = vpop.f32.mrb[0].mxu0
  %v7617 = vadd.f32 %v7380, %v7616
  %v7618 = vpop.f32.mrb[0].mxu0
  %v7619 = vadd.f32 %v7382, %v7618
  %7620 = vmatprep.mubr.bf16.mxu0 0
  %7621 = vmatmul.mubr.bf16.gmra.mrb[0].mxu0 %v7537
  %v7622 = vpop.f32.mrb[0].mxu0
  %v7623 = vadd.f32 %v7386, %v7622
  %v7624 = vpop.f32.mrb[0].mxu0
  %v7625 = vadd.f32 %v7388, %v7624
  %v7626 = vpop.f32.mrb[0].mxu0
  %v7627 = vadd.f32 %v7390, %v7626
  %v7628 = vpop.f32.mrb[0].mxu0
  %v7629 = vadd.f32 %v7392, %v7628
  %7630 = vmatprep.mubr.bf16.mxu0 0
  %7631 = vmatmul.mubr.bf16.gmra.mrb[0].mxu0 %v7540
  %v7632 = vpop.f32.mrb[0].mxu0
  %v7633 = vadd.f32 %v7396, %v7632
  %v7634 = vpop.f32.mrb[0].mxu0
  %v7635 = vadd.f32 %v7398, %v7634
  %v7636 = vpop.f32.mrb[0].mxu0
  %v7637 = vadd.f32 %v7400, %v7636
  %v7638 = vpop.f32.mrb[0].mxu0
  %v7639 = vadd.f32 %v7402, %v7638
  %7640 = vmatprep.mubr.bf16.mxu0 0
  %7641 = vmatmul.mubr.bf16.gmra.mrb[0].mxu0 %v7543
  %v7642 = vpop.f32.mrb[0].mxu0
  %v7643 = vadd.f32 %v7406, %v7642
  %v7644 = vpop.f32.mrb[0].mxu0
  %v7645 = vadd.f32 %v7408, %v7644
  %v7646 = vpop.f32.mrb[0].mxu0
  %v7647 = vadd.f32 %v7410, %v7646
  %v7648 = vpop.f32.mrb[0].mxu0
  %v7649 = vadd.f32 %v7412, %v7648
  %7650 = vmatprep.mubr.bf16.mxu0 0
  %7651 = vmatmul.mubr.bf16.gmra.mrb[0].mxu0 %v7546
  %v7652 = vpop.f32.mrb[0].mxu0
  %v7653 = vadd.f32 %v7416, %v7652
  %v7654 = vpop.f32.mrb[0].mxu0
  %v7655 = vadd.f32 %v7418, %v7654
  %v7656 = vpop.f32.mrb[0].mxu0
  %v7657 = vadd.f32 %v7420, %v7656
  %v7658 = vpop.f32.mrb[0].mxu0
  %v7659 = vadd.f32 %v7422, %v7658
  %7660 = vdwg.mxu0
  %v7661 = vld [vmem:[%s9] sm:$0x3]
  %v7663 = vlaneseq
  %v7664 = vshrl.u32 %v7663, 7
  %v7665 = vsub.s32 0, %v7664
  %v7666 = vrot.slane %v7661, %v7665
  %v7667 = vlaneseq
  %v7668 = vshrl.u32 %v7667, 7
  %v7669 = vsub.s32 1, %v7668
  %v7670 = vrot.slane %v7661, %v7669
  %v7673 = vadd.f32 %v7583, %v7666
  %v7674 = vadd.f32 %v7585, %v7670
  %v7675 = vadd.f32 %v7587, %v7666
  %v7676 = vadd.f32 %v7589, %v7670
  %v7677 = vadd.f32 %v7593, %v7666
  %v7678 = vadd.f32 %v7595, %v7670
  %v7679 = vadd.f32 %v7597, %v7666
  %v7680 = vadd.f32 %v7599, %v7670
  %v7681 = vadd.f32 %v7603, %v7666
  %v7682 = vadd.f32 %v7605, %v7670
  %v7683 = vadd.f32 %v7607, %v7666
  %v7684 = vadd.f32 %v7609, %v7670
  %v7685 = vadd.f32 %v7613, %v7666
  %v7686 = vadd.f32 %v7615, %v7670
  %v7687 = vadd.f32 %v7617, %v7666
  %v7688 = vadd.f32 %v7619, %v7670
  %v7689 = vadd.f32 %v7623, %v7666
  %v7690 = vadd.f32 %v7625, %v7670
  %v7691 = vadd.f32 %v7627, %v7666
  %v7692 = vadd.f32 %v7629, %v7670
  %v7693 = vadd.f32 %v7633, %v7666
  %v7694 = vadd.f32 %v7635, %v7670
  %v7695 = vadd.f32 %v7637, %v7666
  %v7696 = vadd.f32 %v7639, %v7670
  %v7697 = vadd.f32 %v7643, %v7666
  %v7698 = vadd.f32 %v7645, %v7670
  %v7699 = vadd.f32 %v7647, %v7666
  %v7700 = vadd.f32 %v7649, %v7670
  %v7701 = vadd.f32 %v7653, %v7666
  %v7702 = vadd.f32 %v7655, %v7670
  %v7703 = vadd.f32 %v7657, %v7666
  %v7704 = vadd.f32 %v7659, %v7670
  %vm7705 = vcmp.ge.f32.partialorder %v7673, 0.0
  %vm7706 = vcmp.ge.f32.partialorder %v7674, 0.0
  %vm7707 = vcmp.ge.f32.partialorder %v7675, 0.0
  %vm7708 = vcmp.ge.f32.partialorder %v7676, 0.0
  %vm7709 = vcmp.ge.f32.partialorder %v7677, 0.0
  %vm7710 = vcmp.ge.f32.partialorder %v7678, 0.0
  %vm7711 = vcmp.ge.f32.partialorder %v7679, 0.0
  %vm7712 = vcmp.ge.f32.partialorder %v7680, 0.0
  %vm7713 = vcmp.ge.f32.partialorder %v7681, 0.0
  %vm7714 = vcmp.ge.f32.partialorder %v7682, 0.0
  %vm7715 = vcmp.ge.f32.partialorder %v7683, 0.0
  %vm7716 = vcmp.ge.f32.partialorder %v7684, 0.0
  %vm7717 = vcmp.ge.f32.partialorder %v7685, 0.0
  %vm7718 = vcmp.ge.f32.partialorder %v7686, 0.0
  %vm7719 = vcmp.ge.f32.partialorder %v7687, 0.0
  %vm7720 = vcmp.ge.f32.partialorder %v7688, 0.0
  %vm7721 = vcmp.ge.f32.partialorder %v7689, 0.0
  %vm7722 = vcmp.ge.f32.partialorder %v7690, 0.0
  %vm7723 = vcmp.ge.f32.partialorder %v7691, 0.0
  %vm7724 = vcmp.ge.f32.partialorder %v7692, 0.0
  %vm7725 = vcmp.ge.f32.partialorder %v7693, 0.0
  %vm7726 = vcmp.ge.f32.partialorder %v7694, 0.0
  %vm7727 = vcmp.ge.f32.partialorder %v7695, 0.0
  %vm7728 = vcmp.ge.f32.partialorder %v7696, 0.0
  %vm7729 = vcmp.ge.f32.partialorder %v7697, 0.0
  %vm7730 = vcmp.ge.f32.partialorder %v7698, 0.0
  %vm7731 = vcmp.ge.f32.partialorder %v7699, 0.0
  %vm7732 = vcmp.ge.f32.partialorder %v7700, 0.0
  %vm7733 = vcmp.ge.f32.partialorder %v7701, 0.0
  %vm7734 = vcmp.ge.f32.partialorder %v7702, 0.0
  %vm7735 = vcmp.ge.f32.partialorder %v7703, 0.0
  %vm7736 = vcmp.ge.f32.partialorder %v7704, 0.0
  %v7737 = vmul.f32 %v7673, 0.2
  %v7738 = vmul.f32 %v7674, 0.2
  %v7739 = vmul.f32 %v7675, 0.2
  %v7740 = vmul.f32 %v7676, 0.2
  %v7741 = vmul.f32 %v7677, 0.2
  %v7742 = vmul.f32 %v7678, 0.2
  %v7743 = vmul.f32 %v7679, 0.2
  %v7744 = vmul.f32 %v7680, 0.2
  %v7745 = vmul.f32 %v7681, 0.2
  %v7746 = vmul.f32 %v7682, 0.2
  %v7747 = vmul.f32 %v7683, 0.2
  %v7748 = vmul.f32 %v7684, 0.2
  %v7749 = vmul.f32 %v7685, 0.2
  %v7750 = vmul.f32 %v7686, 0.2
  %v7751 = vmul.f32 %v7687, 0.2
  %v7752 = vmul.f32 %v7688, 0.2
  %v7753 = vmul.f32 %v7689, 0.2
  %v7754 = vmul.f32 %v7690, 0.2
  %v7755 = vmul.f32 %v7691, 0.2
  %v7756 = vmul.f32 %v7692, 0.2
  %v7757 = vmul.f32 %v7693, 0.2
  %v7758 = vmul.f32 %v7694, 0.2
  %v7759 = vmul.f32 %v7695, 0.2
  %v7760 = vmul.f32 %v7696, 0.2
  %v7761 = vmul.f32 %v7697, 0.2
  %v7762 = vmul.f32 %v7698, 0.2
  %v7763 = vmul.f32 %v7699, 0.2
  %v7764 = vmul.f32 %v7700, 0.2
  %v7765 = vmul.f32 %v7701, 0.2
  %v7766 = vmul.f32 %v7702, 0.2
  %v7767 = vmul.f32 %v7703, 0.2
  %v7768 = vmul.f32 %v7704, 0.2
  %v7769 = vsel %vm7705, %v7673, %v7737
  %v7770 = vsel %vm7706, %v7674, %v7738
  %v7771 = vsel %vm7707, %v7675, %v7739
  %v7772 = vsel %vm7708, %v7676, %v7740
  %v7773 = vsel %vm7709, %v7677, %v7741
  %v7774 = vsel %vm7710, %v7678, %v7742
  %v7775 = vsel %vm7711, %v7679, %v7743
  %v7776 = vsel %vm7712, %v7680, %v7744
  %v7777 = vsel %vm7713, %v7681, %v7745
  %v7778 = vsel %vm7714, %v7682, %v7746
  %v7779 = vsel %vm7715, %v7683, %v7747
  %v7780 = vsel %vm7716, %v7684, %v7748
  %v7781 = vsel %vm7717, %v7685, %v7749
  %v7782 = vsel %vm7718, %v7686, %v7750
  %v7783 = vsel %vm7719, %v7687, %v7751
  %v7784 = vsel %vm7720, %v7688, %v7752
  %v7785 = vsel %vm7721, %v7689, %v7753
  %v7786 = vsel %vm7722, %v7690, %v7754
  %v7787 = vsel %vm7723, %v7691, %v7755
  %v7788 = vsel %vm7724, %v7692, %v7756
  %v7789 = vsel %vm7725, %v7693, %v7757
  %v7790 = vsel %vm7726, %v7694, %v7758
  %v7791 = vsel %vm7727, %v7695, %v7759
  %v7792 = vsel %vm7728, %v7696, %v7760
  %v7793 = vsel %vm7729, %v7697, %v7761
  %v7794 = vsel %vm7730, %v7698, %v7762
  %v7795 = vsel %vm7731, %v7699, %v7763
  %v7796 = vsel %vm7732, %v7700, %v7764
  %v7797 = vsel %vm7733, %v7701, %v7765
  %v7798 = vsel %vm7734, %v7702, %v7766
  %v7799 = vsel %vm7735, %v7703, %v7767
  %v7800 = vsel %vm7736, %v7704, %v7768
  %v7801 = vpack.c.bf16 %v7771, %v7769
  %v7802 = vpack.c.bf16 %v7772, %v7770
  %v7803 = vpack.c.bf16 %v7775, %v7773
  %v7804 = vpack.c.bf16 %v7776, %v7774
  %v7805 = vpack.c.bf16 %v7779, %v7777
  %v7806 = vpack.c.bf16 %v7780, %v7778
  %v7807 = vpack.c.bf16 %v7783, %v7781
  %v7808 = vpack.c.bf16 %v7784, %v7782
  %v7809 = vpack.c.bf16 %v7787, %v7785
  %v7810 = vpack.c.bf16 %v7788, %v7786
  %v7811 = vpack.c.bf16 %v7791, %v7789
  %v7812 = vpack.c.bf16 %v7792, %v7790
  %v7813 = vpack.c.bf16 %v7795, %v7793
  %v7814 = vpack.c.bf16 %v7796, %v7794
  %v7815 = vpack.c.bf16 %v7799, %v7797
  %v7816 = vpack.c.bf16 %v7800, %v7798
  %v7833 = vunpack.c.l.b16 %v7801
  %v7834 = vunpack.c.l.b16 %v7802
  %v7835 = vunpack.c.h.b16 %v7801
  %v7836 = vunpack.c.h.b16 %v7802
  %v7837 = vunpack.c.l.b16 %v7803
  %v7838 = vunpack.c.l.b16 %v7804
  %v7839 = vunpack.c.h.b16 %v7803
  %v7840 = vunpack.c.h.b16 %v7804
  %v7841 = vunpack.c.l.b16 %v7805
  %v7842 = vunpack.c.l.b16 %v7806
  %v7843 = vunpack.c.h.b16 %v7805
  %v7844 = vunpack.c.h.b16 %v7806
  %v7845 = vunpack.c.l.b16 %v7807
  %v7846 = vunpack.c.l.b16 %v7808
  %v7847 = vunpack.c.h.b16 %v7807
  %v7848 = vunpack.c.h.b16 %v7808
  %v7849 = vunpack.c.l.b16 %v7809
  %v7850 = vunpack.c.l.b16 %v7810
  %v7851 = vunpack.c.h.b16 %v7809
  %v7852 = vunpack.c.h.b16 %v7810
  %v7853 = vunpack.c.l.b16 %v7811
  %v7854 = vunpack.c.l.b16 %v7812
  %v7855 = vunpack.c.h.b16 %v7811
  %v7856 = vunpack.c.h.b16 %v7812
  %v7857 = vunpack.c.l.b16 %v7813
  %v7858 = vunpack.c.l.b16 %v7814
  %v7859 = vunpack.c.h.b16 %v7813
  %v7860 = vunpack.c.h.b16 %v7814
  %v7861 = vunpack.c.l.b16 %v7815
  %v7862 = vunpack.c.l.b16 %v7816
  %v7863 = vunpack.c.h.b16 %v7815
  %v7864 = vunpack.c.h.b16 %v7816
  %v7865 = vpack.c.b16 %v7834, %v7833
  %v7866 = vpack.c.b16 %v7836, %v7835
  %v7867 = vpack.c.b16 %v7838, %v7837
  %v7868 = vpack.c.b16 %v7840, %v7839
  %v7869 = vpack.c.b16 %v7842, %v7841
  %v7870 = vpack.c.b16 %v7844, %v7843
  %v7871 = vpack.c.b16 %v7846, %v7845
  %v7872 = vpack.c.b16 %v7848, %v7847
  %v7873 = vpack.c.b16 %v7850, %v7849
  %v7874 = vpack.c.b16 %v7852, %v7851
  %v7875 = vpack.c.b16 %v7854, %v7853
  %v7876 = vpack.c.b16 %v7856, %v7855
  %v7877 = vpack.c.b16 %v7858, %v7857
  %v7878 = vpack.c.b16 %v7860, %v7859
  %v7879 = vpack.c.b16 %v7862, %v7861
  %v7880 = vpack.c.b16 %v7864, %v7863
  %vm7897 = vcmask 1043456
  %vm7898 = vcmask 261124
  %vm7899 = vmor %vm7898, %vm7897
  %7900 = vst.msk [vmem:[#allocation5] sm:$0xff] %vm7899, %v7865
  %7901 = vst.msk [vmem:[#allocation5 + $0x8] sm:$0xff] %vm7899, %v7866
  %7902 = vst.msk [vmem:[#allocation5 + $0x10] sm:$0xff] %vm7899, %v7867
  %7903 = vst.msk [vmem:[#allocation5 + $0x18] sm:$0xff] %vm7899, %v7868
  %7904 = vst.msk [vmem:[#allocation5 + $0x20] sm:$0xff] %vm7899, %v7869
  %7905 = vst.msk [vmem:[#allocation5 + $0x28] sm:$0xff] %vm7899, %v7870
  %7906 = vst.msk [vmem:[#allocation5 + $0x30] sm:$0xff] %vm7899, %v7871
  %7907 = vst.msk [vmem:[#allocation5 + $0x38] sm:$0xff] %vm7899, %v7872
  %7908 = vst.msk [vmem:[#allocation5 + $0x40] sm:$0xff] %vm7899, %v7873
  %7909 = vst.msk [vmem:[#allocation5 + $0x48] sm:$0xff] %vm7899, %v7874
  %7910 = vst.msk [vmem:[#allocation5 + $0x50] sm:$0xff] %vm7899, %v7875
  %7911 = vst.msk [vmem:[#allocation5 + $0x58] sm:$0xff] %vm7899, %v7876
  %7912 = vst.msk [vmem:[#allocation5 + $0x60] sm:$0xff] %vm7899, %v7877
  %7913 = vst.msk [vmem:[#allocation5 + $0x68] sm:$0xff] %vm7899, %v7878
  %7914 = vst.msk [vmem:[#allocation5 + $0x70] sm:$0xff] %vm7899, %v7879
  %7915 = vst.msk [vmem:[#allocation5 + $0x78] sm:$0xff] %vm7899, %v7880
  %v7916 = vld [vmem:[#allocation5] sm:$0x11]
  %v7917 = vld [vmem:[#allocation5 + $0x8] sm:$0x11]
  %v7918 = vld [vmem:[#allocation5 + $0x10] sm:$0x11]
  %v7919 = vld [vmem:[#allocation5 + $0x18] sm:$0x11]
  %v7920 = vld [vmem:[#allocation5 + $0x20] sm:$0x11]
  %v7921 = vld [vmem:[#allocation5 + $0x28] sm:$0x11]
  %v7922 = vld [vmem:[#allocation5 + $0x30] sm:$0x11]
  %v7923 = vld [vmem:[#allocation5 + $0x38] sm:$0x11]
  %v7924 = vld [vmem:[#allocation5 + $0x40] sm:$0x11]
  %v7925 = vld [vmem:[#allocation5 + $0x48] sm:$0x11]
  %v7926 = vld [vmem:[#allocation5 + $0x50] sm:$0x11]
  %v7927 = vld [vmem:[#allocation5 + $0x58] sm:$0x11]
  %v7928 = vld [vmem:[#allocation5 + $0x60] sm:$0x11]
  %v7929 = vld [vmem:[#allocation5 + $0x68] sm:$0x11]
  %v7930 = vld [vmem:[#allocation5 + $0x70] sm:$0x11]
  %v7931 = vld [vmem:[#allocation5 + $0x78] sm:$0x11]
  %v7932 = vld [vmem:[%s4] sm:$0xff]
  %v7933 = vld [vmem:[%s4 + $0x8] sm:$0xff]
  %v7934 = vld [vmem:[%s4 + $0x10] sm:$0xff]
  %v7935 = vld [vmem:[%s4 + $0x18] sm:$0xff]
  %v7936 = vld [vmem:[%s4 + $0x20] sm:$0xff]
  %v7937 = vld [vmem:[%s4 + $0x28] sm:$0xff]
  %v7938 = vld [vmem:[%s4 + $0x30] sm:$0xff]
  %v7939 = vld [vmem:[%s4 + $0x38] sm:$0xff]
  %v7940 = vld [vmem:[%s4 + $0x40] sm:$0xff]
  %v7941 = vld [vmem:[%s4 + $0x48] sm:$0xff]
  %v7942 = vld [vmem:[%s4 + $0x50] sm:$0xff]
  %v7943 = vld [vmem:[%s4 + $0x58] sm:$0xff]
  %v7944 = vld [vmem:[%s4 + $0x60] sm:$0xff]
  %v7945 = vld [vmem:[%s4 + $0x68] sm:$0xff]
  %v7946 = vld [vmem:[%s4 + $0x70] sm:$0xff]
  %v7947 = vld [vmem:[%s4 + $0x78] sm:$0xff]
  %v7948 = vld [vmem:[%s4 + $0x80] sm:$0xff]
  %v7949 = vld [vmem:[%s4 + $0x88] sm:$0xff]
  %v7950 = vld [vmem:[%s4 + $0x90] sm:$0xff]
  %v7951 = vld [vmem:[%s4 + $0x98] sm:$0xff]
  %v7952 = vld [vmem:[%s4 + $0xa0] sm:$0xff]
  %v7953 = vld [vmem:[%s4 + $0xa8] sm:$0xff]
  %v7954 = vld [vmem:[%s4 + $0xb0] sm:$0xff]
  %v7955 = vld [vmem:[%s4 + $0xb8] sm:$0xff]
  %v7956 = vld [vmem:[%s4 + $0xc0] sm:$0xff]
  %v7957 = vld [vmem:[%s4 + $0xc8] sm:$0xff]
  %v7958 = vld [vmem:[%s4 + $0xd0] sm:$0xff]
  %v7959 = vld [vmem:[%s4 + $0xd8] sm:$0xff]
  %v7960 = vld [vmem:[%s4 + $0xe0] sm:$0xff]
  %v7961 = vld [vmem:[%s4 + $0xe8] sm:$0xff]
  %v7962 = vld [vmem:[%s4 + $0xf0] sm:$0xff]
  %v7963 = vld [vmem:[%s4 + $0xf8] sm:$0xff]
  %v7964 = vld [vmem:[%s4 + $0x100] sm:$0xff]
  %v7965 = vld [vmem:[%s4 + $0x108] sm:$0xff]
  %v7966 = vld [vmem:[%s4 + $0x110] sm:$0xff]
  %v7967 = vld [vmem:[%s4 + $0x118] sm:$0xff]
  %v7968 = vld [vmem:[%s4 + $0x120] sm:$0xff]
  %v7969 = vld [vmem:[%s4 + $0x128] sm:$0xff]
  %v7970 = vld [vmem:[%s4 + $0x130] sm:$0xff]
  %v7971 = vld [vmem:[%s4 + $0x138] sm:$0xff]
  %s7972 = scalar_lea.vmem %s4, 320
  %v7973 = vld [vmem:[%s7972] sm:$0xff]
  %v7974 = vld [vmem:[%s7972 + $0x8] sm:$0xff]
  %v7975 = vld [vmem:[%s7972 + $0x10] sm:$0xff]
  %v7976 = vld [vmem:[%s7972 + $0x18] sm:$0xff]
  %v7977 = vld [vmem:[%s7972 + $0x20] sm:$0xff]
  %v7978 = vld [vmem:[%s7972 + $0x28] sm:$0xff]
  %v7979 = vld [vmem:[%s7972 + $0x30] sm:$0xff]
  %v7980 = vld [vmem:[%s7972 + $0x38] sm:$0xff]
  %v7981 = vld [vmem:[%s7972 + $0x40] sm:$0xff]
  %v7982 = vld [vmem:[%s7972 + $0x48] sm:$0xff]
  %v7983 = vld [vmem:[%s7972 + $0x50] sm:$0xff]
  %v7984 = vld [vmem:[%s7972 + $0x58] sm:$0xff]
  %v7985 = vld [vmem:[%s7972 + $0x60] sm:$0xff]
  %v7986 = vld [vmem:[%s7972 + $0x68] sm:$0xff]
  %v7987 = vld [vmem:[%s7972 + $0x70] sm:$0xff]
  %v7988 = vld [vmem:[%s7972 + $0x78] sm:$0xff]
  %v7989 = vld [vmem:[%s7972 + $0x80] sm:$0xff]
  %v7990 = vld [vmem:[%s7972 + $0x88] sm:$0xff]
  %v7991 = vld [vmem:[%s7972 + $0x90] sm:$0xff]
  %v7992 = vld [vmem:[%s7972 + $0x98] sm:$0xff]
  %v7993 = vld [vmem:[%s7972 + $0xa0] sm:$0xff]
  %v7994 = vld [vmem:[%s7972 + $0xa8] sm:$0xff]
  %v7995 = vld [vmem:[%s7972 + $0xb0] sm:$0xff]
  %v7996 = vld [vmem:[%s7972 + $0xb8] sm:$0xff]
  %v7997 = vld [vmem:[%s7972 + $0xc0] sm:$0xff]
  %v7998 = vld [vmem:[%s7972 + $0xc8] sm:$0xff]
  %v7999 = vld [vmem:[%s7972 + $0xd0] sm:$0xff]
  %v8000 = vld [vmem:[%s7972 + $0xd8] sm:$0xff]
  %v8001 = vld [vmem:[%s7972 + $0xe0] sm:$0xff]
  %v8002 = vld [vmem:[%s7972 + $0xe8] sm:$0xff]
  %v8003 = vld [vmem:[%s7972 + $0xf0] sm:$0xff]
  %v8004 = vld [vmem:[%s7972 + $0xf8] sm:$0xff]
  %v8005 = vld [vmem:[%s7972 + $0x100] sm:$0xff]
  %v8006 = vld [vmem:[%s7972 + $0x108] sm:$0xff]
  %v8007 = vld [vmem:[%s7972 + $0x110] sm:$0xff]
  %v8008 = vld [vmem:[%s7972 + $0x118] sm:$0xff]
  %v8009 = vld [vmem:[%s7972 + $0x120] sm:$0xff]
  %v8010 = vld [vmem:[%s7972 + $0x128] sm:$0xff]
  %v8011 = vld [vmem:[%s7972 + $0x130] sm:$0xff]
  %v8012 = vld [vmem:[%s7972 + $0x138] sm:$0xff]
  %v8029 = vunpack.c.l.b16 %v7916
  %v8030 = vunpack.c.h.b16 %v7916
  %v8031 = vunpack.c.l.b16 %v7917
  %v8032 = vunpack.c.h.b16 %v7917
  %v8033 = vunpack.c.l.b16 %v7918
  %v8034 = vunpack.c.h.b16 %v7918
  %v8035 = vunpack.c.l.b16 %v7919
  %v8036 = vunpack.c.h.b16 %v7919
  %v8037 = vunpack.c.l.b16 %v7920
  %v8038 = vunpack.c.h.b16 %v7920
  %v8039 = vunpack.c.l.b16 %v7921
  %v8040 = vunpack.c.h.b16 %v7921
  %v8041 = vunpack.c.l.b16 %v7922
  %v8042 = vunpack.c.h.b16 %v7922
  %v8043 = vunpack.c.l.b16 %v7923
  %v8044 = vunpack.c.h.b16 %v7923
  %v8045 = vunpack.c.l.b16 %v7924
  %v8046 = vunpack.c.h.b16 %v7924
  %v8047 = vunpack.c.l.b16 %v7925
  %v8048 = vunpack.c.h.b16 %v7925
  %v8049 = vunpack.c.l.b16 %v7926
  %v8050 = vunpack.c.h.b16 %v7926
  %v8051 = vunpack.c.l.b16 %v7927
  %v8052 = vunpack.c.h.b16 %v7927
  %v8053 = vunpack.c.l.b16 %v7928
  %v8054 = vunpack.c.h.b16 %v7928
  %v8055 = vunpack.c.l.b16 %v7929
  %v8056 = vunpack.c.h.b16 %v7929
  %v8057 = vunpack.c.l.b16 %v7930
  %v8058 = vunpack.c.h.b16 %v7930
  %v8059 = vunpack.c.l.b16 %v7931
  %v8060 = vunpack.c.h.b16 %v7931
  %v8061 = vpack.c.b16 %v8029, %v8029
  %v8062 = vpack.c.b16 %v8030, %v8030
  %v8063 = vpack.c.b16 %v8031, %v8031
  %v8064 = vpack.c.b16 %v8032, %v8032
  %v8065 = vpack.c.b16 %v8033, %v8033
  %v8066 = vpack.c.b16 %v8034, %v8034
  %v8067 = vpack.c.b16 %v8035, %v8035
  %v8068 = vpack.c.b16 %v8036, %v8036
  %v8069 = vpack.c.b16 %v8037, %v8037
  %v8070 = vpack.c.b16 %v8038, %v8038
  %v8071 = vpack.c.b16 %v8039, %v8039
  %v8072 = vpack.c.b16 %v8040, %v8040
  %v8073 = vpack.c.b16 %v8041, %v8041
  %v8074 = vpack.c.b16 %v8042, %v8042
  %v8075 = vpack.c.b16 %v8043, %v8043
  %v8076 = vpack.c.b16 %v8044, %v8044
  %v8077 = vpack.c.b16 %v8045, %v8045
  %v8078 = vpack.c.b16 %v8046, %v8046
  %v8079 = vpack.c.b16 %v8047, %v8047
  %v8080 = vpack.c.b16 %v8048, %v8048
  %v8081 = vpack.c.b16 %v8049, %v8049
  %v8082 = vpack.c.b16 %v8050, %v8050
  %v8083 = vpack.c.b16 %v8051, %v8051
  %v8084 = vpack.c.b16 %v8052, %v8052
  %v8085 = vpack.c.b16 %v8053, %v8053
  %v8086 = vpack.c.b16 %v8054, %v8054
  %v8087 = vpack.c.b16 %v8055, %v8055
  %v8088 = vpack.c.b16 %v8056, %v8056
  %v8089 = vpack.c.b16 %v8057, %v8057
  %v8090 = vpack.c.b16 %v8058, %v8058
  %v8091 = vpack.c.b16 %v8059, %v8059
  %v8092 = vpack.c.b16 %v8060, %v8060
  %v8093 = vunpack.c.l.b16 %v8061
  %v8094 = vunpack.c.l.b16 %v8062
  %v8095 = vunpack.c.l.b16 %v8063
  %v8096 = vunpack.c.l.b16 %v8064
  %v8097 = vunpack.c.l.b16 %v8065
  %v8098 = vunpack.c.l.b16 %v8066
  %v8099 = vunpack.c.l.b16 %v8067
  %v8100 = vunpack.c.l.b16 %v8068
  %v8101 = vunpack.c.l.b16 %v8069
  %v8102 = vunpack.c.l.b16 %v8070
  %v8103 = vunpack.c.l.b16 %v8071
  %v8104 = vunpack.c.l.b16 %v8072
  %v8105 = vunpack.c.l.b16 %v8073
  %v8106 = vunpack.c.l.b16 %v8074
  %v8107 = vunpack.c.l.b16 %v8075
  %v8108 = vunpack.c.l.b16 %v8076
  %v8109 = vunpack.c.l.b16 %v8077
  %v8110 = vunpack.c.l.b16 %v8078
  %v8111 = vunpack.c.l.b16 %v8079
  %v8112 = vunpack.c.l.b16 %v8080
  %v8113 = vunpack.c.l.b16 %v8081
  %v8114 = vunpack.c.l.b16 %v8082
  %v8115 = vunpack.c.l.b16 %v8083
  %v8116 = vunpack.c.l.b16 %v8084
  %v8117 = vunpack.c.l.b16 %v8085
  %v8118 = vunpack.c.l.b16 %v8086
  %v8119 = vunpack.c.l.b16 %v8087
  %v8120 = vunpack.c.l.b16 %v8088
  %v8121 = vunpack.c.l.b16 %v8089
  %v8122 = vunpack.c.l.b16 %v8090
  %v8123 = vunpack.c.l.b16 %v8091
  %v8124 = vunpack.c.l.b16 %v8092
  %v8125 = vrot.slane %v8093, 1
  %vm8126 = vcmask 1041409
  %v8127 = vsel %vm8126, %v8095, %v8125
  %v8128 = vrot.slane %v8097, 7
  %vm8129 = vcmask 1042434
  %v8130 = vsel %vm8129, %v8128, %v8127
  %v8131 = vrot.slane %v8099, 6
  %vm8132 = vcmask 1043459
  %v8133 = vsel %vm8132, %v8131, %v8130
  %v8134 = vrot.slane %v8101, 5
  %vm8135 = vcmask 1044484
  %v8136 = vsel %vm8135, %v8134, %v8133
  %v8137 = vrot.slane %v8103, 4
  %vm8138 = vcmask 1045509
  %v8139 = vsel %vm8138, %v8137, %v8136
  %v8140 = vrot.slane %v8105, 3
  %vm8141 = vcmask 1046534
  %v8142 = vsel %vm8141, %v8140, %v8139
  %v8143 = vrot.slane %v8107, 2
  %vm8144 = vcmask 1047559
  %v8145 = vsel %vm8144, %v8143, %v8142
  %v8146 = vrot.slane %v8094, 1
  %v8147 = vsel %vm8126, %v8096, %v8146
  %v8148 = vrot.slane %v8098, 7
  %v8149 = vsel %vm8129, %v8148, %v8147
  %v8150 = vrot.slane %v8100, 6
  %v8151 = vsel %vm8132, %v8150, %v8149
  %v8152 = vrot.slane %v8102, 5
  %v8153 = vsel %vm8135, %v8152, %v8151
  %v8154 = vrot.slane %v8104, 4
  %v8155 = vsel %vm8138, %v8154, %v8153
  %v8156 = vrot.slane %v8106, 3
  %v8157 = vsel %vm8141, %v8156, %v8155
  %v8158 = vrot.slane %v8108, 2
  %v8159 = vsel %vm8144, %v8158, %v8157
  %v8160 = vrot.slane %v8109, 1
  %v8161 = vsel %vm8126, %v8111, %v8160
  %v8162 = vrot.slane %v8113, 7
  %v8163 = vsel %vm8129, %v8162, %v8161
  %v8164 = vrot.slane %v8115, 6
  %v8165 = vsel %vm8132, %v8164, %v8163
  %v8166 = vrot.slane %v8117, 5
  %v8167 = vsel %vm8135, %v8166, %v8165
  %v8168 = vrot.slane %v8119, 4
  %v8169 = vsel %vm8138, %v8168, %v8167
  %v8170 = vrot.slane %v8121, 3
  %v8171 = vsel %vm8141, %v8170, %v8169
  %v8172 = vrot.slane %v8123, 2
  %v8173 = vsel %vm8144, %v8172, %v8171
  %v8174 = vrot.slane %v8110, 1
  %v8175 = vsel %vm8126, %v8112, %v8174
  %v8176 = vrot.slane %v8114, 7
  %v8177 = vsel %vm8129, %v8176, %v8175
  %v8178 = vrot.slane %v8116, 6
  %v8179 = vsel %vm8132, %v8178, %v8177
  %v8180 = vrot.slane %v8118, 5
  %v8181 = vsel %vm8135, %v8180, %v8179
  %v8182 = vrot.slane %v8120, 4
  %v8183 = vsel %vm8138, %v8182, %v8181
  %v8184 = vrot.slane %v8122, 3
  %v8185 = vsel %vm8141, %v8184, %v8183
  %v8186 = vrot.slane %v8124, 2
  %v8187 = vsel %vm8144, %v8186, %v8185
  %v8188 = vpack.c.b16 %v8173, %v8145
  %v8189 = vpack.c.b16 %v8187, %v8159
  %v8231 = vunpack.c.l.b16 %v7973
  %v8232 = vunpack.c.h.b16 %v7973
  %v8233 = vunpack.c.l.b16 %v7974
  %v8234 = vunpack.c.h.b16 %v7974
  %v8235 = vunpack.c.l.b16 %v7975
  %v8236 = vunpack.c.h.b16 %v7975
  %v8237 = vunpack.c.l.b16 %v7976
  %v8238 = vunpack.c.h.b16 %v7976
  %v8239 = vunpack.c.l.b16 %v7977
  %v8240 = vunpack.c.h.b16 %v7977
  %v8241 = vunpack.c.l.b16 %v7978
  %v8242 = vunpack.c.h.b16 %v7978
  %v8243 = vunpack.c.l.b16 %v7979
  %v8244 = vunpack.c.h.b16 %v7979
  %v8245 = vunpack.c.l.b16 %v7980
  %v8246 = vunpack.c.h.b16 %v7980
  %v8247 = vunpack.c.l.b16 %v7981
  %v8248 = vunpack.c.h.b16 %v7981
  %v8249 = vunpack.c.l.b16 %v7982
  %v8250 = vunpack.c.h.b16 %v7982
  %v8251 = vunpack.c.l.b16 %v7983
  %v8252 = vunpack.c.h.b16 %v7983
  %v8253 = vunpack.c.l.b16 %v7984
  %v8254 = vunpack.c.h.b16 %v7984
  %v8255 = vunpack.c.l.b16 %v7985
  %v8256 = vunpack.c.h.b16 %v7985
  %v8257 = vunpack.c.l.b16 %v7986
  %v8258 = vunpack.c.h.b16 %v7986
  %v8259 = vunpack.c.l.b16 %v7987
  %v8260 = vunpack.c.h.b16 %v7987
  %v8261 = vunpack.c.l.b16 %v7988
  %v8262 = vunpack.c.h.b16 %v7988
  %v8263 = vunpack.c.l.b16 %v7989
  %v8264 = vunpack.c.h.b16 %v7989
  %v8265 = vunpack.c.l.b16 %v7990
  %v8266 = vunpack.c.h.b16 %v7990
  %v8267 = vunpack.c.l.b16 %v7991
  %v8268 = vunpack.c.h.b16 %v7991
  %v8269 = vunpack.c.l.b16 %v7992
  %v8270 = vunpack.c.h.b16 %v7992
  %v8271 = vunpack.c.l.b16 %v7993
  %v8272 = vunpack.c.h.b16 %v7993
  %v8273 = vunpack.c.l.b16 %v7994
  %v8274 = vunpack.c.h.b16 %v7994
  %v8275 = vunpack.c.l.b16 %v7995
  %v8276 = vunpack.c.h.b16 %v7995
  %v8277 = vunpack.c.l.b16 %v7996
  %v8278 = vunpack.c.h.b16 %v7996
  %v8279 = vunpack.c.l.b16 %v7997
  %v8280 = vunpack.c.h.b16 %v7997
  %v8281 = vunpack.c.l.b16 %v7998
  %v8282 = vunpack.c.h.b16 %v7998
  %v8283 = vunpack.c.l.b16 %v7999
  %v8284 = vunpack.c.h.b16 %v7999
  %v8285 = vunpack.c.l.b16 %v8000
  %v8286 = vunpack.c.h.b16 %v8000
  %v8287 = vunpack.c.l.b16 %v8001
  %v8288 = vunpack.c.h.b16 %v8001
  %v8289 = vunpack.c.l.b16 %v8002
  %v8290 = vunpack.c.h.b16 %v8002
  %v8291 = vunpack.c.l.b16 %v8003
  %v8292 = vunpack.c.h.b16 %v8003
  %v8293 = vunpack.c.l.b16 %v8004
  %v8294 = vunpack.c.h.b16 %v8004
  %v8295 = vunpack.c.l.b16 %v8005
  %v8296 = vunpack.c.h.b16 %v8005
  %v8297 = vunpack.c.l.b16 %v8006
  %v8298 = vunpack.c.h.b16 %v8006
  %v8299 = vunpack.c.l.b16 %v8007
  %v8300 = vunpack.c.h.b16 %v8007
  %v8301 = vunpack.c.l.b16 %v8008
  %v8302 = vunpack.c.h.b16 %v8008
  %v8303 = vunpack.c.l.b16 %v8009
  %v8304 = vunpack.c.h.b16 %v8009
  %v8305 = vunpack.c.l.b16 %v8010
  %v8306 = vunpack.c.h.b16 %v8010
  %v8307 = vunpack.c.l.b16 %v8011
  %v8308 = vunpack.c.h.b16 %v8011
  %v8309 = vunpack.c.l.b16 %v8012
  %v8310 = vunpack.c.h.b16 %v8012
  %v8311 = vpack.c.b16 %v8235, %v8231
  %v8312 = vpack.c.b16 %v8236, %v8232
  %v8313 = vpack.c.b16 %v8237, %v8233
  %v8314 = vpack.c.b16 %v8238, %v8234
  %v8315 = vpack.c.b16 %v8243, %v8239
  %v8316 = vpack.c.b16 %v8244, %v8240
  %v8317 = vpack.c.b16 %v8245, %v8241
  %v8318 = vpack.c.b16 %v8246, %v8242
  %v8319 = vpack.c.b16 %v8251, %v8247
  %v8320 = vpack.c.b16 %v8252, %v8248
  %v8321 = vpack.c.b16 %v8253, %v8249
  %v8322 = vpack.c.b16 %v8254, %v8250
  %v8323 = vpack.c.b16 %v8259, %v8255
  %v8324 = vpack.c.b16 %v8260, %v8256
  %v8325 = vpack.c.b16 %v8261, %v8257
  %v8326 = vpack.c.b16 %v8262, %v8258
  %v8327 = vpack.c.b16 %v8267, %v8263
  %v8328 = vpack.c.b16 %v8268, %v8264
  %v8329 = vpack.c.b16 %v8269, %v8265
  %v8330 = vpack.c.b16 %v8270, %v8266
  %v8331 = vpack.c.b16 %v8275, %v8271
  %v8332 = vpack.c.b16 %v8276, %v8272
  %v8333 = vpack.c.b16 %v8277, %v8273
  %v8334 = vpack.c.b16 %v8278, %v8274
  %v8335 = vpack.c.b16 %v8283, %v8279
  %v8336 = vpack.c.b16 %v8284, %v8280
  %v8337 = vpack.c.b16 %v8285, %v8281
  %v8338 = vpack.c.b16 %v8286, %v8282
  %v8339 = vpack.c.b16 %v8291, %v8287
  %v8340 = vpack.c.b16 %v8292, %v8288
  %v8341 = vpack.c.b16 %v8293, %v8289
  %v8342 = vpack.c.b16 %v8294, %v8290
  %v8343 = vpack.c.b16 %v8299, %v8295
  %v8344 = vpack.c.b16 %v8300, %v8296
  %v8345 = vpack.c.b16 %v8301, %v8297
  %v8346 = vpack.c.b16 %v8302, %v8298
  %v8347 = vpack.c.b16 %v8307, %v8303
  %v8348 = vpack.c.b16 %v8308, %v8304
  %v8349 = vpack.c.b16 %v8309, %v8305
  %v8350 = vpack.c.b16 %v8310, %v8306
  %vm8391 = vcmask 261120
  %v8393 = vsel %vm8391, %v8189, 0
  %8395 = vmatprep.subr.bf16.mxu0 %v8312
  %8396 = vmatpush1.bf16.msra.mxu0 %v8311
  %8397 = vmatprep.subr.bf16.mxu0 %v8316
  %8398 = vmatpush1.bf16.msra.mxu0 %v8315
  %8399 = vmatprep.subr.bf16.mxu0 %v8320
  %8400 = vmatpush1.bf16.msra.mxu0 %v8319
  %8401 = vmatprep.subr.bf16.mxu0 %v8324
  %8402 = vmatpush1.bf16.msra.mxu0 %v8323
  %8403 = vmatprep.subr.bf16.mxu0 %v8328
  %8404 = vmatpush1.bf16.msra.mxu0 %v8327
  %8405 = vmatprep.subr.bf16.mxu0 %v8332
  %8406 = vmatpush1.bf16.msra.mxu0 %v8331
  %8407 = vmatprep.subr.bf16.mxu0 %v8336
  %8408 = vmatpush1.bf16.msra.mxu0 %v8335
  %8409 = vmatprep.subr.bf16.mxu0 %v8340
  %8410 = vmatpush1.bf16.msra.mxu0 %v8339
  %8411 = vmatprep.subr.bf16.mxu0 %v8344
  %8412 = vmatpush1.bf16.msra.mxu0 %v8343
  %8413 = vmatprep.subr.bf16.mxu0 %v8348
  %8414 = vmatpush1.bf16.msra.mxu0 %v8347
  %8415 = vmatprep.subr.bf16.mxu0 0
  %8416 = vmatpush1.bf16.msra.mxu0 0
  %8417 = vmatprep.subr.bf16.mxu0 0
  %8418 = vmatpush1.bf16.msra.mxu0 0
  %8419 = vmatprep.subr.bf16.mxu0 0
  %8420 = vmatpush1.bf16.msra.mxu0 0
  %8421 = vmatprep.subr.bf16.mxu0 0
  %8422 = vmatpush1.bf16.msra.mxu0 0
  %8423 = vmatprep.subr.bf16.mxu0 0
  %8424 = vmatpush1.bf16.msra.mxu0 0
  %8425 = vmatprep.subr.bf16.mxu0 0
  %8426 = vmatpush1.bf16.msra.mxu0 0
  %8427 = vmatprep.mubr.bf16.mxu0 %v8393
  %8428 = vmatmul.mubr.bf16.gmra.mrb[0].mxu0 %v8188
  %v8429 = vpop.f32.mrb[0].mxu0
  %v8430 = vadd.f32 0.0, %v8429
  %v8431 = vpop.f32.mrb[0].mxu0
  %v8432 = vadd.f32 0.0, %v8431
  %v8433 = vpop.f32.mrb[0].mxu0
  %v8434 = vadd.f32 0.0, %v8433
  %v8435 = vpop.f32.mrb[0].mxu0
  %v8436 = vadd.f32 0.0, %v8435
  %8437 = vdwg.mxu0
  %8438 = vmatprep.subr.bf16.mxu0 %v8314
  %8439 = vmatpush1.bf16.msra.mxu0 %v8313
  %8440 = vmatprep.subr.bf16.mxu0 %v8318
  %8441 = vmatpush1.bf16.msra.mxu0 %v8317
  %8442 = vmatprep.subr.bf16.mxu0 %v8322
  %8443 = vmatpush1.bf16.msra.mxu0 %v8321
  %8444 = vmatprep.subr.bf16.mxu0 %v8326
  %8445 = vmatpush1.bf16.msra.mxu0 %v8325
  %8446 = vmatprep.subr.bf16.mxu0 %v8330
  %8447 = vmatpush1.bf16.msra.mxu0 %v8329
  %8448 = vmatprep.subr.bf16.mxu0 %v8334
  %8449 = vmatpush1.bf16.msra.mxu0 %v8333
  %8450 = vmatprep.subr.bf16.mxu0 %v8338
  %8451 = vmatpush1.bf16.msra.mxu0 %v8337
  %8452 = vmatprep.subr.bf16.mxu0 %v8342
  %8453 = vmatpush1.bf16.msra.mxu0 %v8341
  %8454 = vmatprep.subr.bf16.mxu0 %v8346
  %8455 = vmatpush1.bf16.msra.mxu0 %v8345
  %8456 = vmatprep.subr.bf16.mxu0 %v8350
  %8457 = vmatpush1.bf16.msra.mxu0 %v8349
  %8458 = vmatprep.subr.bf16.mxu0 0
  %8459 = vmatpush1.bf16.msra.mxu0 0
  %8460 = vmatprep.subr.bf16.mxu0 0
  %8461 = vmatpush1.bf16.msra.mxu0 0
  %8462 = vmatprep.subr.bf16.mxu0 0
  %8463 = vmatpush1.bf16.msra.mxu0 0
  %8464 = vmatprep.subr.bf16.mxu0 0
  %8465 = vmatpush1.bf16.msra.mxu0 0
  %8466 = vmatprep.subr.bf16.mxu0 0
  %8467 = vmatpush1.bf16.msra.mxu0 0
  %8468 = vmatprep.subr.bf16.mxu0 0
  %8469 = vmatpush1.bf16.msra.mxu0 0
  %8470 = vmatprep.mubr.bf16.mxu0 %v8393
  %8471 = vmatmul.mubr.bf16.gmra.mrb[0].mxu0 %v8188
  %v8472 = vpop.f32.mrb[0].mxu0
  %v8473 = vadd.f32 0.0, %v8472
  %v8474 = vpop.f32.mrb[0].mxu0
  %v8475 = vadd.f32 0.0, %v8474
  %v8476 = vpop.f32.mrb[0].mxu0
  %v8477 = vadd.f32 0.0, %v8476
  %v8478 = vpop.f32.mrb[0].mxu0
  %v8479 = vadd.f32 0.0, %v8478
  %8480 = vdwg.mxu0
  %v8481 = vrot.slane %v8095, 7
  %v8482 = vsel %vm8126, %v8481, %v8093
  %v8483 = vrot.slane %v8097, 6
  %v8484 = vsel %vm8129, %v8483, %v8482
  %v8485 = vrot.slane %v8099, 5
  %v8486 = vsel %vm8132, %v8485, %v8484
  %v8487 = vrot.slane %v8101, 4
  %v8488 = vsel %vm8135, %v8487, %v8486
  %v8489 = vrot.slane %v8103, 3
  %v8490 = vsel %vm8138, %v8489, %v8488
  %v8491 = vrot.slane %v8105, 2
  %v8492 = vsel %vm8141, %v8491, %v8490
  %v8493 = vrot.slane %v8107, 1
  %v8494 = vsel %vm8144, %v8493, %v8492
  %v8495 = vrot.slane %v8096, 7
  %v8496 = vsel %vm8126, %v8495, %v8094
  %v8497 = vrot.slane %v8098, 6
  %v8498 = vsel %vm8129, %v8497, %v8496
  %v8499 = vrot.slane %v8100, 5
  %v8500 = vsel %vm8132, %v8499, %v8498
  %v8501 = vrot.slane %v8102, 4
  %v8502 = vsel %vm8135, %v8501, %v8500
  %v8503 = vrot.slane %v8104, 3
  %v8504 = vsel %vm8138, %v8503, %v8502
  %v8505 = vrot.slane %v8106, 2
  %v8506 = vsel %vm8141, %v8505, %v8504
  %v8507 = vrot.slane %v8108, 1
  %v8508 = vsel %vm8144, %v8507, %v8506
  %v8509 = vrot.slane %v8111, 7
  %v8510 = vsel %vm8126, %v8509, %v8109
  %v8511 = vrot.slane %v8113, 6
  %v8512 = vsel %vm8129, %v8511, %v8510
  %v8513 = vrot.slane %v8115, 5
  %v8514 = vsel %vm8132, %v8513, %v8512
  %v8515 = vrot.slane %v8117, 4
  %v8516 = vsel %vm8135, %v8515, %v8514
  %v8517 = vrot.slane %v8119, 3
  %v8518 = vsel %vm8138, %v8517, %v8516
  %v8519 = vrot.slane %v8121, 2
  %v8520 = vsel %vm8141, %v8519, %v8518
  %v8521 = vrot.slane %v8123, 1
  %v8522 = vsel %vm8144, %v8521, %v8520
  %v8523 = vrot.slane %v8112, 7
  %v8524 = vsel %vm8126, %v8523, %v8110
  %v8525 = vrot.slane %v8114, 6
  %v8526 = vsel %vm8129, %v8525, %v8524
  %v8527 = vrot.slane %v8116, 5
  %v8528 = vsel %vm8132, %v8527, %v8526
  %v8529 = vrot.slane %v8118, 4
  %v8530 = vsel %vm8135, %v8529, %v8528
  %v8531 = vrot.slane %v8120, 3
  %v8532 = vsel %vm8138, %v8531, %v8530
  %v8533 = vrot.slane %v8122, 2
  %v8534 = vsel %vm8141, %v8533, %v8532
  %v8535 = vrot.slane %v8124, 1
  %v8536 = vsel %vm8144, %v8535, %v8534
  %v8537 = vpack.c.b16 %v8522, %v8494
  %v8538 = vpack.c.b16 %v8536, %v8508
  %v8580 = vunpack.c.l.b16 %v7932
  %v8581 = vunpack.c.h.b16 %v7932
  %v8582 = vunpack.c.l.b16 %v7933
  %v8583 = vunpack.c.h.b16 %v7933
  %v8584 = vunpack.c.l.b16 %v7934
  %v8585 = vunpack.c.h.b16 %v7934
  %v8586 = vunpack.c.l.b16 %v7935
  %v8587 = vunpack.c.h.b16 %v7935
  %v8588 = vunpack.c.l.b16 %v7936
  %v8589 = vunpack.c.h.b16 %v7936
  %v8590 = vunpack.c.l.b16 %v7937
  %v8591 = vunpack.c.h.b16 %v7937
  %v8592 = vunpack.c.l.b16 %v7938
  %v8593 = vunpack.c.h.b16 %v7938
  %v8594 = vunpack.c.l.b16 %v7939
  %v8595 = vunpack.c.h.b16 %v7939
  %v8596 = vunpack.c.l.b16 %v7940
  %v8597 = vunpack.c.h.b16 %v7940
  %v8598 = vunpack.c.l.b16 %v7941
  %v8599 = vunpack.c.h.b16 %v7941
  %v8600 = vunpack.c.l.b16 %v7942
  %v8601 = vunpack.c.h.b16 %v7942
  %v8602 = vunpack.c.l.b16 %v7943
  %v8603 = vunpack.c.h.b16 %v7943
  %v8604 = vunpack.c.l.b16 %v7944
  %v8605 = vunpack.c.h.b16 %v7944
  %v8606 = vunpack.c.l.b16 %v7945
  %v8607 = vunpack.c.h.b16 %v7945
  %v8608 = vunpack.c.l.b16 %v7946
  %v8609 = vunpack.c.h.b16 %v7946
  %v8610 = vunpack.c.l.b16 %v7947
  %v8611 = vunpack.c.h.b16 %v7947
  %v8612 = vunpack.c.l.b16 %v7948
  %v8613 = vunpack.c.h.b16 %v7948
  %v8614 = vunpack.c.l.b16 %v7949
  %v8615 = vunpack.c.h.b16 %v7949
  %v8616 = vunpack.c.l.b16 %v7950
  %v8617 = vunpack.c.h.b16 %v7950
  %v8618 = vunpack.c.l.b16 %v7951
  %v8619 = vunpack.c.h.b16 %v7951
  %v8620 = vunpack.c.l.b16 %v7952
  %v8621 = vunpack.c.h.b16 %v7952
  %v8622 = vunpack.c.l.b16 %v7953
  %v8623 = vunpack.c.h.b16 %v7953
  %v8624 = vunpack.c.l.b16 %v7954
  %v8625 = vunpack.c.h.b16 %v7954
  %v8626 = vunpack.c.l.b16 %v7955
  %v8627 = vunpack.c.h.b16 %v7955
  %v8628 = vunpack.c.l.b16 %v7956
  %v8629 = vunpack.c.h.b16 %v7956
  %v8630 = vunpack.c.l.b16 %v7957
  %v8631 = vunpack.c.h.b16 %v7957
  %v8632 = vunpack.c.l.b16 %v7958
  %v8633 = vunpack.c.h.b16 %v7958
  %v8634 = vunpack.c.l.b16 %v7959
  %v8635 = vunpack.c.h.b16 %v7959
  %v8636 = vunpack.c.l.b16 %v7960
  %v8637 = vunpack.c.h.b16 %v7960
  %v8638 = vunpack.c.l.b16 %v7961
  %v8639 = vunpack.c.h.b16 %v7961
  %v8640 = vunpack.c.l.b16 %v7962
  %v8641 = vunpack.c.h.b16 %v7962
  %v8642 = vunpack.c.l.b16 %v7963
  %v8643 = vunpack.c.h.b16 %v7963
  %v8644 = vunpack.c.l.b16 %v7964
  %v8645 = vunpack.c.h.b16 %v7964
  %v8646 = vunpack.c.l.b16 %v7965
  %v8647 = vunpack.c.h.b16 %v7965
  %v8648 = vunpack.c.l.b16 %v7966
  %v8649 = vunpack.c.h.b16 %v7966
  %v8650 = vunpack.c.l.b16 %v7967
  %v8651 = vunpack.c.h.b16 %v7967
  %v8652 = vunpack.c.l.b16 %v7968
  %v8653 = vunpack.c.h.b16 %v7968
  %v8654 = vunpack.c.l.b16 %v7969
  %v8655 = vunpack.c.h.b16 %v7969
  %v8656 = vunpack.c.l.b16 %v7970
  %v8657 = vunpack.c.h.b16 %v7970
  %v8658 = vunpack.c.l.b16 %v7971
  %v8659 = vunpack.c.h.b16 %v7971
  %v8660 = vpack.c.b16 %v8584, %v8580
  %v8661 = vpack.c.b16 %v8585, %v8581
  %v8662 = vpack.c.b16 %v8586, %v8582
  %v8663 = vpack.c.b16 %v8587, %v8583
  %v8664 = vpack.c.b16 %v8592, %v8588
  %v8665 = vpack.c.b16 %v8593, %v8589
  %v8666 = vpack.c.b16 %v8594, %v8590
  %v8667 = vpack.c.b16 %v8595, %v8591
  %v8668 = vpack.c.b16 %v8600, %v8596
  %v8669 = vpack.c.b16 %v8601, %v8597
  %v8670 = vpack.c.b16 %v8602, %v8598
  %v8671 = vpack.c.b16 %v8603, %v8599
  %v8672 = vpack.c.b16 %v8608, %v8604
  %v8673 = vpack.c.b16 %v8609, %v8605
  %v8674 = vpack.c.b16 %v8610, %v8606
  %v8675 = vpack.c.b16 %v8611, %v8607
  %v8676 = vpack.c.b16 %v8616, %v8612
  %v8677 = vpack.c.b16 %v8617, %v8613
  %v8678 = vpack.c.b16 %v8618, %v8614
  %v8679 = vpack.c.b16 %v8619, %v8615
  %v8680 = vpack.c.b16 %v8624, %v8620
  %v8681 = vpack.c.b16 %v8625, %v8621
  %v8682 = vpack.c.b16 %v8626, %v8622
  %v8683 = vpack.c.b16 %v8627, %v8623
  %v8684 = vpack.c.b16 %v8632, %v8628
  %v8685 = vpack.c.b16 %v8633, %v8629
  %v8686 = vpack.c.b16 %v8634, %v8630
  %v8687 = vpack.c.b16 %v8635, %v8631
  %v8688 = vpack.c.b16 %v8640, %v8636
  %v8689 = vpack.c.b16 %v8641, %v8637
  %v8690 = vpack.c.b16 %v8642, %v8638
  %v8691 = vpack.c.b16 %v8643, %v8639
  %v8692 = vpack.c.b16 %v8648, %v8644
  %v8693 = vpack.c.b16 %v8649, %v8645
  %v8694 = vpack.c.b16 %v8650, %v8646
  %v8695 = vpack.c.b16 %v8651, %v8647
  %v8696 = vpack.c.b16 %v8656, %v8652
  %v8697 = vpack.c.b16 %v8657, %v8653
  %v8698 = vpack.c.b16 %v8658, %v8654
  %v8699 = vpack.c.b16 %v8659, %v8655
  %v8741 = vsel %vm8391, %v8538, 0
  %8743 = vmatprep.subr.bf16.mxu0 %v8661
  %8744 = vmatpush1.bf16.msra.mxu0 %v8660
  %8745 = vmatprep.subr.bf16.mxu0 %v8665
  %8746 = vmatpush1.bf16.msra.mxu0 %v8664
  %8747 = vmatprep.subr.bf16.mxu0 %v8669
  %8748 = vmatpush1.bf16.msra.mxu0 %v8668
  %8749 = vmatprep.subr.bf16.mxu0 %v8673
  %8750 = vmatpush1.bf16.msra.mxu0 %v8672
  %8751 = vmatprep.subr.bf16.mxu0 %v8677
  %8752 = vmatpush1.bf16.msra.mxu0 %v8676
  %8753 = vmatprep.subr.bf16.mxu0 %v8681
  %8754 = vmatpush1.bf16.msra.mxu0 %v8680
  %8755 = vmatprep.subr.bf16.mxu0 %v8685
  %8756 = vmatpush1.bf16.msra.mxu0 %v8684
  %8757 = vmatprep.subr.bf16.mxu0 %v8689
  %8758 = vmatpush1.bf16.msra.mxu0 %v8688
  %8759 = vmatprep.subr.bf16.mxu0 %v8693
  %8760 = vmatpush1.bf16.msra.mxu0 %v8692
  %8761 = vmatprep.subr.bf16.mxu0 %v8697
  %8762 = vmatpush1.bf16.msra.mxu0 %v8696
  %8763 = vmatprep.subr.bf16.mxu0 0
  %8764 = vmatpush1.bf16.msra.mxu0 0
  %8765 = vmatprep.subr.bf16.mxu0 0
  %8766 = vmatpush1.bf16.msra.mxu0 0
  %8767 = vmatprep.subr.bf16.mxu0 0
  %8768 = vmatpush1.bf16.msra.mxu0 0
  %8769 = vmatprep.subr.bf16.mxu0 0
  %8770 = vmatpush1.bf16.msra.mxu0 0
  %8771 = vmatprep.subr.bf16.mxu0 0
  %8772 = vmatpush1.bf16.msra.mxu0 0
  %8773 = vmatprep.subr.bf16.mxu0 0
  %8774 = vmatpush1.bf16.msra.mxu0 0
  %8775 = vmatprep.mubr.bf16.mxu0 %v8741
  %8776 = vmatmul.mubr.bf16.gmra.mrb[0].mxu0 %v8537
  %v8777 = vpop.f32.mrb[0].mxu0
  %v8778 = vadd.f32 %v8430, %v8777
  %v8779 = vpop.f32.mrb[0].mxu0
  %v8780 = vadd.f32 %v8432, %v8779
  %v8781 = vpop.f32.mrb[0].mxu0
  %v8782 = vadd.f32 %v8434, %v8781
  %v8783 = vpop.f32.mrb[0].mxu0
  %v8784 = vadd.f32 %v8436, %v8783
  %8785 = vdwg.mxu0
  %8786 = vmatprep.subr.bf16.mxu0 %v8663
  %8787 = vmatpush1.bf16.msra.mxu0 %v8662
  %8788 = vmatprep.subr.bf16.mxu0 %v8667
  %8789 = vmatpush1.bf16.msra.mxu0 %v8666
  %8790 = vmatprep.subr.bf16.mxu0 %v8671
  %8791 = vmatpush1.bf16.msra.mxu0 %v8670
  %8792 = vmatprep.subr.bf16.mxu0 %v8675
  %8793 = vmatpush1.bf16.msra.mxu0 %v8674
  %8794 = vmatprep.subr.bf16.mxu0 %v8679
  %8795 = vmatpush1.bf16.msra.mxu0 %v8678
  %8796 = vmatprep.subr.bf16.mxu0 %v8683
  %8797 = vmatpush1.bf16.msra.mxu0 %v8682
  %8798 = vmatprep.subr.bf16.mxu0 %v8687
  %8799 = vmatpush1.bf16.msra.mxu0 %v8686
  %8800 = vmatprep.subr.bf16.mxu0 %v8691
  %8801 = vmatpush1.bf16.msra.mxu0 %v8690
  %8802 = vmatprep.subr.bf16.mxu0 %v8695
  %8803 = vmatpush1.bf16.msra.mxu0 %v8694
  %8804 = vmatprep.subr.bf16.mxu0 %v8699
  %8805 = vmatpush1.bf16.msra.mxu0 %v8698
  %8806 = vmatprep.subr.bf16.mxu0 0
  %8807 = vmatpush1.bf16.msra.mxu0 0
  %8808 = vmatprep.subr.bf16.mxu0 0
  %8809 = vmatpush1.bf16.msra.mxu0 0
  %8810 = vmatprep.subr.bf16.mxu0 0
  %8811 = vmatpush1.bf16.msra.mxu0 0
  %8812 = vmatprep.subr.bf16.mxu0 0
  %8813 = vmatpush1.bf16.msra.mxu0 0
  %8814 = vmatprep.subr.bf16.mxu0 0
  %8815 = vmatpush1.bf16.msra.mxu0 0
  %8816 = vmatprep.subr.bf16.mxu0 0
  %8817 = vmatpush1.bf16.msra.mxu0 0
  %8818 = vmatprep.mubr.bf16.mxu0 %v8741
  %8819 = vmatmul.mubr.bf16.gmra.mrb[0].mxu0 %v8537
  %v8820 = vpop.f32.mrb[0].mxu0
  %v8821 = vadd.f32 %v8473, %v8820
  %v8822 = vpop.f32.mrb[0].mxu0
  %v8823 = vadd.f32 %v8475, %v8822
  %v8824 = vpop.f32.mrb[0].mxu0
  %v8825 = vadd.f32 %v8477, %v8824
  %v8826 = vpop.f32.mrb[0].mxu0
  %v8827 = vadd.f32 %v8479, %v8826
  %8828 = vdwg.mxu0
  %v8829 = vld [vmem:[#allocation5] sm:$0x22]
  %v8830 = vld [vmem:[#allocation5 + $0x8] sm:$0x22]
  %v8831 = vld [vmem:[#allocation5 + $0x10] sm:$0x22]
  %v8832 = vld [vmem:[#allocation5 + $0x18] sm:$0x22]
  %v8833 = vld [vmem:[#allocation5 + $0x20] sm:$0x22]
  %v8834 = vld [vmem:[#allocation5 + $0x28] sm:$0x22]
  %v8835 = vld [vmem:[#allocation5 + $0x30] sm:$0x22]
  %v8836 = vld [vmem:[#allocation5 + $0x38] sm:$0x22]
  %v8837 = vld [vmem:[#allocation5 + $0x40] sm:$0x22]
  %v8838 = vld [vmem:[#allocation5 + $0x48] sm:$0x22]
  %v8839 = vld [vmem:[#allocation5 + $0x50] sm:$0x22]
  %v8840 = vld [vmem:[#allocation5 + $0x58] sm:$0x22]
  %v8841 = vld [vmem:[#allocation5 + $0x60] sm:$0x22]
  %v8842 = vld [vmem:[#allocation5 + $0x68] sm:$0x22]
  %v8843 = vld [vmem:[#allocation5 + $0x70] sm:$0x22]
  %v8844 = vld [vmem:[#allocation5 + $0x78] sm:$0x22]
  %s8845 = scalar_lea.vmem %s4, 640
  %v8846 = vld [vmem:[%s8845] sm:$0xff]
  %v8847 = vld [vmem:[%s8845 + $0x8] sm:$0xff]
  %v8848 = vld [vmem:[%s8845 + $0x10] sm:$0xff]
  %v8849 = vld [vmem:[%s8845 + $0x18] sm:$0xff]
  %v8850 = vld [vmem:[%s8845 + $0x20] sm:$0xff]
  %v8851 = vld [vmem:[%s8845 + $0x28] sm:$0xff]
  %v8852 = vld [vmem:[%s8845 + $0x30] sm:$0xff]
  %v8853 = vld [vmem:[%s8845 + $0x38] sm:$0xff]
  %v8854 = vld [vmem:[%s8845 + $0x40] sm:$0xff]
  %v8855 = vld [vmem:[%s8845 + $0x48] sm:$0xff]
  %v8856 = vld [vmem:[%s8845 + $0x50] sm:$0xff]
  %v8857 = vld [vmem:[%s8845 + $0x58] sm:$0xff]
  %v8858 = vld [vmem:[%s8845 + $0x60] sm:$0xff]
  %v8859 = vld [vmem:[%s8845 + $0x68] sm:$0xff]
  %v8860 = vld [vmem:[%s8845 + $0x70] sm:$0xff]
  %v8861 = vld [vmem:[%s8845 + $0x78] sm:$0xff]
  %v8862 = vld [vmem:[%s8845 + $0x80] sm:$0xff]
  %v8863 = vld [vmem:[%s8845 + $0x88] sm:$0xff]
  %v8864 = vld [vmem:[%s8845 + $0x90] sm:$0xff]
  %v8865 = vld [vmem:[%s8845 + $0x98] sm:$0xff]
  %v8866 = vld [vmem:[%s8845 + $0xa0] sm:$0xff]
  %v8867 = vld [vmem:[%s8845 + $0xa8] sm:$0xff]
  %v8868 = vld [vmem:[%s8845 + $0xb0] sm:$0xff]
  %v8869 = vld [vmem:[%s8845 + $0xb8] sm:$0xff]
  %v8870 = vld [vmem:[%s8845 + $0xc0] sm:$0xff]
  %v8871 = vld [vmem:[%s8845 + $0xc8] sm:$0xff]
  %v8872 = vld [vmem:[%s8845 + $0xd0] sm:$0xff]
  %v8873 = vld [vmem:[%s8845 + $0xd8] sm:$0xff]
  %v8874 = vld [vmem:[%s8845 + $0xe0] sm:$0xff]
  %v8875 = vld [vmem:[%s8845 + $0xe8] sm:$0xff]
  %v8876 = vld [vmem:[%s8845 + $0xf0] sm:$0xff]
  %v8877 = vld [vmem:[%s8845 + $0xf8] sm:$0xff]
  %v8878 = vld [vmem:[%s8845 + $0x100] sm:$0xff]
  %v8879 = vld [vmem:[%s8845 + $0x108] sm:$0xff]
  %v8880 = vld [vmem:[%s8845 + $0x110] sm:$0xff]
  %v8881 = vld [vmem:[%s8845 + $0x118] sm:$0xff]
  %v8882 = vld [vmem:[%s8845 + $0x120] sm:$0xff]
  %v8883 = vld [vmem:[%s8845 + $0x128] sm:$0xff]
  %v8884 = vld [vmem:[%s8845 + $0x130] sm:$0xff]
  %v8885 = vld [vmem:[%s8845 + $0x138] sm:$0xff]
  %v8902 = vunpack.c.l.b16 %v8829
  %v8903 = vunpack.c.h.b16 %v8829
  %v8904 = vunpack.c.l.b16 %v8830
  %v8905 = vunpack.c.h.b16 %v8830
  %v8906 = vunpack.c.l.b16 %v8831
  %v8907 = vunpack.c.h.b16 %v8831
  %v8908 = vunpack.c.l.b16 %v8832
  %v8909 = vunpack.c.h.b16 %v8832
  %v8910 = vunpack.c.l.b16 %v8833
  %v8911 = vunpack.c.h.b16 %v8833
  %v8912 = vunpack.c.l.b16 %v8834
  %v8913 = vunpack.c.h.b16 %v8834
  %v8914 = vunpack.c.l.b16 %v8835
  %v8915 = vunpack.c.h.b16 %v8835
  %v8916 = vunpack.c.l.b16 %v8836
  %v8917 = vunpack.c.h.b16 %v8836
  %v8918 = vunpack.c.l.b16 %v8837
  %v8919 = vunpack.c.h.b16 %v8837
  %v8920 = vunpack.c.l.b16 %v8838
  %v8921 = vunpack.c.h.b16 %v8838
  %v8922 = vunpack.c.l.b16 %v8839
  %v8923 = vunpack.c.h.b16 %v8839
  %v8924 = vunpack.c.l.b16 %v8840
  %v8925 = vunpack.c.h.b16 %v8840
  %v8926 = vunpack.c.l.b16 %v8841
  %v8927 = vunpack.c.h.b16 %v8841
  %v8928 = vunpack.c.l.b16 %v8842
  %v8929 = vunpack.c.h.b16 %v8842
  %v8930 = vunpack.c.l.b16 %v8843
  %v8931 = vunpack.c.h.b16 %v8843
  %v8932 = vunpack.c.l.b16 %v8844
  %v8933 = vunpack.c.h.b16 %v8844
  %v8934 = vpack.c.b16 %v8902, %v8902
  %v8935 = vpack.c.b16 %v8903, %v8903
  %v8936 = vpack.c.b16 %v8904, %v8904
  %v8937 = vpack.c.b16 %v8905, %v8905
  %v8938 = vpack.c.b16 %v8906, %v8906
  %v8939 = vpack.c.b16 %v8907, %v8907
  %v8940 = vpack.c.b16 %v8908, %v8908
  %v8941 = vpack.c.b16 %v8909, %v8909
  %v8942 = vpack.c.b16 %v8910, %v8910
  %v8943 = vpack.c.b16 %v8911, %v8911
  %v8944 = vpack.c.b16 %v8912, %v8912
  %v8945 = vpack.c.b16 %v8913, %v8913
  %v8946 = vpack.c.b16 %v8914, %v8914
  %v8947 = vpack.c.b16 %v8915, %v8915
  %v8948 = vpack.c.b16 %v8916, %v8916
  %v8949 = vpack.c.b16 %v8917, %v8917
  %v8950 = vpack.c.b16 %v8918, %v8918
  %v8951 = vpack.c.b16 %v8919, %v8919
  %v8952 = vpack.c.b16 %v8920, %v8920
  %v8953 = vpack.c.b16 %v8921, %v8921
  %v8954 = vpack.c.b16 %v8922, %v8922
  %v8955 = vpack.c.b16 %v8923, %v8923
  %v8956 = vpack.c.b16 %v8924, %v8924
  %v8957 = vpack.c.b16 %v8925, %v8925
  %v8958 = vpack.c.b16 %v8926, %v8926
  %v8959 = vpack.c.b16 %v8927, %v8927
  %v8960 = vpack.c.b16 %v8928, %v8928
  %v8961 = vpack.c.b16 %v8929, %v8929
  %v8962 = vpack.c.b16 %v8930, %v8930
  %v8963 = vpack.c.b16 %v8931, %v8931
  %v8964 = vpack.c.b16 %v8932, %v8932
  %v8965 = vpack.c.b16 %v8933, %v8933
  %v8966 = vunpack.c.l.b16 %v8934
  %v8967 = vunpack.c.l.b16 %v8935
  %v8968 = vunpack.c.l.b16 %v8936
  %v8969 = vunpack.c.l.b16 %v8937
  %v8970 = vunpack.c.l.b16 %v8938
  %v8971 = vunpack.c.l.b16 %v8939
  %v8972 = vunpack.c.l.b16 %v8940
  %v8973 = vunpack.c.l.b16 %v8941
  %v8974 = vunpack.c.l.b16 %v8942
  %v8975 = vunpack.c.l.b16 %v8943
  %v8976 = vunpack.c.l.b16 %v8944
  %v8977 = vunpack.c.l.b16 %v8945
  %v8978 = vunpack.c.l.b16 %v8946
  %v8979 = vunpack.c.l.b16 %v8947
  %v8980 = vunpack.c.l.b16 %v8948
  %v8981 = vunpack.c.l.b16 %v8949
  %v8982 = vunpack.c.l.b16 %v8950
  %v8983 = vunpack.c.l.b16 %v8951
  %v8984 = vunpack.c.l.b16 %v8952
  %v8985 = vunpack.c.l.b16 %v8953
  %v8986 = vunpack.c.l.b16 %v8954
  %v8987 = vunpack.c.l.b16 %v8955
  %v8988 = vunpack.c.l.b16 %v8956
  %v8989 = vunpack.c.l.b16 %v8957
  %v8990 = vunpack.c.l.b16 %v8958
  %v8991 = vunpack.c.l.b16 %v8959
  %v8992 = vunpack.c.l.b16 %v8960
  %v8993 = vunpack.c.l.b16 %v8961
  %v8994 = vunpack.c.l.b16 %v8962
  %v8995 = vunpack.c.l.b16 %v8963
  %v8996 = vunpack.c.l.b16 %v8964
  %v8997 = vunpack.c.l.b16 %v8965
  %v8998 = vrot.slane %v8966, 2
  %v8999 = vrot.slane %v8968, 1
  %v9000 = vsel %vm8126, %v8999, %v8998
  %v9001 = vsel %vm8129, %v8970, %v9000
  %v9002 = vrot.slane %v8972, 7
  %v9003 = vsel %vm8132, %v9002, %v9001
  %v9004 = vrot.slane %v8974, 6
  %v9005 = vsel %vm8135, %v9004, %v9003
  %v9006 = vrot.slane %v8976, 5
  %v9007 = vsel %vm8138, %v9006, %v9005
  %v9008 = vrot.slane %v8978, 4
  %v9009 = vsel %vm8141, %v9008, %v9007
  %v9010 = vrot.slane %v8980, 3
  %v9011 = vsel %vm8144, %v9010, %v9009
  %v9012 = vrot.slane %v8967, 2
  %v9013 = vrot.slane %v8969, 1
  %v9014 = vsel %vm8126, %v9013, %v9012
  %v9015 = vsel %vm8129, %v8971, %v9014
  %v9016 = vrot.slane %v8973, 7
  %v9017 = vsel %vm8132, %v9016, %v9015
  %v9018 = vrot.slane %v8975, 6
  %v9019 = vsel %vm8135, %v9018, %v9017
  %v9020 = vrot.slane %v8977, 5
  %v9021 = vsel %vm8138, %v9020, %v9019
  %v9022 = vrot.slane %v8979, 4
  %v9023 = vsel %vm8141, %v9022, %v9021
  %v9024 = vrot.slane %v8981, 3
  %v9025 = vsel %vm8144, %v9024, %v9023
  %v9026 = vrot.slane %v8982, 2
  %v9027 = vrot.slane %v8984, 1
  %v9028 = vsel %vm8126, %v9027, %v9026
  %v9029 = vsel %vm8129, %v8986, %v9028
  %v9030 = vrot.slane %v8988, 7
  %v9031 = vsel %vm8132, %v9030, %v9029
  %v9032 = vrot.slane %v8990, 6
  %v9033 = vsel %vm8135, %v9032, %v9031
  %v9034 = vrot.slane %v8992, 5
  %v9035 = vsel %vm8138, %v9034, %v9033
  %v9036 = vrot.slane %v8994, 4
  %v9037 = vsel %vm8141, %v9036, %v9035
  %v9038 = vrot.slane %v8996, 3
  %v9039 = vsel %vm8144, %v9038, %v9037
  %v9040 = vrot.slane %v8983, 2
  %v9041 = vrot.slane %v8985, 1
  %v9042 = vsel %vm8126, %v9041, %v9040
  %v9043 = vsel %vm8129, %v8987, %v9042
  %v9044 = vrot.slane %v8989, 7
  %v9045 = vsel %vm8132, %v9044, %v9043
  %v9046 = vrot.slane %v8991, 6
  %v9047 = vsel %vm8135, %v9046, %v9045
  %v9048 = vrot.slane %v8993, 5
  %v9049 = vsel %vm8138, %v9048, %v9047
  %v9050 = vrot.slane %v8995, 4
  %v9051 = vsel %vm8141, %v9050, %v9049
  %v9052 = vrot.slane %v8997, 3
  %v9053 = vsel %vm8144, %v9052, %v9051
  %v9054 = vpack.c.b16 %v9039, %v9011
  %v9055 = vpack.c.b16 %v9053, %v9025
  %v9097 = vunpack.c.l.b16 %v8846
  %v9098 = vunpack.c.h.b16 %v8846
  %v9099 = vunpack.c.l.b16 %v8847
  %v9100 = vunpack.c.h.b16 %v8847
  %v9101 = vunpack.c.l.b16 %v8848
  %v9102 = vunpack.c.h.b16 %v8848
  %v9103 = vunpack.c.l.b16 %v8849
  %v9104 = vunpack.c.h.b16 %v8849
  %v9105 = vunpack.c.l.b16 %v8850
  %v9106 = vunpack.c.h.b16 %v8850
  %v9107 = vunpack.c.l.b16 %v8851
  %v9108 = vunpack.c.h.b16 %v8851
  %v9109 = vunpack.c.l.b16 %v8852
  %v9110 = vunpack.c.h.b16 %v8852
  %v9111 = vunpack.c.l.b16 %v8853
  %v9112 = vunpack.c.h.b16 %v8853
  %v9113 = vunpack.c.l.b16 %v8854
  %v9114 = vunpack.c.h.b16 %v8854
  %v9115 = vunpack.c.l.b16 %v8855
  %v9116 = vunpack.c.h.b16 %v8855
  %v9117 = vunpack.c.l.b16 %v8856
  %v9118 = vunpack.c.h.b16 %v8856
  %v9119 = vunpack.c.l.b16 %v8857
  %v9120 = vunpack.c.h.b16 %v8857
  %v9121 = vunpack.c.l.b16 %v8858
  %v9122 = vunpack.c.h.b16 %v8858
  %v9123 = vunpack.c.l.b16 %v8859
  %v9124 = vunpack.c.h.b16 %v8859
  %v9125 = vunpack.c.l.b16 %v8860
  %v9126 = vunpack.c.h.b16 %v8860
  %v9127 = vunpack.c.l.b16 %v8861
  %v9128 = vunpack.c.h.b16 %v8861
  %v9129 = vunpack.c.l.b16 %v8862
  %v9130 = vunpack.c.h.b16 %v8862
  %v9131 = vunpack.c.l.b16 %v8863
  %v9132 = vunpack.c.h.b16 %v8863
  %v9133 = vunpack.c.l.b16 %v8864
  %v9134 = vunpack.c.h.b16 %v8864
  %v9135 = vunpack.c.l.b16 %v8865
  %v9136 = vunpack.c.h.b16 %v8865
  %v9137 = vunpack.c.l.b16 %v8866
  %v9138 = vunpack.c.h.b16 %v8866
  %v9139 = vunpack.c.l.b16 %v8867
  %v9140 = vunpack.c.h.b16 %v8867
  %v9141 = vunpack.c.l.b16 %v8868
  %v9142 = vunpack.c.h.b16 %v8868
  %v9143 = vunpack.c.l.b16 %v8869
  %v9144 = vunpack.c.h.b16 %v8869
  %v9145 = vunpack.c.l.b16 %v8870
  %v9146 = vunpack.c.h.b16 %v8870
  %v9147 = vunpack.c.l.b16 %v8871
  %v9148 = vunpack.c.h.b16 %v8871
  %v9149 = vunpack.c.l.b16 %v8872
  %v9150 = vunpack.c.h.b16 %v8872
  %v9151 = vunpack.c.l.b16 %v8873
  %v9152 = vunpack.c.h.b16 %v8873
  %v9153 = vunpack.c.l.b16 %v8874
  %v9154 = vunpack.c.h.b16 %v8874
  %v9155 = vunpack.c.l.b16 %v8875
  %v9156 = vunpack.c.h.b16 %v8875
  %v9157 = vunpack.c.l.b16 %v8876
  %v9158 = vunpack.c.h.b16 %v8876
  %v9159 = vunpack.c.l.b16 %v8877
  %v9160 = vunpack.c.h.b16 %v8877
  %v9161 = vunpack.c.l.b16 %v8878
  %v9162 = vunpack.c.h.b16 %v8878
  %v9163 = vunpack.c.l.b16 %v8879
  %v9164 = vunpack.c.h.b16 %v8879
  %v9165 = vunpack.c.l.b16 %v8880
  %v9166 = vunpack.c.h.b16 %v8880
  %v9167 = vunpack.c.l.b16 %v8881
  %v9168 = vunpack.c.h.b16 %v8881
  %v9169 = vunpack.c.l.b16 %v8882
  %v9170 = vunpack.c.h.b16 %v8882
  %v9171 = vunpack.c.l.b16 %v8883
  %v9172 = vunpack.c.h.b16 %v8883
  %v9173 = vunpack.c.l.b16 %v8884
  %v9174 = vunpack.c.h.b16 %v8884
  %v9175 = vunpack.c.l.b16 %v8885
  %v9176 = vunpack.c.h.b16 %v8885
  %v9177 = vpack.c.b16 %v9101, %v9097
  %v9178 = vpack.c.b16 %v9102, %v9098
  %v9179 = vpack.c.b16 %v9103, %v9099
  %v9180 = vpack.c.b16 %v9104, %v9100
  %v9181 = vpack.c.b16 %v9109, %v9105
  %v9182 = vpack.c.b16 %v9110, %v9106
  %v9183 = vpack.c.b16 %v9111, %v9107
  %v9184 = vpack.c.b16 %v9112, %v9108
  %v9185 = vpack.c.b16 %v9117, %v9113
  %v9186 = vpack.c.b16 %v9118, %v9114
  %v9187 = vpack.c.b16 %v9119, %v9115
  %v9188 = vpack.c.b16 %v9120, %v9116
  %v9189 = vpack.c.b16 %v9125, %v9121
  %v9190 = vpack.c.b16 %v9126, %v9122
  %v9191 = vpack.c.b16 %v9127, %v9123
  %v9192 = vpack.c.b16 %v9128, %v9124
  %v9193 = vpack.c.b16 %v9133, %v9129
  %v9194 = vpack.c.b16 %v9134, %v9130
  %v9195 = vpack.c.b16 %v9135, %v9131
  %v9196 = vpack.c.b16 %v9136, %v9132
  %v9197 = vpack.c.b16 %v9141, %v9137
  %v9198 = vpack.c.b16 %v9142, %v9138
  %v9199 = vpack.c.b16 %v9143, %v9139
  %v9200 = vpack.c.b16 %v9144, %v9140
  %v9201 = vpack.c.b16 %v9149, %v9145
  %v9202 = vpack.c.b16 %v9150, %v9146
  %v9203 = vpack.c.b16 %v9151, %v9147
  %v9204 = vpack.c.b16 %v9152, %v9148
  %v9205 = vpack.c.b16 %v9157, %v9153
  %v9206 = vpack.c.b16 %v9158, %v9154
  %v9207 = vpack.c.b16 %v9159, %v9155
  %v9208 = vpack.c.b16 %v9160, %v9156
  %v9209 = vpack.c.b16 %v9165, %v9161
  %v9210 = vpack.c.b16 %v9166, %v9162
  %v9211 = vpack.c.b16 %v9167, %v9163
  %v9212 = vpack.c.b16 %v9168, %v9164
  %v9213 = vpack.c.b16 %v9173, %v9169
  %v9214 = vpack.c.b16 %v9174, %v9170
  %v9215 = vpack.c.b16 %v9175, %v9171
  %v9216 = vpack.c.b16 %v9176, %v9172
  %v9258 = vsel %vm8391, %v9055, 0
  %9260 = vmatprep.subr.bf16.mxu0 %v9178
  %9261 = vmatpush1.bf16.msra.mxu0 %v9177
  %9262 = vmatprep.subr.bf16.mxu0 %v9182
  %9263 = vmatpush1.bf16.msra.mxu0 %v9181
  %9264 = vmatprep.subr.bf16.mxu0 %v9186
  %9265 = vmatpush1.bf16.msra.mxu0 %v9185
  %9266 = vmatprep.subr.bf16.mxu0 %v9190
  %9267 = vmatpush1.bf16.msra.mxu0 %v9189
  %9268 = vmatprep.subr.bf16.mxu0 %v9194
  %9269 = vmatpush1.bf16.msra.mxu0 %v9193
  %9270 = vmatprep.subr.bf16.mxu0 %v9198
  %9271 = vmatpush1.bf16.msra.mxu0 %v9197
  %9272 = vmatprep.subr.bf16.mxu0 %v9202
  %9273 = vmatpush1.bf16.msra.mxu0 %v9201
  %9274 = vmatprep.subr.bf16.mxu0 %v9206
  %9275 = vmatpush1.bf16.msra.mxu0 %v9205
  %9276 = vmatprep.subr.bf16.mxu0 %v9210
  %9277 = vmatpush1.bf16.msra.mxu0 %v9209
  %9278 = vmatprep.subr.bf16.mxu0 %v9214
  %9279 = vmatpush1.bf16.msra.mxu0 %v9213
  %9280 = vmatprep.subr.bf16.mxu0 0
  %9281 = vmatpush1.bf16.msra.mxu0 0
  %9282 = vmatprep.subr.bf16.mxu0 0
  %9283 = vmatpush1.bf16.msra.mxu0 0
  %9284 = vmatprep.subr.bf16.mxu0 0
  %9285 = vmatpush1.bf16.msra.mxu0 0
  %9286 = vmatprep.subr.bf16.mxu0 0
  %9287 = vmatpush1.bf16.msra.mxu0 0
  %9288 = vmatprep.subr.bf16.mxu0 0
  %9289 = vmatpush1.bf16.msra.mxu0 0
  %9290 = vmatprep.subr.bf16.mxu0 0
  %9291 = vmatpush1.bf16.msra.mxu0 0
  %9292 = vmatprep.mubr.bf16.mxu0 %v9258
  %9293 = vmatmul.mubr.bf16.gmra.mrb[0].mxu0 %v9054
  %v9294 = vpop.f32.mrb[0].mxu0
  %v9295 = vadd.f32 0.0, %v9294
  %v9296 = vpop.f32.mrb[0].mxu0
  %v9297 = vadd.f32 0.0, %v9296
  %v9298 = vpop.f32.mrb[0].mxu0
  %v9299 = vadd.f32 0.0, %v9298
  %v9300 = vpop.f32.mrb[0].mxu0
  %v9301 = vadd.f32 0.0, %v9300
  %9302 = vdwg.mxu0
  %9303 = vmatprep.subr.bf16.mxu0 %v9180
  %9304 = vmatpush1.bf16.msra.mxu0 %v9179
  %9305 = vmatprep.subr.bf16.mxu0 %v9184
  %9306 = vmatpush1.bf16.msra.mxu0 %v9183
  %9307 = vmatprep.subr.bf16.mxu0 %v9188
  %9308 = vmatpush1.bf16.msra.mxu0 %v9187
  %9309 = vmatprep.subr.bf16.mxu0 %v9192
  %9310 = vmatpush1.bf16.msra.mxu0 %v9191
  %9311 = vmatprep.subr.bf16.mxu0 %v9196
  %9312 = vmatpush1.bf16.msra.mxu0 %v9195
  %9313 = vmatprep.subr.bf16.mxu0 %v9200
  %9314 = vmatpush1.bf16.msra.mxu0 %v9199
  %9315 = vmatprep.subr.bf16.mxu0 %v9204
  %9316 = vmatpush1.bf16.msra.mxu0 %v9203
  %9317 = vmatprep.subr.bf16.mxu0 %v9208
  %9318 = vmatpush1.bf16.msra.mxu0 %v9207
  %9319 = vmatprep.subr.bf16.mxu0 %v9212
  %9320 = vmatpush1.bf16.msra.mxu0 %v9211
  %9321 = vmatprep.subr.bf16.mxu0 %v9216
  %9322 = vmatpush1.bf16.msra.mxu0 %v9215
  %9323 = vmatprep.subr.bf16.mxu0 0
  %9324 = vmatpush1.bf16.msra.mxu0 0
  %9325 = vmatprep.subr.bf16.mxu0 0
  %9326 = vmatpush1.bf16.msra.mxu0 0
  %9327 = vmatprep.subr.bf16.mxu0 0
  %9328 = vmatpush1.bf16.msra.mxu0 0
  %9329 = vmatprep.subr.bf16.mxu0 0
  %9330 = vmatpush1.bf16.msra.mxu0 0
  %9331 = vmatprep.subr.bf16.mxu0 0
  %9332 = vmatpush1.bf16.msra.mxu0 0
  %9333 = vmatprep.subr.bf16.mxu0 0
  %9334 = vmatpush1.bf16.msra.mxu0 0
  %9335 = vmatprep.mubr.bf16.mxu0 %v9258
  %9336 = vmatmul.mubr.bf16.gmra.mrb[0].mxu0 %v9054
  %v9337 = vpop.f32.mrb[0].mxu0
  %v9338 = vadd.f32 0.0, %v9337
  %v9339 = vpop.f32.mrb[0].mxu0
  %v9340 = vadd.f32 0.0, %v9339
  %v9341 = vpop.f32.mrb[0].mxu0
  %v9342 = vadd.f32 0.0, %v9341
  %v9343 = vpop.f32.mrb[0].mxu0
  %v9344 = vadd.f32 0.0, %v9343
  %9345 = vdwg.mxu0
  %v9346 = vadd.f32 %v8778, %v9295
  %v9347 = vadd.f32 %v8780, %v9297
  %v9348 = vadd.f32 %v8821, %v9338
  %v9349 = vadd.f32 %v8823, %v9340
  %v9350 = vadd.f32 %v8782, %v9299
  %v9351 = vadd.f32 %v8784, %v9301
  %v9352 = vadd.f32 %v8825, %v9342
  %v9353 = vadd.f32 %v8827, %v9344
  %s9354 = scalar_lea.vmem %s4, 960
  %v9355 = vld [vmem:[%s9354] sm:$0xff]
  %v9356 = vld [vmem:[%s9354 + $0x8] sm:$0xff]
  %v9357 = vld [vmem:[%s9354 + $0x10] sm:$0xff]
  %v9358 = vld [vmem:[%s9354 + $0x18] sm:$0xff]
  %v9359 = vld [vmem:[%s9354 + $0x20] sm:$0xff]
  %v9360 = vld [vmem:[%s9354 + $0x28] sm:$0xff]
  %v9361 = vld [vmem:[%s9354 + $0x30] sm:$0xff]
  %v9362 = vld [vmem:[%s9354 + $0x38] sm:$0xff]
  %v9363 = vld [vmem:[%s9354 + $0x40] sm:$0xff]
  %v9364 = vld [vmem:[%s9354 + $0x48] sm:$0xff]
  %v9365 = vld [vmem:[%s9354 + $0x50] sm:$0xff]
  %v9366 = vld [vmem:[%s9354 + $0x58] sm:$0xff]
  %v9367 = vld [vmem:[%s9354 + $0x60] sm:$0xff]
  %v9368 = vld [vmem:[%s9354 + $0x68] sm:$0xff]
  %v9369 = vld [vmem:[%s9354 + $0x70] sm:$0xff]
  %v9370 = vld [vmem:[%s9354 + $0x78] sm:$0xff]
  %v9371 = vld [vmem:[%s9354 + $0x80] sm:$0xff]
  %v9372 = vld [vmem:[%s9354 + $0x88] sm:$0xff]
  %v9373 = vld [vmem:[%s9354 + $0x90] sm:$0xff]
  %v9374 = vld [vmem:[%s9354 + $0x98] sm:$0xff]
  %v9375 = vld [vmem:[%s9354 + $0xa0] sm:$0xff]
  %v9376 = vld [vmem:[%s9354 + $0xa8] sm:$0xff]
  %v9377 = vld [vmem:[%s9354 + $0xb0] sm:$0xff]
  %v9378 = vld [vmem:[%s9354 + $0xb8] sm:$0xff]
  %v9379 = vld [vmem:[%s9354 + $0xc0] sm:$0xff]
  %v9380 = vld [vmem:[%s9354 + $0xc8] sm:$0xff]
  %v9381 = vld [vmem:[%s9354 + $0xd0] sm:$0xff]
  %v9382 = vld [vmem:[%s9354 + $0xd8] sm:$0xff]
  %v9383 = vld [vmem:[%s9354 + $0xe0] sm:$0xff]
  %v9384 = vld [vmem:[%s9354 + $0xe8] sm:$0xff]
  %v9385 = vld [vmem:[%s9354 + $0xf0] sm:$0xff]
  %v9386 = vld [vmem:[%s9354 + $0xf8] sm:$0xff]
  %v9387 = vld [vmem:[%s9354 + $0x100] sm:$0xff]
  %v9388 = vld [vmem:[%s9354 + $0x108] sm:$0xff]
  %v9389 = vld [vmem:[%s9354 + $0x110] sm:$0xff]
  %v9390 = vld [vmem:[%s9354 + $0x118] sm:$0xff]
  %v9391 = vld [vmem:[%s9354 + $0x120] sm:$0xff]
  %v9392 = vld [vmem:[%s9354 + $0x128] sm:$0xff]
  %v9393 = vld [vmem:[%s9354 + $0x130] sm:$0xff]
  %v9394 = vld [vmem:[%s9354 + $0x138] sm:$0xff]
  %v9395 = vrot.slane %v8966, 3
  %v9396 = vrot.slane %v8968, 2
  %v9397 = vsel %vm8126, %v9396, %v9395
  %v9398 = vrot.slane %v8970, 1
  %v9399 = vsel %vm8129, %v9398, %v9397
  %v9400 = vsel %vm8132, %v8972, %v9399
  %v9401 = vrot.slane %v8974, 7
  %v9402 = vsel %vm8135, %v9401, %v9400
  %v9403 = vrot.slane %v8976, 6
  %v9404 = vsel %vm8138, %v9403, %v9402
  %v9405 = vrot.slane %v8978, 5
  %v9406 = vsel %vm8141, %v9405, %v9404
  %v9407 = vrot.slane %v8980, 4
  %v9408 = vsel %vm8144, %v9407, %v9406
  %v9409 = vrot.slane %v8967, 3
  %v9410 = vrot.slane %v8969, 2
  %v9411 = vsel %vm8126, %v9410, %v9409
  %v9412 = vrot.slane %v8971, 1
  %v9413 = vsel %vm8129, %v9412, %v9411
  %v9414 = vsel %vm8132, %v8973, %v9413
  %v9415 = vrot.slane %v8975, 7
  %v9416 = vsel %vm8135, %v9415, %v9414
  %v9417 = vrot.slane %v8977, 6
  %v9418 = vsel %vm8138, %v9417, %v9416
  %v9419 = vrot.slane %v8979, 5
  %v9420 = vsel %vm8141, %v9419, %v9418
  %v9421 = vrot.slane %v8981, 4
  %v9422 = vsel %vm8144, %v9421, %v9420
  %v9423 = vrot.slane %v8982, 3
  %v9424 = vrot.slane %v8984, 2
  %v9425 = vsel %vm8126, %v9424, %v9423
  %v9426 = vrot.slane %v8986, 1
  %v9427 = vsel %vm8129, %v9426, %v9425
  %v9428 = vsel %vm8132, %v8988, %v9427
  %v9429 = vrot.slane %v8990, 7
  %v9430 = vsel %vm8135, %v9429, %v9428
  %v9431 = vrot.slane %v8992, 6
  %v9432 = vsel %vm8138, %v9431, %v9430
  %v9433 = vrot.slane %v8994, 5
  %v9434 = vsel %vm8141, %v9433, %v9432
  %v9435 = vrot.slane %v8996, 4
  %v9436 = vsel %vm8144, %v9435, %v9434
  %v9437 = vrot.slane %v8983, 3
  %v9438 = vrot.slane %v8985, 2
  %v9439 = vsel %vm8126, %v9438, %v9437
  %v9440 = vrot.slane %v8987, 1
  %v9441 = vsel %vm8129, %v9440, %v9439
  %v9442 = vsel %vm8132, %v8989, %v9441
  %v9443 = vrot.slane %v8991, 7
  %v9444 = vsel %vm8135, %v9443, %v9442
  %v9445 = vrot.slane %v8993, 6
  %v9446 = vsel %vm8138, %v9445, %v9444
  %v9447 = vrot.slane %v8995, 5
  %v9448 = vsel %vm8141, %v9447, %v9446
  %v9449 = vrot.slane %v8997, 4
  %v9450 = vsel %vm8144, %v9449, %v9448
  %v9451 = vpack.c.b16 %v9436, %v9408
  %v9452 = vpack.c.b16 %v9450, %v9422
  %v9494 = vunpack.c.l.b16 %v9355
  %v9495 = vunpack.c.h.b16 %v9355
  %v9496 = vunpack.c.l.b16 %v9356
  %v9497 = vunpack.c.h.b16 %v9356
  %v9498 = vunpack.c.l.b16 %v9357
  %v9499 = vunpack.c.h.b16 %v9357
  %v9500 = vunpack.c.l.b16 %v9358
  %v9501 = vunpack.c.h.b16 %v9358
  %v9502 = vunpack.c.l.b16 %v9359
  %v9503 = vunpack.c.h.b16 %v9359
  %v9504 = vunpack.c.l.b16 %v9360
  %v9505 = vunpack.c.h.b16 %v9360
  %v9506 = vunpack.c.l.b16 %v9361
  %v9507 = vunpack.c.h.b16 %v9361
  %v9508 = vunpack.c.l.b16 %v9362
  %v9509 = vunpack.c.h.b16 %v9362
  %v9510 = vunpack.c.l.b16 %v9363
  %v9511 = vunpack.c.h.b16 %v9363
  %v9512 = vunpack.c.l.b16 %v9364
  %v9513 = vunpack.c.h.b16 %v9364
  %v9514 = vunpack.c.l.b16 %v9365
  %v9515 = vunpack.c.h.b16 %v9365
  %v9516 = vunpack.c.l.b16 %v9366
  %v9517 = vunpack.c.h.b16 %v9366
  %v9518 = vunpack.c.l.b16 %v9367
  %v9519 = vunpack.c.h.b16 %v9367
  %v9520 = vunpack.c.l.b16 %v9368
  %v9521 = vunpack.c.h.b16 %v9368
  %v9522 = vunpack.c.l.b16 %v9369
  %v9523 = vunpack.c.h.b16 %v9369
  %v9524 = vunpack.c.l.b16 %v9370
  %v9525 = vunpack.c.h.b16 %v9370
  %v9526 = vunpack.c.l.b16 %v9371
  %v9527 = vunpack.c.h.b16 %v9371
  %v9528 = vunpack.c.l.b16 %v9372
  %v9529 = vunpack.c.h.b16 %v9372
  %v9530 = vunpack.c.l.b16 %v9373
  %v9531 = vunpack.c.h.b16 %v9373
  %v9532 = vunpack.c.l.b16 %v9374
  %v9533 = vunpack.c.h.b16 %v9374
  %v9534 = vunpack.c.l.b16 %v9375
  %v9535 = vunpack.c.h.b16 %v9375
  %v9536 = vunpack.c.l.b16 %v9376
  %v9537 = vunpack.c.h.b16 %v9376
  %v9538 = vunpack.c.l.b16 %v9377
  %v9539 = vunpack.c.h.b16 %v9377
  %v9540 = vunpack.c.l.b16 %v9378
  %v9541 = vunpack.c.h.b16 %v9378
  %v9542 = vunpack.c.l.b16 %v9379
  %v9543 = vunpack.c.h.b16 %v9379
  %v9544 = vunpack.c.l.b16 %v9380
  %v9545 = vunpack.c.h.b16 %v9380
  %v9546 = vunpack.c.l.b16 %v9381
  %v9547 = vunpack.c.h.b16 %v9381
  %v9548 = vunpack.c.l.b16 %v9382
  %v9549 = vunpack.c.h.b16 %v9382
  %v9550 = vunpack.c.l.b16 %v9383
  %v9551 = vunpack.c.h.b16 %v9383
  %v9552 = vunpack.c.l.b16 %v9384
  %v9553 = vunpack.c.h.b16 %v9384
  %v9554 = vunpack.c.l.b16 %v9385
  %v9555 = vunpack.c.h.b16 %v9385
  %v9556 = vunpack.c.l.b16 %v9386
  %v9557 = vunpack.c.h.b16 %v9386
  %v9558 = vunpack.c.l.b16 %v9387
  %v9559 = vunpack.c.h.b16 %v9387
  %v9560 = vunpack.c.l.b16 %v9388
  %v9561 = vunpack.c.h.b16 %v9388
  %v9562 = vunpack.c.l.b16 %v9389
  %v9563 = vunpack.c.h.b16 %v9389
  %v9564 = vunpack.c.l.b16 %v9390
  %v9565 = vunpack.c.h.b16 %v9390
  %v9566 = vunpack.c.l.b16 %v9391
  %v9567 = vunpack.c.h.b16 %v9391
  %v9568 = vunpack.c.l.b16 %v9392
  %v9569 = vunpack.c.h.b16 %v9392
  %v9570 = vunpack.c.l.b16 %v9393
  %v9571 = vunpack.c.h.b16 %v9393
  %v9572 = vunpack.c.l.b16 %v9394
  %v9573 = vunpack.c.h.b16 %v9394
  %v9574 = vpack.c.b16 %v9498, %v9494
  %v9575 = vpack.c.b16 %v9499, %v9495
  %v9576 = vpack.c.b16 %v9500, %v9496
  %v9577 = vpack.c.b16 %v9501, %v9497
  %v9578 = vpack.c.b16 %v9506, %v9502
  %v9579 = vpack.c.b16 %v9507, %v9503
  %v9580 = vpack.c.b16 %v9508, %v9504
  %v9581 = vpack.c.b16 %v9509, %v9505
  %v9582 = vpack.c.b16 %v9514, %v9510
  %v9583 = vpack.c.b16 %v9515, %v9511
  %v9584 = vpack.c.b16 %v9516, %v9512
  %v9585 = vpack.c.b16 %v9517, %v9513
  %v9586 = vpack.c.b16 %v9522, %v9518
  %v9587 = vpack.c.b16 %v9523, %v9519
  %v9588 = vpack.c.b16 %v9524, %v9520
  %v9589 = vpack.c.b16 %v9525, %v9521
  %v9590 = vpack.c.b16 %v9530, %v9526
  %v9591 = vpack.c.b16 %v9531, %v9527
  %v9592 = vpack.c.b16 %v9532, %v9528
  %v9593 = vpack.c.b16 %v9533, %v9529
  %v9594 = vpack.c.b16 %v9538, %v9534
  %v9595 = vpack.c.b16 %v9539, %v9535
  %v9596 = vpack.c.b16 %v9540, %v9536
  %v9597 = vpack.c.b16 %v9541, %v9537
  %v9598 = vpack.c.b16 %v9546, %v9542
  %v9599 = vpack.c.b16 %v9547, %v9543
  %v9600 = vpack.c.b16 %v9548, %v9544
  %v9601 = vpack.c.b16 %v9549, %v9545
  %v9602 = vpack.c.b16 %v9554, %v9550
  %v9603 = vpack.c.b16 %v9555, %v9551
  %v9604 = vpack.c.b16 %v9556, %v9552
  %v9605 = vpack.c.b16 %v9557, %v9553
  %v9606 = vpack.c.b16 %v9562, %v9558
  %v9607 = vpack.c.b16 %v9563, %v9559
  %v9608 = vpack.c.b16 %v9564, %v9560
  %v9609 = vpack.c.b16 %v9565, %v9561
  %v9610 = vpack.c.b16 %v9570, %v9566
  %v9611 = vpack.c.b16 %v9571, %v9567
  %v9612 = vpack.c.b16 %v9572, %v9568
  %v9613 = vpack.c.b16 %v9573, %v9569
  %v9655 = vsel %vm8391, %v9452, 0
  %9657 = vmatprep.subr.bf16.mxu0 %v9575
  %9658 = vmatpush1.bf16.msra.mxu0 %v9574
  %9659 = vmatprep.subr.bf16.mxu0 %v9579
  %9660 = vmatpush1.bf16.msra.mxu0 %v9578
  %9661 = vmatprep.subr.bf16.mxu0 %v9583
  %9662 = vmatpush1.bf16.msra.mxu0 %v9582
  %9663 = vmatprep.subr.bf16.mxu0 %v9587
  %9664 = vmatpush1.bf16.msra.mxu0 %v9586
  %9665 = vmatprep.subr.bf16.mxu0 %v9591
  %9666 = vmatpush1.bf16.msra.mxu0 %v9590
  %9667 = vmatprep.subr.bf16.mxu0 %v9595
  %9668 = vmatpush1.bf16.msra.mxu0 %v9594
  %9669 = vmatprep.subr.bf16.mxu0 %v9599
  %9670 = vmatpush1.bf16.msra.mxu0 %v9598
  %9671 = vmatprep.subr.bf16.mxu0 %v9603
  %9672 = vmatpush1.bf16.msra.mxu0 %v9602
  %9673 = vmatprep.subr.bf16.mxu0 %v9607
  %9674 = vmatpush1.bf16.msra.mxu0 %v9606
  %9675 = vmatprep.subr.bf16.mxu0 %v9611
  %9676 = vmatpush1.bf16.msra.mxu0 %v9610
  %9677 = vmatprep.subr.bf16.mxu0 0
  %9678 = vmatpush1.bf16.msra.mxu0 0
  %9679 = vmatprep.subr.bf16.mxu0 0
  %9680 = vmatpush1.bf16.msra.mxu0 0
  %9681 = vmatprep.subr.bf16.mxu0 0
  %9682 = vmatpush1.bf16.msra.mxu0 0
  %9683 = vmatprep.subr.bf16.mxu0 0
  %9684 = vmatpush1.bf16.msra.mxu0 0
  %9685 = vmatprep.subr.bf16.mxu0 0
  %9686 = vmatpush1.bf16.msra.mxu0 0
  %9687 = vmatprep.subr.bf16.mxu0 0
  %9688 = vmatpush1.bf16.msra.mxu0 0
  %9689 = vmatprep.mubr.bf16.mxu0 %v9655
  %9690 = vmatmul.mubr.bf16.gmra.mrb[0].mxu0 %v9451
  %v9691 = vpop.f32.mrb[0].mxu0
  %v9692 = vadd.f32 0.0, %v9691
  %v9693 = vpop.f32.mrb[0].mxu0
  %v9694 = vadd.f32 0.0, %v9693
  %v9695 = vpop.f32.mrb[0].mxu0
  %v9696 = vadd.f32 0.0, %v9695
  %v9697 = vpop.f32.mrb[0].mxu0
  %v9698 = vadd.f32 0.0, %v9697
  %9699 = vdwg.mxu0
  %9700 = vmatprep.subr.bf16.mxu0 %v9577
  %9701 = vmatpush1.bf16.msra.mxu0 %v9576
  %9702 = vmatprep.subr.bf16.mxu0 %v9581
  %9703 = vmatpush1.bf16.msra.mxu0 %v9580
  %9704 = vmatprep.subr.bf16.mxu0 %v9585
  %9705 = vmatpush1.bf16.msra.mxu0 %v9584
  %9706 = vmatprep.subr.bf16.mxu0 %v9589
  %9707 = vmatpush1.bf16.msra.mxu0 %v9588
  %9708 = vmatprep.subr.bf16.mxu0 %v9593
  %9709 = vmatpush1.bf16.msra.mxu0 %v9592
  %9710 = vmatprep.subr.bf16.mxu0 %v9597
  %9711 = vmatpush1.bf16.msra.mxu0 %v9596
  %9712 = vmatprep.subr.bf16.mxu0 %v9601
  %9713 = vmatpush1.bf16.msra.mxu0 %v9600
  %9714 = vmatprep.subr.bf16.mxu0 %v9605
  %9715 = vmatpush1.bf16.msra.mxu0 %v9604
  %9716 = vmatprep.subr.bf16.mxu0 %v9609
  %9717 = vmatpush1.bf16.msra.mxu0 %v9608
  %9718 = vmatprep.subr.bf16.mxu0 %v9613
  %9719 = vmatpush1.bf16.msra.mxu0 %v9612
  %9720 = vmatprep.subr.bf16.mxu0 0
  %9721 = vmatpush1.bf16.msra.mxu0 0
  %9722 = vmatprep.subr.bf16.mxu0 0
  %9723 = vmatpush1.bf16.msra.mxu0 0
  %9724 = vmatprep.subr.bf16.mxu0 0
  %9725 = vmatpush1.bf16.msra.mxu0 0
  %9726 = vmatprep.subr.bf16.mxu0 0
  %9727 = vmatpush1.bf16.msra.mxu0 0
  %9728 = vmatprep.subr.bf16.mxu0 0
  %9729 = vmatpush1.bf16.msra.mxu0 0
  %9730 = vmatprep.subr.bf16.mxu0 0
  %9731 = vmatpush1.bf16.msra.mxu0 0
  %9732 = vmatprep.mubr.bf16.mxu0 %v9655
  %9733 = vmatmul.mubr.bf16.gmra.mrb[0].mxu0 %v9451
  %v9734 = vpop.f32.mrb[0].mxu0
  %v9735 = vadd.f32 0.0, %v9734
  %v9736 = vpop.f32.mrb[0].mxu0
  %v9737 = vadd.f32 0.0, %v9736
  %v9738 = vpop.f32.mrb[0].mxu0
  %v9739 = vadd.f32 0.0, %v9738
  %v9740 = vpop.f32.mrb[0].mxu0
  %v9741 = vadd.f32 0.0, %v9740
  %9742 = vdwg.mxu0
  %v9743 = vadd.f32 %v9346, %v9692
  %v9744 = vadd.f32 %v9347, %v9694
  %v9745 = vadd.f32 %v9348, %v9735
  %v9746 = vadd.f32 %v9349, %v9737
  %v9747 = vadd.f32 %v9350, %v9696
  %v9748 = vadd.f32 %v9351, %v9698
  %v9749 = vadd.f32 %v9352, %v9739
  %v9750 = vadd.f32 %v9353, %v9741
  %v9751 = vld [vmem:[#allocation5] sm:$0x44]
  %v9752 = vld [vmem:[#allocation5 + $0x8] sm:$0x44]
  %v9753 = vld [vmem:[#allocation5 + $0x10] sm:$0x44]
  %v9754 = vld [vmem:[#allocation5 + $0x18] sm:$0x44]
  %v9755 = vld [vmem:[#allocation5 + $0x20] sm:$0x44]
  %v9756 = vld [vmem:[#allocation5 + $0x28] sm:$0x44]
  %v9757 = vld [vmem:[#allocation5 + $0x30] sm:$0x44]
  %v9758 = vld [vmem:[#allocation5 + $0x38] sm:$0x44]
  %v9759 = vld [vmem:[#allocation5 + $0x40] sm:$0x44]
  %v9760 = vld [vmem:[#allocation5 + $0x48] sm:$0x44]
  %v9761 = vld [vmem:[#allocation5 + $0x50] sm:$0x44]
  %v9762 = vld [vmem:[#allocation5 + $0x58] sm:$0x44]
  %v9763 = vld [vmem:[#allocation5 + $0x60] sm:$0x44]
  %v9764 = vld [vmem:[#allocation5 + $0x68] sm:$0x44]
  %v9765 = vld [vmem:[#allocation5 + $0x70] sm:$0x44]
  %v9766 = vld [vmem:[#allocation5 + $0x78] sm:$0x44]
  %s9767 = scalar_lea.vmem %s4, 1280
  %v9768 = vld [vmem:[%s9767] sm:$0xff]
  %v9769 = vld [vmem:[%s9767 + $0x8] sm:$0xff]
  %v9770 = vld [vmem:[%s9767 + $0x10] sm:$0xff]
  %v9771 = vld [vmem:[%s9767 + $0x18] sm:$0xff]
  %v9772 = vld [vmem:[%s9767 + $0x20] sm:$0xff]
  %v9773 = vld [vmem:[%s9767 + $0x28] sm:$0xff]
  %v9774 = vld [vmem:[%s9767 + $0x30] sm:$0xff]
  %v9775 = vld [vmem:[%s9767 + $0x38] sm:$0xff]
  %v9776 = vld [vmem:[%s9767 + $0x40] sm:$0xff]
  %v9777 = vld [vmem:[%s9767 + $0x48] sm:$0xff]
  %v9778 = vld [vmem:[%s9767 + $0x50] sm:$0xff]
  %v9779 = vld [vmem:[%s9767 + $0x58] sm:$0xff]
  %v9780 = vld [vmem:[%s9767 + $0x60] sm:$0xff]
  %v9781 = vld [vmem:[%s9767 + $0x68] sm:$0xff]
  %v9782 = vld [vmem:[%s9767 + $0x70] sm:$0xff]
  %v9783 = vld [vmem:[%s9767 + $0x78] sm:$0xff]
  %v9784 = vld [vmem:[%s9767 + $0x80] sm:$0xff]
  %v9785 = vld [vmem:[%s9767 + $0x88] sm:$0xff]
  %v9786 = vld [vmem:[%s9767 + $0x90] sm:$0xff]
  %v9787 = vld [vmem:[%s9767 + $0x98] sm:$0xff]
  %v9788 = vld [vmem:[%s9767 + $0xa0] sm:$0xff]
  %v9789 = vld [vmem:[%s9767 + $0xa8] sm:$0xff]
  %v9790 = vld [vmem:[%s9767 + $0xb0] sm:$0xff]
  %v9791 = vld [vmem:[%s9767 + $0xb8] sm:$0xff]
  %v9792 = vld [vmem:[%s9767 + $0xc0] sm:$0xff]
  %v9793 = vld [vmem:[%s9767 + $0xc8] sm:$0xff]
  %v9794 = vld [vmem:[%s9767 + $0xd0] sm:$0xff]
  %v9795 = vld [vmem:[%s9767 + $0xd8] sm:$0xff]
  %v9796 = vld [vmem:[%s9767 + $0xe0] sm:$0xff]
  %v9797 = vld [vmem:[%s9767 + $0xe8] sm:$0xff]
  %v9798 = vld [vmem:[%s9767 + $0xf0] sm:$0xff]
  %v9799 = vld [vmem:[%s9767 + $0xf8] sm:$0xff]
  %v9800 = vld [vmem:[%s9767 + $0x100] sm:$0xff]
  %v9801 = vld [vmem:[%s9767 + $0x108] sm:$0xff]
  %v9802 = vld [vmem:[%s9767 + $0x110] sm:$0xff]
  %v9803 = vld [vmem:[%s9767 + $0x118] sm:$0xff]
  %v9804 = vld [vmem:[%s9767 + $0x120] sm:$0xff]
  %v9805 = vld [vmem:[%s9767 + $0x128] sm:$0xff]
  %v9806 = vld [vmem:[%s9767 + $0x130] sm:$0xff]
  %v9807 = vld [vmem:[%s9767 + $0x138] sm:$0xff]
  %v9824 = vunpack.c.l.b16 %v9751
  %v9825 = vunpack.c.h.b16 %v9751
  %v9826 = vunpack.c.l.b16 %v9752
  %v9827 = vunpack.c.h.b16 %v9752
  %v9828 = vunpack.c.l.b16 %v9753
  %v9829 = vunpack.c.h.b16 %v9753
  %v9830 = vunpack.c.l.b16 %v9754
  %v9831 = vunpack.c.h.b16 %v9754
  %v9832 = vunpack.c.l.b16 %v9755
  %v9833 = vunpack.c.h.b16 %v9755
  %v9834 = vunpack.c.l.b16 %v9756
  %v9835 = vunpack.c.h.b16 %v9756
  %v9836 = vunpack.c.l.b16 %v9757
  %v9837 = vunpack.c.h.b16 %v9757
  %v9838 = vunpack.c.l.b16 %v9758
  %v9839 = vunpack.c.h.b16 %v9758
  %v9840 = vunpack.c.l.b16 %v9759
  %v9841 = vunpack.c.h.b16 %v9759
  %v9842 = vunpack.c.l.b16 %v9760
  %v9843 = vunpack.c.h.b16 %v9760
  %v9844 = vunpack.c.l.b16 %v9761
  %v9845 = vunpack.c.h.b16 %v9761
  %v9846 = vunpack.c.l.b16 %v9762
  %v9847 = vunpack.c.h.b16 %v9762
  %v9848 = vunpack.c.l.b16 %v9763
  %v9849 = vunpack.c.h.b16 %v9763
  %v9850 = vunpack.c.l.b16 %v9764
  %v9851 = vunpack.c.h.b16 %v9764
  %v9852 = vunpack.c.l.b16 %v9765
  %v9853 = vunpack.c.h.b16 %v9765
  %v9854 = vunpack.c.l.b16 %v9766
  %v9855 = vunpack.c.h.b16 %v9766
  %v9856 = vpack.c.b16 %v9824, %v9824
  %v9857 = vpack.c.b16 %v9825, %v9825
  %v9858 = vpack.c.b16 %v9826, %v9826
  %v9859 = vpack.c.b16 %v9827, %v9827
  %v9860 = vpack.c.b16 %v9828, %v9828
  %v9861 = vpack.c.b16 %v9829, %v9829
  %v9862 = vpack.c.b16 %v9830, %v9830
  %v9863 = vpack.c.b16 %v9831, %v9831
  %v9864 = vpack.c.b16 %v9832, %v9832
  %v9865 = vpack.c.b16 %v9833, %v9833
  %v9866 = vpack.c.b16 %v9834, %v9834
  %v9867 = vpack.c.b16 %v9835, %v9835
  %v9868 = vpack.c.b16 %v9836, %v9836
  %v9869 = vpack.c.b16 %v9837, %v9837
  %v9870 = vpack.c.b16 %v9838, %v9838
  %v9871 = vpack.c.b16 %v9839, %v9839
  %v9872 = vpack.c.b16 %v9840, %v9840
  %v9873 = vpack.c.b16 %v9841, %v9841
  %v9874 = vpack.c.b16 %v9842, %v9842
  %v9875 = vpack.c.b16 %v9843, %v9843
  %v9876 = vpack.c.b16 %v9844, %v9844
  %v9877 = vpack.c.b16 %v9845, %v9845
  %v9878 = vpack.c.b16 %v9846, %v9846
  %v9879 = vpack.c.b16 %v9847, %v9847
  %v9880 = vpack.c.b16 %v9848, %v9848
  %v9881 = vpack.c.b16 %v9849, %v9849
  %v9882 = vpack.c.b16 %v9850, %v9850
  %v9883 = vpack.c.b16 %v9851, %v9851
  %v9884 = vpack.c.b16 %v9852, %v9852
  %v9885 = vpack.c.b16 %v9853, %v9853
  %v9886 = vpack.c.b16 %v9854, %v9854
  %v9887 = vpack.c.b16 %v9855, %v9855
  %v9888 = vunpack.c.l.b16 %v9856
  %v9889 = vunpack.c.l.b16 %v9857
  %v9890 = vunpack.c.l.b16 %v9858
  %v9891 = vunpack.c.l.b16 %v9859
  %v9892 = vunpack.c.l.b16 %v9860
  %v9893 = vunpack.c.l.b16 %v9861
  %v9894 = vunpack.c.l.b16 %v9862
  %v9895 = vunpack.c.l.b16 %v9863
  %v9896 = vunpack.c.l.b16 %v9864
  %v9897 = vunpack.c.l.b16 %v9865
  %v9898 = vunpack.c.l.b16 %v9866
  %v9899 = vunpack.c.l.b16 %v9867
  %v9900 = vunpack.c.l.b16 %v9868
  %v9901 = vunpack.c.l.b16 %v9869
  %v9902 = vunpack.c.l.b16 %v9870
  %v9903 = vunpack.c.l.b16 %v9871
  %v9904 = vunpack.c.l.b16 %v9872
  %v9905 = vunpack.c.l.b16 %v9873
  %v9906 = vunpack.c.l.b16 %v9874
  %v9907 = vunpack.c.l.b16 %v9875
  %v9908 = vunpack.c.l.b16 %v9876
  %v9909 = vunpack.c.l.b16 %v9877
  %v9910 = vunpack.c.l.b16 %v9878
  %v9911 = vunpack.c.l.b16 %v9879
  %v9912 = vunpack.c.l.b16 %v9880
  %v9913 = vunpack.c.l.b16 %v9881
  %v9914 = vunpack.c.l.b16 %v9882
  %v9915 = vunpack.c.l.b16 %v9883
  %v9916 = vunpack.c.l.b16 %v9884
  %v9917 = vunpack.c.l.b16 %v9885
  %v9918 = vunpack.c.l.b16 %v9886
  %v9919 = vunpack.c.l.b16 %v9887
  %v9920 = vrot.slane %v9888, 4
  %v9921 = vrot.slane %v9890, 3
  %v9922 = vsel %vm8126, %v9921, %v9920
  %v9923 = vrot.slane %v9892, 2
  %v9924 = vsel %vm8129, %v9923, %v9922
  %v9925 = vrot.slane %v9894, 1
  %v9926 = vsel %vm8132, %v9925, %v9924
  %v9927 = vsel %vm8135, %v9896, %v9926
  %v9928 = vrot.slane %v9898, 7
  %v9929 = vsel %vm8138, %v9928, %v9927
  %v9930 = vrot.slane %v9900, 6
  %v9931 = vsel %vm8141, %v9930, %v9929
  %v9932 = vrot.slane %v9902, 5
  %v9933 = vsel %vm8144, %v9932, %v9931
  %v9934 = vrot.slane %v9889, 4
  %v9935 = vrot.slane %v9891, 3
  %v9936 = vsel %vm8126, %v9935, %v9934
  %v9937 = vrot.slane %v9893, 2
  %v9938 = vsel %vm8129, %v9937, %v9936
  %v9939 = vrot.slane %v9895, 1
  %v9940 = vsel %vm8132, %v9939, %v9938
  %v9941 = vsel %vm8135, %v9897, %v9940
  %v9942 = vrot.slane %v9899, 7
  %v9943 = vsel %vm8138, %v9942, %v9941
  %v9944 = vrot.slane %v9901, 6
  %v9945 = vsel %vm8141, %v9944, %v9943
  %v9946 = vrot.slane %v9903, 5
  %v9947 = vsel %vm8144, %v9946, %v9945
  %v9948 = vrot.slane %v9904, 4
  %v9949 = vrot.slane %v9906, 3
  %v9950 = vsel %vm8126, %v9949, %v9948
  %v9951 = vrot.slane %v9908, 2
  %v9952 = vsel %vm8129, %v9951, %v9950
  %v9953 = vrot.slane %v9910, 1
  %v9954 = vsel %vm8132, %v9953, %v9952
  %v9955 = vsel %vm8135, %v9912, %v9954
  %v9956 = vrot.slane %v9914, 7
  %v9957 = vsel %vm8138, %v9956, %v9955
  %v9958 = vrot.slane %v9916, 6
  %v9959 = vsel %vm8141, %v9958, %v9957
  %v9960 = vrot.slane %v9918, 5
  %v9961 = vsel %vm8144, %v9960, %v9959
  %v9962 = vrot.slane %v9905, 4
  %v9963 = vrot.slane %v9907, 3
  %v9964 = vsel %vm8126, %v9963, %v9962
  %v9965 = vrot.slane %v9909, 2
  %v9966 = vsel %vm8129, %v9965, %v9964
  %v9967 = vrot.slane %v9911, 1
  %v9968 = vsel %vm8132, %v9967, %v9966
  %v9969 = vsel %vm8135, %v9913, %v9968
  %v9970 = vrot.slane %v9915, 7
  %v9971 = vsel %vm8138, %v9970, %v9969
  %v9972 = vrot.slane %v9917, 6
  %v9973 = vsel %vm8141, %v9972, %v9971
  %v9974 = vrot.slane %v9919, 5
  %v9975 = vsel %vm8144, %v9974, %v9973
  %v9976 = vpack.c.b16 %v9961, %v9933
  %v9977 = vpack.c.b16 %v9975, %v9947
  %v10019 = vunpack.c.l.b16 %v9768
  %v10020 = vunpack.c.h.b16 %v9768
  %v10021 = vunpack.c.l.b16 %v9769
  %v10022 = vunpack.c.h.b16 %v9769
  %v10023 = vunpack.c.l.b16 %v9770
  %v10024 = vunpack.c.h.b16 %v9770
  %v10025 = vunpack.c.l.b16 %v9771
  %v10026 = vunpack.c.h.b16 %v9771
  %v10027 = vunpack.c.l.b16 %v9772
  %v10028 = vunpack.c.h.b16 %v9772
  %v10029 = vunpack.c.l.b16 %v9773
  %v10030 = vunpack.c.h.b16 %v9773
  %v10031 = vunpack.c.l.b16 %v9774
  %v10032 = vunpack.c.h.b16 %v9774
  %v10033 = vunpack.c.l.b16 %v9775
  %v10034 = vunpack.c.h.b16 %v9775
  %v10035 = vunpack.c.l.b16 %v9776
  %v10036 = vunpack.c.h.b16 %v9776
  %v10037 = vunpack.c.l.b16 %v9777
  %v10038 = vunpack.c.h.b16 %v9777
  %v10039 = vunpack.c.l.b16 %v9778
  %v10040 = vunpack.c.h.b16 %v9778
  %v10041 = vunpack.c.l.b16 %v9779
  %v10042 = vunpack.c.h.b16 %v9779
  %v10043 = vunpack.c.l.b16 %v9780
  %v10044 = vunpack.c.h.b16 %v9780
  %v10045 = vunpack.c.l.b16 %v9781
  %v10046 = vunpack.c.h.b16 %v9781
  %v10047 = vunpack.c.l.b16 %v9782
  %v10048 = vunpack.c.h.b16 %v9782
  %v10049 = vunpack.c.l.b16 %v9783
  %v10050 = vunpack.c.h.b16 %v9783
  %v10051 = vunpack.c.l.b16 %v9784
  %v10052 = vunpack.c.h.b16 %v9784
  %v10053 = vunpack.c.l.b16 %v9785
  %v10054 = vunpack.c.h.b16 %v9785
  %v10055 = vunpack.c.l.b16 %v9786
  %v10056 = vunpack.c.h.b16 %v9786
  %v10057 = vunpack.c.l.b16 %v9787
  %v10058 = vunpack.c.h.b16 %v9787
  %v10059 = vunpack.c.l.b16 %v9788
  %v10060 = vunpack.c.h.b16 %v9788
  %v10061 = vunpack.c.l.b16 %v9789
  %v10062 = vunpack.c.h.b16 %v9789
  %v10063 = vunpack.c.l.b16 %v9790
  %v10064 = vunpack.c.h.b16 %v9790
  %v10065 = vunpack.c.l.b16 %v9791
  %v10066 = vunpack.c.h.b16 %v9791
  %v10067 = vunpack.c.l.b16 %v9792
  %v10068 = vunpack.c.h.b16 %v9792
  %v10069 = vunpack.c.l.b16 %v9793
  %v10070 = vunpack.c.h.b16 %v9793
  %v10071 = vunpack.c.l.b16 %v9794
  %v10072 = vunpack.c.h.b16 %v9794
  %v10073 = vunpack.c.l.b16 %v9795
  %v10074 = vunpack.c.h.b16 %v9795
  %v10075 = vunpack.c.l.b16 %v9796
  %v10076 = vunpack.c.h.b16 %v9796
  %v10077 = vunpack.c.l.b16 %v9797
  %v10078 = vunpack.c.h.b16 %v9797
  %v10079 = vunpack.c.l.b16 %v9798
  %v10080 = vunpack.c.h.b16 %v9798
  %v10081 = vunpack.c.l.b16 %v9799
  %v10082 = vunpack.c.h.b16 %v9799
  %v10083 = vunpack.c.l.b16 %v9800
  %v10084 = vunpack.c.h.b16 %v9800
  %v10085 = vunpack.c.l.b16 %v9801
  %v10086 = vunpack.c.h.b16 %v9801
  %v10087 = vunpack.c.l.b16 %v9802
  %v10088 = vunpack.c.h.b16 %v9802
  %v10089 = vunpack.c.l.b16 %v9803
  %v10090 = vunpack.c.h.b16 %v9803
  %v10091 = vunpack.c.l.b16 %v9804
  %v10092 = vunpack.c.h.b16 %v9804
  %v10093 = vunpack.c.l.b16 %v9805
  %v10094 = vunpack.c.h.b16 %v9805
  %v10095 = vunpack.c.l.b16 %v9806
  %v10096 = vunpack.c.h.b16 %v9806
  %v10097 = vunpack.c.l.b16 %v9807
  %v10098 = vunpack.c.h.b16 %v9807
  %v10099 = vpack.c.b16 %v10023, %v10019
  %v10100 = vpack.c.b16 %v10024, %v10020
  %v10101 = vpack.c.b16 %v10025, %v10021
  %v10102 = vpack.c.b16 %v10026, %v10022
  %v10103 = vpack.c.b16 %v10031, %v10027
  %v10104 = vpack.c.b16 %v10032, %v10028
  %v10105 = vpack.c.b16 %v10033, %v10029
  %v10106 = vpack.c.b16 %v10034, %v10030
  %v10107 = vpack.c.b16 %v10039, %v10035
  %v10108 = vpack.c.b16 %v10040, %v10036
  %v10109 = vpack.c.b16 %v10041, %v10037
  %v10110 = vpack.c.b16 %v10042, %v10038
  %v10111 = vpack.c.b16 %v10047, %v10043
  %v10112 = vpack.c.b16 %v10048, %v10044
  %v10113 = vpack.c.b16 %v10049, %v10045
  %v10114 = vpack.c.b16 %v10050, %v10046
  %v10115 = vpack.c.b16 %v10055, %v10051
  %v10116 = vpack.c.b16 %v10056, %v10052
  %v10117 = vpack.c.b16 %v10057, %v10053
  %v10118 = vpack.c.b16 %v10058, %v10054
  %v10119 = vpack.c.b16 %v10063, %v10059
  %v10120 = vpack.c.b16 %v10064, %v10060
  %v10121 = vpack.c.b16 %v10065, %v10061
  %v10122 = vpack.c.b16 %v10066, %v10062
  %v10123 = vpack.c.b16 %v10071, %v10067
  %v10124 = vpack.c.b16 %v10072, %v10068
  %v10125 = vpack.c.b16 %v10073, %v10069
  %v10126 = vpack.c.b16 %v10074, %v10070
  %v10127 = vpack.c.b16 %v10079, %v10075
  %v10128 = vpack.c.b16 %v10080, %v10076
  %v10129 = vpack.c.b16 %v10081, %v10077
  %v10130 = vpack.c.b16 %v10082, %v10078
  %v10131 = vpack.c.b16 %v10087, %v10083
  %v10132 = vpack.c.b16 %v10088, %v10084
  %v10133 = vpack.c.b16 %v10089, %v10085
  %v10134 = vpack.c.b16 %v10090, %v10086
  %v10135 = vpack.c.b16 %v10095, %v10091
  %v10136 = vpack.c.b16 %v10096, %v10092
  %v10137 = vpack.c.b16 %v10097, %v10093
  %v10138 = vpack.c.b16 %v10098, %v10094
  %v10180 = vsel %vm8391, %v9977, 0
  %10182 = vmatprep.subr.bf16.mxu0 %v10100
  %10183 = vmatpush1.bf16.msra.mxu0 %v10099
  %10184 = vmatprep.subr.bf16.mxu0 %v10104
  %10185 = vmatpush1.bf16.msra.mxu0 %v10103
  %10186 = vmatprep.subr.bf16.mxu0 %v10108
  %10187 = vmatpush1.bf16.msra.mxu0 %v10107
  %10188 = vmatprep.subr.bf16.mxu0 %v10112
  %10189 = vmatpush1.bf16.msra.mxu0 %v10111
  %10190 = vmatprep.subr.bf16.mxu0 %v10116
  %10191 = vmatpush1.bf16.msra.mxu0 %v10115
  %10192 = vmatprep.subr.bf16.mxu0 %v10120
  %10193 = vmatpush1.bf16.msra.mxu0 %v10119
  %10194 = vmatprep.subr.bf16.mxu0 %v10124
  %10195 = vmatpush1.bf16.msra.mxu0 %v10123
  %10196 = vmatprep.subr.bf16.mxu0 %v10128
  %10197 = vmatpush1.bf16.msra.mxu0 %v10127
  %10198 = vmatprep.subr.bf16.mxu0 %v10132
  %10199 = vmatpush1.bf16.msra.mxu0 %v10131
  %10200 = vmatprep.subr.bf16.mxu0 %v10136
  %10201 = vmatpush1.bf16.msra.mxu0 %v10135
  %10202 = vmatprep.subr.bf16.mxu0 0
  %10203 = vmatpush1.bf16.msra.mxu0 0
  %10204 = vmatprep.subr.bf16.mxu0 0
  %10205 = vmatpush1.bf16.msra.mxu0 0
  %10206 = vmatprep.subr.bf16.mxu0 0
  %10207 = vmatpush1.bf16.msra.mxu0 0
  %10208 = vmatprep.subr.bf16.mxu0 0
  %10209 = vmatpush1.bf16.msra.mxu0 0
  %10210 = vmatprep.subr.bf16.mxu0 0
  %10211 = vmatpush1.bf16.msra.mxu0 0
  %10212 = vmatprep.subr.bf16.mxu0 0
  %10213 = vmatpush1.bf16.msra.mxu0 0
  %10214 = vmatprep.mubr.bf16.mxu0 %v10180
  %10215 = vmatmul.mubr.bf16.gmra.mrb[0].mxu0 %v9976
  %v10216 = vpop.f32.mrb[0].mxu0
  %v10217 = vadd.f32 0.0, %v10216
  %v10218 = vpop.f32.mrb[0].mxu0
  %v10219 = vadd.f32 0.0, %v10218
  %v10220 = vpop.f32.mrb[0].mxu0
  %v10221 = vadd.f32 0.0, %v10220
  %v10222 = vpop.f32.mrb[0].mxu0
  %v10223 = vadd.f32 0.0, %v10222
  %10224 = vdwg.mxu0
  %10225 = vmatprep.subr.bf16.mxu0 %v10102
  %10226 = vmatpush1.bf16.msra.mxu0 %v10101
  %10227 = vmatprep.subr.bf16.mxu0 %v10106
  %10228 = vmatpush1.bf16.msra.mxu0 %v10105
  %10229 = vmatprep.subr.bf16.mxu0 %v10110
  %10230 = vmatpush1.bf16.msra.mxu0 %v10109
  %10231 = vmatprep.subr.bf16.mxu0 %v10114
  %10232 = vmatpush1.bf16.msra.mxu0 %v10113
  %10233 = vmatprep.subr.bf16.mxu0 %v10118
  %10234 = vmatpush1.bf16.msra.mxu0 %v10117
  %10235 = vmatprep.subr.bf16.mxu0 %v10122
  %10236 = vmatpush1.bf16.msra.mxu0 %v10121
  %10237 = vmatprep.subr.bf16.mxu0 %v10126
  %10238 = vmatpush1.bf16.msra.mxu0 %v10125
  %10239 = vmatprep.subr.bf16.mxu0 %v10130
  %10240 = vmatpush1.bf16.msra.mxu0 %v10129
  %10241 = vmatprep.subr.bf16.mxu0 %v10134
  %10242 = vmatpush1.bf16.msra.mxu0 %v10133
  %10243 = vmatprep.subr.bf16.mxu0 %v10138
  %10244 = vmatpush1.bf16.msra.mxu0 %v10137
  %10245 = vmatprep.subr.bf16.mxu0 0
  %10246 = vmatpush1.bf16.msra.mxu0 0
  %10247 = vmatprep.subr.bf16.mxu0 0
  %10248 = vmatpush1.bf16.msra.mxu0 0
  %10249 = vmatprep.subr.bf16.mxu0 0
  %10250 = vmatpush1.bf16.msra.mxu0 0
  %10251 = vmatprep.subr.bf16.mxu0 0
  %10252 = vmatpush1.bf16.msra.mxu0 0
  %10253 = vmatprep.subr.bf16.mxu0 0
  %10254 = vmatpush1.bf16.msra.mxu0 0
  %10255 = vmatprep.subr.bf16.mxu0 0
  %10256 = vmatpush1.bf16.msra.mxu0 0
  %10257 = vmatprep.mubr.bf16.mxu0 %v10180
  %10258 = vmatmul.mubr.bf16.gmra.mrb[0].mxu0 %v9976
  %v10259 = vpop.f32.mrb[0].mxu0
  %v10260 = vadd.f32 0.0, %v10259
  %v10261 = vpop.f32.mrb[0].mxu0
  %v10262 = vadd.f32 0.0, %v10261
  %v10263 = vpop.f32.mrb[0].mxu0
  %v10264 = vadd.f32 0.0, %v10263
  %v10265 = vpop.f32.mrb[0].mxu0
  %v10266 = vadd.f32 0.0, %v10265
  %10267 = vdwg.mxu0
  %v10268 = vadd.f32 %v9743, %v10217
  %v10269 = vadd.f32 %v9744, %v10219
  %v10270 = vadd.f32 %v9745, %v10260
  %v10271 = vadd.f32 %v9746, %v10262
  %v10272 = vadd.f32 %v9747, %v10221
  %v10273 = vadd.f32 %v9748, %v10223
  %v10274 = vadd.f32 %v9749, %v10264
  %v10275 = vadd.f32 %v9750, %v10266
  %v10276 = vmax.f32 %v10268, 0.0
  %v10277 = vmax.f32 %v10269, 0.0
  %v10278 = vmax.f32 %v10270, 0.0
  %v10279 = vmax.f32 %v10271, 0.0
  %v10280 = vmax.f32 %v10272, 0.0
  %v10281 = vmax.f32 %v10273, 0.0
  %v10282 = vmax.f32 %v10274, 0.0
  %v10283 = vmax.f32 %v10275, 0.0
  %v10284 = vpack.c.bf16 %v10280, %v10276
  %v10285 = vpack.c.bf16 %v10281, %v10277
  %v10286 = vpack.c.bf16 %v10282, %v10278
  %v10287 = vpack.c.bf16 %v10283, %v10279
  %v10288 = vld [vmem:[%s5] sm:$0xff]
  %v10289 = vld [vmem:[%s5 + $0x8] sm:$0xff]
  %v10290 = vld [vmem:[%s5 + $0x10] sm:$0xff]
  %v10291 = vld [vmem:[%s5 + $0x18] sm:$0xff]
  %v10292 = vld [vmem:[%s5 + $0x20] sm:$0xff]
  %v10293 = vld [vmem:[%s5 + $0x28] sm:$0xff]
  %v10294 = vld [vmem:[%s5 + $0x30] sm:$0xff]
  %v10295 = vld [vmem:[%s5 + $0x38] sm:$0xff]
  %v10296 = vld [vmem:[%s5 + $0x40] sm:$0xff]
  %v10297 = vld [vmem:[%s5 + $0x48] sm:$0xff]
  %v10298 = vld [vmem:[%s5 + $0x50] sm:$0xff]
  %v10299 = vld [vmem:[%s5 + $0x58] sm:$0xff]
  %v10300 = vld [vmem:[%s5 + $0x60] sm:$0xff]
  %v10301 = vld [vmem:[%s5 + $0x68] sm:$0xff]
  %v10302 = vld [vmem:[%s5 + $0x70] sm:$0xff]
  %v10303 = vld [vmem:[%s5 + $0x78] sm:$0xff]
  %v10304 = vld [vmem:[%s5 + $0x80] sm:$0xff]
  %v10305 = vld [vmem:[%s5 + $0x88] sm:$0xff]
  %v10306 = vld [vmem:[%s5 + $0x90] sm:$0xff]
  %v10307 = vld [vmem:[%s5 + $0x98] sm:$0xff]
  %v10308 = vld [vmem:[%s5 + $0xa0] sm:$0xff]
  %v10309 = vld [vmem:[%s5 + $0xa8] sm:$0xff]
  %v10310 = vld [vmem:[%s5 + $0xb0] sm:$0xff]
  %v10311 = vld [vmem:[%s5 + $0xb8] sm:$0xff]
  %v10312 = vld [vmem:[%s5 + $0xc0] sm:$0xff]
  %v10313 = vld [vmem:[%s5 + $0xc8] sm:$0xff]
  %v10314 = vld [vmem:[%s5 + $0xd0] sm:$0xff]
  %v10315 = vld [vmem:[%s5 + $0xd8] sm:$0xff]
  %v10316 = vld [vmem:[%s5 + $0xe0] sm:$0xff]
  %v10317 = vld [vmem:[%s5 + $0xe8] sm:$0xff]
  %v10318 = vld [vmem:[%s5 + $0xf0] sm:$0xff]
  %v10319 = vld [vmem:[%s5 + $0xf8] sm:$0xff]
  %v10320 = vld [vmem:[%s5 + $0x100] sm:$0xff]
  %v10321 = vld [vmem:[%s5 + $0x108] sm:$0xff]
  %v10322 = vld [vmem:[%s5 + $0x110] sm:$0xff]
  %v10323 = vld [vmem:[%s5 + $0x118] sm:$0xff]
  %v10324 = vld [vmem:[%s5 + $0x120] sm:$0xff]
  %v10325 = vld [vmem:[%s5 + $0x128] sm:$0xff]
  %v10326 = vld [vmem:[%s5 + $0x130] sm:$0xff]
  %v10327 = vld [vmem:[%s5 + $0x138] sm:$0xff]
  %v10328 = vld [vmem:[%s5 + $0x140] sm:$0xff]
  %v10329 = vld [vmem:[%s5 + $0x148] sm:$0xff]
  %v10330 = vld [vmem:[%s5 + $0x150] sm:$0xff]
  %v10331 = vld [vmem:[%s5 + $0x158] sm:$0xff]
  %v10332 = vld [vmem:[%s5 + $0x160] sm:$0xff]
  %v10333 = vld [vmem:[%s5 + $0x168] sm:$0xff]
  %v10334 = vld [vmem:[%s5 + $0x170] sm:$0xff]
  %v10335 = vld [vmem:[%s5 + $0x178] sm:$0xff]
  %v10336 = vld [vmem:[%s5 + $0x180] sm:$0xff]
  %v10337 = vld [vmem:[%s5 + $0x188] sm:$0xff]
  %v10338 = vld [vmem:[%s5 + $0x190] sm:$0xff]
  %v10339 = vld [vmem:[%s5 + $0x198] sm:$0xff]
  %v10340 = vld [vmem:[%s5 + $0x1a0] sm:$0xff]
  %v10341 = vld [vmem:[%s5 + $0x1a8] sm:$0xff]
  %v10342 = vld [vmem:[%s5 + $0x1b0] sm:$0xff]
  %v10343 = vld [vmem:[%s5 + $0x1b8] sm:$0xff]
  %v10344 = vld [vmem:[%s5 + $0x1c0] sm:$0xff]
  %v10345 = vld [vmem:[%s5 + $0x1c8] sm:$0xff]
  %v10346 = vld [vmem:[%s5 + $0x1d0] sm:$0xff]
  %v10347 = vld [vmem:[%s5 + $0x1d8] sm:$0xff]
  %v10348 = vld [vmem:[%s5 + $0x1e0] sm:$0xff]
  %v10349 = vld [vmem:[%s5 + $0x1e8] sm:$0xff]
  %v10350 = vld [vmem:[%s5 + $0x1f0] sm:$0xff]
  %v10351 = vld [vmem:[%s5 + $0x1f8] sm:$0xff]
  %v10352 = vld [vmem:[%s5 + $0x200] sm:$0xff]
  %v10353 = vld [vmem:[%s5 + $0x208] sm:$0xff]
  %v10354 = vld [vmem:[%s5 + $0x210] sm:$0xff]
  %v10355 = vld [vmem:[%s5 + $0x218] sm:$0xff]
  %v10356 = vld [vmem:[%s5 + $0x220] sm:$0xff]
  %v10357 = vld [vmem:[%s5 + $0x228] sm:$0xff]
  %v10358 = vld [vmem:[%s5 + $0x230] sm:$0xff]
  %v10359 = vld [vmem:[%s5 + $0x238] sm:$0xff]
  %v10360 = vld [vmem:[%s5 + $0x240] sm:$0xff]
  %v10361 = vld [vmem:[%s5 + $0x248] sm:$0xff]
  %v10362 = vld [vmem:[%s5 + $0x250] sm:$0xff]
  %v10363 = vld [vmem:[%s5 + $0x258] sm:$0xff]
  %v10364 = vld [vmem:[%s5 + $0x260] sm:$0xff]
  %v10365 = vld [vmem:[%s5 + $0x268] sm:$0xff]
  %v10366 = vld [vmem:[%s5 + $0x270] sm:$0xff]
  %v10367 = vld [vmem:[%s5 + $0x278] sm:$0xff]
  %v10368 = vld [vmem:[%s5 + $0x280] sm:$0xff]
  %v10369 = vld [vmem:[%s5 + $0x288] sm:$0xff]
  %v10370 = vld [vmem:[%s5 + $0x290] sm:$0xff]
  %v10371 = vld [vmem:[%s5 + $0x298] sm:$0xff]
  %v10372 = vld [vmem:[%s5 + $0x2a0] sm:$0xff]
  %v10373 = vld [vmem:[%s5 + $0x2a8] sm:$0xff]
  %v10374 = vld [vmem:[%s5 + $0x2b0] sm:$0xff]
  %v10375 = vld [vmem:[%s5 + $0x2b8] sm:$0xff]
  %v10376 = vld [vmem:[%s5 + $0x2c0] sm:$0xff]
  %v10377 = vld [vmem:[%s5 + $0x2c8] sm:$0xff]
  %v10378 = vld [vmem:[%s5 + $0x2d0] sm:$0xff]
  %v10379 = vld [vmem:[%s5 + $0x2d8] sm:$0xff]
  %v10380 = vld [vmem:[%s5 + $0x2e0] sm:$0xff]
  %v10381 = vld [vmem:[%s5 + $0x2e8] sm:$0xff]
  %v10382 = vld [vmem:[%s5 + $0x2f0] sm:$0xff]
  %v10383 = vld [vmem:[%s5 + $0x2f8] sm:$0xff]
  %v10384 = vld [vmem:[%s5 + $0x300] sm:$0xff]
  %v10385 = vld [vmem:[%s5 + $0x308] sm:$0xff]
  %v10386 = vld [vmem:[%s5 + $0x310] sm:$0xff]
  %v10387 = vld [vmem:[%s5 + $0x318] sm:$0xff]
  %v10388 = vld [vmem:[%s5 + $0x320] sm:$0xff]
  %v10389 = vld [vmem:[%s5 + $0x328] sm:$0xff]
  %v10390 = vld [vmem:[%s5 + $0x330] sm:$0xff]
  %v10391 = vld [vmem:[%s5 + $0x338] sm:$0xff]
  %v10392 = vld [vmem:[%s5 + $0x340] sm:$0xff]
  %v10393 = vld [vmem:[%s5 + $0x348] sm:$0xff]
  %v10394 = vld [vmem:[%s5 + $0x350] sm:$0xff]
  %v10395 = vld [vmem:[%s5 + $0x358] sm:$0xff]
  %v10396 = vld [vmem:[%s5 + $0x360] sm:$0xff]
  %v10397 = vld [vmem:[%s5 + $0x368] sm:$0xff]
  %v10398 = vld [vmem:[%s5 + $0x370] sm:$0xff]
  %v10399 = vld [vmem:[%s5 + $0x378] sm:$0xff]
  %v10400 = vld [vmem:[%s5 + $0x380] sm:$0xff]
  %v10401 = vld [vmem:[%s5 + $0x388] sm:$0xff]
  %v10402 = vld [vmem:[%s5 + $0x390] sm:$0xff]
  %v10403 = vld [vmem:[%s5 + $0x398] sm:$0xff]
  %v10404 = vld [vmem:[%s5 + $0x3a0] sm:$0xff]
  %v10405 = vld [vmem:[%s5 + $0x3a8] sm:$0xff]
  %v10406 = vld [vmem:[%s5 + $0x3b0] sm:$0xff]
  %v10407 = vld [vmem:[%s5 + $0x3b8] sm:$0xff]
  %v10408 = vld [vmem:[%s5 + $0x3c0] sm:$0xff]
  %v10409 = vld [vmem:[%s5 + $0x3c8] sm:$0xff]
  %v10410 = vld [vmem:[%s5 + $0x3d0] sm:$0xff]
  %v10411 = vld [vmem:[%s5 + $0x3d8] sm:$0xff]
  %v10412 = vld [vmem:[%s5 + $0x3e0] sm:$0xff]
  %v10413 = vld [vmem:[%s5 + $0x3e8] sm:$0xff]
  %v10414 = vld [vmem:[%s5 + $0x3f0] sm:$0xff]
  %v10415 = vld [vmem:[%s5 + $0x3f8] sm:$0xff]
  %v10544 = vunpack.c.l.b16 %v10288
  %v10545 = vunpack.c.h.b16 %v10288
  %v10546 = vunpack.c.l.b16 %v10289
  %v10547 = vunpack.c.h.b16 %v10289
  %v10548 = vunpack.c.l.b16 %v10290
  %v10549 = vunpack.c.h.b16 %v10290
  %v10550 = vunpack.c.l.b16 %v10291
  %v10551 = vunpack.c.h.b16 %v10291
  %v10552 = vunpack.c.l.b16 %v10292
  %v10553 = vunpack.c.h.b16 %v10292
  %v10554 = vunpack.c.l.b16 %v10293
  %v10555 = vunpack.c.h.b16 %v10293
  %v10556 = vunpack.c.l.b16 %v10294
  %v10557 = vunpack.c.h.b16 %v10294
  %v10558 = vunpack.c.l.b16 %v10295
  %v10559 = vunpack.c.h.b16 %v10295
  %v10560 = vunpack.c.l.b16 %v10296
  %v10561 = vunpack.c.h.b16 %v10296
  %v10562 = vunpack.c.l.b16 %v10297
  %v10563 = vunpack.c.h.b16 %v10297
  %v10564 = vunpack.c.l.b16 %v10298
  %v10565 = vunpack.c.h.b16 %v10298
  %v10566 = vunpack.c.l.b16 %v10299
  %v10567 = vunpack.c.h.b16 %v10299
  %v10568 = vunpack.c.l.b16 %v10300
  %v10569 = vunpack.c.h.b16 %v10300
  %v10570 = vunpack.c.l.b16 %v10301
  %v10571 = vunpack.c.h.b16 %v10301
  %v10572 = vunpack.c.l.b16 %v10302
  %v10573 = vunpack.c.h.b16 %v10302
  %v10574 = vunpack.c.l.b16 %v10303
  %v10575 = vunpack.c.h.b16 %v10303
  %v10576 = vunpack.c.l.b16 %v10304
  %v10577 = vunpack.c.h.b16 %v10304
  %v10578 = vunpack.c.l.b16 %v10305
  %v10579 = vunpack.c.h.b16 %v10305
  %v10580 = vunpack.c.l.b16 %v10306
  %v10581 = vunpack.c.h.b16 %v10306
  %v10582 = vunpack.c.l.b16 %v10307
  %v10583 = vunpack.c.h.b16 %v10307
  %v10584 = vunpack.c.l.b16 %v10308
  %v10585 = vunpack.c.h.b16 %v10308
  %v10586 = vunpack.c.l.b16 %v10309
  %v10587 = vunpack.c.h.b16 %v10309
  %v10588 = vunpack.c.l.b16 %v10310
  %v10589 = vunpack.c.h.b16 %v10310
  %v10590 = vunpack.c.l.b16 %v10311
  %v10591 = vunpack.c.h.b16 %v10311
  %v10592 = vunpack.c.l.b16 %v10312
  %v10593 = vunpack.c.h.b16 %v10312
  %v10594 = vunpack.c.l.b16 %v10313
  %v10595 = vunpack.c.h.b16 %v10313
  %v10596 = vunpack.c.l.b16 %v10314
  %v10597 = vunpack.c.h.b16 %v10314
  %v10598 = vunpack.c.l.b16 %v10315
  %v10599 = vunpack.c.h.b16 %v10315
  %v10600 = vunpack.c.l.b16 %v10316
  %v10601 = vunpack.c.h.b16 %v10316
  %v10602 = vunpack.c.l.b16 %v10317
  %v10603 = vunpack.c.h.b16 %v10317
  %v10604 = vunpack.c.l.b16 %v10318
  %v10605 = vunpack.c.h.b16 %v10318
  %v10606 = vunpack.c.l.b16 %v10319
  %v10607 = vunpack.c.h.b16 %v10319
  %v10608 = vunpack.c.l.b16 %v10320
  %v10609 = vunpack.c.h.b16 %v10320
  %v10610 = vunpack.c.l.b16 %v10321
  %v10611 = vunpack.c.h.b16 %v10321
  %v10612 = vunpack.c.l.b16 %v10322
  %v10613 = vunpack.c.h.b16 %v10322
  %v10614 = vunpack.c.l.b16 %v10323
  %v10615 = vunpack.c.h.b16 %v10323
  %v10616 = vunpack.c.l.b16 %v10324
  %v10617 = vunpack.c.h.b16 %v10324
  %v10618 = vunpack.c.l.b16 %v10325
  %v10619 = vunpack.c.h.b16 %v10325
  %v10620 = vunpack.c.l.b16 %v10326
  %v10621 = vunpack.c.h.b16 %v10326
  %v10622 = vunpack.c.l.b16 %v10327
  %v10623 = vunpack.c.h.b16 %v10327
  %v10624 = vunpack.c.l.b16 %v10328
  %v10625 = vunpack.c.h.b16 %v10328
  %v10626 = vunpack.c.l.b16 %v10329
  %v10627 = vunpack.c.h.b16 %v10329
  %v10628 = vunpack.c.l.b16 %v10330
  %v10629 = vunpack.c.h.b16 %v10330
  %v10630 = vunpack.c.l.b16 %v10331
  %v10631 = vunpack.c.h.b16 %v10331
  %v10632 = vunpack.c.l.b16 %v10332
  %v10633 = vunpack.c.h.b16 %v10332
  %v10634 = vunpack.c.l.b16 %v10333
  %v10635 = vunpack.c.h.b16 %v10333
  %v10636 = vunpack.c.l.b16 %v10334
  %v10637 = vunpack.c.h.b16 %v10334
  %v10638 = vunpack.c.l.b16 %v10335
  %v10639 = vunpack.c.h.b16 %v10335
  %v10640 = vunpack.c.l.b16 %v10336
  %v10641 = vunpack.c.h.b16 %v10336
  %v10642 = vunpack.c.l.b16 %v10337
  %v10643 = vunpack.c.h.b16 %v10337
  %v10644 = vunpack.c.l.b16 %v10338
  %v10645 = vunpack.c.h.b16 %v10338
  %v10646 = vunpack.c.l.b16 %v10339
  %v10647 = vunpack.c.h.b16 %v10339
  %v10648 = vunpack.c.l.b16 %v10340
  %v10649 = vunpack.c.h.b16 %v10340
  %v10650 = vunpack.c.l.b16 %v10341
  %v10651 = vunpack.c.h.b16 %v10341
  %v10652 = vunpack.c.l.b16 %v10342
  %v10653 = vunpack.c.h.b16 %v10342
  %v10654 = vunpack.c.l.b16 %v10343
  %v10655 = vunpack.c.h.b16 %v10343
  %v10656 = vunpack.c.l.b16 %v10344
  %v10657 = vunpack.c.h.b16 %v10344
  %v10658 = vunpack.c.l.b16 %v10345
  %v10659 = vunpack.c.h.b16 %v10345
  %v10660 = vunpack.c.l.b16 %v10346
  %v10661 = vunpack.c.h.b16 %v10346
  %v10662 = vunpack.c.l.b16 %v10347
  %v10663 = vunpack.c.h.b16 %v10347
  %v10664 = vunpack.c.l.b16 %v10348
  %v10665 = vunpack.c.h.b16 %v10348
  %v10666 = vunpack.c.l.b16 %v10349
  %v10667 = vunpack.c.h.b16 %v10349
  %v10668 = vunpack.c.l.b16 %v10350
  %v10669 = vunpack.c.h.b16 %v10350
  %v10670 = vunpack.c.l.b16 %v10351
  %v10671 = vunpack.c.h.b16 %v10351
  %v10672 = vunpack.c.l.b16 %v10352
  %v10673 = vunpack.c.h.b16 %v10352
  %v10674 = vunpack.c.l.b16 %v10353
  %v10675 = vunpack.c.h.b16 %v10353
  %v10676 = vunpack.c.l.b16 %v10354
  %v10677 = vunpack.c.h.b16 %v10354
  %v10678 = vunpack.c.l.b16 %v10355
  %v10679 = vunpack.c.h.b16 %v10355
  %v10680 = vunpack.c.l.b16 %v10356
  %v10681 = vunpack.c.h.b16 %v10356
  %v10682 = vunpack.c.l.b16 %v10357
  %v10683 = vunpack.c.h.b16 %v10357
  %v10684 = vunpack.c.l.b16 %v10358
  %v10685 = vunpack.c.h.b16 %v10358
  %v10686 = vunpack.c.l.b16 %v10359
  %v10687 = vunpack.c.h.b16 %v10359
  %v10688 = vunpack.c.l.b16 %v10360
  %v10689 = vunpack.c.h.b16 %v10360
  %v10690 = vunpack.c.l.b16 %v10361
  %v10691 = vunpack.c.h.b16 %v10361
  %v10692 = vunpack.c.l.b16 %v10362
  %v10693 = vunpack.c.h.b16 %v10362
  %v10694 = vunpack.c.l.b16 %v10363
  %v10695 = vunpack.c.h.b16 %v10363
  %v10696 = vunpack.c.l.b16 %v10364
  %v10697 = vunpack.c.h.b16 %v10364
  %v10698 = vunpack.c.l.b16 %v10365
  %v10699 = vunpack.c.h.b16 %v10365
  %v10700 = vunpack.c.l.b16 %v10366
  %v10701 = vunpack.c.h.b16 %v10366
  %v10702 = vunpack.c.l.b16 %v10367
  %v10703 = vunpack.c.h.b16 %v10367
  %v10704 = vunpack.c.l.b16 %v10368
  %v10705 = vunpack.c.h.b16 %v10368
  %v10706 = vunpack.c.l.b16 %v10369
  %v10707 = vunpack.c.h.b16 %v10369
  %v10708 = vunpack.c.l.b16 %v10370
  %v10709 = vunpack.c.h.b16 %v10370
  %v10710 = vunpack.c.l.b16 %v10371
  %v10711 = vunpack.c.h.b16 %v10371
  %v10712 = vunpack.c.l.b16 %v10372
  %v10713 = vunpack.c.h.b16 %v10372
  %v10714 = vunpack.c.l.b16 %v10373
  %v10715 = vunpack.c.h.b16 %v10373
  %v10716 = vunpack.c.l.b16 %v10374
  %v10717 = vunpack.c.h.b16 %v10374
  %v10718 = vunpack.c.l.b16 %v10375
  %v10719 = vunpack.c.h.b16 %v10375
  %v10720 = vunpack.c.l.b16 %v10376
  %v10721 = vunpack.c.h.b16 %v10376
  %v10722 = vunpack.c.l.b16 %v10377
  %v10723 = vunpack.c.h.b16 %v10377
  %v10724 = vunpack.c.l.b16 %v10378
  %v10725 = vunpack.c.h.b16 %v10378
  %v10726 = vunpack.c.l.b16 %v10379
  %v10727 = vunpack.c.h.b16 %v10379
  %v10728 = vunpack.c.l.b16 %v10380
  %v10729 = vunpack.c.h.b16 %v10380
  %v10730 = vunpack.c.l.b16 %v10381
  %v10731 = vunpack.c.h.b16 %v10381
  %v10732 = vunpack.c.l.b16 %v10382
  %v10733 = vunpack.c.h.b16 %v10382
  %v10734 = vunpack.c.l.b16 %v10383
  %v10735 = vunpack.c.h.b16 %v10383
  %v10736 = vunpack.c.l.b16 %v10384
  %v10737 = vunpack.c.h.b16 %v10384
  %v10738 = vunpack.c.l.b16 %v10385
  %v10739 = vunpack.c.h.b16 %v10385
  %v10740 = vunpack.c.l.b16 %v10386
  %v10741 = vunpack.c.h.b16 %v10386
  %v10742 = vunpack.c.l.b16 %v10387
  %v10743 = vunpack.c.h.b16 %v10387
  %v10744 = vunpack.c.l.b16 %v10388
  %v10745 = vunpack.c.h.b16 %v10388
  %v10746 = vunpack.c.l.b16 %v10389
  %v10747 = vunpack.c.h.b16 %v10389
  %v10748 = vunpack.c.l.b16 %v10390
  %v10749 = vunpack.c.h.b16 %v10390
  %v10750 = vunpack.c.l.b16 %v10391
  %v10751 = vunpack.c.h.b16 %v10391
  %v10752 = vunpack.c.l.b16 %v10392
  %v10753 = vunpack.c.h.b16 %v10392
  %v10754 = vunpack.c.l.b16 %v10393
  %v10755 = vunpack.c.h.b16 %v10393
  %v10756 = vunpack.c.l.b16 %v10394
  %v10757 = vunpack.c.h.b16 %v10394
  %v10758 = vunpack.c.l.b16 %v10395
  %v10759 = vunpack.c.h.b16 %v10395
  %v10760 = vunpack.c.l.b16 %v10396
  %v10761 = vunpack.c.h.b16 %v10396
  %v10762 = vunpack.c.l.b16 %v10397
  %v10763 = vunpack.c.h.b16 %v10397
  %v10764 = vunpack.c.l.b16 %v10398
  %v10765 = vunpack.c.h.b16 %v10398
  %v10766 = vunpack.c.l.b16 %v10399
  %v10767 = vunpack.c.h.b16 %v10399
  %v10768 = vunpack.c.l.b16 %v10400
  %v10769 = vunpack.c.h.b16 %v10400
  %v10770 = vunpack.c.l.b16 %v10401
  %v10771 = vunpack.c.h.b16 %v10401
  %v10772 = vunpack.c.l.b16 %v10402
  %v10773 = vunpack.c.h.b16 %v10402
  %v10774 = vunpack.c.l.b16 %v10403
  %v10775 = vunpack.c.h.b16 %v10403
  %v10776 = vunpack.c.l.b16 %v10404
  %v10777 = vunpack.c.h.b16 %v10404
  %v10778 = vunpack.c.l.b16 %v10405
  %v10779 = vunpack.c.h.b16 %v10405
  %v10780 = vunpack.c.l.b16 %v10406
  %v10781 = vunpack.c.h.b16 %v10406
  %v10782 = vunpack.c.l.b16 %v10407
  %v10783 = vunpack.c.h.b16 %v10407
  %v10784 = vunpack.c.l.b16 %v10408
  %v10785 = vunpack.c.h.b16 %v10408
  %v10786 = vunpack.c.l.b16 %v10409
  %v10787 = vunpack.c.h.b16 %v10409
  %v10788 = vunpack.c.l.b16 %v10410
  %v10789 = vunpack.c.h.b16 %v10410
  %v10790 = vunpack.c.l.b16 %v10411
  %v10791 = vunpack.c.h.b16 %v10411
  %v10792 = vunpack.c.l.b16 %v10412
  %v10793 = vunpack.c.h.b16 %v10412
  %v10794 = vunpack.c.l.b16 %v10413
  %v10795 = vunpack.c.h.b16 %v10413
  %v10796 = vunpack.c.l.b16 %v10414
  %v10797 = vunpack.c.h.b16 %v10414
  %v10798 = vunpack.c.l.b16 %v10415
  %v10799 = vunpack.c.h.b16 %v10415
  %v10800 = vpack.c.b16 %v10548, %v10544
  %v10801 = vpack.c.b16 %v10549, %v10545
  %v10802 = vpack.c.b16 %v10550, %v10546
  %v10803 = vpack.c.b16 %v10551, %v10547
  %v10804 = vpack.c.b16 %v10556, %v10552
  %v10805 = vpack.c.b16 %v10557, %v10553
  %v10806 = vpack.c.b16 %v10558, %v10554
  %v10807 = vpack.c.b16 %v10559, %v10555
  %v10808 = vpack.c.b16 %v10564, %v10560
  %v10809 = vpack.c.b16 %v10565, %v10561
  %v10810 = vpack.c.b16 %v10566, %v10562
  %v10811 = vpack.c.b16 %v10567, %v10563
  %v10812 = vpack.c.b16 %v10572, %v10568
  %v10813 = vpack.c.b16 %v10573, %v10569
  %v10814 = vpack.c.b16 %v10574, %v10570
  %v10815 = vpack.c.b16 %v10575, %v10571
  %v10816 = vpack.c.b16 %v10580, %v10576
  %v10817 = vpack.c.b16 %v10581, %v10577
  %v10818 = vpack.c.b16 %v10582, %v10578
  %v10819 = vpack.c.b16 %v10583, %v10579
  %v10820 = vpack.c.b16 %v10588, %v10584
  %v10821 = vpack.c.b16 %v10589, %v10585
  %v10822 = vpack.c.b16 %v10590, %v10586
  %v10823 = vpack.c.b16 %v10591, %v10587
  %v10824 = vpack.c.b16 %v10596, %v10592
  %v10825 = vpack.c.b16 %v10597, %v10593
  %v10826 = vpack.c.b16 %v10598, %v10594
  %v10827 = vpack.c.b16 %v10599, %v10595
  %v10828 = vpack.c.b16 %v10604, %v10600
  %v10829 = vpack.c.b16 %v10605, %v10601
  %v10830 = vpack.c.b16 %v10606, %v10602
  %v10831 = vpack.c.b16 %v10607, %v10603
  %v10832 = vpack.c.b16 %v10612, %v10608
  %v10833 = vpack.c.b16 %v10613, %v10609
  %v10834 = vpack.c.b16 %v10614, %v10610
  %v10835 = vpack.c.b16 %v10615, %v10611
  %v10836 = vpack.c.b16 %v10620, %v10616
  %v10837 = vpack.c.b16 %v10621, %v10617
  %v10838 = vpack.c.b16 %v10622, %v10618
  %v10839 = vpack.c.b16 %v10623, %v10619
  %v10840 = vpack.c.b16 %v10628, %v10624
  %v10841 = vpack.c.b16 %v10629, %v10625
  %v10842 = vpack.c.b16 %v10630, %v10626
  %v10843 = vpack.c.b16 %v10631, %v10627
  %v10844 = vpack.c.b16 %v10636, %v10632
  %v10845 = vpack.c.b16 %v10637, %v10633
  %v10846 = vpack.c.b16 %v10638, %v10634
  %v10847 = vpack.c.b16 %v10639, %v10635
  %v10848 = vpack.c.b16 %v10644, %v10640
  %v10849 = vpack.c.b16 %v10645, %v10641
  %v10850 = vpack.c.b16 %v10646, %v10642
  %v10851 = vpack.c.b16 %v10647, %v10643
  %v10852 = vpack.c.b16 %v10652, %v10648
  %v10853 = vpack.c.b16 %v10653, %v10649
  %v10854 = vpack.c.b16 %v10654, %v10650
  %v10855 = vpack.c.b16 %v10655, %v10651
  %v10856 = vpack.c.b16 %v10660, %v10656
  %v10857 = vpack.c.b16 %v10661, %v10657
  %v10858 = vpack.c.b16 %v10662, %v10658
  %v10859 = vpack.c.b16 %v10663, %v10659
  %v10860 = vpack.c.b16 %v10668, %v10664
  %v10861 = vpack.c.b16 %v10669, %v10665
  %v10862 = vpack.c.b16 %v10670, %v10666
  %v10863 = vpack.c.b16 %v10671, %v10667
  %v10864 = vpack.c.b16 %v10676, %v10672
  %v10865 = vpack.c.b16 %v10677, %v10673
  %v10866 = vpack.c.b16 %v10678, %v10674
  %v10867 = vpack.c.b16 %v10679, %v10675
  %v10868 = vpack.c.b16 %v10684, %v10680
  %v10869 = vpack.c.b16 %v10685, %v10681
  %v10870 = vpack.c.b16 %v10686, %v10682
  %v10871 = vpack.c.b16 %v10687, %v10683
  %v10872 = vpack.c.b16 %v10692, %v10688
  %v10873 = vpack.c.b16 %v10693, %v10689
  %v10874 = vpack.c.b16 %v10694, %v10690
  %v10875 = vpack.c.b16 %v10695, %v10691
  %v10876 = vpack.c.b16 %v10700, %v10696
  %v10877 = vpack.c.b16 %v10701, %v10697
  %v10878 = vpack.c.b16 %v10702, %v10698
  %v10879 = vpack.c.b16 %v10703, %v10699
  %v10880 = vpack.c.b16 %v10708, %v10704
  %v10881 = vpack.c.b16 %v10709, %v10705
  %v10882 = vpack.c.b16 %v10710, %v10706
  %v10883 = vpack.c.b16 %v10711, %v10707
  %v10884 = vpack.c.b16 %v10716, %v10712
  %v10885 = vpack.c.b16 %v10717, %v10713
  %v10886 = vpack.c.b16 %v10718, %v10714
  %v10887 = vpack.c.b16 %v10719, %v10715
  %v10888 = vpack.c.b16 %v10724, %v10720
  %v10889 = vpack.c.b16 %v10725, %v10721
  %v10890 = vpack.c.b16 %v10726, %v10722
  %v10891 = vpack.c.b16 %v10727, %v10723
  %v10892 = vpack.c.b16 %v10732, %v10728
  %v10893 = vpack.c.b16 %v10733, %v10729
  %v10894 = vpack.c.b16 %v10734, %v10730
  %v10895 = vpack.c.b16 %v10735, %v10731
  %v10896 = vpack.c.b16 %v10740, %v10736
  %v10897 = vpack.c.b16 %v10741, %v10737
  %v10898 = vpack.c.b16 %v10742, %v10738
  %v10899 = vpack.c.b16 %v10743, %v10739
  %v10900 = vpack.c.b16 %v10748, %v10744
  %v10901 = vpack.c.b16 %v10749, %v10745
  %v10902 = vpack.c.b16 %v10750, %v10746
  %v10903 = vpack.c.b16 %v10751, %v10747
  %v10904 = vpack.c.b16 %v10756, %v10752
  %v10905 = vpack.c.b16 %v10757, %v10753
  %v10906 = vpack.c.b16 %v10758, %v10754
  %v10907 = vpack.c.b16 %v10759, %v10755
  %v10908 = vpack.c.b16 %v10764, %v10760
  %v10909 = vpack.c.b16 %v10765, %v10761
  %v10910 = vpack.c.b16 %v10766, %v10762
  %v10911 = vpack.c.b16 %v10767, %v10763
  %v10912 = vpack.c.b16 %v10772, %v10768
  %v10913 = vpack.c.b16 %v10773, %v10769
  %v10914 = vpack.c.b16 %v10774, %v10770
  %v10915 = vpack.c.b16 %v10775, %v10771
  %v10916 = vpack.c.b16 %v10780, %v10776
  %v10917 = vpack.c.b16 %v10781, %v10777
  %v10918 = vpack.c.b16 %v10782, %v10778
  %v10919 = vpack.c.b16 %v10783, %v10779
  %v10920 = vpack.c.b16 %v10788, %v10784
  %v10921 = vpack.c.b16 %v10789, %v10785
  %v10922 = vpack.c.b16 %v10790, %v10786
  %v10923 = vpack.c.b16 %v10791, %v10787
  %v10924 = vpack.c.b16 %v10796, %v10792
  %v10925 = vpack.c.b16 %v10797, %v10793
  %v10926 = vpack.c.b16 %v10798, %v10794
  %v10927 = vpack.c.b16 %v10799, %v10795
  %11056 = vmatprep.subr.bf16.mxu0 %v10801
  %11057 = vmatpush1.bf16.msra.mxu0 %v10800
  %11058 = vmatprep.subr.bf16.mxu0 %v10805
  %11059 = vmatpush1.bf16.msra.mxu0 %v10804
  %11060 = vmatprep.subr.bf16.mxu0 %v10809
  %11061 = vmatpush1.bf16.msra.mxu0 %v10808
  %11062 = vmatprep.subr.bf16.mxu0 %v10813
  %11063 = vmatpush1.bf16.msra.mxu0 %v10812
  %11064 = vmatprep.subr.bf16.mxu0 %v10817
  %11065 = vmatpush1.bf16.msra.mxu0 %v10816
  %11066 = vmatprep.subr.bf16.mxu0 %v10821
  %11067 = vmatpush1.bf16.msra.mxu0 %v10820
  %11068 = vmatprep.subr.bf16.mxu0 %v10825
  %11069 = vmatpush1.bf16.msra.mxu0 %v10824
  %11070 = vmatprep.subr.bf16.mxu0 %v10829
  %11071 = vmatpush1.bf16.msra.mxu0 %v10828
  %11072 = vmatprep.subr.bf16.mxu0 %v10833
  %11073 = vmatpush1.bf16.msra.mxu0 %v10832
  %11074 = vmatprep.subr.bf16.mxu0 %v10837
  %11075 = vmatpush1.bf16.msra.mxu0 %v10836
  %11076 = vmatprep.subr.bf16.mxu0 %v10841
  %11077 = vmatpush1.bf16.msra.mxu0 %v10840
  %11078 = vmatprep.subr.bf16.mxu0 %v10845
  %11079 = vmatpush1.bf16.msra.mxu0 %v10844
  %11080 = vmatprep.subr.bf16.mxu0 %v10849
  %11081 = vmatpush1.bf16.msra.mxu0 %v10848
  %11082 = vmatprep.subr.bf16.mxu0 %v10853
  %11083 = vmatpush1.bf16.msra.mxu0 %v10852
  %11084 = vmatprep.subr.bf16.mxu0 %v10857
  %11085 = vmatpush1.bf16.msra.mxu0 %v10856
  %11086 = vmatprep.subr.bf16.mxu0 %v10861
  %11087 = vmatpush1.bf16.msra.mxu0 %v10860
  %11088 = vmatprep.mubr.bf16.mxu0 %v10285
  %11089 = vmatmul.mubr.bf16.gmra.mrb[0].mxu0 %v10284
  %v11090 = vpop.f32.mrb[0].mxu0
  %v11091 = vadd.f32 0.0, %v11090
  %v11092 = vpop.f32.mrb[0].mxu0
  %v11093 = vadd.f32 0.0, %v11092
  %v11094 = vpop.f32.mrb[0].mxu0
  %v11095 = vadd.f32 0.0, %v11094
  %v11096 = vpop.f32.mrb[0].mxu0
  %v11097 = vadd.f32 0.0, %v11096
  %11098 = vdwg.mxu0
  %11099 = vmatprep.subr.bf16.mxu0 %v10865
  %11100 = vmatpush1.bf16.msra.mxu0 %v10864
  %11101 = vmatprep.subr.bf16.mxu0 %v10869
  %11102 = vmatpush1.bf16.msra.mxu0 %v10868
  %11103 = vmatprep.subr.bf16.mxu0 %v10873
  %11104 = vmatpush1.bf16.msra.mxu0 %v10872
  %11105 = vmatprep.subr.bf16.mxu0 %v10877
  %11106 = vmatpush1.bf16.msra.mxu0 %v10876
  %11107 = vmatprep.subr.bf16.mxu0 %v10881
  %11108 = vmatpush1.bf16.msra.mxu0 %v10880
  %11109 = vmatprep.subr.bf16.mxu0 %v10885
  %11110 = vmatpush1.bf16.msra.mxu0 %v10884
  %11111 = vmatprep.subr.bf16.mxu0 %v10889
  %11112 = vmatpush1.bf16.msra.mxu0 %v10888
  %11113 = vmatprep.subr.bf16.mxu0 %v10893
  %11114 = vmatpush1.bf16.msra.mxu0 %v10892
  %11115 = vmatprep.subr.bf16.mxu0 %v10897
  %11116 = vmatpush1.bf16.msra.mxu0 %v10896
  %11117 = vmatprep.subr.bf16.mxu0 %v10901
  %11118 = vmatpush1.bf16.msra.mxu0 %v10900
  %11119 = vmatprep.subr.bf16.mxu0 %v10905
  %11120 = vmatpush1.bf16.msra.mxu0 %v10904
  %11121 = vmatprep.subr.bf16.mxu0 %v10909
  %11122 = vmatpush1.bf16.msra.mxu0 %v10908
  %11123 = vmatprep.subr.bf16.mxu0 %v10913
  %11124 = vmatpush1.bf16.msra.mxu0 %v10912
  %11125 = vmatprep.subr.bf16.mxu0 %v10917
  %11126 = vmatpush1.bf16.msra.mxu0 %v10916
  %11127 = vmatprep.subr.bf16.mxu0 %v10921
  %11128 = vmatpush1.bf16.msra.mxu0 %v10920
  %11129 = vmatprep.subr.bf16.mxu0 %v10925
  %11130 = vmatpush1.bf16.msra.mxu0 %v10924
  %11131 = vmatprep.mubr.bf16.mxu0 %v10287
  %11132 = vmatmul.mubr.bf16.gmra.mrb[0].mxu0 %v10286
  %v11133 = vpop.f32.mrb[0].mxu0
  %v11134 = vadd.f32 %v11091, %v11133
  %v11135 = vpop.f32.mrb[0].mxu0
  %v11136 = vadd.f32 %v11093, %v11135
  %v11137 = vpop.f32.mrb[0].mxu0
  %v11138 = vadd.f32 %v11095, %v11137
  %v11139 = vpop.f32.mrb[0].mxu0
  %v11140 = vadd.f32 %v11097, %v11139
  %11141 = vdwg.mxu0
  %11142 = vmatprep.subr.bf16.mxu0 %v10803
  %11143 = vmatpush1.bf16.msra.mxu0 %v10802
  %11144 = vmatprep.subr.bf16.mxu0 %v10807
  %11145 = vmatpush1.bf16.msra.mxu0 %v10806
  %11146 = vmatprep.subr.bf16.mxu0 %v10811
  %11147 = vmatpush1.bf16.msra.mxu0 %v10810
  %11148 = vmatprep.subr.bf16.mxu0 %v10815
  %11149 = vmatpush1.bf16.msra.mxu0 %v10814
  %11150 = vmatprep.subr.bf16.mxu0 %v10819
  %11151 = vmatpush1.bf16.msra.mxu0 %v10818
  %11152 = vmatprep.subr.bf16.mxu0 %v10823
  %11153 = vmatpush1.bf16.msra.mxu0 %v10822
  %11154 = vmatprep.subr.bf16.mxu0 %v10827
  %11155 = vmatpush1.bf16.msra.mxu0 %v10826
  %11156 = vmatprep.subr.bf16.mxu0 %v10831
  %11157 = vmatpush1.bf16.msra.mxu0 %v10830
  %11158 = vmatprep.subr.bf16.mxu0 %v10835
  %11159 = vmatpush1.bf16.msra.mxu0 %v10834
  %11160 = vmatprep.subr.bf16.mxu0 %v10839
  %11161 = vmatpush1.bf16.msra.mxu0 %v10838
  %11162 = vmatprep.subr.bf16.mxu0 %v10843
  %11163 = vmatpush1.bf16.msra.mxu0 %v10842
  %11164 = vmatprep.subr.bf16.mxu0 %v10847
  %11165 = vmatpush1.bf16.msra.mxu0 %v10846
  %11166 = vmatprep.subr.bf16.mxu0 %v10851
  %11167 = vmatpush1.bf16.msra.mxu0 %v10850
  %11168 = vmatprep.subr.bf16.mxu0 %v10855
  %11169 = vmatpush1.bf16.msra.mxu0 %v10854
  %11170 = vmatprep.subr.bf16.mxu0 %v10859
  %11171 = vmatpush1.bf16.msra.mxu0 %v10858
  %11172 = vmatprep.subr.bf16.mxu0 %v10863
  %11173 = vmatpush1.bf16.msra.mxu0 %v10862
  %11174 = vmatprep.mubr.bf16.mxu0 %v10285
  %11175 = vmatmul.mubr.bf16.gmra.mrb[0].mxu0 %v10284
  %v11176 = vpop.f32.mrb[0].mxu0
  %v11177 = vadd.f32 0.0, %v11176
  %v11178 = vpop.f32.mrb[0].mxu0
  %v11179 = vadd.f32 0.0, %v11178
  %v11180 = vpop.f32.mrb[0].mxu0
  %v11181 = vadd.f32 0.0, %v11180
  %v11182 = vpop.f32.mrb[0].mxu0
  %v11183 = vadd.f32 0.0, %v11182
  %11184 = vdwg.mxu0
  %11185 = vmatprep.subr.bf16.mxu0 %v10867
  %11186 = vmatpush1.bf16.msra.mxu0 %v10866
  %11187 = vmatprep.subr.bf16.mxu0 %v10871
  %11188 = vmatpush1.bf16.msra.mxu0 %v10870
  %11189 = vmatprep.subr.bf16.mxu0 %v10875
  %11190 = vmatpush1.bf16.msra.mxu0 %v10874
  %11191 = vmatprep.subr.bf16.mxu0 %v10879
  %11192 = vmatpush1.bf16.msra.mxu0 %v10878
  %11193 = vmatprep.subr.bf16.mxu0 %v10883
  %11194 = vmatpush1.bf16.msra.mxu0 %v10882
  %11195 = vmatprep.subr.bf16.mxu0 %v10887
  %11196 = vmatpush1.bf16.msra.mxu0 %v10886
  %11197 = vmatprep.subr.bf16.mxu0 %v10891
  %11198 = vmatpush1.bf16.msra.mxu0 %v10890
  %11199 = vmatprep.subr.bf16.mxu0 %v10895
  %11200 = vmatpush1.bf16.msra.mxu0 %v10894
  %11201 = vmatprep.subr.bf16.mxu0 %v10899
  %11202 = vmatpush1.bf16.msra.mxu0 %v10898
  %11203 = vmatprep.subr.bf16.mxu0 %v10903
  %11204 = vmatpush1.bf16.msra.mxu0 %v10902
  %11205 = vmatprep.subr.bf16.mxu0 %v10907
  %11206 = vmatpush1.bf16.msra.mxu0 %v10906
  %11207 = vmatprep.subr.bf16.mxu0 %v10911
  %11208 = vmatpush1.bf16.msra.mxu0 %v10910
  %11209 = vmatprep.subr.bf16.mxu0 %v10915
  %11210 = vmatpush1.bf16.msra.mxu0 %v10914
  %11211 = vmatprep.subr.bf16.mxu0 %v10919
  %11212 = vmatpush1.bf16.msra.mxu0 %v10918
  %11213 = vmatprep.subr.bf16.mxu0 %v10923
  %11214 = vmatpush1.bf16.msra.mxu0 %v10922
  %11215 = vmatprep.subr.bf16.mxu0 %v10927
  %11216 = vmatpush1.bf16.msra.mxu0 %v10926
  %11217 = vmatprep.mubr.bf16.mxu0 %v10287
  %11218 = vmatmul.mubr.bf16.gmra.mrb[0].mxu0 %v10286
  %v11219 = vpop.f32.mrb[0].mxu0
  %v11220 = vadd.f32 %v11177, %v11219
  %v11221 = vpop.f32.mrb[0].mxu0
  %v11222 = vadd.f32 %v11179, %v11221
  %v11223 = vpop.f32.mrb[0].mxu0
  %v11224 = vadd.f32 %v11181, %v11223
  %v11225 = vpop.f32.mrb[0].mxu0
  %v11226 = vadd.f32 %v11183, %v11225
  %11227 = vdwg.mxu0
  %v11228 = vmax.f32 %v11134, 0.0
  %v11229 = vmax.f32 %v11136, 0.0
  %v11230 = vmax.f32 %v11220, 0.0
  %v11231 = vmax.f32 %v11222, 0.0
  %v11232 = vmax.f32 %v11138, 0.0
  %v11233 = vmax.f32 %v11140, 0.0
  %v11234 = vmax.f32 %v11224, 0.0
  %v11235 = vmax.f32 %v11226, 0.0
  %v11236 = vld [vmem:[%s6] sm:$0xf]
  %v11238 = vlaneseq
  %v11239 = vshrl.u32 %v11238, 7
  %v11240 = vsub.s32 0, %v11239
  %v11241 = vrot.slane %v11236, %v11240
  %v11242 = vlaneseq
  %v11243 = vshrl.u32 %v11242, 7
  %v11244 = vsub.s32 1, %v11243
  %v11245 = vrot.slane %v11236, %v11244
  %v11246 = vlaneseq
  %v11247 = vshrl.u32 %v11246, 7
  %v11248 = vsub.s32 2, %v11247
  %v11249 = vrot.slane %v11236, %v11248
  %v11250 = vlaneseq
  %v11251 = vshrl.u32 %v11250, 7
  %v11252 = vsub.s32 3, %v11251
  %v11253 = vrot.slane %v11236, %v11252
  %v11258 = vmul.f32 %v11228, %v11241
  %v11259 = vmul.f32 %v11229, %v11245
  %v11260 = vmul.f32 %v11230, %v11249
  %v11261 = vmul.f32 %v11231, %v11253
  %v11262 = vmul.f32 %v11232, %v11241
  %v11263 = vmul.f32 %v11233, %v11245
  %v11264 = vmul.f32 %v11234, %v11249
  %v11265 = vmul.f32 %v11235, %v11253
  %v11266 = vadd.f32 %v11258, %v11259
  %v11267 = vadd.f32 %v11266, %v11260
  %v11268 = vadd.f32 %v11267, %v11261
  %11269 = vadd.xlane.f32.xlu0 %v11268
  %v11270 = vpop.xlane.xlu0 %11269
  %v11271 = vadd.f32 %v11262, %v11263
  %v11272 = vadd.f32 %v11271, %v11264
  %v11273 = vadd.f32 %v11272, %v11265
  %11274 = vadd.xlane.f32.xlu0 %v11273
  %v11275 = vpop.xlane.xlu0 %11274
  %vm11276 = vcmask 7168
  %11277 = vst.msk [vmem:[%s10] sm:$0xff] %vm11276, %v11270
  %11278 = vst.msk [vmem:[%s10 + $0x8] sm:$0xff] %vm11276, %v11275
  // Predicated region
  $region42: #{angle_predictor_forward.1} parent=0 // pred_check
    _
  $region43: #{angle_predictor_forward.1} parent=0 // pred_check_branch
    %11280 = sbr.rel (0) target = $region45
  $region44: #{angle_predictor_forward.1} parent=0 // pred_region
    _
  $region45: #{angle_predictor_forward.1} parent=0 // pred_fallthru
    _
  // Predicated region
  $region46: #{angle_predictor_forward.1} parent=0 // pred_check
    _
  $region47: #{angle_predictor_forward.1} parent=0 // pred_check_branch
    %11282 = sbr.rel (0) target = $region49
  $region48: #{angle_predictor_forward.1} parent=0 // pred_region
    _
  $region49: #{angle_predictor_forward.1} parent=0 // pred_fallthru
    _

</llo_original>
